<compile_context>
chip_gen: v7x
topology: tpu7x:2x2x1
jax: 0.10.0
libtpu: 0.0.40
codegen_flags: <defaults>
</compile_context>

<pallas_src>
import math
import functools

import jax
import jax.numpy as jnp
from jax.experimental import pallas as pl
from jax.experimental.pallas import tpu as pltpu


# ----------------------------- shared in-kernel helpers -----------------------

def _ln(y, g, b, eps):
    mu = jnp.mean(y, axis=-1, keepdims=True)
    yc = y - mu
    var = jnp.mean(yc * yc, axis=-1, keepdims=True)
    return yc * jax.lax.rsqrt(var + eps) * g + b


def _mha_accumulate(xq_bf, xkv_bf, wq_ref, bq_ref, wk_ref, bk_ref, wv_ref, bv_ref,
                    wo_ref, scale, bias):
    """Multi-head attention with the output projection folded in, accumulated over heads.

    xq_bf  : (Lq, D)  bf16 query-side activations
    xkv_bf : (Lk, D)  bf16 key/value-side activations
    wq/wk/wv_ref : (nhead, D, Dh) bf16   head-major projection weights (leading-dim indexed,
                                          so there is NO lane slicing per head)
    bq/bk/bv_ref : (nhead, 1, Dh) f32
    wo_ref       : (nhead, Dh, D) bf16   per-head slice of the output projection
    bias         : (Lq, Lk) or (1, Lk) f32 additive bias (causal / key-padding)
    returns      : (Lq, D) f32 = sum_h softmax(q_h k_h^T) v_h @ Wo_h  (no lane concat needed)
    """
    nhead = wq_ref.shape[0]
    acc = None
    for h in range(nhead):
        q = jnp.dot(xq_bf, wq_ref[h], preferred_element_type=jnp.float32) + bq_ref[h]
        k = jnp.dot(xkv_bf, wk_ref[h], preferred_element_type=jnp.float32) + bk_ref[h]
        v = jnp.dot(xkv_bf, wv_ref[h], preferred_element_type=jnp.float32) + bv_ref[h]
        s = jax.lax.dot_general(q.astype(jnp.bfloat16), k.astype(jnp.bfloat16),
                                (((1,), (1,)), ((), ())),
                                preferred_element_type=jnp.float32) * scale + bias
        m = jnp.max(s, axis=-1, keepdims=True)
        p = jnp.exp(s - m)
        p = p * pl.reciprocal(jnp.sum(p, axis=-1, keepdims=True), approx=True)
        hv = jnp.dot(p.astype(jnp.bfloat16), v.astype(jnp.bfloat16),
                     preferred_element_type=jnp.float32)
        ho = jnp.dot(hv.astype(jnp.bfloat16), wo_ref[h], preferred_element_type=jnp.float32)
        acc = ho if acc is None else acc + ho
    return acc


# ----------------------------- Pallas kernels ---------------------------------

def _matmul_bias_kernel(a_ref, w_ref, b_ref, o_ref, *, activation):
    a = a_ref[...].astype(jnp.bfloat16)
    y = jnp.dot(a, w_ref[...], preferred_element_type=jnp.float32) + b_ref[...]
    if activation == 'relu':
        y = jax.nn.relu(y)
    o_ref[...] = y.astype(o_ref.dtype)


def _matmul_tiled_kernel(a_ref, w_ref, b_ref, o_ref, acc_ref, *, activation):
    @pl.when(pl.program_id(2) == 0)
    def _():
        acc_ref[...] = jnp.zeros_like(acc_ref)

    acc_ref[...] += jnp.dot(a_ref[...].astype(jnp.bfloat16), w_ref[...],
                            preferred_element_type=jnp.float32)

    @pl.when(pl.program_id(2) == pl.num_programs(2) - 1)
    def _():
        y = acc_ref[...] + b_ref[...]
        if activation == 'relu':
            y = jax.nn.relu(y)
        o_ref[...] = y.astype(o_ref.dtype)


def _matmul_bias_ln_kernel(x_ref, w_ref, b_ref, g_ref, beta_ref, o_ref, *, eps):
    x = x_ref[...].astype(jnp.bfloat16)
    y = jnp.dot(x, w_ref[...], preferred_element_type=jnp.float32) + b_ref[...]
    o_ref[...] = _ln(y, g_ref[...], beta_ref[...], eps).astype(o_ref.dtype)


def _ffn_res_ln_kernel(x_ref, w1_ref, b1_ref, w2_ref, b2_ref, g_ref, beta_ref, o_ref, *, eps):
    x = x_ref[...].astype(jnp.float32)
    h = jnp.dot(x.astype(jnp.bfloat16), w1_ref[...],
                preferred_element_type=jnp.float32) + b1_ref[...]
    h = jax.nn.relu(h).astype(jnp.bfloat16)
    y = jnp.dot(h, w2_ref[...], preferred_element_type=jnp.float32) + b2_ref[...]
    y = y + x
    o_ref[...] = _ln(y, g_ref[...], beta_ref[...], eps).astype(o_ref.dtype)


def _self_attn_block_kernel(x_ref, wq_ref, bq_ref, wk_ref, bk_ref, wv_ref, bv_ref,
                            wo_ref, bo_ref, g_ref, beta_ref, o_ref, *, scale, eps):
    """Fused decoder self-attention block for one batch element:
    QKV projection + causal MHA + output projection + residual + LayerNorm."""
    x = x_ref[0].astype(jnp.float32)          # (Lt, D) residual path, f32
    xb = x.astype(jnp.bfloat16)
    Lt = x.shape[0]
    row = jax.lax.broadcasted_iota(jnp.int32, (Lt, Lt), 0)
    col = jax.lax.broadcasted_iota(jnp.int32, (Lt, Lt), 1)
    causal_bias = jnp.where(col > row, -1e9, 0.0).astype(jnp.float32)
    attn = _mha_accumulate(xb, xb, wq_ref, bq_ref, wk_ref, bk_ref, wv_ref, bv_ref,
                           wo_ref, scale, causal_bias)
    y = attn + bo_ref[...] + x
    o_ref[0] = _ln(y, g_ref[...], beta_ref[...], eps).astype(o_ref.dtype)


def _cross_attn_block_kernel(x_ref, feat_ref, mask_ref, wq_ref, bq_ref, wk_ref, bk_ref,
                             wv_ref, bv_ref, wo_ref, bo_ref, g_ref, beta_ref, o_ref,
                             *, scale, eps):
    """Fused decoder cross-attention block for one batch element:
    Q + KV projections + MHA (additive key-padding mask) + out proj + residual + LayerNorm."""
    x = x_ref[0].astype(jnp.float32)           # (Lt, D) residual path, f32
    xb = x.astype(jnp.bfloat16)
    fb = feat_ref[0]                           # (Lk, D) bf16 encoder memory
    bias = mask_ref[0]                         # (1, Lk) f32 additive key-padding mask
    attn = _mha_accumulate(xb, fb, wq_ref, bq_ref, wk_ref, bk_ref, wv_ref, bv_ref,
                           wo_ref, scale, bias)
    y = attn + bo_ref[...] + x
    o_ref[0] = _ln(y, g_ref[...], beta_ref[...], eps).astype(o_ref.dtype)


def _dense_conv_kernel(xp_ref, w_ref, b_ref, o_ref, *, H, W, Cin, Cout):
    """3x3 stride-1 'same' conv + bias + ReLU + DenseNet channel concat, HALO-PRESERVING.

    xp_ref : (1, H+2, W+2, Cin)        bf16, spatially padded input (zero halo)
    w_ref  : (9*Cin, Cout)             bf16 (dy, dx, cin flattened)
    b_ref  : (1, Cout)                 f32
    o_ref  : (1, H+2, W+2, Cin+Cout)   bf16, zero halo maintained (next layer reads it directly,
                                       so no per-layer jnp.pad HBM copy is needed).
    """
    xp = xp_ref[0]
    patches = [xp[dy:dy + H, dx:dx + W, :] for dy in range(3) for dx in range(3)]
    a = jnp.concatenate(patches, axis=-1).reshape(H * W, 9 * Cin)    # im2col lives in VMEM only
    y = jnp.dot(a, w_ref[...], preferred_element_type=jnp.float32) + b_ref[...]
    y3 = jax.nn.relu(y).astype(jnp.bfloat16).reshape(H, W, Cout)
    # Write the zero halo ring, then the interior concat (patches[4] == center == unpadded input).
    o_ref[...] = jnp.zeros(o_ref.shape, o_ref.dtype)
    o_ref[0, 1:H + 1, 1:W + 1, :] = jnp.concatenate([patches[4], y3], axis=-1)


# ----------------------------- pallas_call wrappers ----------------------------

def _gemm_tile_params():
    """Per-generation GEMM tiling: big tiles on 128-MiB VMEM parts, conservative on v7x (64 MiB)."""
    vmem_bytes = 64 * 1024 * 1024
    try:
        vmem_bytes = pltpu.get_tpu_info().vmem_capacity_bytes
    except Exception:
        pass
    if vmem_bytes >= 96 * 1024 * 1024:          # v5e / v6e
        return 512, 512, 512, 80 * 1024 * 1024
    return 256, 256, 256, 40 * 1024 * 1024      # v7x


def _const_spec(x):
    nd = x.ndim
    return pl.BlockSpec(x.shape, lambda b, _nd=nd: (0,) * _nd)


def _call_rowwise(kern, row_ins, full_ins, out_n, out_dtype, tm=256):
    """Call `kern(*row_ins, *full_ins) -> (M, out_n)`, tiling the row dimension.

    Non-divisible M is handled with a pl.cdiv grid (last block masked on store), so large
    activations are always pipelined instead of falling back to one whole-array VMEM block.
    """
    M = row_ins[0].shape[0]
    out_shape = jax.ShapeDtypeStruct((M, out_n), out_dtype)
    if M > tm:
        in_specs = ([pl.BlockSpec((tm, a.shape[1]), lambda i: (i, 0)) for a in row_ins] +
                    [pl.BlockSpec(a.shape, lambda i: (0, 0)) for a in full_ins])
        return pl.pallas_call(
            kern,
            grid=(pl.cdiv(M, tm),),
            in_specs=in_specs,
            out_specs=pl.BlockSpec((tm, out_n), lambda i: (i, 0)),
            out_shape=out_shape,
            compiler_params=pltpu.CompilerParams(dimension_semantics=("parallel",)),
        )(*row_ins, *full_ins)
    # Small shapes: single full-array block.
    return pl.pallas_call(kern, out_shape=out_shape)(*row_ins, *full_ins)


def pallas_linear(a, w, bias, activation=None, out_dtype=jnp.float32):
    """a:(M,K) @ w:(K,N) [bf16 weights] + bias, fused optional ReLU.

    Large divisible shapes use a (tm,tn,tk) grid with an f32 VMEM accumulator; tile sizes and the
    VMEM limit are chosen per TPU generation. Otherwise row-tiled / full-block.
    """
    M, K = a.shape
    N = w.shape[1]
    bias2 = bias.reshape(1, N).astype(jnp.float32)
    tm, tn, tk, vmem_cap = _gemm_tile_params()
    if (M > tm and (N > tn or K > tk)
            and M % tm == 0 and N % tn == 0 and K % tk == 0):
        kern = functools.partial(_matmul_tiled_kernel, activation=activation)
        return pl.pallas_call(
            kern,
            grid=(M // tm, N // tn, K // tk),
            in_specs=[pl.BlockSpec((tm, tk), lambda i, j, k: (i, k)),
                      pl.BlockSpec((tk, tn), lambda i, j, k: (k, j)),
                      pl.BlockSpec((1, tn), lambda i, j, k: (0, j))],
            out_specs=pl.BlockSpec((tm, tn), lambda i, j, k: (i, j)),
            out_shape=jax.ShapeDtypeStruct((M, N), out_dtype),
            scratch_shapes=[pltpu.VMEM((tm, tn), jnp.float32)],
            compiler_params=pltpu.CompilerParams(
                dimension_semantics=("parallel", "parallel", "arbitrary"),
                vmem_limit_bytes=vmem_cap),
        )(a, w, bias2)
    kern = functools.partial(_matmul_bias_kernel, activation=activation)
    return _call_rowwise(kern, [a], [w, bias2], N, out_dtype, tm=tm)


def pallas_matmul_ln(x2d, w, b, g, beta, eps=1e-5):
    N = w.shape[1]
    kern = functools.partial(_matmul_bias_ln_kernel, eps=eps)
    return _call_rowwise(kern, [x2d],
                         [w, b.reshape(1, N).astype(jnp.float32),
                          g.reshape(1, N).astype(jnp.float32),
                          beta.reshape(1, N).astype(jnp.float32)],
                         N, jnp.float32)


def pallas_ffn_res_ln(x2d, w1, b1, w2, b2, g, beta, eps=1e-5):
    D = x2d.shape[1]
    F = w1.shape[1]
    kern = functools.partial(_ffn_res_ln_kernel, eps=eps)
    return _call_rowwise(kern, [x2d.astype(jnp.float32)],
                         [w1, b1.reshape(1, F).astype(jnp.float32),
                          w2, b2.reshape(1, D).astype(jnp.float32),
                          g.reshape(1, D).astype(jnp.float32),
                          beta.reshape(1, D).astype(jnp.float32)],
                         D, jnp.float32)


def pallas_self_attn_block(x, wq, bq, wk, bk, wv, bv, wo, bo, g, beta, scale, eps=1e-5):
    """x:(B,Lt,D) f32 -> fused (QKV proj + causal MHA + out proj + residual + LN), (B,Lt,D) f32."""
    B, Lt, D = x.shape
    bo2 = bo.reshape(1, D).astype(jnp.float32)
    g2 = g.reshape(1, D).astype(jnp.float32)
    beta2 = beta.reshape(1, D).astype(jnp.float32)
    consts = [wq, bq, wk, bk, wv, bv, wo, bo2, g2, beta2]
    kern = functools.partial(_self_attn_block_kernel, scale=scale, eps=eps)
    return pl.pallas_call(
        kern,
        grid=(B,),
        in_specs=[pl.BlockSpec((1, Lt, D), lambda b: (b, 0, 0))] +
                 [_const_spec(t) for t in consts],
        out_specs=pl.BlockSpec((1, Lt, D), lambda b: (b, 0, 0)),
        out_shape=jax.ShapeDtypeStruct((B, Lt, D), jnp.float32),
        compiler_params=pltpu.CompilerParams(dimension_semantics=("parallel",)),
    )(x, *consts)


def pallas_cross_attn_block(x, feat_bf, add_mask, wq, bq, wk, bk, wv, bv, wo, bo, g, beta,
                            scale, eps=1e-5):
    """x:(B,Lt,D) f32, feat:(B,Lk,D) bf16, add_mask:(B,1,Lk) f32 additive. Returns (B,Lt,D) f32."""
    B, Lt, D = x.shape
    Lk = feat_bf.shape[1]
    bo2 = bo.reshape(1, D).astype(jnp.float32)
    g2 = g.reshape(1, D).astype(jnp.float32)
    beta2 = beta.reshape(1, D).astype(jnp.float32)
    consts = [wq, bq, wk, bk, wv, bv, wo, bo2, g2, beta2]
    kern = functools.partial(_cross_attn_block_kernel, scale=scale, eps=eps)
    # TODO(synk): tile Lk flash-style (online softmax) for very long encoder sequences on v7x.
    return pl.pallas_call(
        kern,
        grid=(B,),
        in_specs=[pl.BlockSpec((1, Lt, D), lambda b: (b, 0, 0)),
                  pl.BlockSpec((1, Lk, D), lambda b: (b, 0, 0)),
                  pl.BlockSpec((1, 1, Lk), lambda b: (b, 0, 0))] +
                 [_const_spec(t) for t in consts],
        out_specs=pl.BlockSpec((1, Lt, D), lambda b: (b, 0, 0)),
        out_shape=jax.ShapeDtypeStruct((B, Lt, D), jnp.float32),
        compiler_params=pltpu.CompilerParams(dimension_semantics=("parallel",)),
    )(x, feat_bf, add_mask, *consts)


def dense_conv_padded(xp, w, b):
    """One DenseNet layer on the halo-carrying activation:
    (B, H+2, W+2, Cin) -> (B, H+2, W+2, Cin+Cout) with concat + zero halo fused in-kernel."""
    B, Hp, Wp, Cin = xp.shape
    H, W = Hp - 2, Wp - 2
    Cout = w.shape[-1]
    kern = functools.partial(_dense_conv_kernel, H=H, W=W, Cin=Cin, Cout=Cout)
    return pl.pallas_call(
        kern,
        grid=(B,),
        in_specs=[pl.BlockSpec((1, Hp, Wp, Cin), lambda i: (i, 0, 0, 0)),
                  pl.BlockSpec((9 * Cin, Cout), lambda i: (0, 0)),
                  pl.BlockSpec((1, Cout), lambda i: (0, 0))],
        out_specs=pl.BlockSpec((1, Hp, Wp, Cin + Cout), lambda i: (i, 0, 0, 0)),
        out_shape=jax.ShapeDtypeStruct((B, Hp, Wp, Cin + Cout), jnp.bfloat16),
        compiler_params=pltpu.CompilerParams(dimension_semantics=("parallel",)),
    )(xp, w.reshape(9 * Cin, Cout), b.reshape(1, Cout).astype(jnp.float32))


def stem_conv(x, w, b):
    """3x3 stride-2 'same' conv + ReLU. Cin=1, so wrapper im2col is negligible (9 floats/output)."""
    B, H, W, Cin = x.shape
    Cout = w.shape[-1]
    xp = jnp.pad(x, ((0, 0), (1, 1), (1, 1), (0, 0)))
    Ho = (H - 1) // 2 + 1
    Wo = (W - 1) // 2 + 1
    patches = [xp[:, dy:dy + 2 * Ho:2, dx:dx + 2 * Wo:2, :]
               for dy in range(3) for dx in range(3)]
    pat = jnp.concatenate(patches, axis=-1).reshape(B * Ho * Wo, 9 * Cin)
    out = pallas_linear(pat, w.reshape(9 * Cin, Cout), b,
                        activation='relu', out_dtype=jnp.bfloat16)
    return out.reshape(B, Ho, Wo, Cout)


# --------------------------------- Glue ----------------------------------------

def sinusoid_1d(L, d):
    pos = jnp.arange(L, dtype=jnp.float32)[:, None]
    div = jnp.exp(jnp.arange(0, d, 2, dtype=jnp.float32) * (-math.log(10000.0) / d))
    pe = jnp.zeros((L, d), jnp.float32)
    pe = pe.at[:, 0::2].set(jnp.sin(pos * div))
    pe = pe.at[:, 1::2].set(jnp.cos(pos * div))
    return pe


def pos_enc_2d(H, W, D):
    dh = D // 2
    pe_y = jnp.broadcast_to(sinusoid_1d(H, dh)[:, None, :], (H, W, dh))
    pe_x = jnp.broadcast_to(sinusoid_1d(W, dh)[None, :, :], (H, W, dh))
    return jnp.concatenate([pe_y, pe_x], axis=-1).reshape(1, H * W, D)


# ------------------------------- Parameters ------------------------------------

def init_params(key, d_model, growth_rate, num_layers, nhead,
                num_decoder_layers, dim_feedforward, nline):
    keys = iter(jax.random.split(key, 256))
    Dh = d_model // nhead
    nline_pad = ((nline + 127) // 128) * 128       # lane-dense logits GEMM

    def nrm(shape, scale=0.02):
        return jax.random.normal(next(keys), shape, jnp.float32) * scale

    def bf(x):
        return x.astype(jnp.bfloat16)              # matmul weights live in HBM as bf16

    p = {}
    stem_ch = 2 * growth_rate
    p['stem_w'] = bf(nrm((3, 3, 1, stem_ch)))
    p['stem_b'] = jnp.zeros((stem_ch,), jnp.float32)
    ch = stem_ch
    for i in range(num_layers):
        p[f'dense_w_{i}'] = bf(nrm((3, 3, ch, growth_rate)))
        p[f'dense_b_{i}'] = jnp.zeros((growth_rate,), jnp.float32)
        ch += growth_rate
    p['proj_w'] = bf(nrm((ch, d_model)))
    p['proj_b'] = jnp.zeros((d_model,), jnp.float32)
    p['enc_ln_g'] = jnp.ones((d_model,), jnp.float32)
    p['enc_ln_b'] = jnp.zeros((d_model,), jnp.float32)

    p['embed'] = nrm((nline, d_model), 1.0 / math.sqrt(d_model))
    for i in range(num_decoder_layers):
        for name in ('self', 'cross'):
            # Head-major attention weights: leading-dim per-head slices, no lane slicing in-kernel.
            p[f'dec{i}_{name}_wq'] = bf(nrm((nhead, d_model, Dh)))
            p[f'dec{i}_{name}_bq'] = jnp.zeros((nhead, 1, Dh), jnp.float32)
            p[f'dec{i}_{name}_wk'] = bf(nrm((nhead, d_model, Dh)))
            p[f'dec{i}_{name}_bk'] = jnp.zeros((nhead, 1, Dh), jnp.float32)
            p[f'dec{i}_{name}_wv'] = bf(nrm((nhead, d_model, Dh)))
            p[f'dec{i}_{name}_bv'] = jnp.zeros((nhead, 1, Dh), jnp.float32)
            p[f'dec{i}_{name}_wo'] = bf(nrm((nhead, Dh, d_model)))
            p[f'dec{i}_{name}_bo'] = jnp.zeros((d_model,), jnp.float32)
        for ln in ('ln1', 'ln2', 'ln3'):
            p[f'dec{i}_{ln}_g'] = jnp.ones((d_model,), jnp.float32)
            p[f'dec{i}_{ln}_b'] = jnp.zeros((d_model,), jnp.float32)
        p[f'dec{i}_ffn_w1'] = bf(nrm((d_model, dim_feedforward)))
        p[f'dec{i}_ffn_b1'] = jnp.zeros((dim_feedforward,), jnp.float32)
        p[f'dec{i}_ffn_w2'] = bf(nrm((dim_feedforward, d_model)))
        p[f'dec{i}_ffn_b2'] = jnp.zeros((d_model,), jnp.float32)
    out_w = nrm((d_model, nline))
    p['out_w'] = bf(jnp.zeros((d_model, nline_pad), jnp.float32).at[:, :nline].set(out_w))
    p['out_b'] = jnp.zeros((nline_pad,), jnp.float32)
    return p


# --------------------------------- Model ----------------------------------------

def encoder_forward(p, imgs, img_mask, d_model, num_layers):
    # imgs: (B, 1, H, W) NCHW -> NHWC
    x = jnp.transpose(imgs, (0, 2, 3, 1))
    x = stem_conv(x, p['stem_w'], p['stem_b'])                 # (B, Ho, Wo, 2g) bf16, relu fused
    mask = img_mask[:, ::2, ::2]                               # stride-2 mask downsample
    # Pad ONCE after the stem; the dense-conv kernels maintain the zero halo themselves.
    xp = jnp.pad(x, ((0, 0), (1, 1), (1, 1), (0, 0)))
    for i in range(num_layers):                                # conv+relu+concat fused, no re-pad
        xp = dense_conv_padded(xp, p[f'dense_w_{i}'], p[f'dense_b_{i}'])
    x = xp[:, 1:-1, 1:-1, :]                                   # strip halo once
    B, Ho, Wo, C = x.shape
    feat = pallas_matmul_ln(x.reshape(B * Ho * Wo, C),         # 1x1 conv + LayerNorm fused
                            p['proj_w'], p['proj_b'], p['enc_ln_g'], p['enc_ln_b'])
    feat = feat.reshape(B, Ho * Wo, d_model) + pos_enc_2d(Ho, Wo, d_model)
    f_mask = mask.reshape(B, Ho * Wo)                          # True = padded position
    return feat, f_mask


def decoder_forward(p, feature, f_mask, task_seq, d_model, nhead, num_decoder_layers, nline):
    B, Lt = task_seq.shape
    Dh = d_model // nhead
    scale = 1.0 / math.sqrt(Dh)
    x = p['embed'][task_seq] * math.sqrt(d_model) + sinusoid_1d(Lt, d_model)[None]   # (B,Lt,D) f32

    feat_bf = feature.astype(jnp.bfloat16)                     # cast once; read per decoder layer
    cross_mask = jnp.where(f_mask, -1e9, 0.0).astype(jnp.float32)[:, None, :]        # (B, 1, Lk)

    for i in range(num_decoder_layers):
        s = f'dec{i}_self'
        x = pallas_self_attn_block(x, p[s + '_wq'], p[s + '_bq'], p[s + '_wk'], p[s + '_bk'],
                                   p[s + '_wv'], p[s + '_bv'], p[s + '_wo'], p[s + '_bo'],
                                   p[f'dec{i}_ln1_g'], p[f'dec{i}_ln1_b'], scale)

        c = f'dec{i}_cross'
        x = pallas_cross_attn_block(x, feat_bf, cross_mask,
                                    p[c + '_wq'], p[c + '_bq'], p[c + '_wk'], p[c + '_bk'],
                                    p[c + '_wv'], p[c + '_bv'], p[c + '_wo'], p[c + '_bo'],
                                    p[f'dec{i}_ln2_g'], p[f'dec{i}_ln2_b'], scale)

        x = pallas_ffn_res_ln(x.reshape(B * Lt, d_model),
                              p[f'dec{i}_ffn_w1'], p[f'dec{i}_ffn_b1'],
                              p[f'dec{i}_ffn_w2'], p[f'dec{i}_ffn_b2'],
                              p[f'dec{i}_ln3_g'], p[f'dec{i}_ln3_b']).reshape(B, Lt, d_model)

    # Lane-dense (padded-to-128) logits GEMM; padding columns sliced off outside the kernel.
    logits_pad = pallas_linear(x.reshape(B * Lt, d_model), p['out_w'], p['out_b'])
    return logits_pad[:, :nline].reshape(B, Lt, nline)


def last_forward(p, imgs, img_mask, task_seq, *, d_model, num_layers,
                 nhead, num_decoder_layers, nline):
    feature, f_mask = encoder_forward(p, imgs, img_mask, d_model, num_layers)
    return decoder_forward(p, feature, f_mask, task_seq,
                           d_model, nhead, num_decoder_layers, nline)


# --------------------------------- Main ----------------------------------------

if __name__ == "__main__":
    d_model, growth_rate, num_layers = 32, 8, 3
    nhead, num_decoder_layers, dim_feedforward, dropout, nline = 4, 2, 64, 0.0, 10
    B, H, W, Lt = 2, 16, 16, 8

    key = jax.random.PRNGKey(0)
    kp, ki, kt = jax.random.split(key, 3)

    params = init_params(kp, d_model, growth_rate, num_layers, nhead,
                         num_decoder_layers, dim_feedforward, nline)

    imgs = jax.random.normal(ki, (B, 1, H, W), jnp.float32)              # NCHW like PyTorch
    img_mask = jnp.zeros((B, H, W), jnp.bool_).at[1, :, 12:].set(True)   # True = padding
    task_seq = jax.random.randint(kt, (B, Lt), 0, nline)

    fwd = jax.jit(functools.partial(last_forward, d_model=d_model, num_layers=num_layers,
                                    nhead=nhead, num_decoder_layers=num_decoder_layers,
                                    nline=nline))
    out = fwd(params, imgs, img_mask, task_seq)
    jax.block_until_ready(out)
    assert out.shape == (B, Lt, nline) and bool(jnp.all(jnp.isfinite(out)))
    print("KERNEL_OK")
</pallas_src>

<mosaic_0001>
module attributes {stable_mosaic.version = 11 : i64} {
  func.func @_matmul_bias_kernel(%arg0: memref<128x9xf32, #tpu.memory_space<vmem>>, %arg1: memref<9x16xbf16, #tpu.memory_space<vmem>>, %arg2: memref<1x16xf32, #tpu.memory_space<vmem>>, %arg3: memref<128x16xbf16, #tpu.memory_space<vmem>>) attributes {dimension_semantics = [], scalar_prefetch = 0 : i64, scratch_operands = 0 : i64, tpu.core_type = #tpu.core_type<tc>} {
    %c0 = arith.constant 0 : index
    %c0_0 = arith.constant 0 : index
    %0 = vector.load %arg0[%c0, %c0_0] : memref<128x9xf32, #tpu.memory_space<vmem>>, vector<128x9xf32>
    %1 = arith.truncf %0 : vector<128x9xf32> to vector<128x9xbf16>
    %c0_1 = arith.constant 0 : index
    %c0_2 = arith.constant 0 : index
    %2 = vector.load %arg1[%c0_1, %c0_2] : memref<9x16xbf16, #tpu.memory_space<vmem>>, vector<9x16xbf16>
    %cst = arith.constant dense<0.000000e+00> : vector<128x16xf32>
    %3 = tpu.matmul %1, %2, %cst {dimension_numbers = #tpu.dot_dimension_numbers<[1], [0], [0], [1], [0, 0, 1, 1], [], []>} : vector<128x9xbf16>, vector<9x16xbf16>, vector<128x16xf32> -> vector<128x16xf32>
    %c0_3 = arith.constant 0 : index
    %c0_4 = arith.constant 0 : index
    %4 = vector.load %arg2[%c0_3, %c0_4] : memref<1x16xf32, #tpu.memory_space<vmem>>, vector<1x16xf32>
    %5 = vector.broadcast %4 : vector<1x16xf32> to vector<128x16xf32>
    %6 = arith.addf %3, %5 : vector<128x16xf32>
    %cst_5 = arith.constant 0.000000e+00 : f32
    %7 = vector.broadcast %cst_5 : f32 to vector<128x16xf32>
    %8 = arith.maximumf %6, %7 : vector<128x16xf32>
    %9 = arith.truncf %8 : vector<128x16xf32> to vector<128x16xbf16>
    %c0_6 = arith.constant 0 : index
    %c0_7 = arith.constant 0 : index
    %10 = vector.load %arg3[%c0_6, %c0_7] : memref<128x16xbf16, #tpu.memory_space<vmem>>, vector<128x16xbf16>
    tpu.vector_store %arg3[%c0_6, %c0_7], %9 {strides = array<i32>} : memref<128x16xbf16, #tpu.memory_space<vmem>>, vector<128x16xbf16>,
    return
  }
}

module attributes {stable_mosaic.version = 11 : i64} {
  func.func @_dense_conv_kernel(%arg0: i32, %arg1: memref<1x10x10x16xbf16, #tpu.memory_space<vmem>>, %arg2: memref<144x8xbf16, #tpu.memory_space<vmem>>, %arg3: memref<1x8xf32, #tpu.memory_space<vmem>>, %arg4: memref<1x10x10x24xbf16, #tpu.memory_space<vmem>>) attributes {dimension_semantics = [#tpu.dimension_semantics<parallel>], iteration_bounds = array<i64: 2>, scalar_prefetch = 0 : i64, scratch_operands = 0 : i64, tpu.core_type = #tpu.core_type<tc>, window_params = [{transform_indices = @transform_0, window_bounds = array<i64: 1, 10, 10, 16>}, {pipeline_mode = #tpu.pipeline_mode<synchronous>, transform_indices = @transform_1, window_bounds = array<i64: 144, 8>}, {pipeline_mode = #tpu.pipeline_mode<synchronous>, transform_indices = @transform_2, window_bounds = array<i64: 1, 8>}, {transform_indices = @transform_3, window_bounds = array<i64: 1, 10, 10, 24>}]} {
    %c0 = arith.constant 0 : index
    %c0_0 = arith.constant 0 : index
    %c0_1 = arith.constant 0 : index
    %c0_2 = arith.constant 0 : index
    %0 = vector.load %arg1[%c0, %c0_0, %c0_1, %c0_2] : memref<1x10x10x16xbf16, #tpu.memory_space<vmem>>, vector<1x10x10x16xbf16>
    %1 = vector.shape_cast %0 : vector<1x10x10x16xbf16> to vector<10x10x16xbf16>
    %2 = vector.extract_strided_slice %1 {offsets = [0, 0, 0], sizes = [8, 8, 16], strides = [1, 1, 1]} : vector<10x10x16xbf16> to vector<8x8x16xbf16>
    %3 = vector.extract_strided_slice %1 {offsets = [0, 1, 0], sizes = [8, 8, 16], strides = [1, 1, 1]} : vector<10x10x16xbf16> to vector<8x8x16xbf16>
    %4 = vector.extract_strided_slice %1 {offsets = [0, 2, 0], sizes = [8, 8, 16], strides = [1, 1, 1]} : vector<10x10x16xbf16> to vector<8x8x16xbf16>
    %5 = vector.extract_strided_slice %1 {offsets = [1, 0, 0], sizes = [8, 8, 16], strides = [1, 1, 1]} : vector<10x10x16xbf16> to vector<8x8x16xbf16>
    %6 = vector.extract_strided_slice %1 {offsets = [1, 1, 0], sizes = [8, 8, 16], strides = [1, 1, 1]} : vector<10x10x16xbf16> to vector<8x8x16xbf16>
    %7 = vector.extract_strided_slice %1 {offsets = [1, 2, 0], sizes = [8, 8, 16], strides = [1, 1, 1]} : vector<10x10x16xbf16> to vector<8x8x16xbf16>
    %8 = vector.extract_strided_slice %1 {offsets = [2, 0, 0], sizes = [8, 8, 16], strides = [1, 1, 1]} : vector<10x10x16xbf16> to vector<8x8x16xbf16>
    %9 = vector.extract_strided_slice %1 {offsets = [2, 1, 0], sizes = [8, 8, 16], strides = [1, 1, 1]} : vector<10x10x16xbf16> to vector<8x8x16xbf16>
    %10 = vector.extract_strided_slice %1 {offsets = [2, 2, 0], sizes = [8, 8, 16], strides = [1, 1, 1]} : vector<10x10x16xbf16> to vector<8x8x16xbf16>
    %11 = tpu.concatenate %2, %3, %4, %5, %6, %7, %8, %9, %10 in 2 : vector<8x8x16xbf16>, vector<8x8x16xbf16>, vector<8x8x16xbf16>, vector<8x8x16xbf16>, vector<8x8x16xbf16>, vector<8x8x16xbf16>, vector<8x8x16xbf16>, vector<8x8x16xbf16>, vector<8x8x16xbf16> -> vector<8x8x144xbf16>
    %12 = vector.shape_cast %11 : vector<8x8x144xbf16> to vector<64x144xbf16>
    %c0_3 = arith.constant 0 : index
    %c0_4 = arith.constant 0 : index
    %13 = vector.load %arg2[%c0_3, %c0_4] : memref<144x8xbf16, #tpu.memory_space<vmem>>, vector<144x8xbf16>
    %cst = arith.constant dense<0.000000e+00> : vector<64x8xf32>
    %14 = tpu.matmul %12, %13, %cst {dimension_numbers = #tpu.dot_dimension_numbers<[1], [0], [0], [1], [0, 0, 1, 1], [], []>} : vector<64x144xbf16>, vector<144x8xbf16>, vector<64x8xf32> -> vector<64x8xf32>
    %c0_5 = arith.constant 0 : index
    %c0_6 = arith.constant 0 : index
    %15 = vector.load %arg3[%c0_5, %c0_6] : memref<1x8xf32, #tpu.memory_space<vmem>>, vector<1x8xf32>
    %16 = vector.broadcast %15 : vector<1x8xf32> to vector<64x8xf32>
    %17 = arith.addf %14, %16 : vector<64x8xf32>
    %cst_7 = arith.constant 0.000000e+00 : f32
    %18 = vector.broadcast %cst_7 : f32 to vector<64x8xf32>
    %19 = arith.maximumf %17, %18 : vector<64x8xf32>
    %20 = arith.truncf %19 : vector<64x8xf32> to vector<64x8xbf16>
    %21 = vector.shape_cast %20 : vector<64x8xbf16> to vector<8x8x8xbf16>
    %cst_8 = arith.constant 0.000000e+00 : bf16
    %22 = vector.broadcast %cst_8 : bf16 to vector<1x10x10x24xbf16>
    %c0_9 = arith.constant 0 : index
    %c0_10 = arith.constant 0 : index
    %c0_11 = arith.constant 0 : index
    %c0_12 = arith.constant 0 : index
    %23 = vector.load %arg4[%c0_9, %c0_10, %c0_11, %c0_12] : memref<1x10x10x24xbf16, #tpu.memory_space<vmem>>, vector<1x10x10x24xbf16>
    tpu.vector_store %arg4[%c0_9, %c0_10, %c0_11, %c0_12], %22 {strides = array<i32>} : memref<1x10x10x24xbf16, #tpu.memory_space<vmem>>, vector<1x10x10x24xbf16>,
    %24 = tpu.concatenate %6, %21 in 2 : vector<8x8x16xbf16>, vector<8x8x8xbf16> -> vector<8x8x24xbf16>
    %c0_13 = arith.constant 0 : index
    %c1 = arith.constant 1 : index
    %c1_14 = arith.constant 1 : index
    %c0_15 = arith.constant 0 : index
    %25 = vector.load %arg4[%c0_13, %c1, %c1_14, %c0_15] : memref<1x10x10x24xbf16, #tpu.memory_space<vmem>>, vector<1x8x8x24xbf16>
    %26 = vector.shape_cast %25 : vector<1x8x8x24xbf16> to vector<8x8x24xbf16>
    %27 = vector.shape_cast %24 : vector<8x8x24xbf16> to vector<1x8x8x24xbf16>
    tpu.vector_store %arg4[%c0_13, %c1, %c1_14, %c0_15], %27 {strides = array<i32>} : memref<1x10x10x24xbf16, #tpu.memory_space<vmem>>, vector<1x8x8x24xbf16>,
    return
  }
  func.func @transform_0(%arg0: i32) -> (i32, i32, i32, i32) {
    %c0_i32 = arith.constant 0 : i32
    %c0_i32_0 = arith.constant 0 : i32
    %c0_i32_1 = arith.constant 0 : i32
    %c0_i32_2 = arith.constant 0 : i32
    return %arg0, %c0_i32, %c0_i32_0, %c0_i32_1 : i32, i32, i32, i32
  }
  func.func @transform_1(%arg0: i32) -> (i32, i32) {
    %c0_i32 = arith.constant 0 : i32
    %c0_i32_0 = arith.constant 0 : i32
    %c0_i32_1 = arith.constant 0 : i32
    return %c0_i32, %c0_i32_0 : i32, i32
  }
  func.func @transform_2(%arg0: i32) -> (i32, i32) {
    %c0_i32 = arith.constant 0 : i32
    %c0_i32_0 = arith.constant 0 : i32
    %c0_i32_1 = arith.constant 0 : i32
    return %c0_i32, %c0_i32_0 : i32, i32
  }
  func.func @transform_3(%arg0: i32) -> (i32, i32, i32, i32) {
    %c0_i32 = arith.constant 0 : i32
    %c0_i32_0 = arith.constant 0 : i32
    %c0_i32_1 = arith.constant 0 : i32
    %c0_i32_2 = arith.constant 0 : i32
    return %arg0, %c0_i32, %c0_i32_0, %c0_i32_1 : i32, i32, i32, i32
  }
}

module attributes {stable_mosaic.version = 11 : i64} {
  func.func @_dense_conv_kernel(%arg0: i32, %arg1: memref<1x10x10x24xbf16, #tpu.memory_space<vmem>>, %arg2: memref<216x8xbf16, #tpu.memory_space<vmem>>, %arg3: memref<1x8xf32, #tpu.memory_space<vmem>>, %arg4: memref<1x10x10x32xbf16, #tpu.memory_space<vmem>>) attributes {dimension_semantics = [#tpu.dimension_semantics<parallel>], iteration_bounds = array<i64: 2>, scalar_prefetch = 0 : i64, scratch_operands = 0 : i64, tpu.core_type = #tpu.core_type<tc>, window_params = [{transform_indices = @transform_0, window_bounds = array<i64: 1, 10, 10, 24>}, {pipeline_mode = #tpu.pipeline_mode<synchronous>, transform_indices = @transform_1, window_bounds = array<i64: 216, 8>}, {pipeline_mode = #tpu.pipeline_mode<synchronous>, transform_indices = @transform_2, window_bounds = array<i64: 1, 8>}, {transform_indices = @transform_3, window_bounds = array<i64: 1, 10, 10, 32>}]} {
    %c0 = arith.constant 0 : index
    %c0_0 = arith.constant 0 : index
    %c0_1 = arith.constant 0 : index
    %c0_2 = arith.constant 0 : index
    %0 = vector.load %arg1[%c0, %c0_0, %c0_1, %c0_2] : memref<1x10x10x24xbf16, #tpu.memory_space<vmem>>, vector<1x10x10x24xbf16>
    %1 = vector.shape_cast %0 : vector<1x10x10x24xbf16> to vector<10x10x24xbf16>
    %2 = vector.extract_strided_slice %1 {offsets = [0, 0, 0], sizes = [8, 8, 24], strides = [1, 1, 1]} : vector<10x10x24xbf16> to vector<8x8x24xbf16>
    %3 = vector.extract_strided_slice %1 {offsets = [0, 1, 0], sizes = [8, 8, 24], strides = [1, 1, 1]} : vector<10x10x24xbf16> to vector<8x8x24xbf16>
    %4 = vector.extract_strided_slice %1 {offsets = [0, 2, 0], sizes = [8, 8, 24], strides = [1, 1, 1]} : vector<10x10x24xbf16> to vector<8x8x24xbf16>
    %5 = vector.extract_strided_slice %1 {offsets = [1, 0, 0], sizes = [8, 8, 24], strides = [1, 1, 1]} : vector<10x10x24xbf16> to vector<8x8x24xbf16>
    %6 = vector.extract_strided_slice %1 {offsets = [1, 1, 0], sizes = [8, 8, 24], strides = [1, 1, 1]} : vector<10x10x24xbf16> to vector<8x8x24xbf16>
    %7 = vector.extract_strided_slice %1 {offsets = [1, 2, 0], sizes = [8, 8, 24], strides = [1, 1, 1]} : vector<10x10x24xbf16> to vector<8x8x24xbf16>
    %8 = vector.extract_strided_slice %1 {offsets = [2, 0, 0], sizes = [8, 8, 24], strides = [1, 1, 1]} : vector<10x10x24xbf16> to vector<8x8x24xbf16>
    %9 = vector.extract_strided_slice %1 {offsets = [2, 1, 0], sizes = [8, 8, 24], strides = [1, 1, 1]} : vector<10x10x24xbf16> to vector<8x8x24xbf16>
    %10 = vector.extract_strided_slice %1 {offsets = [2, 2, 0], sizes = [8, 8, 24], strides = [1, 1, 1]} : vector<10x10x24xbf16> to vector<8x8x24xbf16>
    %11 = tpu.concatenate %2, %3, %4, %5, %6, %7, %8, %9, %10 in 2 : vector<8x8x24xbf16>, vector<8x8x24xbf16>, vector<8x8x24xbf16>, vector<8x8x24xbf16>, vector<8x8x24xbf16>, vector<8x8x24xbf16>, vector<8x8x24xbf16>, vector<8x8x24xbf16>, vector<8x8x24xbf16> -> vector<8x8x216xbf16>
    %12 = vector.shape_cast %11 : vector<8x8x216xbf16> to vector<64x216xbf16>
    %c0_3 = arith.constant 0 : index
    %c0_4 = arith.constant 0 : index
    %13 = vector.load %arg2[%c0_3, %c0_4] : memref<216x8xbf16, #tpu.memory_space<vmem>>, vector<216x8xbf16>
    %cst = arith.constant dense<0.000000e+00> : vector<64x8xf32>
    %14 = tpu.matmul %12, %13, %cst {dimension_numbers = #tpu.dot_dimension_numbers<[1], [0], [0], [1], [0, 0, 1, 1], [], []>} : vector<64x216xbf16>, vector<216x8xbf16>, vector<64x8xf32> -> vector<64x8xf32>
    %c0_5 = arith.constant 0 : index
    %c0_6 = arith.constant 0 : index
    %15 = vector.load %arg3[%c0_5, %c0_6] : memref<1x8xf32, #tpu.memory_space<vmem>>, vector<1x8xf32>
    %16 = vector.broadcast %15 : vector<1x8xf32> to vector<64x8xf32>
    %17 = arith.addf %14, %16 : vector<64x8xf32>
    %cst_7 = arith.constant 0.000000e+00 : f32
    %18 = vector.broadcast %cst_7 : f32 to vector<64x8xf32>
    %19 = arith.maximumf %17, %18 : vector<64x8xf32>
    %20 = arith.truncf %19 : vector<64x8xf32> to vector<64x8xbf16>
    %21 = vector.shape_cast %20 : vector<64x8xbf16> to vector<8x8x8xbf16>
    %cst_8 = arith.constant 0.000000e+00 : bf16
    %22 = vector.broadcast %cst_8 : bf16 to vector<1x10x10x32xbf16>
    %c0_9 = arith.constant 0 : index
    %c0_10 = arith.constant 0 : index
    %c0_11 = arith.constant 0 : index
    %c0_12 = arith.constant 0 : index
    %23 = vector.load %arg4[%c0_9, %c0_10, %c0_11, %c0_12] : memref<1x10x10x32xbf16, #tpu.memory_space<vmem>>, vector<1x10x10x32xbf16>
    tpu.vector_store %arg4[%c0_9, %c0_10, %c0_11, %c0_12], %22 {strides = array<i32>} : memref<1x10x10x32xbf16, #tpu.memory_space<vmem>>, vector<1x10x10x32xbf16>,
    %24 = tpu.concatenate %6, %21 in 2 : vector<8x8x24xbf16>, vector<8x8x8xbf16> -> vector<8x8x32xbf16>
    %c0_13 = arith.constant 0 : index
    %c1 = arith.constant 1 : index
    %c1_14 = arith.constant 1 : index
    %c0_15 = arith.constant 0 : index
    %25 = vector.load %arg4[%c0_13, %c1, %c1_14, %c0_15] : memref<1x10x10x32xbf16, #tpu.memory_space<vmem>>, vector<1x8x8x32xbf16>
    %26 = vector.shape_cast %25 : vector<1x8x8x32xbf16> to vector<8x8x32xbf16>
    %27 = vector.shape_cast %24 : vector<8x8x32xbf16> to vector<1x8x8x32xbf16>
    tpu.vector_store %arg4[%c0_13, %c1, %c1_14, %c0_15], %27 {strides = array<i32>} : memref<1x10x10x32xbf16, #tpu.memory_space<vmem>>, vector<1x8x8x32xbf16>,
    return
  }
  func.func @transform_0(%arg0: i32) -> (i32, i32, i32, i32) {
    %c0_i32 = arith.constant 0 : i32
    %c0_i32_0 = arith.constant 0 : i32
    %c0_i32_1 = arith.constant 0 : i32
    %c0_i32_2 = arith.constant 0 : i32
    return %arg0, %c0_i32, %c0_i32_0, %c0_i32_1 : i32, i32, i32, i32
  }
  func.func @transform_1(%arg0: i32) -> (i32, i32) {
    %c0_i32 = arith.constant 0 : i32
    %c0_i32_0 = arith.constant 0 : i32
    %c0_i32_1 = arith.constant 0 : i32
    return %c0_i32, %c0_i32_0 : i32, i32
  }
  func.func @transform_2(%arg0: i32) -> (i32, i32) {
    %c0_i32 = arith.constant 0 : i32
    %c0_i32_0 = arith.constant 0 : i32
    %c0_i32_1 = arith.constant 0 : i32
    return %c0_i32, %c0_i32_0 : i32, i32
  }
  func.func @transform_3(%arg0: i32) -> (i32, i32, i32, i32) {
    %c0_i32 = arith.constant 0 : i32
    %c0_i32_0 = arith.constant 0 : i32
    %c0_i32_1 = arith.constant 0 : i32
    %c0_i32_2 = arith.constant 0 : i32
    return %arg0, %c0_i32, %c0_i32_0, %c0_i32_1 : i32, i32, i32, i32
  }
}

module attributes {stable_mosaic.version = 11 : i64} {
  func.func @_dense_conv_kernel(%arg0: i32, %arg1: memref<1x10x10x32xbf16, #tpu.memory_space<vmem>>, %arg2: memref<288x8xbf16, #tpu.memory_space<vmem>>, %arg3: memref<1x8xf32, #tpu.memory_space<vmem>>, %arg4: memref<1x10x10x40xbf16, #tpu.memory_space<vmem>>) attributes {dimension_semantics = [#tpu.dimension_semantics<parallel>], iteration_bounds = array<i64: 2>, scalar_prefetch = 0 : i64, scratch_operands = 0 : i64, tpu.core_type = #tpu.core_type<tc>, window_params = [{transform_indices = @transform_0, window_bounds = array<i64: 1, 10, 10, 32>}, {pipeline_mode = #tpu.pipeline_mode<synchronous>, transform_indices = @transform_1, window_bounds = array<i64: 288, 8>}, {pipeline_mode = #tpu.pipeline_mode<synchronous>, transform_indices = @transform_2, window_bounds = array<i64: 1, 8>}, {transform_indices = @transform_3, window_bounds = array<i64: 1, 10, 10, 40>}]} {
    %c0 = arith.constant 0 : index
    %c0_0 = arith.constant 0 : index
    %c0_1 = arith.constant 0 : index
    %c0_2 = arith.constant 0 : index
    %0 = vector.load %arg1[%c0, %c0_0, %c0_1, %c0_2] : memref<1x10x10x32xbf16, #tpu.memory_space<vmem>>, vector<1x10x10x32xbf16>
    %1 = vector.shape_cast %0 : vector<1x10x10x32xbf16> to vector<10x10x32xbf16>
    %2 = vector.extract_strided_slice %1 {offsets = [0, 0, 0], sizes = [8, 8, 32], strides = [1, 1, 1]} : vector<10x10x32xbf16> to vector<8x8x32xbf16>
    %3 = vector.extract_strided_slice %1 {offsets = [0, 1, 0], sizes = [8, 8, 32], strides = [1, 1, 1]} : vector<10x10x32xbf16> to vector<8x8x32xbf16>
    %4 = vector.extract_strided_slice %1 {offsets = [0, 2, 0], sizes = [8, 8, 32], strides = [1, 1, 1]} : vector<10x10x32xbf16> to vector<8x8x32xbf16>
    %5 = vector.extract_strided_slice %1 {offsets = [1, 0, 0], sizes = [8, 8, 32], strides = [1, 1, 1]} : vector<10x10x32xbf16> to vector<8x8x32xbf16>
    %6 = vector.extract_strided_slice %1 {offsets = [1, 1, 0], sizes = [8, 8, 32], strides = [1, 1, 1]} : vector<10x10x32xbf16> to vector<8x8x32xbf16>
    %7 = vector.extract_strided_slice %1 {offsets = [1, 2, 0], sizes = [8, 8, 32], strides = [1, 1, 1]} : vector<10x10x32xbf16> to vector<8x8x32xbf16>
    %8 = vector.extract_strided_slice %1 {offsets = [2, 0, 0], sizes = [8, 8, 32], strides = [1, 1, 1]} : vector<10x10x32xbf16> to vector<8x8x32xbf16>
    %9 = vector.extract_strided_slice %1 {offsets = [2, 1, 0], sizes = [8, 8, 32], strides = [1, 1, 1]} : vector<10x10x32xbf16> to vector<8x8x32xbf16>
    %10 = vector.extract_strided_slice %1 {offsets = [2, 2, 0], sizes = [8, 8, 32], strides = [1, 1, 1]} : vector<10x10x32xbf16> to vector<8x8x32xbf16>
    %11 = tpu.concatenate %2, %3, %4, %5, %6, %7, %8, %9, %10 in 2 : vector<8x8x32xbf16>, vector<8x8x32xbf16>, vector<8x8x32xbf16>, vector<8x8x32xbf16>, vector<8x8x32xbf16>, vector<8x8x32xbf16>, vector<8x8x32xbf16>, vector<8x8x32xbf16>, vector<8x8x32xbf16> -> vector<8x8x288xbf16>
    %12 = vector.shape_cast %11 : vector<8x8x288xbf16> to vector<64x288xbf16>
    %c0_3 = arith.constant 0 : index
    %c0_4 = arith.constant 0 : index
    %13 = vector.load %arg2[%c0_3, %c0_4] : memref<288x8xbf16, #tpu.memory_space<vmem>>, vector<288x8xbf16>
    %cst = arith.constant dense<0.000000e+00> : vector<64x8xf32>
    %14 = tpu.matmul %12, %13, %cst {dimension_numbers = #tpu.dot_dimension_numbers<[1], [0], [0], [1], [0, 0, 1, 1], [], []>} : vector<64x288xbf16>, vector<288x8xbf16>, vector<64x8xf32> -> vector<64x8xf32>
    %c0_5 = arith.constant 0 : index
    %c0_6 = arith.constant 0 : index
    %15 = vector.load %arg3[%c0_5, %c0_6] : memref<1x8xf32, #tpu.memory_space<vmem>>, vector<1x8xf32>
    %16 = vector.broadcast %15 : vector<1x8xf32> to vector<64x8xf32>
    %17 = arith.addf %14, %16 : vector<64x8xf32>
    %cst_7 = arith.constant 0.000000e+00 : f32
    %18 = vector.broadcast %cst_7 : f32 to vector<64x8xf32>
    %19 = arith.maximumf %17, %18 : vector<64x8xf32>
    %20 = arith.truncf %19 : vector<64x8xf32> to vector<64x8xbf16>
    %21 = vector.shape_cast %20 : vector<64x8xbf16> to vector<8x8x8xbf16>
    %cst_8 = arith.constant 0.000000e+00 : bf16
    %22 = vector.broadcast %cst_8 : bf16 to vector<1x10x10x40xbf16>
    %c0_9 = arith.constant 0 : index
    %c0_10 = arith.constant 0 : index
    %c0_11 = arith.constant 0 : index
    %c0_12 = arith.constant 0 : index
    %23 = vector.load %arg4[%c0_9, %c0_10, %c0_11, %c0_12] : memref<1x10x10x40xbf16, #tpu.memory_space<vmem>>, vector<1x10x10x40xbf16>
    tpu.vector_store %arg4[%c0_9, %c0_10, %c0_11, %c0_12], %22 {strides = array<i32>} : memref<1x10x10x40xbf16, #tpu.memory_space<vmem>>, vector<1x10x10x40xbf16>,
    %24 = tpu.concatenate %6, %21 in 2 : vector<8x8x32xbf16>, vector<8x8x8xbf16> -> vector<8x8x40xbf16>
    %c0_13 = arith.constant 0 : index
    %c1 = arith.constant 1 : index
    %c1_14 = arith.constant 1 : index
    %c0_15 = arith.constant 0 : index
    %25 = vector.load %arg4[%c0_13, %c1, %c1_14, %c0_15] : memref<1x10x10x40xbf16, #tpu.memory_space<vmem>>, vector<1x8x8x40xbf16>
    %26 = vector.shape_cast %25 : vector<1x8x8x40xbf16> to vector<8x8x40xbf16>
    %27 = vector.shape_cast %24 : vector<8x8x40xbf16> to vector<1x8x8x40xbf16>
    tpu.vector_store %arg4[%c0_13, %c1, %c1_14, %c0_15], %27 {strides = array<i32>} : memref<1x10x10x40xbf16, #tpu.memory_space<vmem>>, vector<1x8x8x40xbf16>,
    return
  }
  func.func @transform_0(%arg0: i32) -> (i32, i32, i32, i32) {
    %c0_i32 = arith.constant 0 : i32
    %c0_i32_0 = arith.constant 0 : i32
    %c0_i32_1 = arith.constant 0 : i32
    %c0_i32_2 = arith.constant 0 : i32
    return %arg0, %c0_i32, %c0_i32_0, %c0_i32_1 : i32, i32, i32, i32
  }
  func.func @transform_1(%arg0: i32) -> (i32, i32) {
    %c0_i32 = arith.constant 0 : i32
    %c0_i32_0 = arith.constant 0 : i32
    %c0_i32_1 = arith.constant 0 : i32
    return %c0_i32, %c0_i32_0 : i32, i32
  }
  func.func @transform_2(%arg0: i32) -> (i32, i32) {
    %c0_i32 = arith.constant 0 : i32
    %c0_i32_0 = arith.constant 0 : i32
    %c0_i32_1 = arith.constant 0 : i32
    return %c0_i32, %c0_i32_0 : i32, i32
  }
  func.func @transform_3(%arg0: i32) -> (i32, i32, i32, i32) {
    %c0_i32 = arith.constant 0 : i32
    %c0_i32_0 = arith.constant 0 : i32
    %c0_i32_1 = arith.constant 0 : i32
    %c0_i32_2 = arith.constant 0 : i32
    return %arg0, %c0_i32, %c0_i32_0, %c0_i32_1 : i32, i32, i32, i32
  }
}

module attributes {stable_mosaic.version = 11 : i64} {
  func.func @_matmul_bias_ln_kernel(%arg0: memref<128x40xbf16, #tpu.memory_space<vmem>>, %arg1: memref<40x32xbf16, #tpu.memory_space<vmem>>, %arg2: memref<1x32xf32, #tpu.memory_space<vmem>>, %arg3: memref<1x32xf32, #tpu.memory_space<vmem>>, %arg4: memref<1x32xf32, #tpu.memory_space<vmem>>, %arg5: memref<128x32xf32, #tpu.memory_space<vmem>>) attributes {dimension_semantics = [], scalar_prefetch = 0 : i64, scratch_operands = 0 : i64, tpu.core_type = #tpu.core_type<tc>} {
    %c0 = arith.constant 0 : index
    %c0_0 = arith.constant 0 : index
    %0 = vector.load %arg0[%c0, %c0_0] : memref<128x40xbf16, #tpu.memory_space<vmem>>, vector<128x40xbf16>
    %c0_1 = arith.constant 0 : index
    %c0_2 = arith.constant 0 : index
    %1 = vector.load %arg1[%c0_1, %c0_2] : memref<40x32xbf16, #tpu.memory_space<vmem>>, vector<40x32xbf16>
    %cst = arith.constant dense<0.000000e+00> : vector<128x32xf32>
    %2 = tpu.matmul %0, %1, %cst {dimension_numbers = #tpu.dot_dimension_numbers<[1], [0], [0], [1], [0, 0, 1, 1], [], []>} : vector<128x40xbf16>, vector<40x32xbf16>, vector<128x32xf32> -> vector<128x32xf32>
    %c0_3 = arith.constant 0 : index
    %c0_4 = arith.constant 0 : index
    %3 = vector.load %arg2[%c0_3, %c0_4] : memref<1x32xf32, #tpu.memory_space<vmem>>, vector<1x32xf32>
    %4 = vector.broadcast %3 : vector<1x32xf32> to vector<128x32xf32>
    %5 = arith.addf %2, %4 : vector<128x32xf32>
    %c0_5 = arith.constant 0 : index
    %c0_6 = arith.constant 0 : index
    %6 = vector.load %arg3[%c0_5, %c0_6] : memref<1x32xf32, #tpu.memory_space<vmem>>, vector<1x32xf32>
    %c0_7 = arith.constant 0 : index
    %c0_8 = arith.constant 0 : index
    %7 = vector.load %arg4[%c0_7, %c0_8] : memref<1x32xf32, #tpu.memory_space<vmem>>, vector<1x32xf32>
    %cst_9 = arith.constant dense<0.000000e+00> : vector<128xf32>
    %8 = vector.multi_reduction <add>, %5, %cst_9 [1] : vector<128x32xf32> to vector<128xf32>
    %9 = vector.shape_cast %8 : vector<128xf32> to vector<128x1xf32>
    %cst_10 = arith.constant 3.200000e+01 : f32
    %10 = vector.broadcast %cst_10 : f32 to vector<128x1xf32>
    %11 = arith.divf %9, %10 : vector<128x1xf32>
    %12 = vector.broadcast %11 : vector<128x1xf32> to vector<128x32xf32>
    %13 = arith.subf %5, %12 : vector<128x32xf32>
    %14 = arith.mulf %13, %13 : vector<128x32xf32>
    %cst_11 = arith.constant dense<0.000000e+00> : vector<128xf32>
    %15 = vector.multi_reduction <add>, %14, %cst_11 [1] : vector<128x32xf32> to vector<128xf32>
    %16 = vector.shape_cast %15 : vector<128xf32> to vector<128x1xf32>
    %cst_12 = arith.constant 3.200000e+01 : f32
    %17 = vector.broadcast %cst_12 : f32 to vector<128x1xf32>
    %18 = arith.divf %16, %17 : vector<128x1xf32>
    %cst_13 = arith.constant 9.99999974E-6 : f32
    %19 = vector.broadcast %cst_13 : f32 to vector<128x1xf32>
    %20 = arith.addf %18, %19 : vector<128x1xf32>
    %21 = math.rsqrt %20 : vector<128x1xf32>
    %22 = vector.broadcast %21 : vector<128x1xf32> to vector<128x32xf32>
    %23 = arith.mulf %13, %22 : vector<128x32xf32>
    %24 = vector.broadcast %6 : vector<1x32xf32> to vector<128x32xf32>
    %25 = arith.mulf %23, %24 : vector<128x32xf32>
    %26 = vector.broadcast %7 : vector<1x32xf32> to vector<128x32xf32>
    %27 = arith.addf %25, %26 : vector<128x32xf32>
    %c0_14 = arith.constant 0 : index
    %c0_15 = arith.constant 0 : index
    %28 = vector.load %arg5[%c0_14, %c0_15] : memref<128x32xf32, #tpu.memory_space<vmem>>, vector<128x32xf32>
    tpu.vector_store %arg5[%c0_14, %c0_15], %27 {strides = array<i32>} : memref<128x32xf32, #tpu.memory_space<vmem>>, vector<128x32xf32>,
    return
  }
}

module attributes {stable_mosaic.version = 11 : i64} {
  func.func @_self_attn_block_kernel(%arg0: i32, %arg1: memref<1x8x32xf32, #tpu.memory_space<vmem>>, %arg2: memref<4x32x8xbf16, #tpu.memory_space<vmem>>, %arg3: memref<4x1x8xf32, #tpu.memory_space<vmem>>, %arg4: memref<4x32x8xbf16, #tpu.memory_space<vmem>>, %arg5: memref<4x1x8xf32, #tpu.memory_space<vmem>>, %arg6: memref<4x32x8xbf16, #tpu.memory_space<vmem>>, %arg7: memref<4x1x8xf32, #tpu.memory_space<vmem>>, %arg8: memref<4x8x32xbf16, #tpu.memory_space<vmem>>, %arg9: memref<1x32xf32, #tpu.memory_space<vmem>>, %arg10: memref<1x32xf32, #tpu.memory_space<vmem>>, %arg11: memref<1x32xf32, #tpu.memory_space<vmem>>, %arg12: memref<1x8x32xf32, #tpu.memory_space<vmem>>) attributes {dimension_semantics = [#tpu.dimension_semantics<parallel>], iteration_bounds = array<i64: 2>, scalar_prefetch = 0 : i64, scratch_operands = 0 : i64, tpu.core_type = #tpu.core_type<tc>, window_params = [{transform_indices = @transform_0, window_bounds = array<i64: 1, 8, 32>}, {pipeline_mode = #tpu.pipeline_mode<synchronous>, transform_indices = @transform_1, window_bounds = array<i64: 4, 32, 8>}, {pipeline_mode = #tpu.pipeline_mode<synchronous>, transform_indices = @transform_2, window_bounds = array<i64: 4, 1, 8>}, {pipeline_mode = #tpu.pipeline_mode<synchronous>, transform_indices = @transform_3, window_bounds = array<i64: 4, 32, 8>}, {pipeline_mode = #tpu.pipeline_mode<synchronous>, transform_indices = @transform_4, window_bounds = array<i64: 4, 1, 8>}, {pipeline_mode = #tpu.pipeline_mode<synchronous>, transform_indices = @transform_5, window_bounds = array<i64: 4, 32, 8>}, {pipeline_mode = #tpu.pipeline_mode<synchronous>, transform_indices = @transform_6, window_bounds = array<i64: 4, 1, 8>}, {pipeline_mode = #tpu.pipeline_mode<synchronous>, transform_indices = @transform_7, window_bounds = array<i64: 4, 8, 32>}, {pipeline_mode = #tpu.pipeline_mode<synchronous>, transform_indices = @transform_8, window_bounds = array<i64: 1, 32>}, {pipeline_mode = #tpu.pipeline_mode<synchronous>, transform_indices = @transform_9, window_bounds = array<i64: 1, 32>}, {pipeline_mode = #tpu.pipeline_mode<synchronous>, transform_indices = @transform_10, window_bounds = array<i64: 1, 32>}, {transform_indices = @transform_11, window_bounds = array<i64: 1, 8, 32>}]} {
    %c0 = arith.constant 0 : index
    %c0_0 = arith.constant 0 : index
    %c0_1 = arith.constant 0 : index
    %0 = vector.load %arg1[%c0, %c0_0, %c0_1] : memref<1x8x32xf32, #tpu.memory_space<vmem>>, vector<1x8x32xf32>
    %1 = vector.shape_cast %0 : vector<1x8x32xf32> to vector<8x32xf32>
    %2 = arith.truncf %1 : vector<8x32xf32> to vector<8x32xbf16>
    %3 = tpu.iota {dimensions = array<i32: 0>} : vector<8x8xi32>
    %4 = tpu.iota {dimensions = array<i32: 1>} : vector<8x8xi32>
    %5 = arith.cmpi sgt, %4, %3 : vector<8x8xi32>
    %cst = arith.constant -1.000000e+09 : f32
    %cst_2 = arith.constant 0.000000e+00 : f32
    %6 = vector.broadcast %cst : f32 to vector<8x8xf32>
    %7 = vector.broadcast %cst_2 : f32 to vector<8x8xf32>
    %8 = arith.select %5, %6, %7 : vector<8x8xi1>, vector<8x8xf32>
    %c0_3 = arith.constant 0 : index
    %c0_4 = arith.constant 0 : index
    %c0_5 = arith.constant 0 : index
    %9 = vector.load %arg2[%c0_3, %c0_4, %c0_5] : memref<4x32x8xbf16, #tpu.memory_space<vmem>>, vector<1x32x8xbf16>
    %10 = vector.shape_cast %9 : vector<1x32x8xbf16> to vector<32x8xbf16>
    %cst_6 = arith.constant dense<0.000000e+00> : vector<8x8xf32>
    %11 = tpu.matmul %2, %10, %cst_6 {dimension_numbers = #tpu.dot_dimension_numbers<[1], [0], [0], [1], [0, 0, 1, 1], [], []>} : vector<8x32xbf16>, vector<32x8xbf16>, vector<8x8xf32> -> vector<8x8xf32>
    %c0_7 = arith.constant 0 : index
    %c0_8 = arith.constant 0 : index
    %c0_9 = arith.constant 0 : index
    %12 = vector.load %arg3[%c0_7, %c0_8, %c0_9] : memref<4x1x8xf32, #tpu.memory_space<vmem>>, vector<1x1x8xf32>
    %13 = vector.shape_cast %12 : vector<1x1x8xf32> to vector<1x8xf32>
    %14 = vector.broadcast %13 : vector<1x8xf32> to vector<8x8xf32>
    %15 = arith.addf %11, %14 : vector<8x8xf32>
    %c0_10 = arith.constant 0 : index
    %c0_11 = arith.constant 0 : index
    %c0_12 = arith.constant 0 : index
    %16 = vector.load %arg4[%c0_10, %c0_11, %c0_12] : memref<4x32x8xbf16, #tpu.memory_space<vmem>>, vector<1x32x8xbf16>
    %17 = vector.shape_cast %16 : vector<1x32x8xbf16> to vector<32x8xbf16>
    %cst_13 = arith.constant dense<0.000000e+00> : vector<8x8xf32>
    %18 = tpu.matmul %2, %17, %cst_13 {dimension_numbers = #tpu.dot_dimension_numbers<[1], [0], [0], [1], [0, 0, 1, 1], [], []>} : vector<8x32xbf16>, vector<32x8xbf16>, vector<8x8xf32> -> vector<8x8xf32>
    %c0_14 = arith.constant 0 : index
    %c0_15 = arith.constant 0 : index
    %c0_16 = arith.constant 0 : index
    %19 = vector.load %arg5[%c0_14, %c0_15, %c0_16] : memref<4x1x8xf32, #tpu.memory_space<vmem>>, vector<1x1x8xf32>
    %20 = vector.shape_cast %19 : vector<1x1x8xf32> to vector<1x8xf32>
    %21 = vector.broadcast %20 : vector<1x8xf32> to vector<8x8xf32>
    %22 = arith.addf %18, %21 : vector<8x8xf32>
    %c0_17 = arith.constant 0 : index
    %c0_18 = arith.constant 0 : index
    %c0_19 = arith.constant 0 : index
    %23 = vector.load %arg6[%c0_17, %c0_18, %c0_19] : memref<4x32x8xbf16, #tpu.memory_space<vmem>>, vector<1x32x8xbf16>
    %24 = vector.shape_cast %23 : vector<1x32x8xbf16> to vector<32x8xbf16>
    %cst_20 = arith.constant dense<0.000000e+00> : vector<8x8xf32>
    %25 = tpu.matmul %2, %24, %cst_20 {dimension_numbers = #tpu.dot_dimension_numbers<[1], [0], [0], [1], [0, 0, 1, 1], [], []>} : vector<8x32xbf16>, vector<32x8xbf16>, vector<8x8xf32> -> vector<8x8xf32>
    %c0_21 = arith.constant 0 : index
    %c0_22 = arith.constant 0 : index
    %c0_23 = arith.constant 0 : index
    %26 = vector.load %arg7[%c0_21, %c0_22, %c0_23] : memref<4x1x8xf32, #tpu.memory_space<vmem>>, vector<1x1x8xf32>
    %27 = vector.shape_cast %26 : vector<1x1x8xf32> to vector<1x8xf32>
    %28 = vector.broadcast %27 : vector<1x8xf32> to vector<8x8xf32>
    %29 = arith.addf %25, %28 : vector<8x8xf32>
    %30 = arith.truncf %15 : vector<8x8xf32> to vector<8x8xbf16>
    %31 = arith.truncf %22 : vector<8x8xf32> to vector<8x8xbf16>
    %cst_24 = arith.constant dense<0.000000e+00> : vector<8x8xf32>
    %32 = tpu.matmul %30, %31, %cst_24 {dimension_numbers = #tpu.dot_dimension_numbers<[1], [1], [0], [0], [0, 0, 1, 0], [], []>} : vector<8x8xbf16>, vector<8x8xbf16>, vector<8x8xf32> -> vector<8x8xf32>
    %cst_25 = arith.constant 0.353553385 : f32
    %33 = vector.broadcast %cst_25 : f32 to vector<8x8xf32>
    %34 = arith.mulf %32, %33 : vector<8x8xf32>
    %35 = arith.addf %34, %8 : vector<8x8xf32>
    %cst_26 = arith.constant dense<0xFF800000> : vector<8xf32>
    %36 = vector.multi_reduction <maximumf>, %35, %cst_26 [1] : vector<8x8xf32> to vector<8xf32>
    %37 = vector.shape_cast %36 : vector<8xf32> to vector<8x1xf32>
    %38 = vector.broadcast %37 : vector<8x1xf32> to vector<8x8xf32>
    %39 = arith.subf %35, %38 : vector<8x8xf32>
    %40 = math.exp %39 : vector<8x8xf32>
    %cst_27 = arith.constant dense<0.000000e+00> : vector<8xf32>
    %41 = vector.multi_reduction <add>, %40, %cst_27 [1] : vector<8x8xf32> to vector<8xf32>
    %42 = vector.shape_cast %41 : vector<8xf32> to vector<8x1xf32>
    %43 = tpu.reciprocal %42 {approx = true} : vector<8x1xf32> -> vector<8x1xf32>
    %44 = vector.broadcast %43 : vector<8x1xf32> to vector<8x8xf32>
    %45 = arith.mulf %40, %44 : vector<8x8xf32>
    %46 = arith.truncf %45 : vector<8x8xf32> to vector<8x8xbf16>
    %47 = arith.truncf %29 : vector<8x8xf32> to vector<8x8xbf16>
    %cst_28 = arith.constant dense<0.000000e+00> : vector<8x8xf32>
    %48 = tpu.matmul %46, %47, %cst_28 {dimension_numbers = #tpu.dot_dimension_numbers<[1], [0], [0], [1], [0, 0, 1, 1], [], []>} : vector<8x8xbf16>, vector<8x8xbf16>, vector<8x8xf32> -> vector<8x8xf32>
    %49 = arith.truncf %48 : vector<8x8xf32> to vector<8x8xbf16>
    %c0_29 = arith.constant 0 : index
    %c0_30 = arith.constant 0 : index
    %c0_31 = arith.constant 0 : index
    %50 = vector.load %arg8[%c0_29, %c0_30, %c0_31] : memref<4x8x32xbf16, #tpu.memory_space<vmem>>, vector<1x8x32xbf16>
    %51 = vector.shape_cast %50 : vector<1x8x32xbf16> to vector<8x32xbf16>
    %cst_32 = arith.constant dense<0.000000e+00> : vector<8x32xf32>
    %52 = tpu.matmul %49, %51, %cst_32 {dimension_numbers = #tpu.dot_dimension_numbers<[1], [0], [0], [1], [0, 0, 1, 1], [], []>} : vector<8x8xbf16>, vector<8x32xbf16>, vector<8x32xf32> -> vector<8x32xf32>
    %c1 = arith.constant 1 : index
    %c0_33 = arith.constant 0 : index
    %c0_34 = arith.constant 0 : index
    %53 = vector.load %arg2[%c1, %c0_33, %c0_34] : memref<4x32x8xbf16, #tpu.memory_space<vmem>>, vector<1x32x8xbf16>
    %54 = vector.shape_cast %53 : vector<1x32x8xbf16> to vector<32x8xbf16>
    %cst_35 = arith.constant dense<0.000000e+00> : vector<8x8xf32>
    %55 = tpu.matmul %2, %54, %cst_35 {dimension_numbers = #tpu.dot_dimension_numbers<[1], [0], [0], [1], [0, 0, 1, 1], [], []>} : vector<8x32xbf16>, vector<32x8xbf16>, vector<8x8xf32> -> vector<8x8xf32>
    %c1_36 = arith.constant 1 : index
    %c0_37 = arith.constant 0 : index
    %c0_38 = arith.constant 0 : index
    %56 = vector.load %arg3[%c1_36, %c0_37, %c0_38] : memref<4x1x8xf32, #tpu.memory_space<vmem>>, vector<1x1x8xf32>
    %57 = vector.shape_cast %56 : vector<1x1x8xf32> to vector<1x8xf32>
    %58 = vector.broadcast %57 : vector<1x8xf32> to vector<8x8xf32>
    %59 = arith.addf %55, %58 : vector<8x8xf32>
    %c1_39 = arith.constant 1 : index
    %c0_40 = arith.constant 0 : index
    %c0_41 = arith.constant 0 : index
    %60 = vector.load %arg4[%c1_39, %c0_40, %c0_41] : memref<4x32x8xbf16, #tpu.memory_space<vmem>>, vector<1x32x8xbf16>
    %61 = vector.shape_cast %60 : vector<1x32x8xbf16> to vector<32x8xbf16>
    %cst_42 = arith.constant dense<0.000000e+00> : vector<8x8xf32>
    %62 = tpu.matmul %2, %61, %cst_42 {dimension_numbers = #tpu.dot_dimension_numbers<[1], [0], [0], [1], [0, 0, 1, 1], [], []>} : vector<8x32xbf16>, vector<32x8xbf16>, vector<8x8xf32> -> vector<8x8xf32>
    %c1_43 = arith.constant 1 : index
    %c0_44 = arith.constant 0 : index
    %c0_45 = arith.constant 0 : index
    %63 = vector.load %arg5[%c1_43, %c0_44, %c0_45] : memref<4x1x8xf32, #tpu.memory_space<vmem>>, vector<1x1x8xf32>
    %64 = vector.shape_cast %63 : vector<1x1x8xf32> to vector<1x8xf32>
    %65 = vector.broadcast %64 : vector<1x8xf32> to vector<8x8xf32>
    %66 = arith.addf %62, %65 : vector<8x8xf32>
    %c1_46 = arith.constant 1 : index
    %c0_47 = arith.constant 0 : index
    %c0_48 = arith.constant 0 : index
    %67 = vector.load %arg6[%c1_46, %c0_47, %c0_48] : memref<4x32x8xbf16, #tpu.memory_space<vmem>>, vector<1x32x8xbf16>
    %68 = vector.shape_cast %67 : vector<1x32x8xbf16> to vector<32x8xbf16>
    %cst_49 = arith.constant dense<0.000000e+00> : vector<8x8xf32>
    %69 = tpu.matmul %2, %68, %cst_49 {dimension_numbers = #tpu.dot_dimension_numbers<[1], [0], [0], [1], [0, 0, 1, 1], [], []>} : vector<8x32xbf16>, vector<32x8xbf16>, vector<8x8xf32> -> vector<8x8xf32>
    %c1_50 = arith.constant 1 : index
    %c0_51 = arith.constant 0 : index
    %c0_52 = arith.constant 0 : index
    %70 = vector.load %arg7[%c1_50, %c0_51, %c0_52] : memref<4x1x8xf32, #tpu.memory_space<vmem>>, vector<1x1x8xf32>
    %71 = vector.shape_cast %70 : vector<1x1x8xf32> to vector<1x8xf32>
    %72 = vector.broadcast %71 : vector<1x8xf32> to vector<8x8xf32>
    %73 = arith.addf %69, %72 : vector<8x8xf32>
    %74 = arith.truncf %59 : vector<8x8xf32> to vector<8x8xbf16>
    %75 = arith.truncf %66 : vector<8x8xf32> to vector<8x8xbf16>
    %cst_53 = arith.constant dense<0.000000e+00> : vector<8x8xf32>
    %76 = tpu.matmul %74, %75, %cst_53 {dimension_numbers = #tpu.dot_dimension_numbers<[1], [1], [0], [0], [0, 0, 1, 0], [], []>} : vector<8x8xbf16>, vector<8x8xbf16>, vector<8x8xf32> -> vector<8x8xf32>
    %cst_54 = arith.constant 0.353553385 : f32
    %77 = vector.broadcast %cst_54 : f32 to vector<8x8xf32>
    %78 = arith.mulf %76, %77 : vector<8x8xf32>
    %79 = arith.addf %78, %8 : vector<8x8xf32>
    %cst_55 = arith.constant dense<0xFF800000> : vector<8xf32>
    %80 = vector.multi_reduction <maximumf>, %79, %cst_55 [1] : vector<8x8xf32> to vector<8xf32>
    %81 = vector.shape_cast %80 : vector<8xf32> to vector<8x1xf32>
    %82 = vector.broadcast %81 : vector<8x1xf32> to vector<8x8xf32>
    %83 = arith.subf %79, %82 : vector<8x8xf32>
    %84 = math.exp %83 : vector<8x8xf32>
    %cst_56 = arith.constant dense<0.000000e+00> : vector<8xf32>
    %85 = vector.multi_reduction <add>, %84, %cst_56 [1] : vector<8x8xf32> to vector<8xf32>
    %86 = vector.shape_cast %85 : vector<8xf32> to vector<8x1xf32>
    %87 = tpu.reciprocal %86 {approx = true} : vector<8x1xf32> -> vector<8x1xf32>
    %88 = vector.broadcast %87 : vector<8x1xf32> to vector<8x8xf32>
    %89 = arith.mulf %84, %88 : vector<8x8xf32>
    %90 = arith.truncf %89 : vector<8x8xf32> to vector<8x8xbf16>
    %91 = arith.truncf %73 : vector<8x8xf32> to vector<8x8xbf16>
    %cst_57 = arith.constant dense<0.000000e+00> : vector<8x8xf32>
    %92 = tpu.matmul %90, %91, %cst_57 {dimension_numbers = #tpu.dot_dimension_numbers<[1], [0], [0], [1], [0, 0, 1, 1], [], []>} : vector<8x8xbf16>, vector<8x8xbf16>, vector<8x8xf32> -> vector<8x8xf32>
    %93 = arith.truncf %92 : vector<8x8xf32> to vector<8x8xbf16>
    %c1_58 = arith.constant 1 : index
    %c0_59 = arith.constant 0 : index
    %c0_60 = arith.constant 0 : index
    %94 = vector.load %arg8[%c1_58, %c0_59, %c0_60] : memref<4x8x32xbf16, #tpu.memory_space<vmem>>, vector<1x8x32xbf16>
    %95 = vector.shape_cast %94 : vector<1x8x32xbf16> to vector<8x32xbf16>
    %cst_61 = arith.constant dense<0.000000e+00> : vector<8x32xf32>
    %96 = tpu.matmul %93, %95, %cst_61 {dimension_numbers = #tpu.dot_dimension_numbers<[1], [0], [0], [1], [0, 0, 1, 1], [], []>} : vector<8x8xbf16>, vector<8x32xbf16>, vector<8x32xf32> -> vector<8x32xf32>
    %97 = arith.addf %52, %96 : vector<8x32xf32>
    %c2 = arith.constant 2 : index
    %c0_62 = arith.constant 0 : index
    %c0_63 = arith.constant 0 : index
    %98 = vector.load %arg2[%c2, %c0_62, %c0_63] : memref<4x32x8xbf16, #tpu.memory_space<vmem>>, vector<1x32x8xbf16>
    %99 = vector.shape_cast %98 : vector<1x32x8xbf16> to vector<32x8xbf16>
    %cst_64 = arith.constant dense<0.000000e+00> : vector<8x8xf32>
    %100 = tpu.matmul %2, %99, %cst_64 {dimension_numbers = #tpu.dot_dimension_numbers<[1], [0], [0], [1], [0, 0, 1, 1], [], []>} : vector<8x32xbf16>, vector<32x8xbf16>, vector<8x8xf32> -> vector<8x8xf32>
    %c2_65 = arith.constant 2 : index
    %c0_66 = arith.constant 0 : index
    %c0_67 = arith.constant 0 : index
    %101 = vector.load %arg3[%c2_65, %c0_66, %c0_67] : memref<4x1x8xf32, #tpu.memory_space<vmem>>, vector<1x1x8xf32>
    %102 = vector.shape_cast %101 : vector<1x1x8xf32> to vector<1x8xf32>
    %103 = vector.broadcast %102 : vector<1x8xf32> to vector<8x8xf32>
    %104 = arith.addf %100, %103 : vector<8x8xf32>
    %c2_68 = arith.constant 2 : index
    %c0_69 = arith.constant 0 : index
    %c0_70 = arith.constant 0 : index
    %105 = vector.load %arg4[%c2_68, %c0_69, %c0_70] : memref<4x32x8xbf16, #tpu.memory_space<vmem>>, vector<1x32x8xbf16>
    %106 = vector.shape_cast %105 : vector<1x32x8xbf16> to vector<32x8xbf16>
    %cst_71 = arith.constant dense<0.000000e+00> : vector<8x8xf32>
    %107 = tpu.matmul %2, %106, %cst_71 {dimension_numbers = #tpu.dot_dimension_numbers<[1], [0], [0], [1], [0, 0, 1, 1], [], []>} : vector<8x32xbf16>, vector<32x8xbf16>, vector<8x8xf32> -> vector<8x8xf32>
    %c2_72 = arith.constant 2 : index
    %c0_73 = arith.constant 0 : index
    %c0_74 = arith.constant 0 : index
    %108 = vector.load %arg5[%c2_72, %c0_73, %c0_74] : memref<4x1x8xf32, #tpu.memory_space<vmem>>, vector<1x1x8xf32>
    %109 = vector.shape_cast %108 : vector<1x1x8xf32> to vector<1x8xf32>
    %110 = vector.broadcast %109 : vector<1x8xf32> to vector<8x8xf32>
    %111 = arith.addf %107, %110 : vector<8x8xf32>
    %c2_75 = arith.constant 2 : index
    %c0_76 = arith.constant 0 : index
    %c0_77 = arith.constant 0 : index
    %112 = vector.load %arg6[%c2_75, %c0_76, %c0_77] : memref<4x32x8xbf16, #tpu.memory_space<vmem>>, vector<1x32x8xbf16>
    %113 = vector.shape_cast %112 : vector<1x32x8xbf16> to vector<32x8xbf16>
    %cst_78 = arith.constant dense<0.000000e+00> : vector<8x8xf32>
    %114 = tpu.matmul %2, %113, %cst_78 {dimension_numbers = #tpu.dot_dimension_numbers<[1], [0], [0], [1], [0, 0, 1, 1], [], []>} : vector<8x32xbf16>, vector<32x8xbf16>, vector<8x8xf32> -> vector<8x8xf32>
    %c2_79 = arith.constant 2 : index
    %c0_80 = arith.constant 0 : index
    %c0_81 = arith.constant 0 : index
    %115 = vector.load %arg7[%c2_79, %c0_80, %c0_81] : memref<4x1x8xf32, #tpu.memory_space<vmem>>, vector<1x1x8xf32>
    %116 = vector.shape_cast %115 : vector<1x1x8xf32> to vector<1x8xf32>
    %117 = vector.broadcast %116 : vector<1x8xf32> to vector<8x8xf32>
    %118 = arith.addf %114, %117 : vector<8x8xf32>
    %119 = arith.truncf %104 : vector<8x8xf32> to vector<8x8xbf16>
    %120 = arith.truncf %111 : vector<8x8xf32> to vector<8x8xbf16>
    %cst_82 = arith.constant dense<0.000000e+00> : vector<8x8xf32>
    %121 = tpu.matmul %119, %120, %cst_82 {dimension_numbers = #tpu.dot_dimension_numbers<[1], [1], [0], [0], [0, 0, 1, 0], [], []>} : vector<8x8xbf16>, vector<8x8xbf16>, vector<8x8xf32> -> vector<8x8xf32>
    %cst_83 = arith.constant 0.353553385 : f32
    %122 = vector.broadcast %cst_83 : f32 to vector<8x8xf32>
    %123 = arith.mulf %121, %122 : vector<8x8xf32>
    %124 = arith.addf %123, %8 : vector<8x8xf32>
    %cst_84 = arith.constant dense<0xFF800000> : vector<8xf32>
    %125 = vector.multi_reduction <maximumf>, %124, %cst_84 [1] : vector<8x8xf32> to vector<8xf32>
    %126 = vector.shape_cast %125 : vector<8xf32> to vector<8x1xf32>
    %127 = vector.broadcast %126 : vector<8x1xf32> to vector<8x8xf32>
    %128 = arith.subf %124, %127 : vector<8x8xf32>
    %129 = math.exp %128 : vector<8x8xf32>
    %cst_85 = arith.constant dense<0.000000e+00> : vector<8xf32>
    %130 = vector.multi_reduction <add>, %129, %cst_85 [1] : vector<8x8xf32> to vector<8xf32>
    %131 = vector.shape_cast %130 : vector<8xf32> to vector<8x1xf32>
    %132 = tpu.reciprocal %131 {approx = true} : vector<8x1xf32> -> vector<8x1xf32>
    %133 = vector.broadcast %132 : vector<8x1xf32> to vector<8x8xf32>
    %134 = arith.mulf %129, %133 : vector<8x8xf32>
    %135 = arith.truncf %134 : vector<8x8xf32> to vector<8x8xbf16>
    %136 = arith.truncf %118 : vector<8x8xf32> to vector<8x8xbf16>
    %cst_86 = arith.constant dense<0.000000e+00> : vector<8x8xf32>
    %137 = tpu.matmul %135, %136, %cst_86 {dimension_numbers = #tpu.dot_dimension_numbers<[1], [0], [0], [1], [0, 0, 1, 1], [], []>} : vector<8x8xbf16>, vector<8x8xbf16>, vector<8x8xf32> -> vector<8x8xf32>
    %138 = arith.truncf %137 : vector<8x8xf32> to vector<8x8xbf16>
    %c2_87 = arith.constant 2 : index
    %c0_88 = arith.constant 0 : index
    %c0_89 = arith.constant 0 : index
    %139 = vector.load %arg8[%c2_87, %c0_88, %c0_89] : memref<4x8x32xbf16, #tpu.memory_space<vmem>>, vector<1x8x32xbf16>
    %140 = vector.shape_cast %139 : vector<1x8x32xbf16> to vector<8x32xbf16>
    %cst_90 = arith.constant dense<0.000000e+00> : vector<8x32xf32>
    %141 = tpu.matmul %138, %140, %cst_90 {dimension_numbers = #tpu.dot_dimension_numbers<[1], [0], [0], [1], [0, 0, 1, 1], [], []>} : vector<8x8xbf16>, vector<8x32xbf16>, vector<8x32xf32> -> vector<8x32xf32>
    %142 = arith.addf %97, %141 : vector<8x32xf32>
    %c3 = arith.constant 3 : index
    %c0_91 = arith.constant 0 : index
    %c0_92 = arith.constant 0 : index
    %143 = vector.load %arg2[%c3, %c0_91, %c0_92] : memref<4x32x8xbf16, #tpu.memory_space<vmem>>, vector<1x32x8xbf16>
    %144 = vector.shape_cast %143 : vector<1x32x8xbf16> to vector<32x8xbf16>
    %cst_93 = arith.constant dense<0.000000e+00> : vector<8x8xf32>
    %145 = tpu.matmul %2, %144, %cst_93 {dimension_numbers = #tpu.dot_dimension_numbers<[1], [0], [0], [1], [0, 0, 1, 1], [], []>} : vector<8x32xbf16>, vector<32x8xbf16>, vector<8x8xf32> -> vector<8x8xf32>
    %c3_94 = arith.constant 3 : index
    %c0_95 = arith.constant 0 : index
    %c0_96 = arith.constant 0 : index
    %146 = vector.load %arg3[%c3_94, %c0_95, %c0_96] : memref<4x1x8xf32, #tpu.memory_space<vmem>>, vector<1x1x8xf32>
    %147 = vector.shape_cast %146 : vector<1x1x8xf32> to vector<1x8xf32>
    %148 = vector.broadcast %147 : vector<1x8xf32> to vector<8x8xf32>
    %149 = arith.addf %145, %148 : vector<8x8xf32>
    %c3_97 = arith.constant 3 : index
    %c0_98 = arith.constant 0 : index
    %c0_99 = arith.constant 0 : index
    %150 = vector.load %arg4[%c3_97, %c0_98, %c0_99] : memref<4x32x8xbf16, #tpu.memory_space<vmem>>, vector<1x32x8xbf16>
    %151 = vector.shape_cast %150 : vector<1x32x8xbf16> to vector<32x8xbf16>
    %cst_100 = arith.constant dense<0.000000e+00> : vector<8x8xf32>
    %152 = tpu.matmul %2, %151, %cst_100 {dimension_numbers = #tpu.dot_dimension_numbers<[1], [0], [0], [1], [0, 0, 1, 1], [], []>} : vector<8x32xbf16>, vector<32x8xbf16>, vector<8x8xf32> -> vector<8x8xf32>
    %c3_101 = arith.constant 3 : index
    %c0_102 = arith.constant 0 : index
    %c0_103 = arith.constant 0 : index
    %153 = vector.load %arg5[%c3_101, %c0_102, %c0_103] : memref<4x1x8xf32, #tpu.memory_space<vmem>>, vector<1x1x8xf32>
    %154 = vector.shape_cast %153 : vector<1x1x8xf32> to vector<1x8xf32>
    %155 = vector.broadcast %154 : vector<1x8xf32> to vector<8x8xf32>
    %156 = arith.addf %152, %155 : vector<8x8xf32>
    %c3_104 = arith.constant 3 : index
    %c0_105 = arith.constant 0 : index
    %c0_106 = arith.constant 0 : index
    %157 = vector.load %arg6[%c3_104, %c0_105, %c0_106] : memref<4x32x8xbf16, #tpu.memory_space<vmem>>, vector<1x32x8xbf16>
    %158 = vector.shape_cast %157 : vector<1x32x8xbf16> to vector<32x8xbf16>
    %cst_107 = arith.constant dense<0.000000e+00> : vector<8x8xf32>
    %159 = tpu.matmul %2, %158, %cst_107 {dimension_numbers = #tpu.dot_dimension_numbers<[1], [0], [0], [1], [0, 0, 1, 1], [], []>} : vector<8x32xbf16>, vector<32x8xbf16>, vector<8x8xf32> -> vector<8x8xf32>
    %c3_108 = arith.constant 3 : index
    %c0_109 = arith.constant 0 : index
    %c0_110 = arith.constant 0 : index
    %160 = vector.load %arg7[%c3_108, %c0_109, %c0_110] : memref<4x1x8xf32, #tpu.memory_space<vmem>>, vector<1x1x8xf32>
    %161 = vector.shape_cast %160 : vector<1x1x8xf32> to vector<1x8xf32>
    %162 = vector.broadcast %161 : vector<1x8xf32> to vector<8x8xf32>
    %163 = arith.addf %159, %162 : vector<8x8xf32>
    %164 = arith.truncf %149 : vector<8x8xf32> to vector<8x8xbf16>
    %165 = arith.truncf %156 : vector<8x8xf32> to vector<8x8xbf16>
    %cst_111 = arith.constant dense<0.000000e+00> : vector<8x8xf32>
    %166 = tpu.matmul %164, %165, %cst_111 {dimension_numbers = #tpu.dot_dimension_numbers<[1], [1], [0], [0], [0, 0, 1, 0], [], []>} : vector<8x8xbf16>, vector<8x8xbf16>, vector<8x8xf32> -> vector<8x8xf32>
    %cst_112 = arith.constant 0.353553385 : f32
    %167 = vector.broadcast %cst_112 : f32 to vector<8x8xf32>
    %168 = arith.mulf %166, %167 : vector<8x8xf32>
    %169 = arith.addf %168, %8 : vector<8x8xf32>
    %cst_113 = arith.constant dense<0xFF800000> : vector<8xf32>
    %170 = vector.multi_reduction <maximumf>, %169, %cst_113 [1] : vector<8x8xf32> to vector<8xf32>
    %171 = vector.shape_cast %170 : vector<8xf32> to vector<8x1xf32>
    %172 = vector.broadcast %171 : vector<8x1xf32> to vector<8x8xf32>
    %173 = arith.subf %169, %172 : vector<8x8xf32>
    %174 = math.exp %173 : vector<8x8xf32>
    %cst_114 = arith.constant dense<0.000000e+00> : vector<8xf32>
    %175 = vector.multi_reduction <add>, %174, %cst_114 [1] : vector<8x8xf32> to vector<8xf32>
    %176 = vector.shape_cast %175 : vector<8xf32> to vector<8x1xf32>
    %177 = tpu.reciprocal %176 {approx = true} : vector<8x1xf32> -> vector<8x1xf32>
    %178 = vector.broadcast %177 : vector<8x1xf32> to vector<8x8xf32>
    %179 = arith.mulf %174, %178 : vector<8x8xf32>
    %180 = arith.truncf %179 : vector<8x8xf32> to vector<8x8xbf16>
    %181 = arith.truncf %163 : vector<8x8xf32> to vector<8x8xbf16>
    %cst_115 = arith.constant dense<0.000000e+00> : vector<8x8xf32>
    %182 = tpu.matmul %180, %181, %cst_115 {dimension_numbers = #tpu.dot_dimension_numbers<[1], [0], [0], [1], [0, 0, 1, 1], [], []>} : vector<8x8xbf16>, vector<8x8xbf16>, vector<8x8xf32> -> vector<8x8xf32>
    %183 = arith.truncf %182 : vector<8x8xf32> to vector<8x8xbf16>
    %c3_116 = arith.constant 3 : index
    %c0_117 = arith.constant 0 : index
    %c0_118 = arith.constant 0 : index
    %184 = vector.load %arg8[%c3_116, %c0_117, %c0_118] : memref<4x8x32xbf16, #tpu.memory_space<vmem>>, vector<1x8x32xbf16>
    %185 = vector.shape_cast %184 : vector<1x8x32xbf16> to vector<8x32xbf16>
    %cst_119 = arith.constant dense<0.000000e+00> : vector<8x32xf32>
    %186 = tpu.matmul %183, %185, %cst_119 {dimension_numbers = #tpu.dot_dimension_numbers<[1], [0], [0], [1], [0, 0, 1, 1], [], []>} : vector<8x8xbf16>, vector<8x32xbf16>, vector<8x32xf32> -> vector<8x32xf32>
    %187 = arith.addf %142, %186 : vector<8x32xf32>
    %c0_120 = arith.constant 0 : index
    %c0_121 = arith.constant 0 : index
    %188 = vector.load %arg9[%c0_120, %c0_121] : memref<1x32xf32, #tpu.memory_space<vmem>>, vector<1x32xf32>
    %189 = vector.broadcast %188 : vector<1x32xf32> to vector<8x32xf32>
    %190 = arith.addf %187, %189 : vector<8x32xf32>
    %191 = arith.addf %190, %1 : vector<8x32xf32>
    %c0_122 = arith.constant 0 : index
    %c0_123 = arith.constant 0 : index
    %192 = vector.load %arg10[%c0_122, %c0_123] : memref<1x32xf32, #tpu.memory_space<vmem>>, vector<1x32xf32>
    %c0_124 = arith.constant 0 : index
    %c0_125 = arith.constant 0 : index
    %193 = vector.load %arg11[%c0_124, %c0_125] : memref<1x32xf32, #tpu.memory_space<vmem>>, vector<1x32xf32>
    %cst_126 = arith.constant dense<0.000000e+00> : vector<8xf32>
    %194 = vector.multi_reduction <add>, %191, %cst_126 [1] : vector<8x32xf32> to vector<8xf32>
    %195 = vector.shape_cast %194 : vector<8xf32> to vector<8x1xf32>
    %cst_127 = arith.constant 3.200000e+01 : f32
    %196 = vector.broadcast %cst_127 : f32 to vector<8x1xf32>
    %197 = arith.divf %195, %196 : vector<8x1xf32>
    %198 = vector.broadcast %197 : vector<8x1xf32> to vector<8x32xf32>
    %199 = arith.subf %191, %198 : vector<8x32xf32>
    %200 = arith.mulf %199, %199 : vector<8x32xf32>
    %cst_128 = arith.constant dense<0.000000e+00> : vector<8xf32>
    %201 = vector.multi_reduction <add>, %200, %cst_128 [1] : vector<8x32xf32> to vector<8xf32>
    %202 = vector.shape_cast %201 : vector<8xf32> to vector<8x1xf32>
    %cst_129 = arith.constant 3.200000e+01 : f32
    %203 = vector.broadcast %cst_129 : f32 to vector<8x1xf32>
    %204 = arith.divf %202, %203 : vector<8x1xf32>
    %cst_130 = arith.constant 9.99999974E-6 : f32
    %205 = vector.broadcast %cst_130 : f32 to vector<8x1xf32>
    %206 = arith.addf %204, %205 : vector<8x1xf32>
    %207 = math.rsqrt %206 : vector<8x1xf32>
    %208 = vector.broadcast %207 : vector<8x1xf32> to vector<8x32xf32>
    %209 = arith.mulf %199, %208 : vector<8x32xf32>
    %210 = vector.broadcast %192 : vector<1x32xf32> to vector<8x32xf32>
    %211 = arith.mulf %209, %210 : vector<8x32xf32>
    %212 = vector.broadcast %193 : vector<1x32xf32> to vector<8x32xf32>
    %213 = arith.addf %211, %212 : vector<8x32xf32>
    %c0_131 = arith.constant 0 : index
    %c0_132 = arith.constant 0 : index
    %c0_133 = arith.constant 0 : index
    %214 = vector.load %arg12[%c0_131, %c0_132, %c0_133] : memref<1x8x32xf32, #tpu.memory_space<vmem>>, vector<1x8x32xf32>
    %215 = vector.shape_cast %214 : vector<1x8x32xf32> to vector<8x32xf32>
    %216 = vector.shape_cast %213 : vector<8x32xf32> to vector<1x8x32xf32>
    tpu.vector_store %arg12[%c0_131, %c0_132, %c0_133], %216 {strides = array<i32>} : memref<1x8x32xf32, #tpu.memory_space<vmem>>, vector<1x8x32xf32>,
    return
  }
  func.func @transform_0(%arg0: i32) -> (i32, i32, i32) {
    %c0_i32 = arith.constant 0 : i32
    %c0_i32_0 = arith.constant 0 : i32
    %c0_i32_1 = arith.constant 0 : i32
    return %arg0, %c0_i32, %c0_i32_0 : i32, i32, i32
  }
  func.func @transform_1(%arg0: i32) -> (i32, i32, i32) {
    %c0_i32 = arith.constant 0 : i32
    %c0_i32_0 = arith.constant 0 : i32
    %c0_i32_1 = arith.constant 0 : i32
    %c0_i32_2 = arith.constant 0 : i32
    return %c0_i32, %c0_i32_0, %c0_i32_1 : i32, i32, i32
  }
  func.func @transform_2(%arg0: i32) -> (i32, i32, i32) {
    %c0_i32 = arith.constant 0 : i32
    %c0_i32_0 = arith.constant 0 : i32
    %c0_i32_1 = arith.constant 0 : i32
    %c0_i32_2 = arith.constant 0 : i32
    return %c0_i32, %c0_i32_0, %c0_i32_1 : i32, i32, i32
  }
  func.func @transform_3(%arg0: i32) -> (i32, i32, i32) {
    %c0_i32 = arith.constant 0 : i32
    %c0_i32_0 = arith.constant 0 : i32
    %c0_i32_1 = arith.constant 0 : i32
    %c0_i32_2 = arith.constant 0 : i32
    return %c0_i32, %c0_i32_0, %c0_i32_1 : i32, i32, i32
  }
  func.func @transform_4(%arg0: i32) -> (i32, i32, i32) {
    %c0_i32 = arith.constant 0 : i32
    %c0_i32_0 = arith.constant 0 : i32
    %c0_i32_1 = arith.constant 0 : i32
    %c0_i32_2 = arith.constant 0 : i32
    return %c0_i32, %c0_i32_0, %c0_i32_1 : i32, i32, i32
  }
  func.func @transform_5(%arg0: i32) -> (i32, i32, i32) {
    %c0_i32 = arith.constant 0 : i32
    %c0_i32_0 = arith.constant 0 : i32
    %c0_i32_1 = arith.constant 0 : i32
    %c0_i32_2 = arith.constant 0 : i32
    return %c0_i32, %c0_i32_0, %c0_i32_1 : i32, i32, i32
  }
  func.func @transform_6(%arg0: i32) -> (i32, i32, i32) {
    %c0_i32 = arith.constant 0 : i32
    %c0_i32_0 = arith.constant 0 : i32
    %c0_i32_1 = arith.constant 0 : i32
    %c0_i32_2 = arith.constant 0 : i32
    return %c0_i32, %c0_i32_0, %c0_i32_1 : i32, i32, i32
  }
  func.func @transform_7(%arg0: i32) -> (i32, i32, i32) {
    %c0_i32 = arith.constant 0 : i32
    %c0_i32_0 = arith.constant 0 : i32
    %c0_i32_1 = arith.constant 0 : i32
    %c0_i32_2 = arith.constant 0 : i32
    return %c0_i32, %c0_i32_0, %c0_i32_1 : i32, i32, i32
  }
  func.func @transform_8(%arg0: i32) -> (i32, i32) {
    %c0_i32 = arith.constant 0 : i32
    %c0_i32_0 = arith.constant 0 : i32
    %c0_i32_1 = arith.constant 0 : i32
    return %c0_i32, %c0_i32_0 : i32, i32
  }
  func.func @transform_9(%arg0: i32) -> (i32, i32) {
    %c0_i32 = arith.constant 0 : i32
    %c0_i32_0 = arith.constant 0 : i32
    %c0_i32_1 = arith.constant 0 : i32
    return %c0_i32, %c0_i32_0 : i32, i32
  }
  func.func @transform_10(%arg0: i32) -> (i32, i32) {
    %c0_i32 = arith.constant 0 : i32
    %c0_i32_0 = arith.constant 0 : i32
    %c0_i32_1 = arith.constant 0 : i32
    return %c0_i32, %c0_i32_0 : i32, i32
  }
  func.func @transform_11(%arg0: i32) -> (i32, i32, i32) {
    %c0_i32 = arith.constant 0 : i32
    %c0_i32_0 = arith.constant 0 : i32
    %c0_i32_1 = arith.constant 0 : i32
    return %arg0, %c0_i32, %c0_i32_0 : i32, i32, i32
  }
}

module attributes {stable_mosaic.version = 11 : i64} {
  func.func @_cross_attn_block_kernel(%arg0: i32, %arg1: memref<1x8x32xf32, #tpu.memory_space<vmem>>, %arg2: memref<1x64x32xbf16, #tpu.memory_space<vmem>>, %arg3: memref<1x1x64xf32, #tpu.memory_space<vmem>>, %arg4: memref<4x32x8xbf16, #tpu.memory_space<vmem>>, %arg5: memref<4x1x8xf32, #tpu.memory_space<vmem>>, %arg6: memref<4x32x8xbf16, #tpu.memory_space<vmem>>, %arg7: memref<4x1x8xf32, #tpu.memory_space<vmem>>, %arg8: memref<4x32x8xbf16, #tpu.memory_space<vmem>>, %arg9: memref<4x1x8xf32, #tpu.memory_space<vmem>>, %arg10: memref<4x8x32xbf16, #tpu.memory_space<vmem>>, %arg11: memref<1x32xf32, #tpu.memory_space<vmem>>, %arg12: memref<1x32xf32, #tpu.memory_space<vmem>>, %arg13: memref<1x32xf32, #tpu.memory_space<vmem>>, %arg14: memref<1x8x32xf32, #tpu.memory_space<vmem>>) attributes {dimension_semantics = [#tpu.dimension_semantics<parallel>], iteration_bounds = array<i64: 2>, scalar_prefetch = 0 : i64, scratch_operands = 0 : i64, tpu.core_type = #tpu.core_type<tc>, window_params = [{transform_indices = @transform_0, window_bounds = array<i64: 1, 8, 32>}, {transform_indices = @transform_1, window_bounds = array<i64: 1, 64, 32>}, {transform_indices = @transform_2, window_bounds = array<i64: 1, 1, 64>}, {pipeline_mode = #tpu.pipeline_mode<synchronous>, transform_indices = @transform_3, window_bounds = array<i64: 4, 32, 8>}, {pipeline_mode = #tpu.pipeline_mode<synchronous>, transform_indices = @transform_4, window_bounds = array<i64: 4, 1, 8>}, {pipeline_mode = #tpu.pipeline_mode<synchronous>, transform_indices = @transform_5, window_bounds = array<i64: 4, 32, 8>}, {pipeline_mode = #tpu.pipeline_mode<synchronous>, transform_indices = @transform_6, window_bounds = array<i64: 4, 1, 8>}, {pipeline_mode = #tpu.pipeline_mode<synchronous>, transform_indices = @transform_7, window_bounds = array<i64: 4, 32, 8>}, {pipeline_mode = #tpu.pipeline_mode<synchronous>, transform_indices = @transform_8, window_bounds = array<i64: 4, 1, 8>}, {pipeline_mode = #tpu.pipeline_mode<synchronous>, transform_indices = @transform_9, window_bounds = array<i64: 4, 8, 32>}, {pipeline_mode = #tpu.pipeline_mode<synchronous>, transform_indices = @transform_10, window_bounds = array<i64: 1, 32>}, {pipeline_mode = #tpu.pipeline_mode<synchronous>, transform_indices = @transform_11, window_bounds = array<i64: 1, 32>}, {pipeline_mode = #tpu.pipeline_mode<synchronous>, transform_indices = @transform_12, window_bounds = array<i64: 1, 32>}, {transform_indices = @transform_13, window_bounds = array<i64: 1, 8, 32>}]} {
    %c0 = arith.constant 0 : index
    %c0_0 = arith.constant 0 : index
    %c0_1 = arith.constant 0 : index
    %0 = vector.load %arg1[%c0, %c0_0, %c0_1] : memref<1x8x32xf32, #tpu.memory_space<vmem>>, vector<1x8x32xf32>
    %1 = vector.shape_cast %0 : vector<1x8x32xf32> to vector<8x32xf32>
    %2 = arith.truncf %1 : vector<8x32xf32> to vector<8x32xbf16>
    %c0_2 = arith.constant 0 : index
    %c0_3 = arith.constant 0 : index
    %c0_4 = arith.constant 0 : index
    %3 = vector.load %arg2[%c0_2, %c0_3, %c0_4] : memref<1x64x32xbf16, #tpu.memory_space<vmem>>, vector<1x64x32xbf16>
    %4 = vector.shape_cast %3 : vector<1x64x32xbf16> to vector<64x32xbf16>
    %c0_5 = arith.constant 0 : index
    %c0_6 = arith.constant 0 : index
    %c0_7 = arith.constant 0 : index
    %5 = vector.load %arg3[%c0_5, %c0_6, %c0_7] : memref<1x1x64xf32, #tpu.memory_space<vmem>>, vector<1x1x64xf32>
    %6 = vector.shape_cast %5 : vector<1x1x64xf32> to vector<1x64xf32>
    %c0_8 = arith.constant 0 : index
    %c0_9 = arith.constant 0 : index
    %c0_10 = arith.constant 0 : index
    %7 = vector.load %arg4[%c0_8, %c0_9, %c0_10] : memref<4x32x8xbf16, #tpu.memory_space<vmem>>, vector<1x32x8xbf16>
    %8 = vector.shape_cast %7 : vector<1x32x8xbf16> to vector<32x8xbf16>
    %cst = arith.constant dense<0.000000e+00> : vector<8x8xf32>
    %9 = tpu.matmul %2, %8, %cst {dimension_numbers = #tpu.dot_dimension_numbers<[1], [0], [0], [1], [0, 0, 1, 1], [], []>} : vector<8x32xbf16>, vector<32x8xbf16>, vector<8x8xf32> -> vector<8x8xf32>
    %c0_11 = arith.constant 0 : index
    %c0_12 = arith.constant 0 : index
    %c0_13 = arith.constant 0 : index
    %10 = vector.load %arg5[%c0_11, %c0_12, %c0_13] : memref<4x1x8xf32, #tpu.memory_space<vmem>>, vector<1x1x8xf32>
    %11 = vector.shape_cast %10 : vector<1x1x8xf32> to vector<1x8xf32>
    %12 = vector.broadcast %11 : vector<1x8xf32> to vector<8x8xf32>
    %13 = arith.addf %9, %12 : vector<8x8xf32>
    %c0_14 = arith.constant 0 : index
    %c0_15 = arith.constant 0 : index
    %c0_16 = arith.constant 0 : index
    %14 = vector.load %arg6[%c0_14, %c0_15, %c0_16] : memref<4x32x8xbf16, #tpu.memory_space<vmem>>, vector<1x32x8xbf16>
    %15 = vector.shape_cast %14 : vector<1x32x8xbf16> to vector<32x8xbf16>
    %cst_17 = arith.constant dense<0.000000e+00> : vector<64x8xf32>
    %16 = tpu.matmul %4, %15, %cst_17 {dimension_numbers = #tpu.dot_dimension_numbers<[1], [0], [0], [1], [0, 0, 1, 1], [], []>} : vector<64x32xbf16>, vector<32x8xbf16>, vector<64x8xf32> -> vector<64x8xf32>
    %c0_18 = arith.constant 0 : index
    %c0_19 = arith.constant 0 : index
    %c0_20 = arith.constant 0 : index
    %17 = vector.load %arg7[%c0_18, %c0_19, %c0_20] : memref<4x1x8xf32, #tpu.memory_space<vmem>>, vector<1x1x8xf32>
    %18 = vector.shape_cast %17 : vector<1x1x8xf32> to vector<1x8xf32>
    %19 = vector.broadcast %18 : vector<1x8xf32> to vector<64x8xf32>
    %20 = arith.addf %16, %19 : vector<64x8xf32>
    %c0_21 = arith.constant 0 : index
    %c0_22 = arith.constant 0 : index
    %c0_23 = arith.constant 0 : index
    %21 = vector.load %arg8[%c0_21, %c0_22, %c0_23] : memref<4x32x8xbf16, #tpu.memory_space<vmem>>, vector<1x32x8xbf16>
    %22 = vector.shape_cast %21 : vector<1x32x8xbf16> to vector<32x8xbf16>
    %cst_24 = arith.constant dense<0.000000e+00> : vector<64x8xf32>
    %23 = tpu.matmul %4, %22, %cst_24 {dimension_numbers = #tpu.dot_dimension_numbers<[1], [0], [0], [1], [0, 0, 1, 1], [], []>} : vector<64x32xbf16>, vector<32x8xbf16>, vector<64x8xf32> -> vector<64x8xf32>
    %c0_25 = arith.constant 0 : index
    %c0_26 = arith.constant 0 : index
    %c0_27 = arith.constant 0 : index
    %24 = vector.load %arg9[%c0_25, %c0_26, %c0_27] : memref<4x1x8xf32, #tpu.memory_space<vmem>>, vector<1x1x8xf32>
    %25 = vector.shape_cast %24 : vector<1x1x8xf32> to vector<1x8xf32>
    %26 = vector.broadcast %25 : vector<1x8xf32> to vector<64x8xf32>
    %27 = arith.addf %23, %26 : vector<64x8xf32>
    %28 = arith.truncf %13 : vector<8x8xf32> to vector<8x8xbf16>
    %29 = arith.truncf %20 : vector<64x8xf32> to vector<64x8xbf16>
    %cst_28 = arith.constant dense<0.000000e+00> : vector<8x64xf32>
    %30 = tpu.matmul %28, %29, %cst_28 {dimension_numbers = #tpu.dot_dimension_numbers<[1], [1], [0], [0], [0, 0, 1, 0], [], []>} : vector<8x8xbf16>, vector<64x8xbf16>, vector<8x64xf32> -> vector<8x64xf32>
    %cst_29 = arith.constant 0.353553385 : f32
    %31 = vector.broadcast %cst_29 : f32 to vector<8x64xf32>
    %32 = arith.mulf %30, %31 : vector<8x64xf32>
    %33 = vector.broadcast %6 : vector<1x64xf32> to vector<8x64xf32>
    %34 = arith.addf %32, %33 : vector<8x64xf32>
    %cst_30 = arith.constant dense<0xFF800000> : vector<8xf32>
    %35 = vector.multi_reduction <maximumf>, %34, %cst_30 [1] : vector<8x64xf32> to vector<8xf32>
    %36 = vector.shape_cast %35 : vector<8xf32> to vector<8x1xf32>
    %37 = vector.broadcast %36 : vector<8x1xf32> to vector<8x64xf32>
    %38 = arith.subf %34, %37 : vector<8x64xf32>
    %39 = math.exp %38 : vector<8x64xf32>
    %cst_31 = arith.constant dense<0.000000e+00> : vector<8xf32>
    %40 = vector.multi_reduction <add>, %39, %cst_31 [1] : vector<8x64xf32> to vector<8xf32>
    %41 = vector.shape_cast %40 : vector<8xf32> to vector<8x1xf32>
    %42 = tpu.reciprocal %41 {approx = true} : vector<8x1xf32> -> vector<8x1xf32>
    %43 = vector.broadcast %42 : vector<8x1xf32> to vector<8x64xf32>
    %44 = arith.mulf %39, %43 : vector<8x64xf32>
    %45 = arith.truncf %44 : vector<8x64xf32> to vector<8x64xbf16>
    %46 = arith.truncf %27 : vector<64x8xf32> to vector<64x8xbf16>
    %cst_32 = arith.constant dense<0.000000e+00> : vector<8x8xf32>
    %47 = tpu.matmul %45, %46, %cst_32 {dimension_numbers = #tpu.dot_dimension_numbers<[1], [0], [0], [1], [0, 0, 1, 1], [], []>} : vector<8x64xbf16>, vector<64x8xbf16>, vector<8x8xf32> -> vector<8x8xf32>
    %48 = arith.truncf %47 : vector<8x8xf32> to vector<8x8xbf16>
    %c0_33 = arith.constant 0 : index
    %c0_34 = arith.constant 0 : index
    %c0_35 = arith.constant 0 : index
    %49 = vector.load %arg10[%c0_33, %c0_34, %c0_35] : memref<4x8x32xbf16, #tpu.memory_space<vmem>>, vector<1x8x32xbf16>
    %50 = vector.shape_cast %49 : vector<1x8x32xbf16> to vector<8x32xbf16>
    %cst_36 = arith.constant dense<0.000000e+00> : vector<8x32xf32>
    %51 = tpu.matmul %48, %50, %cst_36 {dimension_numbers = #tpu.dot_dimension_numbers<[1], [0], [0], [1], [0, 0, 1, 1], [], []>} : vector<8x8xbf16>, vector<8x32xbf16>, vector<8x32xf32> -> vector<8x32xf32>
    %c1 = arith.constant 1 : index
    %c0_37 = arith.constant 0 : index
    %c0_38 = arith.constant 0 : index
    %52 = vector.load %arg4[%c1, %c0_37, %c0_38] : memref<4x32x8xbf16, #tpu.memory_space<vmem>>, vector<1x32x8xbf16>
    %53 = vector.shape_cast %52 : vector<1x32x8xbf16> to vector<32x8xbf16>
    %cst_39 = arith.constant dense<0.000000e+00> : vector<8x8xf32>
    %54 = tpu.matmul %2, %53, %cst_39 {dimension_numbers = #tpu.dot_dimension_numbers<[1], [0], [0], [1], [0, 0, 1, 1], [], []>} : vector<8x32xbf16>, vector<32x8xbf16>, vector<8x8xf32> -> vector<8x8xf32>
    %c1_40 = arith.constant 1 : index
    %c0_41 = arith.constant 0 : index
    %c0_42 = arith.constant 0 : index
    %55 = vector.load %arg5[%c1_40, %c0_41, %c0_42] : memref<4x1x8xf32, #tpu.memory_space<vmem>>, vector<1x1x8xf32>
    %56 = vector.shape_cast %55 : vector<1x1x8xf32> to vector<1x8xf32>
    %57 = vector.broadcast %56 : vector<1x8xf32> to vector<8x8xf32>
    %58 = arith.addf %54, %57 : vector<8x8xf32>
    %c1_43 = arith.constant 1 : index
    %c0_44 = arith.constant 0 : index
    %c0_45 = arith.constant 0 : index
    %59 = vector.load %arg6[%c1_43, %c0_44, %c0_45] : memref<4x32x8xbf16, #tpu.memory_space<vmem>>, vector<1x32x8xbf16>
    %60 = vector.shape_cast %59 : vector<1x32x8xbf16> to vector<32x8xbf16>
    %cst_46 = arith.constant dense<0.000000e+00> : vector<64x8xf32>
    %61 = tpu.matmul %4, %60, %cst_46 {dimension_numbers = #tpu.dot_dimension_numbers<[1], [0], [0], [1], [0, 0, 1, 1], [], []>} : vector<64x32xbf16>, vector<32x8xbf16>, vector<64x8xf32> -> vector<64x8xf32>
    %c1_47 = arith.constant 1 : index
    %c0_48 = arith.constant 0 : index
    %c0_49 = arith.constant 0 : index
    %62 = vector.load %arg7[%c1_47, %c0_48, %c0_49] : memref<4x1x8xf32, #tpu.memory_space<vmem>>, vector<1x1x8xf32>
    %63 = vector.shape_cast %62 : vector<1x1x8xf32> to vector<1x8xf32>
    %64 = vector.broadcast %63 : vector<1x8xf32> to vector<64x8xf32>
    %65 = arith.addf %61, %64 : vector<64x8xf32>
    %c1_50 = arith.constant 1 : index
    %c0_51 = arith.constant 0 : index
    %c0_52 = arith.constant 0 : index
    %66 = vector.load %arg8[%c1_50, %c0_51, %c0_52] : memref<4x32x8xbf16, #tpu.memory_space<vmem>>, vector<1x32x8xbf16>
    %67 = vector.shape_cast %66 : vector<1x32x8xbf16> to vector<32x8xbf16>
    %cst_53 = arith.constant dense<0.000000e+00> : vector<64x8xf32>
    %68 = tpu.matmul %4, %67, %cst_53 {dimension_numbers = #tpu.dot_dimension_numbers<[1], [0], [0], [1], [0, 0, 1, 1], [], []>} : vector<64x32xbf16>, vector<32x8xbf16>, vector<64x8xf32> -> vector<64x8xf32>
    %c1_54 = arith.constant 1 : index
    %c0_55 = arith.constant 0 : index
    %c0_56 = arith.constant 0 : index
    %69 = vector.load %arg9[%c1_54, %c0_55, %c0_56] : memref<4x1x8xf32, #tpu.memory_space<vmem>>, vector<1x1x8xf32>
    %70 = vector.shape_cast %69 : vector<1x1x8xf32> to vector<1x8xf32>
    %71 = vector.broadcast %70 : vector<1x8xf32> to vector<64x8xf32>
    %72 = arith.addf %68, %71 : vector<64x8xf32>
    %73 = arith.truncf %58 : vector<8x8xf32> to vector<8x8xbf16>
    %74 = arith.truncf %65 : vector<64x8xf32> to vector<64x8xbf16>
    %cst_57 = arith.constant dense<0.000000e+00> : vector<8x64xf32>
    %75 = tpu.matmul %73, %74, %cst_57 {dimension_numbers = #tpu.dot_dimension_numbers<[1], [1], [0], [0], [0, 0, 1, 0], [], []>} : vector<8x8xbf16>, vector<64x8xbf16>, vector<8x64xf32> -> vector<8x64xf32>
    %cst_58 = arith.constant 0.353553385 : f32
    %76 = vector.broadcast %cst_58 : f32 to vector<8x64xf32>
    %77 = arith.mulf %75, %76 : vector<8x64xf32>
    %78 = vector.broadcast %6 : vector<1x64xf32> to vector<8x64xf32>
    %79 = arith.addf %77, %78 : vector<8x64xf32>
    %cst_59 = arith.constant dense<0xFF800000> : vector<8xf32>
    %80 = vector.multi_reduction <maximumf>, %79, %cst_59 [1] : vector<8x64xf32> to vector<8xf32>
    %81 = vector.shape_cast %80 : vector<8xf32> to vector<8x1xf32>
    %82 = vector.broadcast %81 : vector<8x1xf32> to vector<8x64xf32>
    %83 = arith.subf %79, %82 : vector<8x64xf32>
    %84 = math.exp %83 : vector<8x64xf32>
    %cst_60 = arith.constant dense<0.000000e+00> : vector<8xf32>
    %85 = vector.multi_reduction <add>, %84, %cst_60 [1] : vector<8x64xf32> to vector<8xf32>
    %86 = vector.shape_cast %85 : vector<8xf32> to vector<8x1xf32>
    %87 = tpu.reciprocal %86 {approx = true} : vector<8x1xf32> -> vector<8x1xf32>
    %88 = vector.broadcast %87 : vector<8x1xf32> to vector<8x64xf32>
    %89 = arith.mulf %84, %88 : vector<8x64xf32>
    %90 = arith.truncf %89 : vector<8x64xf32> to vector<8x64xbf16>
    %91 = arith.truncf %72 : vector<64x8xf32> to vector<64x8xbf16>
    %cst_61 = arith.constant dense<0.000000e+00> : vector<8x8xf32>
    %92 = tpu.matmul %90, %91, %cst_61 {dimension_numbers = #tpu.dot_dimension_numbers<[1], [0], [0], [1], [0, 0, 1, 1], [], []>} : vector<8x64xbf16>, vector<64x8xbf16>, vector<8x8xf32> -> vector<8x8xf32>
    %93 = arith.truncf %92 : vector<8x8xf32> to vector<8x8xbf16>
    %c1_62 = arith.constant 1 : index
    %c0_63 = arith.constant 0 : index
    %c0_64 = arith.constant 0 : index
    %94 = vector.load %arg10[%c1_62, %c0_63, %c0_64] : memref<4x8x32xbf16, #tpu.memory_space<vmem>>, vector<1x8x32xbf16>
    %95 = vector.shape_cast %94 : vector<1x8x32xbf16> to vector<8x32xbf16>
    %cst_65 = arith.constant dense<0.000000e+00> : vector<8x32xf32>
    %96 = tpu.matmul %93, %95, %cst_65 {dimension_numbers = #tpu.dot_dimension_numbers<[1], [0], [0], [1], [0, 0, 1, 1], [], []>} : vector<8x8xbf16>, vector<8x32xbf16>, vector<8x32xf32> -> vector<8x32xf32>
    %97 = arith.addf %51, %96 : vector<8x32xf32>
    %c2 = arith.constant 2 : index
    %c0_66 = arith.constant 0 : index
    %c0_67 = arith.constant 0 : index
    %98 = vector.load %arg4[%c2, %c0_66, %c0_67] : memref<4x32x8xbf16, #tpu.memory_space<vmem>>, vector<1x32x8xbf16>
    %99 = vector.shape_cast %98 : vector<1x32x8xbf16> to vector<32x8xbf16>
    %cst_68 = arith.constant dense<0.000000e+00> : vector<8x8xf32>
    %100 = tpu.matmul %2, %99, %cst_68 {dimension_numbers = #tpu.dot_dimension_numbers<[1], [0], [0], [1], [0, 0, 1, 1], [], []>} : vector<8x32xbf16>, vector<32x8xbf16>, vector<8x8xf32> -> vector<8x8xf32>
    %c2_69 = arith.constant 2 : index
    %c0_70 = arith.constant 0 : index
    %c0_71 = arith.constant 0 : index
    %101 = vector.load %arg5[%c2_69, %c0_70, %c0_71] : memref<4x1x8xf32, #tpu.memory_space<vmem>>, vector<1x1x8xf32>
    %102 = vector.shape_cast %101 : vector<1x1x8xf32> to vector<1x8xf32>
    %103 = vector.broadcast %102 : vector<1x8xf32> to vector<8x8xf32>
    %104 = arith.addf %100, %103 : vector<8x8xf32>
    %c2_72 = arith.constant 2 : index
    %c0_73 = arith.constant 0 : index
    %c0_74 = arith.constant 0 : index
    %105 = vector.load %arg6[%c2_72, %c0_73, %c0_74] : memref<4x32x8xbf16, #tpu.memory_space<vmem>>, vector<1x32x8xbf16>
    %106 = vector.shape_cast %105 : vector<1x32x8xbf16> to vector<32x8xbf16>
    %cst_75 = arith.constant dense<0.000000e+00> : vector<64x8xf32>
    %107 = tpu.matmul %4, %106, %cst_75 {dimension_numbers = #tpu.dot_dimension_numbers<[1], [0], [0], [1], [0, 0, 1, 1], [], []>} : vector<64x32xbf16>, vector<32x8xbf16>, vector<64x8xf32> -> vector<64x8xf32>
    %c2_76 = arith.constant 2 : index
    %c0_77 = arith.constant 0 : index
    %c0_78 = arith.constant 0 : index
    %108 = vector.load %arg7[%c2_76, %c0_77, %c0_78] : memref<4x1x8xf32, #tpu.memory_space<vmem>>, vector<1x1x8xf32>
    %109 = vector.shape_cast %108 : vector<1x1x8xf32> to vector<1x8xf32>
    %110 = vector.broadcast %109 : vector<1x8xf32> to vector<64x8xf32>
    %111 = arith.addf %107, %110 : vector<64x8xf32>
    %c2_79 = arith.constant 2 : index
    %c0_80 = arith.constant 0 : index
    %c0_81 = arith.constant 0 : index
    %112 = vector.load %arg8[%c2_79, %c0_80, %c0_81] : memref<4x32x8xbf16, #tpu.memory_space<vmem>>, vector<1x32x8xbf16>
    %113 = vector.shape_cast %112 : vector<1x32x8xbf16> to vector<32x8xbf16>
    %cst_82 = arith.constant dense<0.000000e+00> : vector<64x8xf32>
    %114 = tpu.matmul %4, %113, %cst_82 {dimension_numbers = #tpu.dot_dimension_numbers<[1], [0], [0], [1], [0, 0, 1, 1], [], []>} : vector<64x32xbf16>, vector<32x8xbf16>, vector<64x8xf32> -> vector<64x8xf32>
    %c2_83 = arith.constant 2 : index
    %c0_84 = arith.constant 0 : index
    %c0_85 = arith.constant 0 : index
    %115 = vector.load %arg9[%c2_83, %c0_84, %c0_85] : memref<4x1x8xf32, #tpu.memory_space<vmem>>, vector<1x1x8xf32>
    %116 = vector.shape_cast %115 : vector<1x1x8xf32> to vector<1x8xf32>
    %117 = vector.broadcast %116 : vector<1x8xf32> to vector<64x8xf32>
    %118 = arith.addf %114, %117 : vector<64x8xf32>
    %119 = arith.truncf %104 : vector<8x8xf32> to vector<8x8xbf16>
    %120 = arith.truncf %111 : vector<64x8xf32> to vector<64x8xbf16>
    %cst_86 = arith.constant dense<0.000000e+00> : vector<8x64xf32>
    %121 = tpu.matmul %119, %120, %cst_86 {dimension_numbers = #tpu.dot_dimension_numbers<[1], [1], [0], [0], [0, 0, 1, 0], [], []>} : vector<8x8xbf16>, vector<64x8xbf16>, vector<8x64xf32> -> vector<8x64xf32>
    %cst_87 = arith.constant 0.353553385 : f32
    %122 = vector.broadcast %cst_87 : f32 to vector<8x64xf32>
    %123 = arith.mulf %121, %122 : vector<8x64xf32>
    %124 = vector.broadcast %6 : vector<1x64xf32> to vector<8x64xf32>
    %125 = arith.addf %123, %124 : vector<8x64xf32>
    %cst_88 = arith.constant dense<0xFF800000> : vector<8xf32>
    %126 = vector.multi_reduction <maximumf>, %125, %cst_88 [1] : vector<8x64xf32> to vector<8xf32>
    %127 = vector.shape_cast %126 : vector<8xf32> to vector<8x1xf32>
    %128 = vector.broadcast %127 : vector<8x1xf32> to vector<8x64xf32>
    %129 = arith.subf %125, %128 : vector<8x64xf32>
    %130 = math.exp %129 : vector<8x64xf32>
    %cst_89 = arith.constant dense<0.000000e+00> : vector<8xf32>
    %131 = vector.multi_reduction <add>, %130, %cst_89 [1] : vector<8x64xf32> to vector<8xf32>
    %132 = vector.shape_cast %131 : vector<8xf32> to vector<8x1xf32>
    %133 = tpu.reciprocal %132 {approx = true} : vector<8x1xf32> -> vector<8x1xf32>
    %134 = vector.broadcast %133 : vector<8x1xf32> to vector<8x64xf32>
    %135 = arith.mulf %130, %134 : vector<8x64xf32>
    %136 = arith.truncf %135 : vector<8x64xf32> to vector<8x64xbf16>
    %137 = arith.truncf %118 : vector<64x8xf32> to vector<64x8xbf16>
    %cst_90 = arith.constant dense<0.000000e+00> : vector<8x8xf32>
    %138 = tpu.matmul %136, %137, %cst_90 {dimension_numbers = #tpu.dot_dimension_numbers<[1], [0], [0], [1], [0, 0, 1, 1], [], []>} : vector<8x64xbf16>, vector<64x8xbf16>, vector<8x8xf32> -> vector<8x8xf32>
    %139 = arith.truncf %138 : vector<8x8xf32> to vector<8x8xbf16>
    %c2_91 = arith.constant 2 : index
    %c0_92 = arith.constant 0 : index
    %c0_93 = arith.constant 0 : index
    %140 = vector.load %arg10[%c2_91, %c0_92, %c0_93] : memref<4x8x32xbf16, #tpu.memory_space<vmem>>, vector<1x8x32xbf16>
    %141 = vector.shape_cast %140 : vector<1x8x32xbf16> to vector<8x32xbf16>
    %cst_94 = arith.constant dense<0.000000e+00> : vector<8x32xf32>
    %142 = tpu.matmul %139, %141, %cst_94 {dimension_numbers = #tpu.dot_dimension_numbers<[1], [0], [0], [1], [0, 0, 1, 1], [], []>} : vector<8x8xbf16>, vector<8x32xbf16>, vector<8x32xf32> -> vector<8x32xf32>
    %143 = arith.addf %97, %142 : vector<8x32xf32>
    %c3 = arith.constant 3 : index
    %c0_95 = arith.constant 0 : index
    %c0_96 = arith.constant 0 : index
    %144 = vector.load %arg4[%c3, %c0_95, %c0_96] : memref<4x32x8xbf16, #tpu.memory_space<vmem>>, vector<1x32x8xbf16>
    %145 = vector.shape_cast %144 : vector<1x32x8xbf16> to vector<32x8xbf16>
    %cst_97 = arith.constant dense<0.000000e+00> : vector<8x8xf32>
    %146 = tpu.matmul %2, %145, %cst_97 {dimension_numbers = #tpu.dot_dimension_numbers<[1], [0], [0], [1], [0, 0, 1, 1], [], []>} : vector<8x32xbf16>, vector<32x8xbf16>, vector<8x8xf32> -> vector<8x8xf32>
    %c3_98 = arith.constant 3 : index
    %c0_99 = arith.constant 0 : index
    %c0_100 = arith.constant 0 : index
    %147 = vector.load %arg5[%c3_98, %c0_99, %c0_100] : memref<4x1x8xf32, #tpu.memory_space<vmem>>, vector<1x1x8xf32>
    %148 = vector.shape_cast %147 : vector<1x1x8xf32> to vector<1x8xf32>
    %149 = vector.broadcast %148 : vector<1x8xf32> to vector<8x8xf32>
    %150 = arith.addf %146, %149 : vector<8x8xf32>
    %c3_101 = arith.constant 3 : index
    %c0_102 = arith.constant 0 : index
    %c0_103 = arith.constant 0 : index
    %151 = vector.load %arg6[%c3_101, %c0_102, %c0_103] : memref<4x32x8xbf16, #tpu.memory_space<vmem>>, vector<1x32x8xbf16>
    %152 = vector.shape_cast %151 : vector<1x32x8xbf16> to vector<32x8xbf16>
    %cst_104 = arith.constant dense<0.000000e+00> : vector<64x8xf32>
    %153 = tpu.matmul %4, %152, %cst_104 {dimension_numbers = #tpu.dot_dimension_numbers<[1], [0], [0], [1], [0, 0, 1, 1], [], []>} : vector<64x32xbf16>, vector<32x8xbf16>, vector<64x8xf32> -> vector<64x8xf32>
    %c3_105 = arith.constant 3 : index
    %c0_106 = arith.constant 0 : index
    %c0_107 = arith.constant 0 : index
    %154 = vector.load %arg7[%c3_105, %c0_106, %c0_107] : memref<4x1x8xf32, #tpu.memory_space<vmem>>, vector<1x1x8xf32>
    %155 = vector.shape_cast %154 : vector<1x1x8xf32> to vector<1x8xf32>
    %156 = vector.broadcast %155 : vector<1x8xf32> to vector<64x8xf32>
    %157 = arith.addf %153, %156 : vector<64x8xf32>
    %c3_108 = arith.constant 3 : index
    %c0_109 = arith.constant 0 : index
    %c0_110 = arith.constant 0 : index
    %158 = vector.load %arg8[%c3_108, %c0_109, %c0_110] : memref<4x32x8xbf16, #tpu.memory_space<vmem>>, vector<1x32x8xbf16>
    %159 = vector.shape_cast %158 : vector<1x32x8xbf16> to vector<32x8xbf16>
    %cst_111 = arith.constant dense<0.000000e+00> : vector<64x8xf32>
    %160 = tpu.matmul %4, %159, %cst_111 {dimension_numbers = #tpu.dot_dimension_numbers<[1], [0], [0], [1], [0, 0, 1, 1], [], []>} : vector<64x32xbf16>, vector<32x8xbf16>, vector<64x8xf32> -> vector<64x8xf32>
    %c3_112 = arith.constant 3 : index
    %c0_113 = arith.constant 0 : index
    %c0_114 = arith.constant 0 : index
    %161 = vector.load %arg9[%c3_112, %c0_113, %c0_114] : memref<4x1x8xf32, #tpu.memory_space<vmem>>, vector<1x1x8xf32>
    %162 = vector.shape_cast %161 : vector<1x1x8xf32> to vector<1x8xf32>
    %163 = vector.broadcast %162 : vector<1x8xf32> to vector<64x8xf32>
    %164 = arith.addf %160, %163 : vector<64x8xf32>
    %165 = arith.truncf %150 : vector<8x8xf32> to vector<8x8xbf16>
    %166 = arith.truncf %157 : vector<64x8xf32> to vector<64x8xbf16>
    %cst_115 = arith.constant dense<0.000000e+00> : vector<8x64xf32>
    %167 = tpu.matmul %165, %166, %cst_115 {dimension_numbers = #tpu.dot_dimension_numbers<[1], [1], [0], [0], [0, 0, 1, 0], [], []>} : vector<8x8xbf16>, vector<64x8xbf16>, vector<8x64xf32> -> vector<8x64xf32>
    %cst_116 = arith.constant 0.353553385 : f32
    %168 = vector.broadcast %cst_116 : f32 to vector<8x64xf32>
    %169 = arith.mulf %167, %168 : vector<8x64xf32>
    %170 = vector.broadcast %6 : vector<1x64xf32> to vector<8x64xf32>
    %171 = arith.addf %169, %170 : vector<8x64xf32>
    %cst_117 = arith.constant dense<0xFF800000> : vector<8xf32>
    %172 = vector.multi_reduction <maximumf>, %171, %cst_117 [1] : vector<8x64xf32> to vector<8xf32>
    %173 = vector.shape_cast %172 : vector<8xf32> to vector<8x1xf32>
    %174 = vector.broadcast %173 : vector<8x1xf32> to vector<8x64xf32>
    %175 = arith.subf %171, %174 : vector<8x64xf32>
    %176 = math.exp %175 : vector<8x64xf32>
    %cst_118 = arith.constant dense<0.000000e+00> : vector<8xf32>
    %177 = vector.multi_reduction <add>, %176, %cst_118 [1] : vector<8x64xf32> to vector<8xf32>
    %178 = vector.shape_cast %177 : vector<8xf32> to vector<8x1xf32>
    %179 = tpu.reciprocal %178 {approx = true} : vector<8x1xf32> -> vector<8x1xf32>
    %180 = vector.broadcast %179 : vector<8x1xf32> to vector<8x64xf32>
    %181 = arith.mulf %176, %180 : vector<8x64xf32>
    %182 = arith.truncf %181 : vector<8x64xf32> to vector<8x64xbf16>
    %183 = arith.truncf %164 : vector<64x8xf32> to vector<64x8xbf16>
    %cst_119 = arith.constant dense<0.000000e+00> : vector<8x8xf32>
    %184 = tpu.matmul %182, %183, %cst_119 {dimension_numbers = #tpu.dot_dimension_numbers<[1], [0], [0], [1], [0, 0, 1, 1], [], []>} : vector<8x64xbf16>, vector<64x8xbf16>, vector<8x8xf32> -> vector<8x8xf32>
    %185 = arith.truncf %184 : vector<8x8xf32> to vector<8x8xbf16>
    %c3_120 = arith.constant 3 : index
    %c0_121 = arith.constant 0 : index
    %c0_122 = arith.constant 0 : index
    %186 = vector.load %arg10[%c3_120, %c0_121, %c0_122] : memref<4x8x32xbf16, #tpu.memory_space<vmem>>, vector<1x8x32xbf16>
    %187 = vector.shape_cast %186 : vector<1x8x32xbf16> to vector<8x32xbf16>
    %cst_123 = arith.constant dense<0.000000e+00> : vector<8x32xf32>
    %188 = tpu.matmul %185, %187, %cst_123 {dimension_numbers = #tpu.dot_dimension_numbers<[1], [0], [0], [1], [0, 0, 1, 1], [], []>} : vector<8x8xbf16>, vector<8x32xbf16>, vector<8x32xf32> -> vector<8x32xf32>
    %189 = arith.addf %143, %188 : vector<8x32xf32>
    %c0_124 = arith.constant 0 : index
    %c0_125 = arith.constant 0 : index
    %190 = vector.load %arg11[%c0_124, %c0_125] : memref<1x32xf32, #tpu.memory_space<vmem>>, vector<1x32xf32>
    %191 = vector.broadcast %190 : vector<1x32xf32> to vector<8x32xf32>
    %192 = arith.addf %189, %191 : vector<8x32xf32>
    %193 = arith.addf %192, %1 : vector<8x32xf32>
    %c0_126 = arith.constant 0 : index
    %c0_127 = arith.constant 0 : index
    %194 = vector.load %arg12[%c0_126, %c0_127] : memref<1x32xf32, #tpu.memory_space<vmem>>, vector<1x32xf32>
    %c0_128 = arith.constant 0 : index
    %c0_129 = arith.constant 0 : index
    %195 = vector.load %arg13[%c0_128, %c0_129] : memref<1x32xf32, #tpu.memory_space<vmem>>, vector<1x32xf32>
    %cst_130 = arith.constant dense<0.000000e+00> : vector<8xf32>
    %196 = vector.multi_reduction <add>, %193, %cst_130 [1] : vector<8x32xf32> to vector<8xf32>
    %197 = vector.shape_cast %196 : vector<8xf32> to vector<8x1xf32>
    %cst_131 = arith.constant 3.200000e+01 : f32
    %198 = vector.broadcast %cst_131 : f32 to vector<8x1xf32>
    %199 = arith.divf %197, %198 : vector<8x1xf32>
    %200 = vector.broadcast %199 : vector<8x1xf32> to vector<8x32xf32>
    %201 = arith.subf %193, %200 : vector<8x32xf32>
    %202 = arith.mulf %201, %201 : vector<8x32xf32>
    %cst_132 = arith.constant dense<0.000000e+00> : vector<8xf32>
    %203 = vector.multi_reduction <add>, %202, %cst_132 [1] : vector<8x32xf32> to vector<8xf32>
    %204 = vector.shape_cast %203 : vector<8xf32> to vector<8x1xf32>
    %cst_133 = arith.constant 3.200000e+01 : f32
    %205 = vector.broadcast %cst_133 : f32 to vector<8x1xf32>
    %206 = arith.divf %204, %205 : vector<8x1xf32>
    %cst_134 = arith.constant 9.99999974E-6 : f32
    %207 = vector.broadcast %cst_134 : f32 to vector<8x1xf32>
    %208 = arith.addf %206, %207 : vector<8x1xf32>
    %209 = math.rsqrt %208 : vector<8x1xf32>
    %210 = vector.broadcast %209 : vector<8x1xf32> to vector<8x32xf32>
    %211 = arith.mulf %201, %210 : vector<8x32xf32>
    %212 = vector.broadcast %194 : vector<1x32xf32> to vector<8x32xf32>
    %213 = arith.mulf %211, %212 : vector<8x32xf32>
    %214 = vector.broadcast %195 : vector<1x32xf32> to vector<8x32xf32>
    %215 = arith.addf %213, %214 : vector<8x32xf32>
    %c0_135 = arith.constant 0 : index
    %c0_136 = arith.constant 0 : index
    %c0_137 = arith.constant 0 : index
    %216 = vector.load %arg14[%c0_135, %c0_136, %c0_137] : memref<1x8x32xf32, #tpu.memory_space<vmem>>, vector<1x8x32xf32>
    %217 = vector.shape_cast %216 : vector<1x8x32xf32> to vector<8x32xf32>
    %218 = vector.shape_cast %215 : vector<8x32xf32> to vector<1x8x32xf32>
    tpu.vector_store %arg14[%c0_135, %c0_136, %c0_137], %218 {strides = array<i32>} : memref<1x8x32xf32, #tpu.memory_space<vmem>>, vector<1x8x32xf32>,
    return
  }
  func.func @transform_0(%arg0: i32) -> (i32, i32, i32) {
    %c0_i32 = arith.constant 0 : i32
    %c0_i32_0 = arith.constant 0 : i32
    %c0_i32_1 = arith.constant 0 : i32
    return %arg0, %c0_i32, %c0_i32_0 : i32, i32, i32
  }
  func.func @transform_1(%arg0: i32) -> (i32, i32, i32) {
    %c0_i32 = arith.constant 0 : i32
    %c0_i32_0 = arith.constant 0 : i32
    %c0_i32_1 = arith.constant 0 : i32
    return %arg0, %c0_i32, %c0_i32_0 : i32, i32, i32
  }
  func.func @transform_2(%arg0: i32) -> (i32, i32, i32) {
    %c0_i32 = arith.constant 0 : i32
    %c0_i32_0 = arith.constant 0 : i32
    %c0_i32_1 = arith.constant 0 : i32
    return %arg0, %c0_i32, %c0_i32_0 : i32, i32, i32
  }
  func.func @transform_3(%arg0: i32) -> (i32, i32, i32) {
    %c0_i32 = arith.constant 0 : i32
    %c0_i32_0 = arith.constant 0 : i32
    %c0_i32_1 = arith.constant 0 : i32
    %c0_i32_2 = arith.constant 0 : i32
    return %c0_i32, %c0_i32_0, %c0_i32_1 : i32, i32, i32
  }
  func.func @transform_4(%arg0: i32) -> (i32, i32, i32) {
    %c0_i32 = arith.constant 0 : i32
    %c0_i32_0 = arith.constant 0 : i32
    %c0_i32_1 = arith.constant 0 : i32
    %c0_i32_2 = arith.constant 0 : i32
    return %c0_i32, %c0_i32_0, %c0_i32_1 : i32, i32, i32
  }
  func.func @transform_5(%arg0: i32) -> (i32, i32, i32) {
    %c0_i32 = arith.constant 0 : i32
    %c0_i32_0 = arith.constant 0 : i32
    %c0_i32_1 = arith.constant 0 : i32
    %c0_i32_2 = arith.constant 0 : i32
    return %c0_i32, %c0_i32_0, %c0_i32_1 : i32, i32, i32
  }
  func.func @transform_6(%arg0: i32) -> (i32, i32, i32) {
    %c0_i32 = arith.constant 0 : i32
    %c0_i32_0 = arith.constant 0 : i32
    %c0_i32_1 = arith.constant 0 : i32
    %c0_i32_2 = arith.constant 0 : i32
    return %c0_i32, %c0_i32_0, %c0_i32_1 : i32, i32, i32
  }
  func.func @transform_7(%arg0: i32) -> (i32, i32, i32) {
    %c0_i32 = arith.constant 0 : i32
    %c0_i32_0 = arith.constant 0 : i32
    %c0_i32_1 = arith.constant 0 : i32
    %c0_i32_2 = arith.constant 0 : i32
    return %c0_i32, %c0_i32_0, %c0_i32_1 : i32, i32, i32
  }
  func.func @transform_8(%arg0: i32) -> (i32, i32, i32) {
    %c0_i32 = arith.constant 0 : i32
    %c0_i32_0 = arith.constant 0 : i32
    %c0_i32_1 = arith.constant 0 : i32
    %c0_i32_2 = arith.constant 0 : i32
    return %c0_i32, %c0_i32_0, %c0_i32_1 : i32, i32, i32
  }
  func.func @transform_9(%arg0: i32) -> (i32, i32, i32) {
    %c0_i32 = arith.constant 0 : i32
    %c0_i32_0 = arith.constant 0 : i32
    %c0_i32_1 = arith.constant 0 : i32
    %c0_i32_2 = arith.constant 0 : i32
    return %c0_i32, %c0_i32_0, %c0_i32_1 : i32, i32, i32
  }
  func.func @transform_10(%arg0: i32) -> (i32, i32) {
    %c0_i32 = arith.constant 0 : i32
    %c0_i32_0 = arith.constant 0 : i32
    %c0_i32_1 = arith.constant 0 : i32
    return %c0_i32, %c0_i32_0 : i32, i32
  }
  func.func @transform_11(%arg0: i32) -> (i32, i32) {
    %c0_i32 = arith.constant 0 : i32
    %c0_i32_0 = arith.constant 0 : i32
    %c0_i32_1 = arith.constant 0 : i32
    return %c0_i32, %c0_i32_0 : i32, i32
  }
  func.func @transform_12(%arg0: i32) -> (i32, i32) {
    %c0_i32 = arith.constant 0 : i32
    %c0_i32_0 = arith.constant 0 : i32
    %c0_i32_1 = arith.constant 0 : i32
    return %c0_i32, %c0_i32_0 : i32, i32
  }
  func.func @transform_13(%arg0: i32) -> (i32, i32, i32) {
    %c0_i32 = arith.constant 0 : i32
    %c0_i32_0 = arith.constant 0 : i32
    %c0_i32_1 = arith.constant 0 : i32
    return %arg0, %c0_i32, %c0_i32_0 : i32, i32, i32
  }
}

module attributes {stable_mosaic.version = 11 : i64} {
  func.func @_ffn_res_ln_kernel(%arg0: memref<16x32xf32, #tpu.memory_space<vmem>>, %arg1: memref<32x64xbf16, #tpu.memory_space<vmem>>, %arg2: memref<1x64xf32, #tpu.memory_space<vmem>>, %arg3: memref<64x32xbf16, #tpu.memory_space<vmem>>, %arg4: memref<1x32xf32, #tpu.memory_space<vmem>>, %arg5: memref<1x32xf32, #tpu.memory_space<vmem>>, %arg6: memref<1x32xf32, #tpu.memory_space<vmem>>, %arg7: memref<16x32xf32, #tpu.memory_space<vmem>>) attributes {dimension_semantics = [], scalar_prefetch = 0 : i64, scratch_operands = 0 : i64, tpu.core_type = #tpu.core_type<tc>} {
    %c0 = arith.constant 0 : index
    %c0_0 = arith.constant 0 : index
    %0 = vector.load %arg0[%c0, %c0_0] : memref<16x32xf32, #tpu.memory_space<vmem>>, vector<16x32xf32>
    %1 = arith.truncf %0 : vector<16x32xf32> to vector<16x32xbf16>
    %c0_1 = arith.constant 0 : index
    %c0_2 = arith.constant 0 : index
    %2 = vector.load %arg1[%c0_1, %c0_2] : memref<32x64xbf16, #tpu.memory_space<vmem>>, vector<32x64xbf16>
    %cst = arith.constant dense<0.000000e+00> : vector<16x64xf32>
    %3 = tpu.matmul %1, %2, %cst {dimension_numbers = #tpu.dot_dimension_numbers<[1], [0], [0], [1], [0, 0, 1, 1], [], []>} : vector<16x32xbf16>, vector<32x64xbf16>, vector<16x64xf32> -> vector<16x64xf32>
    %c0_3 = arith.constant 0 : index
    %c0_4 = arith.constant 0 : index
    %4 = vector.load %arg2[%c0_3, %c0_4] : memref<1x64xf32, #tpu.memory_space<vmem>>, vector<1x64xf32>
    %5 = vector.broadcast %4 : vector<1x64xf32> to vector<16x64xf32>
    %6 = arith.addf %3, %5 : vector<16x64xf32>
    %cst_5 = arith.constant 0.000000e+00 : f32
    %7 = vector.broadcast %cst_5 : f32 to vector<16x64xf32>
    %8 = arith.maximumf %6, %7 : vector<16x64xf32>
    %9 = arith.truncf %8 : vector<16x64xf32> to vector<16x64xbf16>
    %c0_6 = arith.constant 0 : index
    %c0_7 = arith.constant 0 : index
    %10 = vector.load %arg3[%c0_6, %c0_7] : memref<64x32xbf16, #tpu.memory_space<vmem>>, vector<64x32xbf16>
    %cst_8 = arith.constant dense<0.000000e+00> : vector<16x32xf32>
    %11 = tpu.matmul %9, %10, %cst_8 {dimension_numbers = #tpu.dot_dimension_numbers<[1], [0], [0], [1], [0, 0, 1, 1], [], []>} : vector<16x64xbf16>, vector<64x32xbf16>, vector<16x32xf32> -> vector<16x32xf32>
    %c0_9 = arith.constant 0 : index
    %c0_10 = arith.constant 0 : index
    %12 = vector.load %arg4[%c0_9, %c0_10] : memref<1x32xf32, #tpu.memory_space<vmem>>, vector<1x32xf32>
    %13 = vector.broadcast %12 : vector<1x32xf32> to vector<16x32xf32>
    %14 = arith.addf %11, %13 : vector<16x32xf32>
    %15 = arith.addf %14, %0 : vector<16x32xf32>
    %c0_11 = arith.constant 0 : index
    %c0_12 = arith.constant 0 : index
    %16 = vector.load %arg5[%c0_11, %c0_12] : memref<1x32xf32, #tpu.memory_space<vmem>>, vector<1x32xf32>
    %c0_13 = arith.constant 0 : index
    %c0_14 = arith.constant 0 : index
    %17 = vector.load %arg6[%c0_13, %c0_14] : memref<1x32xf32, #tpu.memory_space<vmem>>, vector<1x32xf32>
    %cst_15 = arith.constant dense<0.000000e+00> : vector<16xf32>
    %18 = vector.multi_reduction <add>, %15, %cst_15 [1] : vector<16x32xf32> to vector<16xf32>
    %19 = vector.shape_cast %18 : vector<16xf32> to vector<16x1xf32>
    %cst_16 = arith.constant 3.200000e+01 : f32
    %20 = vector.broadcast %cst_16 : f32 to vector<16x1xf32>
    %21 = arith.divf %19, %20 : vector<16x1xf32>
    %22 = vector.broadcast %21 : vector<16x1xf32> to vector<16x32xf32>
    %23 = arith.subf %15, %22 : vector<16x32xf32>
    %24 = arith.mulf %23, %23 : vector<16x32xf32>
    %cst_17 = arith.constant dense<0.000000e+00> : vector<16xf32>
    %25 = vector.multi_reduction <add>, %24, %cst_17 [1] : vector<16x32xf32> to vector<16xf32>
    %26 = vector.shape_cast %25 : vector<16xf32> to vector<16x1xf32>
    %cst_18 = arith.constant 3.200000e+01 : f32
    %27 = vector.broadcast %cst_18 : f32 to vector<16x1xf32>
    %28 = arith.divf %26, %27 : vector<16x1xf32>
    %cst_19 = arith.constant 9.99999974E-6 : f32
    %29 = vector.broadcast %cst_19 : f32 to vector<16x1xf32>
    %30 = arith.addf %28, %29 : vector<16x1xf32>
    %31 = math.rsqrt %30 : vector<16x1xf32>
    %32 = vector.broadcast %31 : vector<16x1xf32> to vector<16x32xf32>
    %33 = arith.mulf %23, %32 : vector<16x32xf32>
    %34 = vector.broadcast %16 : vector<1x32xf32> to vector<16x32xf32>
    %35 = arith.mulf %33, %34 : vector<16x32xf32>
    %36 = vector.broadcast %17 : vector<1x32xf32> to vector<16x32xf32>
    %37 = arith.addf %35, %36 : vector<16x32xf32>
    %c0_20 = arith.constant 0 : index
    %c0_21 = arith.constant 0 : index
    %38 = vector.load %arg7[%c0_20, %c0_21] : memref<16x32xf32, #tpu.memory_space<vmem>>, vector<16x32xf32>
    tpu.vector_store %arg7[%c0_20, %c0_21], %37 {strides = array<i32>} : memref<16x32xf32, #tpu.memory_space<vmem>>, vector<16x32xf32>,
    return
  }
}

module attributes {stable_mosaic.version = 11 : i64} {
  func.func @_matmul_bias_kernel(%arg0: memref<16x32xf32, #tpu.memory_space<vmem>>, %arg1: memref<32x128xbf16, #tpu.memory_space<vmem>>, %arg2: memref<1x128xf32, #tpu.memory_space<vmem>>, %arg3: memref<16x128xf32, #tpu.memory_space<vmem>>) attributes {dimension_semantics = [], scalar_prefetch = 0 : i64, scratch_operands = 0 : i64, tpu.core_type = #tpu.core_type<tc>} {
    %c0 = arith.constant 0 : index
    %c0_0 = arith.constant 0 : index
    %0 = vector.load %arg0[%c0, %c0_0] : memref<16x32xf32, #tpu.memory_space<vmem>>, vector<16x32xf32>
    %1 = arith.truncf %0 : vector<16x32xf32> to vector<16x32xbf16>
    %c0_1 = arith.constant 0 : index
    %c0_2 = arith.constant 0 : index
    %2 = vector.load %arg1[%c0_1, %c0_2] : memref<32x128xbf16, #tpu.memory_space<vmem>>, vector<32x128xbf16>
    %cst = arith.constant dense<0.000000e+00> : vector<16x128xf32>
    %3 = tpu.matmul %1, %2, %cst {dimension_numbers = #tpu.dot_dimension_numbers<[1], [0], [0], [1], [0, 0, 1, 1], [], []>} : vector<16x32xbf16>, vector<32x128xbf16>, vector<16x128xf32> -> vector<16x128xf32>
    %c0_3 = arith.constant 0 : index
    %c0_4 = arith.constant 0 : index
    %4 = vector.load %arg2[%c0_3, %c0_4] : memref<1x128xf32, #tpu.memory_space<vmem>>, vector<1x128xf32>
    %5 = vector.broadcast %4 : vector<1x128xf32> to vector<16x128xf32>
    %6 = arith.addf %3, %5 : vector<16x128xf32>
    %c0_5 = arith.constant 0 : index
    %c0_6 = arith.constant 0 : index
    %7 = vector.load %arg3[%c0_5, %c0_6] : memref<16x128xf32, #tpu.memory_space<vmem>>, vector<16x128xf32>
    tpu.vector_store %arg3[%c0_5, %c0_6], %6 {strides = array<i32>} : memref<16x128xf32, #tpu.memory_space<vmem>>, vector<16x128xf32>,
    return
  }
}

</mosaic_0001>

<llo_original>
// kernel: last_forward.12
$region0: #{last_forward.12}
  #allocation0 [shape = 'u32[]', space=smem, size = 0x4, offset = 0x4, fixed_abs, tag = 'smem constant byte address 0x4 - core index']
  #allocation1 [shape = 'u32[144,128]{1,0:T(1,128)}', space=vmem, size = 0x12000, scoped, tag = 'internal scratch']
  %s0 = inlined_call_operand.vmem [shape: f32[128,9], index: 0, kind: input, shape index: {}]
  %s1 = inlined_call_operand.vmem [shape: bf16[9,16], index: 1, kind: input, shape index: {}]
  %s2 = inlined_call_operand.vmem [shape: f32[1,16], index: 2, kind: input, shape index: {}]
  %s3 = inlined_call_operand.vmem [shape: bf16[128,16], index: 3, kind: output, shape index: {}]
  %s4 = sld [smem:[#allocation0]]
  $region22: #{last_forward.12} parent=0
    _
  %s6 = ssub.s32 1, %s4
  %s7 = scalar_select 0, %s6, %s4
  // Predicated region
  $region2: #{last_forward.12} parent=0 // pred_check
    _
  $region3: #{last_forward.12} parent=0 // pred_check_branch
    %9 = sbr.rel (0) target = $region5
  $region4: #{last_forward.12} parent=0 // pred_region
    _
  $region5: #{last_forward.12} parent=0 // pred_fallthru
    _
  // Predicated region
  $region6: #{last_forward.12} parent=0 // pred_check
    _
  $region7: #{last_forward.12} parent=0 // pred_check_branch
    %11 = sbr.rel (0) target = $region9
  $region8: #{last_forward.12} parent=0 // pred_region
    _
  $region9: #{last_forward.12} parent=0 // pred_fallthru
    _
  // Predicated region
  $region10: #{last_forward.12} parent=0 // pred_check
    _
  $region11: #{last_forward.12} parent=0 // pred_check_branch
    %13 = sbr.rel (0) target = $region13
  $region12: #{last_forward.12} parent=0 // pred_region
    _
  $region13: #{last_forward.12} parent=0 // pred_fallthru
    _
  %v15 = vld [vmem:[%s0] sm:$0xff]
  %v16 = vld [vmem:[%s0 + $0x8] sm:$0xff]
  %v17 = vld [vmem:[%s0 + $0x10] sm:$0xff]
  %v18 = vld [vmem:[%s0 + $0x18] sm:$0xff]
  %v19 = vld [vmem:[%s0 + $0x20] sm:$0xff]
  %v20 = vld [vmem:[%s0 + $0x28] sm:$0xff]
  %v21 = vld [vmem:[%s0 + $0x30] sm:$0xff]
  %v22 = vld [vmem:[%s0 + $0x38] sm:$0xff]
  %v23 = vld [vmem:[%s0 + $0x40] sm:$0xff]
  %v24 = vld [vmem:[%s0 + $0x48] sm:$0xff]
  %v25 = vld [vmem:[%s0 + $0x50] sm:$0xff]
  %v26 = vld [vmem:[%s0 + $0x58] sm:$0xff]
  %v27 = vld [vmem:[%s0 + $0x60] sm:$0xff]
  %v28 = vld [vmem:[%s0 + $0x68] sm:$0xff]
  %v29 = vld [vmem:[%s0 + $0x70] sm:$0xff]
  %v30 = vld [vmem:[%s0 + $0x78] sm:$0xff]
  %v31 = vpack.c.bf16 %v16, %v15
  %v32 = vpack.c.bf16 %v18, %v17
  %v33 = vpack.c.bf16 %v20, %v19
  %v34 = vpack.c.bf16 %v22, %v21
  %v35 = vpack.c.bf16 %v24, %v23
  %v36 = vpack.c.bf16 %v26, %v25
  %v37 = vpack.c.bf16 %v28, %v27
  %v38 = vpack.c.bf16 %v30, %v29
  %v39 = vld [vmem:[%s1] sm:$0xf]
  %v40 = vld [vmem:[%s1 + $0x4] sm:$0x1]
  %v41 = vld [vmem:[%s2] sm:$0x1]
  %v43 = vlaneseq
  %v44 = vshrl.u32 %v43, 7
  %v45 = vsub.s32 0, %v44
  %v46 = vrot.slane %v41, %v45
  %v50 = vunpack.c.l.b16 %v39
  %v51 = vunpack.c.l.b16 %v40
  %v52 = vpack.c.b16 %v51, %v50
  %vm53 = vcmask 72704
  %v55 = vsel %vm53, %v31, 0
  %v58 = vsel %vm53, %v32, 0
  %v61 = vsel %vm53, %v33, 0
  %v64 = vsel %vm53, %v34, 0
  %v67 = vsel %vm53, %v35, 0
  %v70 = vsel %vm53, %v36, 0
  %v73 = vsel %vm53, %v37, 0
  %v76 = vsel %vm53, %v38, 0
  %vm78 = vcmask 1043456
  %vm79 = vcmask 1044480
  %v80 = vsel %vm78, 4294967295, 65535
  %v81 = vsel %vm79, %v80, 0
  %v83 = vand.u32 %v52, %v81
  %85 = vmatprep.subr.bf16.mxu0 0
  %86 = vmatpush1.bf16.msra.mxu0 %v83
  %87 = vmatprep.subr.bf16.mxu0 0
  %88 = vmatpush1.bf16.msra.mxu0 0
  %89 = vmatprep.subr.bf16.mxu0 0
  %90 = vmatpush1.bf16.msra.mxu0 0
  %91 = vmatprep.subr.bf16.mxu0 0
  %92 = vmatpush1.bf16.msra.mxu0 0
  %93 = vmatprep.subr.bf16.mxu0 0
  %94 = vmatpush1.bf16.msra.mxu0 0
  %95 = vmatprep.subr.bf16.mxu0 0
  %96 = vmatpush1.bf16.msra.mxu0 0
  %97 = vmatprep.subr.bf16.mxu0 0
  %98 = vmatpush1.bf16.msra.mxu0 0
  %99 = vmatprep.subr.bf16.mxu0 0
  %100 = vmatpush1.bf16.msra.mxu0 0
  %101 = vmatprep.subr.bf16.mxu0 0
  %102 = vmatpush1.bf16.msra.mxu0 0
  %103 = vmatprep.subr.bf16.mxu0 0
  %104 = vmatpush1.bf16.msra.mxu0 0
  %105 = vmatprep.subr.bf16.mxu0 0
  %106 = vmatpush1.bf16.msra.mxu0 0
  %107 = vmatprep.subr.bf16.mxu0 0
  %108 = vmatpush1.bf16.msra.mxu0 0
  %109 = vmatprep.subr.bf16.mxu0 0
  %110 = vmatpush1.bf16.msra.mxu0 0
  %111 = vmatprep.subr.bf16.mxu0 0
  %112 = vmatpush1.bf16.msra.mxu0 0
  %113 = vmatprep.subr.bf16.mxu0 0
  %114 = vmatpush1.bf16.msra.mxu0 0
  %115 = vmatprep.subr.bf16.mxu0 0
  %116 = vmatpush1.bf16.msra.mxu0 0
  %117 = vmatprep.mubr.bf16.mxu0 0
  %118 = vmatmul.mubr.bf16.gmra.mrb[0].mxu0 %v55
  %v119 = vpop.f32.mrb[0].mxu0
  %v120 = vadd.f32 %v46, %v119
  %v121 = vpop.f32.mrb[0].mxu0
  %v122 = vpop.f32.mrb[0].mxu0
  %v123 = vadd.f32 %v46, %v122
  %v124 = vpop.f32.mrb[0].mxu0
  %125 = vmatprep.mubr.bf16.mxu0 0
  %126 = vmatmul.mubr.bf16.gmra.mrb[0].mxu0 %v58
  %v127 = vpop.f32.mrb[0].mxu0
  %v128 = vadd.f32 %v46, %v127
  %v129 = vpop.f32.mrb[0].mxu0
  %v130 = vpop.f32.mrb[0].mxu0
  %v131 = vadd.f32 %v46, %v130
  %v132 = vpop.f32.mrb[0].mxu0
  %133 = vmatprep.mubr.bf16.mxu0 0
  %134 = vmatmul.mubr.bf16.gmra.mrb[0].mxu0 %v61
  %v135 = vpop.f32.mrb[0].mxu0
  %v136 = vadd.f32 %v46, %v135
  %v137 = vpop.f32.mrb[0].mxu0
  %v138 = vpop.f32.mrb[0].mxu0
  %v139 = vadd.f32 %v46, %v138
  %v140 = vpop.f32.mrb[0].mxu0
  %141 = vmatprep.mubr.bf16.mxu0 0
  %142 = vmatmul.mubr.bf16.gmra.mrb[0].mxu0 %v64
  %v143 = vpop.f32.mrb[0].mxu0
  %v144 = vadd.f32 %v46, %v143
  %v145 = vpop.f32.mrb[0].mxu0
  %v146 = vpop.f32.mrb[0].mxu0
  %v147 = vadd.f32 %v46, %v146
  %v148 = vpop.f32.mrb[0].mxu0
  %149 = vmatprep.mubr.bf16.mxu0 0
  %150 = vmatmul.mubr.bf16.gmra.mrb[0].mxu0 %v67
  %v151 = vpop.f32.mrb[0].mxu0
  %v152 = vadd.f32 %v46, %v151
  %v153 = vpop.f32.mrb[0].mxu0
  %v154 = vpop.f32.mrb[0].mxu0
  %v155 = vadd.f32 %v46, %v154
  %v156 = vpop.f32.mrb[0].mxu0
  %157 = vmatprep.mubr.bf16.mxu0 0
  %158 = vmatmul.mubr.bf16.gmra.mrb[0].mxu0 %v70
  %v159 = vpop.f32.mrb[0].mxu0
  %v160 = vadd.f32 %v46, %v159
  %v161 = vpop.f32.mrb[0].mxu0
  %v162 = vpop.f32.mrb[0].mxu0
  %v163 = vadd.f32 %v46, %v162
  %v164 = vpop.f32.mrb[0].mxu0
  %165 = vmatprep.mubr.bf16.mxu0 0
  %166 = vmatmul.mubr.bf16.gmra.mrb[0].mxu0 %v73
  %v167 = vpop.f32.mrb[0].mxu0
  %v168 = vadd.f32 %v46, %v167
  %v169 = vpop.f32.mrb[0].mxu0
  %v170 = vpop.f32.mrb[0].mxu0
  %v171 = vadd.f32 %v46, %v170
  %v172 = vpop.f32.mrb[0].mxu0
  %173 = vmatprep.mubr.bf16.mxu0 0
  %174 = vmatmul.mubr.bf16.gmra.mrb[0].mxu0 %v76
  %v175 = vpop.f32.mrb[0].mxu0
  %v176 = vadd.f32 %v46, %v175
  %v177 = vpop.f32.mrb[0].mxu0
  %v178 = vpop.f32.mrb[0].mxu0
  %v179 = vadd.f32 %v46, %v178
  %v180 = vpop.f32.mrb[0].mxu0
  %181 = vdwg.mxu0
  %v182 = vmax.f32 %v120, 0.0
  %v183 = vmax.f32 %v123, 0.0
  %v184 = vmax.f32 %v128, 0.0
  %v185 = vmax.f32 %v131, 0.0
  %v186 = vmax.f32 %v136, 0.0
  %v187 = vmax.f32 %v139, 0.0
  %v188 = vmax.f32 %v144, 0.0
  %v189 = vmax.f32 %v147, 0.0
  %v190 = vmax.f32 %v152, 0.0
  %v191 = vmax.f32 %v155, 0.0
  %v192 = vmax.f32 %v160, 0.0
  %v193 = vmax.f32 %v163, 0.0
  %v194 = vmax.f32 %v168, 0.0
  %v195 = vmax.f32 %v171, 0.0
  %v196 = vmax.f32 %v176, 0.0
  %v197 = vmax.f32 %v179, 0.0
  %v198 = vpack.c.bf16 %v183, %v182
  %v199 = vpack.c.bf16 %v185, %v184
  %v200 = vpack.c.bf16 %v187, %v186
  %v201 = vpack.c.bf16 %v189, %v188
  %v202 = vpack.c.bf16 %v191, %v190
  %v203 = vpack.c.bf16 %v193, %v192
  %v204 = vpack.c.bf16 %v195, %v194
  %v205 = vpack.c.bf16 %v197, %v196
  %v214 = vunpack.c.l.b16 %v198
  %v215 = vunpack.c.h.b16 %v198
  %v216 = vunpack.c.l.b16 %v199
  %v217 = vunpack.c.h.b16 %v199
  %v218 = vunpack.c.l.b16 %v200
  %v219 = vunpack.c.h.b16 %v200
  %v220 = vunpack.c.l.b16 %v201
  %v221 = vunpack.c.h.b16 %v201
  %v222 = vunpack.c.l.b16 %v202
  %v223 = vunpack.c.h.b16 %v202
  %v224 = vunpack.c.l.b16 %v203
  %v225 = vunpack.c.h.b16 %v203
  %v226 = vunpack.c.l.b16 %v204
  %v227 = vunpack.c.h.b16 %v204
  %v228 = vunpack.c.l.b16 %v205
  %v229 = vunpack.c.h.b16 %v205
  %v230 = vpack.c.b16 %v214, %v214
  %v231 = vpack.c.b16 %v215, %v215
  %v232 = vpack.c.b16 %v216, %v216
  %v233 = vpack.c.b16 %v217, %v217
  %v234 = vpack.c.b16 %v218, %v218
  %v235 = vpack.c.b16 %v219, %v219
  %v236 = vpack.c.b16 %v220, %v220
  %v237 = vpack.c.b16 %v221, %v221
  %v238 = vpack.c.b16 %v222, %v222
  %v239 = vpack.c.b16 %v223, %v223
  %v240 = vpack.c.b16 %v224, %v224
  %v241 = vpack.c.b16 %v225, %v225
  %v242 = vpack.c.b16 %v226, %v226
  %v243 = vpack.c.b16 %v227, %v227
  %v244 = vpack.c.b16 %v228, %v228
  %v245 = vpack.c.b16 %v229, %v229
  %vm262 = vcmask 125952
  %263 = vst.msk [vmem:[%s3] sm:$0xf] %vm262, %v230
  %264 = vst.msk [vmem:[%s3 + $0x4] sm:$0xf] %vm262, %v231
  %265 = vst.msk [vmem:[%s3 + $0x8] sm:$0xf] %vm262, %v232
  %266 = vst.msk [vmem:[%s3 + $0xc] sm:$0xf] %vm262, %v233
  %267 = vst.msk [vmem:[%s3 + $0x10] sm:$0xf] %vm262, %v234
  %268 = vst.msk [vmem:[%s3 + $0x14] sm:$0xf] %vm262, %v235
  %269 = vst.msk [vmem:[%s3 + $0x18] sm:$0xf] %vm262, %v236
  %270 = vst.msk [vmem:[%s3 + $0x1c] sm:$0xf] %vm262, %v237
  %271 = vst.msk [vmem:[%s3 + $0x20] sm:$0xf] %vm262, %v238
  %272 = vst.msk [vmem:[%s3 + $0x24] sm:$0xf] %vm262, %v239
  %273 = vst.msk [vmem:[%s3 + $0x28] sm:$0xf] %vm262, %v240
  %274 = vst.msk [vmem:[%s3 + $0x2c] sm:$0xf] %vm262, %v241
  %275 = vst.msk [vmem:[%s3 + $0x30] sm:$0xf] %vm262, %v242
  %276 = vst.msk [vmem:[%s3 + $0x34] sm:$0xf] %vm262, %v243
  %277 = vst.msk [vmem:[%s3 + $0x38] sm:$0xf] %vm262, %v244
  %278 = vst.msk [vmem:[%s3 + $0x3c] sm:$0xf] %vm262, %v245
  // Predicated region
  $region14: #{last_forward.12} parent=0 // pred_check
    _
  $region15: #{last_forward.12} parent=0 // pred_check_branch
    %280 = sbr.rel (0) target = $region17
  $region16: #{last_forward.12} parent=0 // pred_region
    _
  $region17: #{last_forward.12} parent=0 // pred_fallthru
    _
  // Predicated region
  $region18: #{last_forward.12} parent=0 // pred_check
    _
  $region19: #{last_forward.12} parent=0 // pred_check_branch
    %282 = sbr.rel (0) target = $region21
  $region20: #{last_forward.12} parent=0 // pred_region
    _
  $region21: #{last_forward.12} parent=0 // pred_fallthru
    _

// kernel: last_forward.13
$region0: #{last_forward.13}
  #allocation0 [shape = 'u32[]', space=smem, size = 0x4, offset = 0x4, fixed_abs, tag = 'smem constant byte address 0x4 - core index']
  #allocation1 [shape = 'u32[144,128]{1,0:T(1,128)}', space=vmem, size = 0x12000, scoped, tag = 'internal scratch']
  %s0 = inlined_call_operand.vmem [shape: bf16[2,10,10,16], index: 0, kind: input, shape index: {}]
  %s1 = inlined_call_operand.vmem [shape: bf16[144,8], index: 1, kind: input, shape index: {}]
  %s2 = inlined_call_operand.vmem [shape: f32[1,8], index: 2, kind: input, shape index: {}]
  %s3 = inlined_call_operand.vmem [shape: bf16[2,10,10,24], index: 3, kind: output, shape index: {}]
  %s4 = sld [smem:[#allocation0]]
  $region45: #{last_forward.13} parent=0
    _
  %s6 = ssub.s32 1, %s4
  %s7 = scalar_select 0, %s6, %s4
  loop: start=0, step=1, limit=4
  $region2: #{last_forward.13} parent=0 // loop_pre_header
    _
  $region3: #{last_forward.13} parent=0 // loop_header
    %s9 = sphi 0, %s13
    %p10 = scmp.ge.s32.totalorder %s9, 4
    %s19 = sphi 0, %s21
    %s22 = sphi 0, %s19
    %s23 = sphi 0, %s22
    %s39 = sphi 0, %s23
    %s43 = sphi 0, %s43
    %s45 = sphi 0, %s43
    %s46 = sphi 0, %s45
    %s60 = sphi 0, %s46
    %s64 = sphi 0, %s64
    %s66 = sphi 0, %s64
    %s67 = sphi 0, %s66
    %s81 = sphi 0, %s67
    %s87 = sphi 0, %s89
    %s90 = sphi 0, %s87
    %s91 = sphi 0, %s90
    %s107 = sphi 0, %s91
  $region4: #{last_forward.13} parent=0 // loop_header_branch
    %12 = sbr.rel (%p10) target = $region8
  $region5: #{last_forward.13} parent=0 // loop_body
    %s14 = ssub.s32 %s9, 1
    %s15 = ssub.s32 %s9, 2
    %s16 = sadd.s32 %s9, 1
    %s17 = ssub.s32 %s9, %s16
    %p18 = scmp.eq.s32.totalorder %s17, 0
    %s20 = sadd.s32 %s19, 1
    %s21 = scalar_select %p18, %s19, %s20
    %p24 = pneg %p18
    %p25 = scmp.eq.s32.totalorder %s9, 1
    %p26 = por %p24, %p25
    %p27 = scmp.ne.s32.totalorder %s19, %s22
    %p28 = scmp.eq.s32.totalorder %s9, 0
    %p29 = por %p27, %p28
    %p30 = scmp.ne.s32.totalorder %s19, %s22
    %p31 = scmp.eq.s32.totalorder %s14, 1
    %p32 = por %p30, %p31
    %p33 = scmp.ne.s32.totalorder %s22, %s23
    %p34 = scmp.eq.s32.totalorder %s14, 0
    %p35 = por %p33, %p34
    %p36 = scmp.ne.s32.totalorder %s22, %s23
    %p37 = scmp.eq.s32.totalorder %s15, 1
    %p38 = por %p36, %p37
    %p40 = scmp.ne.s32.totalorder %s23, %s39
    %p41 = scmp.eq.s32.totalorder %s15, 0
    %p42 = por %p40, %p41
    %s44 = sadd.s32 %s43, 1
    %p47 = scmp.eq.s32.totalorder %s9, 1
    %p48 = scmp.ne.s32.totalorder %s43, %s45
    %p49 = scmp.eq.s32.totalorder %s9, 0
    %p50 = por %p48, %p49
    %p51 = scmp.ne.s32.totalorder %s43, %s45
    %p52 = scmp.eq.s32.totalorder %s14, 1
    %p53 = por %p51, %p52
    %p54 = scmp.ne.s32.totalorder %s45, %s46
    %p55 = scmp.eq.s32.totalorder %s14, 0
    %p56 = por %p54, %p55
    %p57 = scmp.ne.s32.totalorder %s45, %s46
    %p58 = scmp.eq.s32.totalorder %s15, 1
    %p59 = por %p57, %p58
    %p61 = scmp.ne.s32.totalorder %s46, %s60
    %p62 = scmp.eq.s32.totalorder %s15, 0
    %p63 = por %p61, %p62
    %s65 = sadd.s32 %s64, 1
    %p68 = scmp.eq.s32.totalorder %s9, 1
    %p69 = scmp.ne.s32.totalorder %s64, %s66
    %p70 = scmp.eq.s32.totalorder %s9, 0
    %p71 = por %p69, %p70
    %p72 = scmp.ne.s32.totalorder %s64, %s66
    %p73 = scmp.eq.s32.totalorder %s14, 1
    %p74 = por %p72, %p73
    %p75 = scmp.ne.s32.totalorder %s66, %s67
    %p76 = scmp.eq.s32.totalorder %s14, 0
    %p77 = por %p75, %p76
    %p78 = scmp.ne.s32.totalorder %s66, %s67
    %p79 = scmp.eq.s32.totalorder %s15, 1
    %p80 = por %p78, %p79
    %p82 = scmp.ne.s32.totalorder %s67, %s81
    %p83 = scmp.eq.s32.totalorder %s15, 0
    %p84 = por %p82, %p83
    %s85 = ssub.s32 %s9, %s16
    %p86 = scmp.eq.s32.totalorder %s85, 0
    %s88 = sadd.s32 %s87, 1
    %s89 = scalar_select %p86, %s87, %s88
    %p92 = pneg %p86
    %p93 = scmp.eq.s32.totalorder %s9, 1
    %p94 = por %p92, %p93
    %p95 = scmp.ne.s32.totalorder %s87, %s90
    %p96 = scmp.eq.s32.totalorder %s9, 0
    %p97 = por %p95, %p96
    %p98 = scmp.ne.s32.totalorder %s87, %s90
    %p99 = scmp.eq.s32.totalorder %s14, 1
    %p100 = por %p98, %p99
    %p101 = scmp.ne.s32.totalorder %s90, %s91
    %p102 = scmp.eq.s32.totalorder %s14, 0
    %p103 = por %p101, %p102
    %p104 = scmp.ne.s32.totalorder %s90, %s91
    %p105 = scmp.eq.s32.totalorder %s15, 1
    %p106 = por %p104, %p105
    %p108 = scmp.ne.s32.totalorder %s91, %s107
    %p109 = scmp.eq.s32.totalorder %s15, 0
    %p110 = por %p108, %p109
    %p111 = scmp.le.s32.totalorder 1, %s9
    %p112 = scmp.lt.s32.totalorder %s9, 3
    %p113 = pnand %p111, %p112
    %p114 = pneg %p113
    // Predicated region
    $region9: #{last_forward.13} parent=5 // pred_check
      _
    $region10: #{last_forward.13} parent=5 // pred_check_branch
      %116 = sbr.rel (%p113) target = $region12
    $region11: #{last_forward.13} parent=5 // pred_region
      %s117 = ssub.s32 %s9, 1
      // Predicated region
      $region13: #{last_forward.13} parent=11 // pred_check
        %p118 = pneg %p56
      $region14: #{last_forward.13} parent=11 // pred_check_branch
        %120 = sbr.rel (%p118) target = $region16
      $region15: #{last_forward.13} parent=11 // pred_region
        _
      $region16: #{last_forward.13} parent=11 // pred_fallthru
        _
      // Predicated region
      $region17: #{last_forward.13} parent=11 // pred_check
        %p121 = pneg %p77
      $region18: #{last_forward.13} parent=11 // pred_check_branch
        %123 = sbr.rel (%p121) target = $region20
      $region19: #{last_forward.13} parent=11 // pred_region
        _
      $region20: #{last_forward.13} parent=11 // pred_fallthru
        _
    $region12: #{last_forward.13} parent=5 // pred_fallthru
      _
    %p124 = scmp.lt.s32.totalorder %s9, 2
    // Predicated region
    $region21: #{last_forward.13} parent=5 // pred_check
      %p125 = pneg %p124
    $region22: #{last_forward.13} parent=5 // pred_check_branch
      %127 = sbr.rel (%p125) target = $region24
    $region23: #{last_forward.13} parent=5 // pred_region
      // Predicated region
      $region25: #{last_forward.13} parent=23 // pred_check
        %p128 = pneg %p29
      $region26: #{last_forward.13} parent=23 // pred_check_branch
        %130 = sbr.rel (%p128) target = $region28
      $region27: #{last_forward.13} parent=23 // pred_region
        %p131 = scmp.lt.s32.totalorder %s9, 1
        %s132 = scalar_select %p131, %s9, 1
        %s133 = smul.addr %s132, 20
        %s134 = smul.addr %s133, 4
        %s135 = scalar_lea.vmem %s0, %s134
      $region28: #{last_forward.13} parent=23 // pred_fallthru
        _
    $region24: #{last_forward.13} parent=5 // pred_fallthru
      _
    %p136 = scmp.le.s32.totalorder 1, %s9
    %p137 = scmp.lt.s32.totalorder %s9, 3
    %p138 = pnand %p136, %p137
    %p139 = pneg %p138
    // Predicated region
    $region29: #{last_forward.13} parent=5 // pred_check
      _
    $region30: #{last_forward.13} parent=5 // pred_check_branch
      %141 = sbr.rel (%p138) target = $region32
    $region31: #{last_forward.13} parent=5 // pred_region
      %s142 = ssub.s32 %s9, 1
      %p143 = scmp.lt.s32.totalorder %s14, 1
      %s144 = scalar_select %p143, %s14, 1
      %s145 = smul.addr %s144, 20
      %s146 = smul.addr %s145, 4
      %s147 = scalar_lea.vmem %s0, %s146
      %p148 = pneg %p35
      %p149 = pneg %p32
      %p150 = pneg %p56
      %p151 = pneg %p53
      %p152 = pneg %p77
      %p153 = pneg %p74
      %p154 = pneg %p103
      %p155 = pneg %p100
      %p156 = scmp.lt.s32.totalorder %s14, 1
      %s157 = scalar_select %p156, %s14, 1
      %s158 = smul.addr %s157, 20
      %s159 = smul.addr %s158, 4
      %s160 = scalar_lea.vmem %s3, %s159
      %p161 = scmp.lt.s32.totalorder %s14, 1
      %s162 = scalar_select %p161, %s14, 1
      %s163 = smul.addr %s162, 20
      %s164 = smul.addr %s163, 4
      %s165 = scalar_lea.vmem %s0, %s164
      %p166 = scmp.lt.s32.totalorder %s14, 1
      %s167 = scalar_select %p166, %s14, 1
      %s168 = smul.addr %s167, 20
      %s169 = smul.addr %s168, 4
      %s170 = scalar_lea.vmem %s3, %s169
      %v172 = vld [vmem:[%s165] sm:$0xf]
      %v173 = vld [vmem:[%s165 + $0x4] sm:$0x1]
      %v174 = vld [vmem:[%s165 + $0x8] sm:$0xf]
      %v175 = vld [vmem:[%s165 + $0xc] sm:$0x1]
      %v176 = vld [vmem:[%s165 + $0x10] sm:$0xf]
      %v177 = vld [vmem:[%s165 + $0x14] sm:$0x1]
      %v178 = vld [vmem:[%s165 + $0x18] sm:$0xf]
      %v179 = vld [vmem:[%s165 + $0x1c] sm:$0x1]
      %v180 = vld [vmem:[%s165 + $0x20] sm:$0xf]
      %v181 = vld [vmem:[%s165 + $0x24] sm:$0x1]
      %v182 = vld [vmem:[%s165 + $0x28] sm:$0xf]
      %v183 = vld [vmem:[%s165 + $0x2c] sm:$0x1]
      %v184 = vld [vmem:[%s165 + $0x30] sm:$0xf]
      %v185 = vld [vmem:[%s165 + $0x34] sm:$0x1]
      %v186 = vld [vmem:[%s165 + $0x38] sm:$0xf]
      %v187 = vld [vmem:[%s165 + $0x3c] sm:$0x1]
      %v188 = vld [vmem:[%s165 + $0x40] sm:$0xf]
      %v189 = vld [vmem:[%s165 + $0x44] sm:$0x1]
      %v190 = vld [vmem:[%s165 + $0x48] sm:$0xf]
      %v191 = vld [vmem:[%s165 + $0x4c] sm:$0x1]
      %v208 = vunpack.c.l.b16 %v172
      %v209 = vunpack.c.l.b16 %v173
      %v210 = vunpack.c.l.b16 %v174
      %v211 = vunpack.c.l.b16 %v175
      %v212 = vunpack.c.l.b16 %v176
      %v213 = vunpack.c.l.b16 %v177
      %v214 = vunpack.c.l.b16 %v178
      %v215 = vunpack.c.l.b16 %v179
      %v216 = vunpack.c.l.b16 %v180
      %v217 = vunpack.c.l.b16 %v181
      %v218 = vunpack.c.l.b16 %v182
      %v219 = vunpack.c.l.b16 %v183
      %v220 = vunpack.c.l.b16 %v184
      %v221 = vunpack.c.l.b16 %v185
      %v222 = vunpack.c.l.b16 %v186
      %v223 = vunpack.c.l.b16 %v187
      %v224 = vpack.c.b16 %v209, %v208
      %v225 = vpack.c.b16 %v211, %v210
      %v226 = vpack.c.b16 %v213, %v212
      %v227 = vpack.c.b16 %v215, %v214
      %v228 = vpack.c.b16 %v217, %v216
      %v229 = vpack.c.b16 %v219, %v218
      %v230 = vpack.c.b16 %v221, %v220
      %v231 = vpack.c.b16 %v223, %v222
      %v233 = vshrl.u32 %v224, 16
      %v235 = vshll.u32 %v224, 16
      %v237 = vrot.slane %v235, 1
      %v238 = vor.u32 %v233, %v237
      %v240 = vshrl.u32 %v225, 16
      %v242 = vshll.u32 %v225, 16
      %v244 = vrot.slane %v242, 1
      %v245 = vor.u32 %v240, %v244
      %v247 = vshrl.u32 %v226, 16
      %v249 = vshll.u32 %v226, 16
      %v251 = vrot.slane %v249, 1
      %v252 = vor.u32 %v247, %v251
      %v254 = vshrl.u32 %v227, 16
      %v256 = vshll.u32 %v227, 16
      %v258 = vrot.slane %v256, 1
      %v259 = vor.u32 %v254, %v258
      %v261 = vshrl.u32 %v228, 16
      %v263 = vshll.u32 %v228, 16
      %v265 = vrot.slane %v263, 1
      %v266 = vor.u32 %v261, %v265
      %v268 = vshrl.u32 %v229, 16
      %v270 = vshll.u32 %v229, 16
      %v272 = vrot.slane %v270, 1
      %v273 = vor.u32 %v268, %v272
      %v275 = vshrl.u32 %v230, 16
      %v277 = vshll.u32 %v230, 16
      %v279 = vrot.slane %v277, 1
      %v280 = vor.u32 %v275, %v279
      %v282 = vshrl.u32 %v231, 16
      %v284 = vshll.u32 %v231, 16
      %v286 = vrot.slane %v284, 1
      %v287 = vor.u32 %v282, %v286
      %288 = vrot.lane.b32.xlu0 %v238, 16
      %v289 = vpop.permute.xlu0 %288
      %290 = vrot.lane.b32.xlu0 %v245, 16
      %v291 = vpop.permute.xlu0 %290
      %292 = vrot.lane.b32.xlu0 %v252, 16
      %v293 = vpop.permute.xlu0 %292
      %294 = vrot.lane.b32.xlu0 %v259, 16
      %v295 = vpop.permute.xlu0 %294
      %296 = vrot.lane.b32.xlu0 %v266, 16
      %v297 = vpop.permute.xlu0 %296
      %298 = vrot.lane.b32.xlu0 %v273, 16
      %v299 = vpop.permute.xlu0 %298
      %300 = vrot.lane.b32.xlu0 %v280, 16
      %v301 = vpop.permute.xlu0 %300
      %302 = vrot.lane.b32.xlu0 %v287, 16
      %v303 = vpop.permute.xlu0 %302
      %v304 = vrot.slane %v224, 1
      %v305 = vrot.slane %v225, 1
      %v306 = vrot.slane %v226, 1
      %v307 = vrot.slane %v227, 1
      %v308 = vrot.slane %v228, 1
      %v309 = vrot.slane %v229, 1
      %v310 = vrot.slane %v230, 1
      %v311 = vrot.slane %v231, 1
      %312 = vrot.lane.b32.xlu0 %v304, 32
      %v313 = vpop.permute.xlu0 %312
      %314 = vrot.lane.b32.xlu0 %v305, 32
      %v315 = vpop.permute.xlu0 %314
      %316 = vrot.lane.b32.xlu0 %v306, 32
      %v317 = vpop.permute.xlu0 %316
      %318 = vrot.lane.b32.xlu0 %v307, 32
      %v319 = vpop.permute.xlu0 %318
      %320 = vrot.lane.b32.xlu0 %v308, 32
      %v321 = vpop.permute.xlu0 %320
      %322 = vrot.lane.b32.xlu0 %v309, 32
      %v323 = vpop.permute.xlu0 %322
      %324 = vrot.lane.b32.xlu0 %v310, 32
      %v325 = vpop.permute.xlu0 %324
      %326 = vrot.lane.b32.xlu0 %v311, 32
      %v327 = vpop.permute.xlu0 %326
      %v329 = vunpack.c.l.b16 %v188
      %v330 = vpack.c.b16 %v210, %v210
      %v331 = vpack.c.b16 %v212, %v212
      %v332 = vpack.c.b16 %v214, %v214
      %v333 = vpack.c.b16 %v216, %v216
      %v334 = vpack.c.b16 %v218, %v218
      %v335 = vpack.c.b16 %v220, %v220
      %v336 = vpack.c.b16 %v222, %v222
      %v337 = vpack.c.b16 %v329, %v329
      %338 = vrot.lane.b32.xlu0 %v330, 48
      %v339 = vpop.permute.xlu0 %338
      %340 = vrot.lane.b32.xlu0 %v331, 48
      %v341 = vpop.permute.xlu0 %340
      %342 = vrot.lane.b32.xlu0 %v332, 48
      %v343 = vpop.permute.xlu0 %342
      %344 = vrot.lane.b32.xlu0 %v333, 48
      %v345 = vpop.permute.xlu0 %344
      %346 = vrot.lane.b32.xlu0 %v334, 48
      %v347 = vpop.permute.xlu0 %346
      %348 = vrot.lane.b32.xlu0 %v335, 48
      %v349 = vpop.permute.xlu0 %348
      %350 = vrot.lane.b32.xlu0 %v336, 48
      %v351 = vpop.permute.xlu0 %350
      %352 = vrot.lane.b32.xlu0 %v337, 48
      %v353 = vpop.permute.xlu0 %352
      %v355 = vunpack.c.l.b16 %v189
      %v356 = vpack.c.b16 %v355, %v329
      %v358 = vshrl.u32 %v356, 16
      %v360 = vshll.u32 %v356, 16
      %v362 = vrot.slane %v360, 1
      %v363 = vor.u32 %v358, %v362
      %364 = vrot.lane.b32.xlu0 %v245, 64
      %v365 = vpop.permute.xlu0 %364
      %366 = vrot.lane.b32.xlu0 %v252, 64
      %v367 = vpop.permute.xlu0 %366
      %368 = vrot.lane.b32.xlu0 %v259, 64
      %v369 = vpop.permute.xlu0 %368
      %370 = vrot.lane.b32.xlu0 %v266, 64
      %v371 = vpop.permute.xlu0 %370
      %372 = vrot.lane.b32.xlu0 %v273, 64
      %v373 = vpop.permute.xlu0 %372
      %374 = vrot.lane.b32.xlu0 %v280, 64
      %v375 = vpop.permute.xlu0 %374
      %376 = vrot.lane.b32.xlu0 %v287, 64
      %v377 = vpop.permute.xlu0 %376
      %378 = vrot.lane.b32.xlu0 %v363, 64
      %v379 = vpop.permute.xlu0 %378
      %v380 = vrot.slane %v356, 1
      %381 = vrot.lane.b32.xlu0 %v305, 80
      %v382 = vpop.permute.xlu0 %381
      %383 = vrot.lane.b32.xlu0 %v306, 80
      %v384 = vpop.permute.xlu0 %383
      %385 = vrot.lane.b32.xlu0 %v307, 80
      %v386 = vpop.permute.xlu0 %385
      %387 = vrot.lane.b32.xlu0 %v308, 80
      %v388 = vpop.permute.xlu0 %387
      %389 = vrot.lane.b32.xlu0 %v309, 80
      %v390 = vpop.permute.xlu0 %389
      %391 = vrot.lane.b32.xlu0 %v310, 80
      %v392 = vpop.permute.xlu0 %391
      %393 = vrot.lane.b32.xlu0 %v311, 80
      %v394 = vpop.permute.xlu0 %393
      %395 = vrot.lane.b32.xlu0 %v380, 80
      %v396 = vpop.permute.xlu0 %395
      %v398 = vunpack.c.l.b16 %v190
      %v399 = vpack.c.b16 %v398, %v398
      %400 = vrot.lane.b32.xlu0 %v331, 96
      %v401 = vpop.permute.xlu0 %400
      %402 = vrot.lane.b32.xlu0 %v332, 96
      %v403 = vpop.permute.xlu0 %402
      %404 = vrot.lane.b32.xlu0 %v333, 96
      %v405 = vpop.permute.xlu0 %404
      %406 = vrot.lane.b32.xlu0 %v334, 96
      %v407 = vpop.permute.xlu0 %406
      %408 = vrot.lane.b32.xlu0 %v335, 96
      %v409 = vpop.permute.xlu0 %408
      %410 = vrot.lane.b32.xlu0 %v336, 96
      %v411 = vpop.permute.xlu0 %410
      %412 = vrot.lane.b32.xlu0 %v337, 96
      %v413 = vpop.permute.xlu0 %412
      %414 = vrot.lane.b32.xlu0 %v399, 96
      %v415 = vpop.permute.xlu0 %414
      %v417 = vunpack.c.l.b16 %v191
      %v418 = vpack.c.b16 %v417, %v398
      %v420 = vshrl.u32 %v418, 16
      %v422 = vshll.u32 %v418, 16
      %v424 = vrot.slane %v422, 1
      %v425 = vor.u32 %v420, %v424
      %426 = vrot.lane.b32.xlu0 %v252, 112
      %v427 = vpop.permute.xlu0 %426
      %428 = vrot.lane.b32.xlu0 %v259, 112
      %v429 = vpop.permute.xlu0 %428
      %430 = vrot.lane.b32.xlu0 %v266, 112
      %v431 = vpop.permute.xlu0 %430
      %432 = vrot.lane.b32.xlu0 %v273, 112
      %v433 = vpop.permute.xlu0 %432
      %434 = vrot.lane.b32.xlu0 %v280, 112
      %v435 = vpop.permute.xlu0 %434
      %436 = vrot.lane.b32.xlu0 %v287, 112
      %v437 = vpop.permute.xlu0 %436
      %438 = vrot.lane.b32.xlu0 %v363, 112
      %v439 = vpop.permute.xlu0 %438
      %440 = vrot.lane.b32.xlu0 %v425, 112
      %v441 = vpop.permute.xlu0 %440
      %v442 = vrot.slane %v418, 1
      %vm443 = vcmask 130048
      %v446 = vsel %vm443, %v172, %v289
      %v449 = vsel %vm443, %v174, %v291
      %v452 = vsel %vm443, %v176, %v293
      %v455 = vsel %vm443, %v178, %v295
      %v458 = vsel %vm443, %v180, %v297
      %v461 = vsel %vm443, %v182, %v299
      %v464 = vsel %vm443, %v184, %v301
      %v467 = vsel %vm443, %v186, %v303
      %vm468 = vcmask 261120
      %v470 = vsel %vm468, %v446, %v313
      %v472 = vsel %vm468, %v449, %v315
      %v474 = vsel %vm468, %v452, %v317
      %v476 = vsel %vm468, %v455, %v319
      %v478 = vsel %vm468, %v458, %v321
      %v480 = vsel %vm468, %v461, %v323
      %v482 = vsel %vm468, %v464, %v325
      %v484 = vsel %vm468, %v467, %v327
      %vm485 = vcmask 392192
      %v487 = vsel %vm485, %v470, %v339
      %v489 = vsel %vm485, %v472, %v341
      %v491 = vsel %vm485, %v474, %v343
      %v493 = vsel %vm485, %v476, %v345
      %v495 = vsel %vm485, %v478, %v347
      %v497 = vsel %vm485, %v480, %v349
      %v499 = vsel %vm485, %v482, %v351
      %v501 = vsel %vm485, %v484, %v353
      %vm502 = vcmask 523264
      %v504 = vsel %vm502, %v487, %v365
      %v506 = vsel %vm502, %v489, %v367
      %v508 = vsel %vm502, %v491, %v369
      %v510 = vsel %vm502, %v493, %v371
      %v512 = vsel %vm502, %v495, %v373
      %v514 = vsel %vm502, %v497, %v375
      %v516 = vsel %vm502, %v499, %v377
      %v518 = vsel %vm502, %v501, %v379
      %vm519 = vcmask 654336
      %v521 = vsel %vm519, %v504, %v382
      %v523 = vsel %vm519, %v506, %v384
      %v525 = vsel %vm519, %v508, %v386
      %v527 = vsel %vm519, %v510, %v388
      %v529 = vsel %vm519, %v512, %v390
      %v531 = vsel %vm519, %v514, %v392
      %v533 = vsel %vm519, %v516, %v394
      %v535 = vsel %vm519, %v518, %v396
      %vm536 = vcmask 785408
      %v538 = vsel %vm536, %v521, %v401
      %v540 = vsel %vm536, %v523, %v403
      %v542 = vsel %vm536, %v525, %v405
      %v544 = vsel %vm536, %v527, %v407
      %v546 = vsel %vm536, %v529, %v409
      %v548 = vsel %vm536, %v531, %v411
      %v550 = vsel %vm536, %v533, %v413
      %v552 = vsel %vm536, %v535, %v415
      %vm553 = vcmask 916480
      %v555 = vsel %vm553, %v538, %v427
      %v557 = vsel %vm553, %v540, %v429
      %v559 = vsel %vm553, %v542, %v431
      %v561 = vsel %vm553, %v544, %v433
      %v563 = vsel %vm553, %v546, %v435
      %v565 = vsel %vm553, %v548, %v437
      %v567 = vsel %vm553, %v550, %v439
      %v569 = vsel %vm553, %v552, %v441
      %v578 = vunpack.c.l.b16 %v555
      %v579 = vunpack.c.l.b16 %v306
      %v580 = vunpack.c.l.b16 %v557
      %v581 = vunpack.c.l.b16 %v307
      %v582 = vunpack.c.l.b16 %v559
      %v583 = vunpack.c.l.b16 %v308
      %v584 = vunpack.c.l.b16 %v561
      %v585 = vunpack.c.l.b16 %v309
      %v586 = vunpack.c.l.b16 %v563
      %v587 = vunpack.c.l.b16 %v310
      %v588 = vunpack.c.l.b16 %v565
      %v589 = vunpack.c.l.b16 %v311
      %v590 = vunpack.c.l.b16 %v567
      %v591 = vunpack.c.l.b16 %v380
      %v592 = vunpack.c.l.b16 %v569
      %v593 = vunpack.c.l.b16 %v442
      %v594 = vld [vmem:[%s1] sm:$0xf]
      %v595 = vld [vmem:[%s1 + $0x4] sm:$0xf]
      %v596 = vld [vmem:[%s1 + $0x8] sm:$0xf]
      %v597 = vld [vmem:[%s1 + $0xc] sm:$0xf]
      %v598 = vld [vmem:[%s1 + $0x10] sm:$0xf]
      %v599 = vld [vmem:[%s1 + $0x14] sm:$0xf]
      %v600 = vld [vmem:[%s1 + $0x18] sm:$0xf]
      %v601 = vld [vmem:[%s1 + $0x1c] sm:$0xf]
      %v602 = vld [vmem:[%s1 + $0x20] sm:$0xf]
      %v603 = vld [vmem:[%s1 + $0x24] sm:$0xf]
      %v604 = vld [vmem:[%s1 + $0x28] sm:$0xf]
      %v605 = vld [vmem:[%s1 + $0x2c] sm:$0xf]
      %v606 = vld [vmem:[%s1 + $0x30] sm:$0xf]
      %v607 = vld [vmem:[%s1 + $0x34] sm:$0xf]
      %v608 = vld [vmem:[%s1 + $0x38] sm:$0xf]
      %v609 = vld [vmem:[%s1 + $0x3c] sm:$0xf]
      %v610 = vld [vmem:[%s1 + $0x40] sm:$0xf]
      %v611 = vld [vmem:[%s1 + $0x44] sm:$0xf]
      %v612 = vld [vmem:[%s2] sm:$0x1]
      %v614 = vlaneseq
      %v615 = vshrl.u32 %v614, 7
      %v616 = vsub.s32 0, %v615
      %v617 = vrot.slane %v612, %v616
      %v619 = vpack.c.b16 %v580, %v578
      %v620 = vpack.c.b16 %v581, %v579
      %v621 = vpack.c.b16 %v584, %v582
      %v622 = vpack.c.b16 %v585, %v583
      %v623 = vpack.c.b16 %v588, %v586
      %v624 = vpack.c.b16 %v589, %v587
      %v625 = vpack.c.b16 %v592, %v590
      %v626 = vpack.c.b16 %v593, %v591
      %v649 = vunpack.c.l.b16 %v594
      %v650 = vunpack.c.l.b16 %v595
      %v651 = vunpack.c.l.b16 %v596
      %v652 = vunpack.c.l.b16 %v597
      %v653 = vunpack.c.l.b16 %v598
      %v654 = vunpack.c.l.b16 %v599
      %v655 = vunpack.c.l.b16 %v600
      %v656 = vunpack.c.l.b16 %v601
      %v657 = vunpack.c.l.b16 %v602
      %v658 = vunpack.c.l.b16 %v603
      %v659 = vunpack.c.l.b16 %v604
      %v660 = vunpack.c.l.b16 %v605
      %v661 = vunpack.c.l.b16 %v606
      %v662 = vunpack.c.l.b16 %v607
      %v663 = vunpack.c.l.b16 %v608
      %v664 = vunpack.c.l.b16 %v609
      %v665 = vunpack.c.l.b16 %v610
      %v666 = vunpack.c.l.b16 %v611
      %v667 = vpack.c.b16 %v650, %v649
      %v668 = vpack.c.b16 %v652, %v651
      %v669 = vpack.c.b16 %v654, %v653
      %v670 = vpack.c.b16 %v656, %v655
      %v671 = vpack.c.b16 %v658, %v657
      %v672 = vpack.c.b16 %v660, %v659
      %v673 = vpack.c.b16 %v662, %v661
      %v674 = vpack.c.b16 %v664, %v663
      %v675 = vpack.c.b16 %v666, %v665
      %v686 = vsel %vm443, %v620, 0
      %v689 = vsel %vm443, %v622, 0
      %v692 = vsel %vm443, %v624, 0
      %v695 = vsel %vm443, %v626, 0
      %697 = vmatprep.subr.bf16.mxu0 0
      %698 = vmatpush1.bf16.msra.mxu0 %v667
      %699 = vmatprep.subr.bf16.mxu0 0
      %700 = vmatpush1.bf16.msra.mxu0 %v668
      %701 = vmatprep.subr.bf16.mxu0 0
      %702 = vmatpush1.bf16.msra.mxu0 %v669
      %703 = vmatprep.subr.bf16.mxu0 0
      %704 = vmatpush1.bf16.msra.mxu0 %v670
      %705 = vmatprep.subr.bf16.mxu0 0
      %706 = vmatpush1.bf16.msra.mxu0 %v671
      %707 = vmatprep.subr.bf16.mxu0 0
      %708 = vmatpush1.bf16.msra.mxu0 %v672
      %709 = vmatprep.subr.bf16.mxu0 0
      %710 = vmatpush1.bf16.msra.mxu0 %v673
      %711 = vmatprep.subr.bf16.mxu0 0
      %712 = vmatpush1.bf16.msra.mxu0 %v674
      %713 = vmatprep.subr.bf16.mxu0 0
      %714 = vmatpush1.bf16.msra.mxu0 %v675
      %715 = vmatprep.subr.bf16.mxu0 0
      %716 = vmatpush1.bf16.msra.mxu0 0
      %717 = vmatprep.subr.bf16.mxu0 0
      %718 = vmatpush1.bf16.msra.mxu0 0
      %719 = vmatprep.subr.bf16.mxu0 0
      %720 = vmatpush1.bf16.msra.mxu0 0
      %721 = vmatprep.subr.bf16.mxu0 0
      %722 = vmatpush1.bf16.msra.mxu0 0
      %723 = vmatprep.subr.bf16.mxu0 0
      %724 = vmatpush1.bf16.msra.mxu0 0
      %725 = vmatprep.subr.bf16.mxu0 0
      %726 = vmatpush1.bf16.msra.mxu0 0
      %727 = vmatprep.subr.bf16.mxu0 0
      %728 = vmatpush1.bf16.msra.mxu0 0
      %729 = vmatprep.mubr.bf16.mxu0 %v686
      %730 = vmatmul.mubr.bf16.gmra.mrb[0].mxu0 %v619
      %v731 = vpop.f32.mrb[0].mxu0
      %v732 = vadd.f32 %v617, %v731
      %v733 = vpop.f32.mrb[0].mxu0
      %v734 = vpop.f32.mrb[0].mxu0
      %v735 = vadd.f32 %v617, %v734
      %v736 = vpop.f32.mrb[0].mxu0
      %737 = vmatprep.mubr.bf16.mxu0 %v689
      %738 = vmatmul.mubr.bf16.gmra.mrb[0].mxu0 %v621
      %v739 = vpop.f32.mrb[0].mxu0
      %v740 = vadd.f32 %v617, %v739
      %v741 = vpop.f32.mrb[0].mxu0
      %v742 = vpop.f32.mrb[0].mxu0
      %v743 = vadd.f32 %v617, %v742
      %v744 = vpop.f32.mrb[0].mxu0
      %745 = vmatprep.mubr.bf16.mxu0 %v692
      %746 = vmatmul.mubr.bf16.gmra.mrb[0].mxu0 %v623
      %v747 = vpop.f32.mrb[0].mxu0
      %v748 = vadd.f32 %v617, %v747
      %v749 = vpop.f32.mrb[0].mxu0
      %v750 = vpop.f32.mrb[0].mxu0
      %v751 = vadd.f32 %v617, %v750
      %v752 = vpop.f32.mrb[0].mxu0
      %753 = vmatprep.mubr.bf16.mxu0 %v695
      %754 = vmatmul.mubr.bf16.gmra.mrb[0].mxu0 %v625
      %v755 = vpop.f32.mrb[0].mxu0
      %v756 = vadd.f32 %v617, %v755
      %v757 = vpop.f32.mrb[0].mxu0
      %v758 = vpop.f32.mrb[0].mxu0
      %v759 = vadd.f32 %v617, %v758
      %v760 = vpop.f32.mrb[0].mxu0
      %761 = vdwg.mxu0
      %v762 = vmax.f32 %v732, 0.0
      %v763 = vmax.f32 %v735, 0.0
      %v764 = vmax.f32 %v740, 0.0
      %v765 = vmax.f32 %v743, 0.0
      %v766 = vmax.f32 %v748, 0.0
      %v767 = vmax.f32 %v751, 0.0
      %v768 = vmax.f32 %v756, 0.0
      %v769 = vmax.f32 %v759, 0.0
      %v770 = vpack.c.bf16 %v763, %v762
      %v771 = vpack.c.bf16 %v765, %v764
      %v772 = vpack.c.bf16 %v767, %v766
      %v773 = vpack.c.bf16 %v769, %v768
      %v778 = vunpack.c.l.b16 %v770
      %v779 = vunpack.c.h.b16 %v770
      %v780 = vunpack.c.l.b16 %v771
      %v781 = vunpack.c.h.b16 %v771
      %v782 = vunpack.c.l.b16 %v772
      %v783 = vunpack.c.h.b16 %v772
      %v784 = vunpack.c.l.b16 %v773
      %v785 = vunpack.c.h.b16 %v773
      %vm786 = vcmask 191488
      %787 = vst.msk [vmem:[%s170] sm:$0xf] %vm786, 0
      %vm788 = vcmask 188416
      %789 = vst.msk [vmem:[%s170 + $0x4] sm:$0x1] %vm788, 0
      %790 = vst.msk [vmem:[%s170 + $0x8] sm:$0xf] %vm786, 0
      %791 = vst.msk [vmem:[%s170 + $0xc] sm:$0x1] %vm788, 0
      %792 = vst.msk [vmem:[%s170 + $0x10] sm:$0xf] %vm786, 0
      %793 = vst.msk [vmem:[%s170 + $0x14] sm:$0x1] %vm788, 0
      %794 = vst.msk [vmem:[%s170 + $0x18] sm:$0xf] %vm786, 0
      %795 = vst.msk [vmem:[%s170 + $0x1c] sm:$0x1] %vm788, 0
      %796 = vst.msk [vmem:[%s170 + $0x20] sm:$0xf] %vm786, 0
      %797 = vst.msk [vmem:[%s170 + $0x24] sm:$0x1] %vm788, 0
      %798 = vst.msk [vmem:[%s170 + $0x28] sm:$0xf] %vm786, 0
      %799 = vst.msk [vmem:[%s170 + $0x2c] sm:$0x1] %vm788, 0
      %800 = vst.msk [vmem:[%s170 + $0x30] sm:$0xf] %vm786, 0
      %801 = vst.msk [vmem:[%s170 + $0x34] sm:$0x1] %vm788, 0
      %802 = vst.msk [vmem:[%s170 + $0x38] sm:$0xf] %vm786, 0
      %803 = vst.msk [vmem:[%s170 + $0x3c] sm:$0x1] %vm788, 0
      %804 = vst.msk [vmem:[%s170 + $0x40] sm:$0xf] %vm786, 0
      %805 = vst.msk [vmem:[%s170 + $0x44] sm:$0x1] %vm788, 0
      %806 = vst.msk [vmem:[%s170 + $0x48] sm:$0xf] %vm786, 0
      %807 = vst.msk [vmem:[%s170 + $0x4c] sm:$0x1] %vm788, 0
      %v808 = vpack.c.b16 %v778, %v778
      %v809 = vpack.c.b16 %v779, %v779
      %v810 = vpack.c.b16 %v780, %v780
      %v811 = vpack.c.b16 %v781, %v781
      %v812 = vpack.c.b16 %v782, %v782
      %v813 = vpack.c.b16 %v783, %v783
      %v814 = vpack.c.b16 %v784, %v784
      %v815 = vpack.c.b16 %v785, %v785
      %v817 = vshrl.u32 %v808, 16
      %v819 = vrot.slane %v817, 7
      %v820 = vshll.u32 %v808, 16
      %v822 = vor.u32 %v819, %v820
      %v824 = vshrl.u32 %v809, 16
      %v826 = vrot.slane %v824, 7
      %v827 = vshll.u32 %v809, 16
      %v829 = vor.u32 %v826, %v827
      %v831 = vshrl.u32 %v810, 16
      %v833 = vrot.slane %v831, 7
      %v834 = vshll.u32 %v810, 16
      %v836 = vor.u32 %v833, %v834
      %v838 = vshrl.u32 %v811, 16
      %v840 = vrot.slane %v838, 7
      %v841 = vshll.u32 %v811, 16
      %v843 = vor.u32 %v840, %v841
      %v845 = vshrl.u32 %v812, 16
      %v847 = vrot.slane %v845, 7
      %v848 = vshll.u32 %v812, 16
      %v850 = vor.u32 %v847, %v848
      %v852 = vshrl.u32 %v813, 16
      %v854 = vrot.slane %v852, 7
      %v855 = vshll.u32 %v813, 16
      %v857 = vor.u32 %v854, %v855
      %v859 = vshrl.u32 %v814, 16
      %v861 = vrot.slane %v859, 7
      %v862 = vshll.u32 %v814, 16
      %v864 = vor.u32 %v861, %v862
      %v866 = vshrl.u32 %v815, 16
      %v868 = vrot.slane %v866, 7
      %v869 = vshll.u32 %v815, 16
      %v871 = vor.u32 %v868, %v869
      %872 = vrot.lane.b32.xlu0 %v822, 16
      %v873 = vpop.permute.xlu0 %872
      %874 = vrot.lane.b32.xlu0 %v829, 16
      %v875 = vpop.permute.xlu0 %874
      %876 = vrot.lane.b32.xlu0 %v836, 16
      %v877 = vpop.permute.xlu0 %876
      %878 = vrot.lane.b32.xlu0 %v843, 16
      %v879 = vpop.permute.xlu0 %878
      %880 = vrot.lane.b32.xlu0 %v850, 16
      %v881 = vpop.permute.xlu0 %880
      %882 = vrot.lane.b32.xlu0 %v857, 16
      %v883 = vpop.permute.xlu0 %882
      %884 = vrot.lane.b32.xlu0 %v864, 16
      %v885 = vpop.permute.xlu0 %884
      %886 = vrot.lane.b32.xlu0 %v871, 16
      %v887 = vpop.permute.xlu0 %886
      %v889 = vsel %vm443, %v225, %v873
      %v891 = vsel %vm443, %v226, %v875
      %v893 = vsel %vm443, %v227, %v877
      %v895 = vsel %vm443, %v228, %v879
      %v897 = vsel %vm443, %v229, %v881
      %v899 = vsel %vm443, %v230, %v883
      %v901 = vsel %vm443, %v231, %v885
      %v903 = vsel %vm443, %v356, %v887
      %v912 = vunpack.c.l.b16 %v889
      %v913 = vunpack.c.h.b16 %v889
      %v914 = vunpack.c.l.b16 %v891
      %v915 = vunpack.c.h.b16 %v891
      %v916 = vunpack.c.l.b16 %v893
      %v917 = vunpack.c.h.b16 %v893
      %v918 = vunpack.c.l.b16 %v895
      %v919 = vunpack.c.h.b16 %v895
      %v920 = vunpack.c.l.b16 %v897
      %v921 = vunpack.c.h.b16 %v897
      %v922 = vunpack.c.l.b16 %v899
      %v923 = vunpack.c.h.b16 %v899
      %v924 = vunpack.c.l.b16 %v901
      %v925 = vunpack.c.h.b16 %v901
      %v926 = vunpack.c.l.b16 %v903
      %v927 = vunpack.c.h.b16 %v903
      %v928 = vpack.c.b16 %v912, %v912
      %v929 = vpack.c.b16 %v913, %v913
      %v930 = vpack.c.b16 %v914, %v914
      %v931 = vpack.c.b16 %v915, %v915
      %v932 = vpack.c.b16 %v916, %v916
      %v933 = vpack.c.b16 %v917, %v917
      %v934 = vpack.c.b16 %v918, %v918
      %v935 = vpack.c.b16 %v919, %v919
      %v936 = vpack.c.b16 %v920, %v920
      %v937 = vpack.c.b16 %v921, %v921
      %v938 = vpack.c.b16 %v922, %v922
      %v939 = vpack.c.b16 %v923, %v923
      %v940 = vpack.c.b16 %v924, %v924
      %v941 = vpack.c.b16 %v925, %v925
      %v942 = vpack.c.b16 %v926, %v926
      %v943 = vpack.c.b16 %v927, %v927
      %s960 = scalar_lea.vmem %s170, 8
      %vm961 = vcmask 191488
      %vm962 = vsmask.f32 7938
      %vm963 = vmand %vm961, %vm962
      %v964 = vld [vmem:[%s960] sm:$0xf]
      %v965 = vsel %vm963, %v928, %v964
      %966 = vst [vmem:[%s960] sm:$0xf] %v965
      %vm967 = vcmask 188416
      %vm968 = vsmask.f32 256
      %vm969 = vmand %vm967, %vm968
      %v970 = vld [vmem:[%s960 + $0x4] sm:$0x1]
      %v971 = vsel %vm969, %v929, %v970
      %972 = vst [vmem:[%s960 + $0x4] sm:$0x1] %v971
      %v973 = vld [vmem:[%s960 + $0x8] sm:$0xf]
      %v974 = vsel %vm963, %v930, %v973
      %975 = vst [vmem:[%s960 + $0x8] sm:$0xf] %v974
      %v976 = vld [vmem:[%s960 + $0xc] sm:$0x1]
      %v977 = vsel %vm969, %v931, %v976
      %978 = vst [vmem:[%s960 + $0xc] sm:$0x1] %v977
      %v979 = vld [vmem:[%s960 + $0x10] sm:$0xf]
      %v980 = vsel %vm963, %v932, %v979
      %981 = vst [vmem:[%s960 + $0x10] sm:$0xf] %v980
      %v982 = vld [vmem:[%s960 + $0x14] sm:$0x1]
      %v983 = vsel %vm969, %v933, %v982
      %984 = vst [vmem:[%s960 + $0x14] sm:$0x1] %v983
      %v985 = vld [vmem:[%s960 + $0x18] sm:$0xf]
      %v986 = vsel %vm963, %v934, %v985
      %987 = vst [vmem:[%s960 + $0x18] sm:$0xf] %v986
      %v988 = vld [vmem:[%s960 + $0x1c] sm:$0x1]
      %v989 = vsel %vm969, %v935, %v988
      %990 = vst [vmem:[%s960 + $0x1c] sm:$0x1] %v989
      %v991 = vld [vmem:[%s960 + $0x20] sm:$0xf]
      %v992 = vsel %vm963, %v936, %v991
      %993 = vst [vmem:[%s960 + $0x20] sm:$0xf] %v992
      %v994 = vld [vmem:[%s960 + $0x24] sm:$0x1]
      %v995 = vsel %vm969, %v937, %v994
      %996 = vst [vmem:[%s960 + $0x24] sm:$0x1] %v995
      %v997 = vld [vmem:[%s960 + $0x28] sm:$0xf]
      %v998 = vsel %vm963, %v938, %v997
      %999 = vst [vmem:[%s960 + $0x28] sm:$0xf] %v998
      %v1000 = vld [vmem:[%s960 + $0x2c] sm:$0x1]
      %v1001 = vsel %vm969, %v939, %v1000
      %1002 = vst [vmem:[%s960 + $0x2c] sm:$0x1] %v1001
      %v1003 = vld [vmem:[%s960 + $0x30] sm:$0xf]
      %v1004 = vsel %vm963, %v940, %v1003
      %1005 = vst [vmem:[%s960 + $0x30] sm:$0xf] %v1004
      %v1006 = vld [vmem:[%s960 + $0x34] sm:$0x1]
      %v1007 = vsel %vm969, %v941, %v1006
      %1008 = vst [vmem:[%s960 + $0x34] sm:$0x1] %v1007
      %v1009 = vld [vmem:[%s960 + $0x38] sm:$0xf]
      %v1010 = vsel %vm963, %v942, %v1009
      %1011 = vst [vmem:[%s960 + $0x38] sm:$0xf] %v1010
      %v1012 = vld [vmem:[%s960 + $0x3c] sm:$0x1]
      %v1013 = vsel %vm969, %v943, %v1012
      %1014 = vst [vmem:[%s960 + $0x3c] sm:$0x1] %v1013
      %p1015 = scmp.lt.s32.totalorder %s14, 1
      %s1016 = scalar_select %p1015, %s14, 1
      %s1017 = smul.addr %s1016, 20
      %s1018 = smul.addr %s1017, 4
      %s1019 = scalar_lea.vmem %s3, %s1018
      // Predicated region
      $region33: #{last_forward.13} parent=31 // pred_check
        %p1020 = pneg %p100
      $region34: #{last_forward.13} parent=31 // pred_check_branch
        %1022 = sbr.rel (%p1020) target = $region36
      $region35: #{last_forward.13} parent=31 // pred_region
        _
      $region36: #{last_forward.13} parent=31 // pred_fallthru
        _
    $region32: #{last_forward.13} parent=5 // pred_fallthru
      _
    %p1023 = scmp.le.s32.totalorder 2, %s9
    // Predicated region
    $region37: #{last_forward.13} parent=5 // pred_check
      %p1024 = pneg %p1023
    $region38: #{last_forward.13} parent=5 // pred_check_branch
      %1026 = sbr.rel (%p1024) target = $region40
    $region39: #{last_forward.13} parent=5 // pred_region
      %s1027 = ssub.s32 %s9, 2
      // Predicated region
      $region41: #{last_forward.13} parent=39 // pred_check
        %p1028 = pneg %p106
      $region42: #{last_forward.13} parent=39 // pred_check_branch
        %1030 = sbr.rel (%p1028) target = $region44
      $region43: #{last_forward.13} parent=39 // pred_region
        %p1031 = scmp.lt.s32.totalorder %s15, 1
        %s1032 = scalar_select %p1031, %s15, 1
        %s1033 = smul.addr %s1032, 20
        %s1034 = smul.addr %s1033, 4
        %s1035 = scalar_lea.vmem %s3, %s1034
      $region44: #{last_forward.13} parent=39 // pred_fallthru
        _
    $region40: #{last_forward.13} parent=5 // pred_fallthru
      _
  $region6: #{last_forward.13} parent=0 // loop_footer
    %s13 = sadd.s32 1, %s9
  $region7: #{last_forward.13} parent=0 // loop_footer_branch
    %8 = sbr.rel target = $region3
  $region8: #{last_forward.13} parent=0 // loop_exit
    _

// kernel: last_forward.14
$region0: #{last_forward.14}
  #allocation0 [shape = 'u32[]', space=smem, size = 0x4, offset = 0x4, fixed_abs, tag = 'smem constant byte address 0x4 - core index']
  #allocation1 [shape = 'u32[144,128]{1,0:T(1,128)}', space=vmem, size = 0x12000, scoped, tag = 'internal scratch']
  %s0 = inlined_call_operand.vmem [shape: bf16[2,10,10,24], index: 0, kind: input, shape index: {}]
  %s1 = inlined_call_operand.vmem [shape: bf16[216,8], index: 1, kind: input, shape index: {}]
  %s2 = inlined_call_operand.vmem [shape: f32[1,8], index: 2, kind: input, shape index: {}]
  %s3 = inlined_call_operand.vmem [shape: bf16[2,10,10,32], index: 3, kind: output, shape index: {}]
  %s4 = sld [smem:[#allocation0]]
  $region45: #{last_forward.14} parent=0
    _
  %s6 = ssub.s32 1, %s4
  %s7 = scalar_select 0, %s6, %s4
  loop: start=0, step=1, limit=4
  $region2: #{last_forward.14} parent=0 // loop_pre_header
    _
  $region3: #{last_forward.14} parent=0 // loop_header
    %s9 = sphi 0, %s13
    %p10 = scmp.ge.s32.totalorder %s9, 4
    %s19 = sphi 0, %s21
    %s22 = sphi 0, %s19
    %s23 = sphi 0, %s22
    %s39 = sphi 0, %s23
    %s43 = sphi 0, %s43
    %s45 = sphi 0, %s43
    %s46 = sphi 0, %s45
    %s60 = sphi 0, %s46
    %s64 = sphi 0, %s64
    %s66 = sphi 0, %s64
    %s67 = sphi 0, %s66
    %s81 = sphi 0, %s67
    %s87 = sphi 0, %s89
    %s90 = sphi 0, %s87
    %s91 = sphi 0, %s90
    %s107 = sphi 0, %s91
  $region4: #{last_forward.14} parent=0 // loop_header_branch
    %12 = sbr.rel (%p10) target = $region8
  $region5: #{last_forward.14} parent=0 // loop_body
    %s14 = ssub.s32 %s9, 1
    %s15 = ssub.s32 %s9, 2
    %s16 = sadd.s32 %s9, 1
    %s17 = ssub.s32 %s9, %s16
    %p18 = scmp.eq.s32.totalorder %s17, 0
    %s20 = sadd.s32 %s19, 1
    %s21 = scalar_select %p18, %s19, %s20
    %p24 = pneg %p18
    %p25 = scmp.eq.s32.totalorder %s9, 1
    %p26 = por %p24, %p25
    %p27 = scmp.ne.s32.totalorder %s19, %s22
    %p28 = scmp.eq.s32.totalorder %s9, 0
    %p29 = por %p27, %p28
    %p30 = scmp.ne.s32.totalorder %s19, %s22
    %p31 = scmp.eq.s32.totalorder %s14, 1
    %p32 = por %p30, %p31
    %p33 = scmp.ne.s32.totalorder %s22, %s23
    %p34 = scmp.eq.s32.totalorder %s14, 0
    %p35 = por %p33, %p34
    %p36 = scmp.ne.s32.totalorder %s22, %s23
    %p37 = scmp.eq.s32.totalorder %s15, 1
    %p38 = por %p36, %p37
    %p40 = scmp.ne.s32.totalorder %s23, %s39
    %p41 = scmp.eq.s32.totalorder %s15, 0
    %p42 = por %p40, %p41
    %s44 = sadd.s32 %s43, 1
    %p47 = scmp.eq.s32.totalorder %s9, 1
    %p48 = scmp.ne.s32.totalorder %s43, %s45
    %p49 = scmp.eq.s32.totalorder %s9, 0
    %p50 = por %p48, %p49
    %p51 = scmp.ne.s32.totalorder %s43, %s45
    %p52 = scmp.eq.s32.totalorder %s14, 1
    %p53 = por %p51, %p52
    %p54 = scmp.ne.s32.totalorder %s45, %s46
    %p55 = scmp.eq.s32.totalorder %s14, 0
    %p56 = por %p54, %p55
    %p57 = scmp.ne.s32.totalorder %s45, %s46
    %p58 = scmp.eq.s32.totalorder %s15, 1
    %p59 = por %p57, %p58
    %p61 = scmp.ne.s32.totalorder %s46, %s60
    %p62 = scmp.eq.s32.totalorder %s15, 0
    %p63 = por %p61, %p62
    %s65 = sadd.s32 %s64, 1
    %p68 = scmp.eq.s32.totalorder %s9, 1
    %p69 = scmp.ne.s32.totalorder %s64, %s66
    %p70 = scmp.eq.s32.totalorder %s9, 0
    %p71 = por %p69, %p70
    %p72 = scmp.ne.s32.totalorder %s64, %s66
    %p73 = scmp.eq.s32.totalorder %s14, 1
    %p74 = por %p72, %p73
    %p75 = scmp.ne.s32.totalorder %s66, %s67
    %p76 = scmp.eq.s32.totalorder %s14, 0
    %p77 = por %p75, %p76
    %p78 = scmp.ne.s32.totalorder %s66, %s67
    %p79 = scmp.eq.s32.totalorder %s15, 1
    %p80 = por %p78, %p79
    %p82 = scmp.ne.s32.totalorder %s67, %s81
    %p83 = scmp.eq.s32.totalorder %s15, 0
    %p84 = por %p82, %p83
    %s85 = ssub.s32 %s9, %s16
    %p86 = scmp.eq.s32.totalorder %s85, 0
    %s88 = sadd.s32 %s87, 1
    %s89 = scalar_select %p86, %s87, %s88
    %p92 = pneg %p86
    %p93 = scmp.eq.s32.totalorder %s9, 1
    %p94 = por %p92, %p93
    %p95 = scmp.ne.s32.totalorder %s87, %s90
    %p96 = scmp.eq.s32.totalorder %s9, 0
    %p97 = por %p95, %p96
    %p98 = scmp.ne.s32.totalorder %s87, %s90
    %p99 = scmp.eq.s32.totalorder %s14, 1
    %p100 = por %p98, %p99
    %p101 = scmp.ne.s32.totalorder %s90, %s91
    %p102 = scmp.eq.s32.totalorder %s14, 0
    %p103 = por %p101, %p102
    %p104 = scmp.ne.s32.totalorder %s90, %s91
    %p105 = scmp.eq.s32.totalorder %s15, 1
    %p106 = por %p104, %p105
    %p108 = scmp.ne.s32.totalorder %s91, %s107
    %p109 = scmp.eq.s32.totalorder %s15, 0
    %p110 = por %p108, %p109
    %p111 = scmp.le.s32.totalorder 1, %s9
    %p112 = scmp.lt.s32.totalorder %s9, 3
    %p113 = pnand %p111, %p112
    %p114 = pneg %p113
    // Predicated region
    $region9: #{last_forward.14} parent=5 // pred_check
      _
    $region10: #{last_forward.14} parent=5 // pred_check_branch
      %116 = sbr.rel (%p113) target = $region12
    $region11: #{last_forward.14} parent=5 // pred_region
      %s117 = ssub.s32 %s9, 1
      // Predicated region
      $region13: #{last_forward.14} parent=11 // pred_check
        %p118 = pneg %p56
      $region14: #{last_forward.14} parent=11 // pred_check_branch
        %120 = sbr.rel (%p118) target = $region16
      $region15: #{last_forward.14} parent=11 // pred_region
        _
      $region16: #{last_forward.14} parent=11 // pred_fallthru
        _
      // Predicated region
      $region17: #{last_forward.14} parent=11 // pred_check
        %p121 = pneg %p77
      $region18: #{last_forward.14} parent=11 // pred_check_branch
        %123 = sbr.rel (%p121) target = $region20
      $region19: #{last_forward.14} parent=11 // pred_region
        _
      $region20: #{last_forward.14} parent=11 // pred_fallthru
        _
    $region12: #{last_forward.14} parent=5 // pred_fallthru
      _
    %p124 = scmp.lt.s32.totalorder %s9, 2
    // Predicated region
    $region21: #{last_forward.14} parent=5 // pred_check
      %p125 = pneg %p124
    $region22: #{last_forward.14} parent=5 // pred_check_branch
      %127 = sbr.rel (%p125) target = $region24
    $region23: #{last_forward.14} parent=5 // pred_region
      // Predicated region
      $region25: #{last_forward.14} parent=23 // pred_check
        %p128 = pneg %p29
      $region26: #{last_forward.14} parent=23 // pred_check_branch
        %130 = sbr.rel (%p128) target = $region28
      $region27: #{last_forward.14} parent=23 // pred_region
        %p131 = scmp.lt.s32.totalorder %s9, 1
        %s132 = scalar_select %p131, %s9, 1
        %s133 = smul.addr %s132, 20
        %s134 = smul.addr %s133, 4
        %s135 = scalar_lea.vmem %s0, %s134
      $region28: #{last_forward.14} parent=23 // pred_fallthru
        _
    $region24: #{last_forward.14} parent=5 // pred_fallthru
      _
    %p136 = scmp.le.s32.totalorder 1, %s9
    %p137 = scmp.lt.s32.totalorder %s9, 3
    %p138 = pnand %p136, %p137
    %p139 = pneg %p138
    // Predicated region
    $region29: #{last_forward.14} parent=5 // pred_check
      _
    $region30: #{last_forward.14} parent=5 // pred_check_branch
      %141 = sbr.rel (%p138) target = $region32
    $region31: #{last_forward.14} parent=5 // pred_region
      %s142 = ssub.s32 %s9, 1
      %p143 = scmp.lt.s32.totalorder %s14, 1
      %s144 = scalar_select %p143, %s14, 1
      %s145 = smul.addr %s144, 20
      %s146 = smul.addr %s145, 4
      %s147 = scalar_lea.vmem %s0, %s146
      %p148 = pneg %p35
      %p149 = pneg %p32
      %p150 = pneg %p56
      %p151 = pneg %p53
      %p152 = pneg %p77
      %p153 = pneg %p74
      %p154 = pneg %p103
      %p155 = pneg %p100
      %p156 = scmp.lt.s32.totalorder %s14, 1
      %s157 = scalar_select %p156, %s14, 1
      %s158 = smul.addr %s157, 20
      %s159 = smul.addr %s158, 4
      %s160 = scalar_lea.vmem %s3, %s159
      %p161 = scmp.lt.s32.totalorder %s14, 1
      %s162 = scalar_select %p161, %s14, 1
      %s163 = smul.addr %s162, 20
      %s164 = smul.addr %s163, 4
      %s165 = scalar_lea.vmem %s0, %s164
      %p166 = scmp.lt.s32.totalorder %s14, 1
      %s167 = scalar_select %p166, %s14, 1
      %s168 = smul.addr %s167, 20
      %s169 = smul.addr %s168, 4
      %s170 = scalar_lea.vmem %s3, %s169
      %v172 = vld [vmem:[%s165] sm:$0xf]
      %v173 = vld [vmem:[%s165 + $0x4] sm:$0x1]
      %v174 = vld [vmem:[%s165 + $0x8] sm:$0xf]
      %v175 = vld [vmem:[%s165 + $0xc] sm:$0x1]
      %v176 = vld [vmem:[%s165 + $0x10] sm:$0xf]
      %v177 = vld [vmem:[%s165 + $0x14] sm:$0x1]
      %v178 = vld [vmem:[%s165 + $0x18] sm:$0xf]
      %v179 = vld [vmem:[%s165 + $0x1c] sm:$0x1]
      %v180 = vld [vmem:[%s165 + $0x20] sm:$0xf]
      %v181 = vld [vmem:[%s165 + $0x24] sm:$0x1]
      %v182 = vld [vmem:[%s165 + $0x28] sm:$0xf]
      %v183 = vld [vmem:[%s165 + $0x2c] sm:$0x1]
      %v184 = vld [vmem:[%s165 + $0x30] sm:$0xf]
      %v185 = vld [vmem:[%s165 + $0x34] sm:$0x1]
      %v186 = vld [vmem:[%s165 + $0x38] sm:$0xf]
      %v187 = vld [vmem:[%s165 + $0x3c] sm:$0x1]
      %v188 = vld [vmem:[%s165 + $0x40] sm:$0xf]
      %v189 = vld [vmem:[%s165 + $0x44] sm:$0x1]
      %v190 = vld [vmem:[%s165 + $0x48] sm:$0xf]
      %v191 = vld [vmem:[%s165 + $0x4c] sm:$0x1]
      %v208 = vunpack.c.l.b16 %v172
      %v209 = vunpack.c.l.b16 %v173
      %v210 = vunpack.c.l.b16 %v174
      %v211 = vunpack.c.l.b16 %v175
      %v212 = vunpack.c.l.b16 %v176
      %v213 = vunpack.c.l.b16 %v177
      %v214 = vunpack.c.l.b16 %v178
      %v215 = vunpack.c.l.b16 %v179
      %v216 = vunpack.c.l.b16 %v180
      %v217 = vunpack.c.l.b16 %v181
      %v218 = vunpack.c.l.b16 %v182
      %v219 = vunpack.c.l.b16 %v183
      %v220 = vunpack.c.l.b16 %v184
      %v221 = vunpack.c.l.b16 %v185
      %v222 = vunpack.c.l.b16 %v186
      %v223 = vunpack.c.l.b16 %v187
      %v224 = vpack.c.b16 %v209, %v208
      %v225 = vpack.c.b16 %v211, %v210
      %v226 = vpack.c.b16 %v213, %v212
      %v227 = vpack.c.b16 %v215, %v214
      %v228 = vpack.c.b16 %v217, %v216
      %v229 = vpack.c.b16 %v219, %v218
      %v230 = vpack.c.b16 %v221, %v220
      %v231 = vpack.c.b16 %v223, %v222
      %v233 = vshrl.u32 %v224, 16
      %v235 = vshll.u32 %v224, 16
      %v237 = vrot.slane %v235, 1
      %v238 = vor.u32 %v233, %v237
      %v240 = vshrl.u32 %v225, 16
      %v242 = vshll.u32 %v225, 16
      %v244 = vrot.slane %v242, 1
      %v245 = vor.u32 %v240, %v244
      %v247 = vshrl.u32 %v226, 16
      %v249 = vshll.u32 %v226, 16
      %v251 = vrot.slane %v249, 1
      %v252 = vor.u32 %v247, %v251
      %v254 = vshrl.u32 %v227, 16
      %v256 = vshll.u32 %v227, 16
      %v258 = vrot.slane %v256, 1
      %v259 = vor.u32 %v254, %v258
      %v261 = vshrl.u32 %v228, 16
      %v263 = vshll.u32 %v228, 16
      %v265 = vrot.slane %v263, 1
      %v266 = vor.u32 %v261, %v265
      %v268 = vshrl.u32 %v229, 16
      %v270 = vshll.u32 %v229, 16
      %v272 = vrot.slane %v270, 1
      %v273 = vor.u32 %v268, %v272
      %v275 = vshrl.u32 %v230, 16
      %v277 = vshll.u32 %v230, 16
      %v279 = vrot.slane %v277, 1
      %v280 = vor.u32 %v275, %v279
      %v282 = vshrl.u32 %v231, 16
      %v284 = vshll.u32 %v231, 16
      %v286 = vrot.slane %v284, 1
      %v287 = vor.u32 %v282, %v286
      %288 = vrot.lane.b32.xlu0 %v238, 24
      %v289 = vpop.permute.xlu0 %288
      %290 = vrot.lane.b32.xlu0 %v245, 24
      %v291 = vpop.permute.xlu0 %290
      %292 = vrot.lane.b32.xlu0 %v252, 24
      %v293 = vpop.permute.xlu0 %292
      %294 = vrot.lane.b32.xlu0 %v259, 24
      %v295 = vpop.permute.xlu0 %294
      %296 = vrot.lane.b32.xlu0 %v266, 24
      %v297 = vpop.permute.xlu0 %296
      %298 = vrot.lane.b32.xlu0 %v273, 24
      %v299 = vpop.permute.xlu0 %298
      %300 = vrot.lane.b32.xlu0 %v280, 24
      %v301 = vpop.permute.xlu0 %300
      %302 = vrot.lane.b32.xlu0 %v287, 24
      %v303 = vpop.permute.xlu0 %302
      %v304 = vrot.slane %v224, 1
      %v305 = vrot.slane %v225, 1
      %v306 = vrot.slane %v226, 1
      %v307 = vrot.slane %v227, 1
      %v308 = vrot.slane %v228, 1
      %v309 = vrot.slane %v229, 1
      %v310 = vrot.slane %v230, 1
      %v311 = vrot.slane %v231, 1
      %312 = vrot.lane.b32.xlu0 %v304, 48
      %v313 = vpop.permute.xlu0 %312
      %314 = vrot.lane.b32.xlu0 %v305, 48
      %v315 = vpop.permute.xlu0 %314
      %316 = vrot.lane.b32.xlu0 %v306, 48
      %v317 = vpop.permute.xlu0 %316
      %318 = vrot.lane.b32.xlu0 %v307, 48
      %v319 = vpop.permute.xlu0 %318
      %320 = vrot.lane.b32.xlu0 %v308, 48
      %v321 = vpop.permute.xlu0 %320
      %322 = vrot.lane.b32.xlu0 %v309, 48
      %v323 = vpop.permute.xlu0 %322
      %324 = vrot.lane.b32.xlu0 %v310, 48
      %v325 = vpop.permute.xlu0 %324
      %326 = vrot.lane.b32.xlu0 %v311, 48
      %v327 = vpop.permute.xlu0 %326
      %v329 = vunpack.c.l.b16 %v188
      %v330 = vpack.c.b16 %v210, %v210
      %v331 = vpack.c.b16 %v212, %v212
      %v332 = vpack.c.b16 %v214, %v214
      %v333 = vpack.c.b16 %v216, %v216
      %v334 = vpack.c.b16 %v218, %v218
      %v335 = vpack.c.b16 %v220, %v220
      %v336 = vpack.c.b16 %v222, %v222
      %v337 = vpack.c.b16 %v329, %v329
      %338 = vrot.lane.b32.xlu0 %v330, 72
      %v339 = vpop.permute.xlu0 %338
      %340 = vrot.lane.b32.xlu0 %v331, 72
      %v341 = vpop.permute.xlu0 %340
      %342 = vrot.lane.b32.xlu0 %v332, 72
      %v343 = vpop.permute.xlu0 %342
      %344 = vrot.lane.b32.xlu0 %v333, 72
      %v345 = vpop.permute.xlu0 %344
      %346 = vrot.lane.b32.xlu0 %v334, 72
      %v347 = vpop.permute.xlu0 %346
      %348 = vrot.lane.b32.xlu0 %v335, 72
      %v349 = vpop.permute.xlu0 %348
      %350 = vrot.lane.b32.xlu0 %v336, 72
      %v351 = vpop.permute.xlu0 %350
      %352 = vrot.lane.b32.xlu0 %v337, 72
      %v353 = vpop.permute.xlu0 %352
      %v355 = vunpack.c.l.b16 %v189
      %v356 = vpack.c.b16 %v355, %v329
      %v358 = vshrl.u32 %v356, 16
      %v360 = vshll.u32 %v356, 16
      %v362 = vrot.slane %v360, 1
      %v363 = vor.u32 %v358, %v362
      %364 = vrot.lane.b32.xlu0 %v245, 96
      %v365 = vpop.permute.xlu0 %364
      %366 = vrot.lane.b32.xlu0 %v252, 96
      %v367 = vpop.permute.xlu0 %366
      %368 = vrot.lane.b32.xlu0 %v259, 96
      %v369 = vpop.permute.xlu0 %368
      %370 = vrot.lane.b32.xlu0 %v266, 96
      %v371 = vpop.permute.xlu0 %370
      %372 = vrot.lane.b32.xlu0 %v273, 96
      %v373 = vpop.permute.xlu0 %372
      %374 = vrot.lane.b32.xlu0 %v280, 96
      %v375 = vpop.permute.xlu0 %374
      %376 = vrot.lane.b32.xlu0 %v287, 96
      %v377 = vpop.permute.xlu0 %376
      %378 = vrot.lane.b32.xlu0 %v363, 96
      %v379 = vpop.permute.xlu0 %378
      %v380 = vrot.slane %v356, 1
      %381 = vrot.lane.b32.xlu0 %v305, 120
      %v382 = vpop.permute.xlu0 %381
      %383 = vrot.lane.b32.xlu0 %v306, 120
      %v384 = vpop.permute.xlu0 %383
      %385 = vrot.lane.b32.xlu0 %v307, 120
      %v386 = vpop.permute.xlu0 %385
      %387 = vrot.lane.b32.xlu0 %v308, 120
      %v388 = vpop.permute.xlu0 %387
      %389 = vrot.lane.b32.xlu0 %v309, 120
      %v390 = vpop.permute.xlu0 %389
      %391 = vrot.lane.b32.xlu0 %v310, 120
      %v392 = vpop.permute.xlu0 %391
      %393 = vrot.lane.b32.xlu0 %v311, 120
      %v394 = vpop.permute.xlu0 %393
      %395 = vrot.lane.b32.xlu0 %v380, 120
      %v396 = vpop.permute.xlu0 %395
      %v398 = vunpack.c.l.b16 %v190
      %v399 = vpack.c.b16 %v398, %v398
      %400 = vrot.lane.b32.xlu0 %v331, 16
      %v401 = vpop.permute.xlu0 %400
      %402 = vrot.lane.b32.xlu0 %v332, 16
      %v403 = vpop.permute.xlu0 %402
      %404 = vrot.lane.b32.xlu0 %v333, 16
      %v405 = vpop.permute.xlu0 %404
      %406 = vrot.lane.b32.xlu0 %v334, 16
      %v407 = vpop.permute.xlu0 %406
      %408 = vrot.lane.b32.xlu0 %v335, 16
      %v409 = vpop.permute.xlu0 %408
      %410 = vrot.lane.b32.xlu0 %v336, 16
      %v411 = vpop.permute.xlu0 %410
      %412 = vrot.lane.b32.xlu0 %v337, 16
      %v413 = vpop.permute.xlu0 %412
      %414 = vrot.lane.b32.xlu0 %v399, 16
      %v415 = vpop.permute.xlu0 %414
      %v417 = vunpack.c.l.b16 %v191
      %v418 = vpack.c.b16 %v417, %v398
      %v420 = vshrl.u32 %v418, 16
      %v422 = vshll.u32 %v418, 16
      %v424 = vrot.slane %v422, 1
      %v425 = vor.u32 %v420, %v424
      %426 = vrot.lane.b32.xlu0 %v252, 40
      %v427 = vpop.permute.xlu0 %426
      %428 = vrot.lane.b32.xlu0 %v259, 40
      %v429 = vpop.permute.xlu0 %428
      %430 = vrot.lane.b32.xlu0 %v266, 40
      %v431 = vpop.permute.xlu0 %430
      %432 = vrot.lane.b32.xlu0 %v273, 40
      %v433 = vpop.permute.xlu0 %432
      %434 = vrot.lane.b32.xlu0 %v280, 40
      %v435 = vpop.permute.xlu0 %434
      %436 = vrot.lane.b32.xlu0 %v287, 40
      %v437 = vpop.permute.xlu0 %436
      %438 = vrot.lane.b32.xlu0 %v363, 40
      %v439 = vpop.permute.xlu0 %438
      %440 = vrot.lane.b32.xlu0 %v425, 40
      %v441 = vpop.permute.xlu0 %440
      %v442 = vrot.slane %v418, 1
      %443 = vrot.lane.b32.xlu0 %v306, 64
      %v444 = vpop.permute.xlu0 %443
      %445 = vrot.lane.b32.xlu0 %v307, 64
      %v446 = vpop.permute.xlu0 %445
      %447 = vrot.lane.b32.xlu0 %v308, 64
      %v448 = vpop.permute.xlu0 %447
      %449 = vrot.lane.b32.xlu0 %v309, 64
      %v450 = vpop.permute.xlu0 %449
      %451 = vrot.lane.b32.xlu0 %v310, 64
      %v452 = vpop.permute.xlu0 %451
      %453 = vrot.lane.b32.xlu0 %v311, 64
      %v454 = vpop.permute.xlu0 %453
      %455 = vrot.lane.b32.xlu0 %v380, 64
      %v456 = vpop.permute.xlu0 %455
      %457 = vrot.lane.b32.xlu0 %v442, 64
      %v458 = vpop.permute.xlu0 %457
      %vm459 = vcmask 195584
      %v462 = vsel %vm459, %v172, %v289
      %v465 = vsel %vm459, %v174, %v291
      %v468 = vsel %vm459, %v176, %v293
      %v471 = vsel %vm459, %v178, %v295
      %v474 = vsel %vm459, %v180, %v297
      %v477 = vsel %vm459, %v182, %v299
      %v480 = vsel %vm459, %v184, %v301
      %v483 = vsel %vm459, %v186, %v303
      %vm484 = vcmask 392192
      %v486 = vsel %vm484, %v462, %v313
      %v488 = vsel %vm484, %v465, %v315
      %v490 = vsel %vm484, %v468, %v317
      %v492 = vsel %vm484, %v471, %v319
      %v494 = vsel %vm484, %v474, %v321
      %v496 = vsel %vm484, %v477, %v323
      %v498 = vsel %vm484, %v480, %v325
      %v500 = vsel %vm484, %v483, %v327
      %vm501 = vcmask 588800
      %v503 = vsel %vm501, %v486, %v339
      %v505 = vsel %vm501, %v488, %v341
      %v507 = vsel %vm501, %v490, %v343
      %v509 = vsel %vm501, %v492, %v345
      %v511 = vsel %vm501, %v494, %v347
      %v513 = vsel %vm501, %v496, %v349
      %v515 = vsel %vm501, %v498, %v351
      %v517 = vsel %vm501, %v500, %v353
      %vm518 = vcmask 785408
      %v520 = vsel %vm518, %v503, %v365
      %v522 = vsel %vm518, %v505, %v367
      %v524 = vsel %vm518, %v507, %v369
      %v526 = vsel %vm518, %v509, %v371
      %v528 = vsel %vm518, %v511, %v373
      %v530 = vsel %vm518, %v513, %v375
      %v532 = vsel %vm518, %v515, %v377
      %v534 = vsel %vm518, %v517, %v379
      %vm535 = vcmask 982016
      %v537 = vsel %vm535, %v520, %v382
      %v539 = vsel %vm535, %v522, %v384
      %v541 = vsel %vm535, %v524, %v386
      %v543 = vsel %vm535, %v526, %v388
      %v545 = vsel %vm535, %v528, %v390
      %v547 = vsel %vm535, %v530, %v392
      %v549 = vsel %vm535, %v532, %v394
      %v551 = vsel %vm535, %v534, %v396
      %vm552 = vcmask 130048
      %v554 = vsel %vm552, %v382, %v401
      %v556 = vsel %vm552, %v384, %v403
      %v558 = vsel %vm552, %v386, %v405
      %v560 = vsel %vm552, %v388, %v407
      %v562 = vsel %vm552, %v390, %v409
      %v564 = vsel %vm552, %v392, %v411
      %v566 = vsel %vm552, %v394, %v413
      %v568 = vsel %vm552, %v396, %v415
      %vm569 = vcmask 326656
      %v571 = vsel %vm569, %v554, %v427
      %v573 = vsel %vm569, %v556, %v429
      %v575 = vsel %vm569, %v558, %v431
      %v577 = vsel %vm569, %v560, %v433
      %v579 = vsel %vm569, %v562, %v435
      %v581 = vsel %vm569, %v564, %v437
      %v583 = vsel %vm569, %v566, %v439
      %v585 = vsel %vm569, %v568, %v441
      %vm586 = vcmask 523264
      %v588 = vsel %vm586, %v571, %v444
      %v590 = vsel %vm586, %v573, %v446
      %v592 = vsel %vm586, %v575, %v448
      %v594 = vsel %vm586, %v577, %v450
      %v596 = vsel %vm586, %v579, %v452
      %v598 = vsel %vm586, %v581, %v454
      %v600 = vsel %vm586, %v583, %v456
      %v602 = vsel %vm586, %v585, %v458
      %v619 = vunpack.c.l.b16 %v537
      %v620 = vunpack.c.l.b16 %v588
      %v621 = vunpack.c.l.b16 %v539
      %v622 = vunpack.c.l.b16 %v590
      %v623 = vunpack.c.l.b16 %v541
      %v624 = vunpack.c.l.b16 %v592
      %v625 = vunpack.c.l.b16 %v543
      %v626 = vunpack.c.l.b16 %v594
      %v627 = vunpack.c.l.b16 %v545
      %v628 = vunpack.c.l.b16 %v596
      %v629 = vunpack.c.l.b16 %v547
      %v630 = vunpack.c.l.b16 %v598
      %v631 = vunpack.c.l.b16 %v549
      %v632 = vunpack.c.l.b16 %v600
      %v633 = vunpack.c.l.b16 %v551
      %v634 = vunpack.c.l.b16 %v602
      %v635 = vld [vmem:[%s1] sm:$0xf]
      %v636 = vld [vmem:[%s1 + $0x4] sm:$0xf]
      %v637 = vld [vmem:[%s1 + $0x8] sm:$0xf]
      %v638 = vld [vmem:[%s1 + $0xc] sm:$0xf]
      %v639 = vld [vmem:[%s1 + $0x10] sm:$0xf]
      %v640 = vld [vmem:[%s1 + $0x14] sm:$0xf]
      %v641 = vld [vmem:[%s1 + $0x18] sm:$0xf]
      %v642 = vld [vmem:[%s1 + $0x1c] sm:$0xf]
      %v643 = vld [vmem:[%s1 + $0x20] sm:$0xf]
      %v644 = vld [vmem:[%s1 + $0x24] sm:$0xf]
      %v645 = vld [vmem:[%s1 + $0x28] sm:$0xf]
      %v646 = vld [vmem:[%s1 + $0x2c] sm:$0xf]
      %v647 = vld [vmem:[%s1 + $0x30] sm:$0xf]
      %v648 = vld [vmem:[%s1 + $0x34] sm:$0xf]
      %v649 = vld [vmem:[%s1 + $0x38] sm:$0xf]
      %v650 = vld [vmem:[%s1 + $0x3c] sm:$0xf]
      %v651 = vld [vmem:[%s1 + $0x40] sm:$0xf]
      %v652 = vld [vmem:[%s1 + $0x44] sm:$0xf]
      %v653 = vld [vmem:[%s1 + $0x48] sm:$0xf]
      %v654 = vld [vmem:[%s1 + $0x4c] sm:$0xf]
      %v655 = vld [vmem:[%s1 + $0x50] sm:$0xf]
      %v656 = vld [vmem:[%s1 + $0x54] sm:$0xf]
      %v657 = vld [vmem:[%s1 + $0x58] sm:$0xf]
      %v658 = vld [vmem:[%s1 + $0x5c] sm:$0xf]
      %v659 = vld [vmem:[%s1 + $0x60] sm:$0xf]
      %v660 = vld [vmem:[%s1 + $0x64] sm:$0xf]
      %v661 = vld [vmem:[%s1 + $0x68] sm:$0xf]
      %v662 = vld [vmem:[%s2] sm:$0x1]
      %v664 = vlaneseq
      %v665 = vshrl.u32 %v664, 7
      %v666 = vsub.s32 0, %v665
      %v667 = vrot.slane %v662, %v666
      %v669 = vpack.c.b16 %v621, %v619
      %v670 = vpack.c.b16 %v622, %v620
      %v671 = vpack.c.b16 %v625, %v623
      %v672 = vpack.c.b16 %v626, %v624
      %v673 = vpack.c.b16 %v629, %v627
      %v674 = vpack.c.b16 %v630, %v628
      %v675 = vpack.c.b16 %v633, %v631
      %v676 = vpack.c.b16 %v634, %v632
      %v708 = vunpack.c.l.b16 %v635
      %v709 = vunpack.c.l.b16 %v636
      %v710 = vunpack.c.l.b16 %v637
      %v711 = vunpack.c.l.b16 %v638
      %v712 = vunpack.c.l.b16 %v639
      %v713 = vunpack.c.l.b16 %v640
      %v714 = vunpack.c.l.b16 %v641
      %v715 = vunpack.c.l.b16 %v642
      %v716 = vunpack.c.l.b16 %v643
      %v717 = vunpack.c.l.b16 %v644
      %v718 = vunpack.c.l.b16 %v645
      %v719 = vunpack.c.l.b16 %v646
      %v720 = vunpack.c.l.b16 %v647
      %v721 = vunpack.c.l.b16 %v648
      %v722 = vunpack.c.l.b16 %v649
      %v723 = vunpack.c.l.b16 %v650
      %v724 = vunpack.c.l.b16 %v651
      %v725 = vunpack.c.l.b16 %v652
      %v726 = vunpack.c.l.b16 %v653
      %v727 = vunpack.c.l.b16 %v654
      %v728 = vunpack.c.l.b16 %v655
      %v729 = vunpack.c.l.b16 %v656
      %v730 = vunpack.c.l.b16 %v657
      %v731 = vunpack.c.l.b16 %v658
      %v732 = vunpack.c.l.b16 %v659
      %v733 = vunpack.c.l.b16 %v660
      %v734 = vunpack.c.l.b16 %v661
      %v735 = vpack.c.b16 %v709, %v708
      %v736 = vpack.c.b16 %v711, %v710
      %v737 = vpack.c.b16 %v713, %v712
      %v738 = vpack.c.b16 %v715, %v714
      %v739 = vpack.c.b16 %v717, %v716
      %v740 = vpack.c.b16 %v719, %v718
      %v741 = vpack.c.b16 %v721, %v720
      %v742 = vpack.c.b16 %v723, %v722
      %v743 = vpack.c.b16 %v725, %v724
      %v744 = vpack.c.b16 %v727, %v726
      %v745 = vpack.c.b16 %v729, %v728
      %v746 = vpack.c.b16 %v731, %v730
      %v747 = vpack.c.b16 %v733, %v732
      %v748 = vpack.c.b16 %v734, %v734
      %vm762 = vcmask 719872
      %v764 = vsel %vm762, %v670, 0
      %v767 = vsel %vm762, %v672, 0
      %v770 = vsel %vm762, %v674, 0
      %v773 = vsel %vm762, %v676, 0
      %vm775 = vcmask 1043456
      %v777 = vsel %vm775, %v748, 0
      %779 = vmatprep.subr.bf16.mxu0 0
      %780 = vmatpush1.bf16.msra.mxu0 %v735
      %781 = vmatprep.subr.bf16.mxu0 0
      %782 = vmatpush1.bf16.msra.mxu0 %v736
      %783 = vmatprep.subr.bf16.mxu0 0
      %784 = vmatpush1.bf16.msra.mxu0 %v737
      %785 = vmatprep.subr.bf16.mxu0 0
      %786 = vmatpush1.bf16.msra.mxu0 %v738
      %787 = vmatprep.subr.bf16.mxu0 0
      %788 = vmatpush1.bf16.msra.mxu0 %v739
      %789 = vmatprep.subr.bf16.mxu0 0
      %790 = vmatpush1.bf16.msra.mxu0 %v740
      %791 = vmatprep.subr.bf16.mxu0 0
      %792 = vmatpush1.bf16.msra.mxu0 %v741
      %793 = vmatprep.subr.bf16.mxu0 0
      %794 = vmatpush1.bf16.msra.mxu0 %v742
      %795 = vmatprep.subr.bf16.mxu0 0
      %796 = vmatpush1.bf16.msra.mxu0 %v743
      %797 = vmatprep.subr.bf16.mxu0 0
      %798 = vmatpush1.bf16.msra.mxu0 %v744
      %799 = vmatprep.subr.bf16.mxu0 0
      %800 = vmatpush1.bf16.msra.mxu0 %v745
      %801 = vmatprep.subr.bf16.mxu0 0
      %802 = vmatpush1.bf16.msra.mxu0 %v746
      %803 = vmatprep.subr.bf16.mxu0 0
      %804 = vmatpush1.bf16.msra.mxu0 %v747
      %805 = vmatprep.subr.bf16.mxu0 0
      %806 = vmatpush1.bf16.msra.mxu0 %v777
      %807 = vmatprep.subr.bf16.mxu0 0
      %808 = vmatpush1.bf16.msra.mxu0 0
      %809 = vmatprep.subr.bf16.mxu0 0
      %810 = vmatpush1.bf16.msra.mxu0 0
      %811 = vmatprep.mubr.bf16.mxu0 %v764
      %812 = vmatmul.mubr.bf16.gmra.mrb[0].mxu0 %v669
      %v813 = vpop.f32.mrb[0].mxu0
      %v814 = vadd.f32 %v667, %v813
      %v815 = vpop.f32.mrb[0].mxu0
      %v816 = vpop.f32.mrb[0].mxu0
      %v817 = vadd.f32 %v667, %v816
      %v818 = vpop.f32.mrb[0].mxu0
      %819 = vmatprep.mubr.bf16.mxu0 %v767
      %820 = vmatmul.mubr.bf16.gmra.mrb[0].mxu0 %v671
      %v821 = vpop.f32.mrb[0].mxu0
      %v822 = vadd.f32 %v667, %v821
      %v823 = vpop.f32.mrb[0].mxu0
      %v824 = vpop.f32.mrb[0].mxu0
      %v825 = vadd.f32 %v667, %v824
      %v826 = vpop.f32.mrb[0].mxu0
      %827 = vmatprep.mubr.bf16.mxu0 %v770
      %828 = vmatmul.mubr.bf16.gmra.mrb[0].mxu0 %v673
      %v829 = vpop.f32.mrb[0].mxu0
      %v830 = vadd.f32 %v667, %v829
      %v831 = vpop.f32.mrb[0].mxu0
      %v832 = vpop.f32.mrb[0].mxu0
      %v833 = vadd.f32 %v667, %v832
      %v834 = vpop.f32.mrb[0].mxu0
      %835 = vmatprep.mubr.bf16.mxu0 %v773
      %836 = vmatmul.mubr.bf16.gmra.mrb[0].mxu0 %v675
      %v837 = vpop.f32.mrb[0].mxu0
      %v838 = vadd.f32 %v667, %v837
      %v839 = vpop.f32.mrb[0].mxu0
      %v840 = vpop.f32.mrb[0].mxu0
      %v841 = vadd.f32 %v667, %v840
      %v842 = vpop.f32.mrb[0].mxu0
      %843 = vdwg.mxu0
      %v844 = vmax.f32 %v814, 0.0
      %v845 = vmax.f32 %v817, 0.0
      %v846 = vmax.f32 %v822, 0.0
      %v847 = vmax.f32 %v825, 0.0
      %v848 = vmax.f32 %v830, 0.0
      %v849 = vmax.f32 %v833, 0.0
      %v850 = vmax.f32 %v838, 0.0
      %v851 = vmax.f32 %v841, 0.0
      %v852 = vpack.c.bf16 %v845, %v844
      %v853 = vpack.c.bf16 %v847, %v846
      %v854 = vpack.c.bf16 %v849, %v848
      %v855 = vpack.c.bf16 %v851, %v850
      %v860 = vunpack.c.l.b16 %v852
      %v861 = vunpack.c.h.b16 %v852
      %v862 = vunpack.c.l.b16 %v853
      %v863 = vunpack.c.h.b16 %v853
      %v864 = vunpack.c.l.b16 %v854
      %v865 = vunpack.c.h.b16 %v854
      %v866 = vunpack.c.l.b16 %v855
      %v867 = vunpack.c.h.b16 %v855
      %vm868 = vcmask 257024
      %869 = vst.msk [vmem:[%s170] sm:$0xf] %vm868, 0
      %vm870 = vcmask 253952
      %871 = vst.msk [vmem:[%s170 + $0x4] sm:$0x1] %vm870, 0
      %872 = vst.msk [vmem:[%s170 + $0x8] sm:$0xf] %vm868, 0
      %873 = vst.msk [vmem:[%s170 + $0xc] sm:$0x1] %vm870, 0
      %874 = vst.msk [vmem:[%s170 + $0x10] sm:$0xf] %vm868, 0
      %875 = vst.msk [vmem:[%s170 + $0x14] sm:$0x1] %vm870, 0
      %876 = vst.msk [vmem:[%s170 + $0x18] sm:$0xf] %vm868, 0
      %877 = vst.msk [vmem:[%s170 + $0x1c] sm:$0x1] %vm870, 0
      %878 = vst.msk [vmem:[%s170 + $0x20] sm:$0xf] %vm868, 0
      %879 = vst.msk [vmem:[%s170 + $0x24] sm:$0x1] %vm870, 0
      %880 = vst.msk [vmem:[%s170 + $0x28] sm:$0xf] %vm868, 0
      %881 = vst.msk [vmem:[%s170 + $0x2c] sm:$0x1] %vm870, 0
      %882 = vst.msk [vmem:[%s170 + $0x30] sm:$0xf] %vm868, 0
      %883 = vst.msk [vmem:[%s170 + $0x34] sm:$0x1] %vm870, 0
      %884 = vst.msk [vmem:[%s170 + $0x38] sm:$0xf] %vm868, 0
      %885 = vst.msk [vmem:[%s170 + $0x3c] sm:$0x1] %vm870, 0
      %886 = vst.msk [vmem:[%s170 + $0x40] sm:$0xf] %vm868, 0
      %887 = vst.msk [vmem:[%s170 + $0x44] sm:$0x1] %vm870, 0
      %888 = vst.msk [vmem:[%s170 + $0x48] sm:$0xf] %vm868, 0
      %889 = vst.msk [vmem:[%s170 + $0x4c] sm:$0x1] %vm870, 0
      %v890 = vpack.c.b16 %v860, %v860
      %v891 = vpack.c.b16 %v861, %v861
      %v892 = vpack.c.b16 %v862, %v862
      %v893 = vpack.c.b16 %v863, %v863
      %v894 = vpack.c.b16 %v864, %v864
      %v895 = vpack.c.b16 %v865, %v865
      %v896 = vpack.c.b16 %v866, %v866
      %v897 = vpack.c.b16 %v867, %v867
      %v899 = vshrl.u32 %v890, 16
      %v901 = vrot.slane %v899, 7
      %v902 = vshll.u32 %v890, 16
      %v904 = vor.u32 %v901, %v902
      %v906 = vshrl.u32 %v891, 16
      %v908 = vrot.slane %v906, 7
      %v909 = vshll.u32 %v891, 16
      %v911 = vor.u32 %v908, %v909
      %v913 = vshrl.u32 %v892, 16
      %v915 = vrot.slane %v913, 7
      %v916 = vshll.u32 %v892, 16
      %v918 = vor.u32 %v915, %v916
      %v920 = vshrl.u32 %v893, 16
      %v922 = vrot.slane %v920, 7
      %v923 = vshll.u32 %v893, 16
      %v925 = vor.u32 %v922, %v923
      %v927 = vshrl.u32 %v894, 16
      %v929 = vrot.slane %v927, 7
      %v930 = vshll.u32 %v894, 16
      %v932 = vor.u32 %v929, %v930
      %v934 = vshrl.u32 %v895, 16
      %v936 = vrot.slane %v934, 7
      %v937 = vshll.u32 %v895, 16
      %v939 = vor.u32 %v936, %v937
      %v941 = vshrl.u32 %v896, 16
      %v943 = vrot.slane %v941, 7
      %v944 = vshll.u32 %v896, 16
      %v946 = vor.u32 %v943, %v944
      %v948 = vshrl.u32 %v897, 16
      %v950 = vrot.slane %v948, 7
      %v951 = vshll.u32 %v897, 16
      %v953 = vor.u32 %v950, %v951
      %954 = vrot.lane.b32.xlu0 %v904, 24
      %v955 = vpop.permute.xlu0 %954
      %956 = vrot.lane.b32.xlu0 %v911, 24
      %v957 = vpop.permute.xlu0 %956
      %958 = vrot.lane.b32.xlu0 %v918, 24
      %v959 = vpop.permute.xlu0 %958
      %960 = vrot.lane.b32.xlu0 %v925, 24
      %v961 = vpop.permute.xlu0 %960
      %962 = vrot.lane.b32.xlu0 %v932, 24
      %v963 = vpop.permute.xlu0 %962
      %964 = vrot.lane.b32.xlu0 %v939, 24
      %v965 = vpop.permute.xlu0 %964
      %966 = vrot.lane.b32.xlu0 %v946, 24
      %v967 = vpop.permute.xlu0 %966
      %968 = vrot.lane.b32.xlu0 %v953, 24
      %v969 = vpop.permute.xlu0 %968
      %v971 = vsel %vm459, %v225, %v955
      %v973 = vsel %vm459, %v226, %v957
      %v975 = vsel %vm459, %v227, %v959
      %v977 = vsel %vm459, %v228, %v961
      %v979 = vsel %vm459, %v229, %v963
      %v981 = vsel %vm459, %v230, %v965
      %v983 = vsel %vm459, %v231, %v967
      %v985 = vsel %vm459, %v356, %v969
      %v994 = vunpack.c.l.b16 %v971
      %v995 = vunpack.c.h.b16 %v971
      %v996 = vunpack.c.l.b16 %v973
      %v997 = vunpack.c.h.b16 %v973
      %v998 = vunpack.c.l.b16 %v975
      %v999 = vunpack.c.h.b16 %v975
      %v1000 = vunpack.c.l.b16 %v977
      %v1001 = vunpack.c.h.b16 %v977
      %v1002 = vunpack.c.l.b16 %v979
      %v1003 = vunpack.c.h.b16 %v979
      %v1004 = vunpack.c.l.b16 %v981
      %v1005 = vunpack.c.h.b16 %v981
      %v1006 = vunpack.c.l.b16 %v983
      %v1007 = vunpack.c.h.b16 %v983
      %v1008 = vunpack.c.l.b16 %v985
      %v1009 = vunpack.c.h.b16 %v985
      %v1010 = vpack.c.b16 %v994, %v994
      %v1011 = vpack.c.b16 %v995, %v995
      %v1012 = vpack.c.b16 %v996, %v996
      %v1013 = vpack.c.b16 %v997, %v997
      %v1014 = vpack.c.b16 %v998, %v998
      %v1015 = vpack.c.b16 %v999, %v999
      %v1016 = vpack.c.b16 %v1000, %v1000
      %v1017 = vpack.c.b16 %v1001, %v1001
      %v1018 = vpack.c.b16 %v1002, %v1002
      %v1019 = vpack.c.b16 %v1003, %v1003
      %v1020 = vpack.c.b16 %v1004, %v1004
      %v1021 = vpack.c.b16 %v1005, %v1005
      %v1022 = vpack.c.b16 %v1006, %v1006
      %v1023 = vpack.c.b16 %v1007, %v1007
      %v1024 = vpack.c.b16 %v1008, %v1008
      %v1025 = vpack.c.b16 %v1009, %v1009
      %s1042 = scalar_lea.vmem %s170, 8
      %vm1043 = vcmask 257024
      %vm1044 = vsmask.f32 7938
      %vm1045 = vmand %vm1043, %vm1044
      %v1046 = vld [vmem:[%s1042] sm:$0xf]
      %v1047 = vsel %vm1045, %v1010, %v1046
      %1048 = vst [vmem:[%s1042] sm:$0xf] %v1047
      %vm1049 = vcmask 253952
      %vm1050 = vsmask.f32 256
      %vm1051 = vmand %vm1049, %vm1050
      %v1052 = vld [vmem:[%s1042 + $0x4] sm:$0x1]
      %v1053 = vsel %vm1051, %v1011, %v1052
      %1054 = vst [vmem:[%s1042 + $0x4] sm:$0x1] %v1053
      %v1055 = vld [vmem:[%s1042 + $0x8] sm:$0xf]
      %v1056 = vsel %vm1045, %v1012, %v1055
      %1057 = vst [vmem:[%s1042 + $0x8] sm:$0xf] %v1056
      %v1058 = vld [vmem:[%s1042 + $0xc] sm:$0x1]
      %v1059 = vsel %vm1051, %v1013, %v1058
      %1060 = vst [vmem:[%s1042 + $0xc] sm:$0x1] %v1059
      %v1061 = vld [vmem:[%s1042 + $0x10] sm:$0xf]
      %v1062 = vsel %vm1045, %v1014, %v1061
      %1063 = vst [vmem:[%s1042 + $0x10] sm:$0xf] %v1062
      %v1064 = vld [vmem:[%s1042 + $0x14] sm:$0x1]
      %v1065 = vsel %vm1051, %v1015, %v1064
      %1066 = vst [vmem:[%s1042 + $0x14] sm:$0x1] %v1065
      %v1067 = vld [vmem:[%s1042 + $0x18] sm:$0xf]
      %v1068 = vsel %vm1045, %v1016, %v1067
      %1069 = vst [vmem:[%s1042 + $0x18] sm:$0xf] %v1068
      %v1070 = vld [vmem:[%s1042 + $0x1c] sm:$0x1]
      %v1071 = vsel %vm1051, %v1017, %v1070
      %1072 = vst [vmem:[%s1042 + $0x1c] sm:$0x1] %v1071
      %v1073 = vld [vmem:[%s1042 + $0x20] sm:$0xf]
      %v1074 = vsel %vm1045, %v1018, %v1073
      %1075 = vst [vmem:[%s1042 + $0x20] sm:$0xf] %v1074
      %v1076 = vld [vmem:[%s1042 + $0x24] sm:$0x1]
      %v1077 = vsel %vm1051, %v1019, %v1076
      %1078 = vst [vmem:[%s1042 + $0x24] sm:$0x1] %v1077
      %v1079 = vld [vmem:[%s1042 + $0x28] sm:$0xf]
      %v1080 = vsel %vm1045, %v1020, %v1079
      %1081 = vst [vmem:[%s1042 + $0x28] sm:$0xf] %v1080
      %v1082 = vld [vmem:[%s1042 + $0x2c] sm:$0x1]
      %v1083 = vsel %vm1051, %v1021, %v1082
      %1084 = vst [vmem:[%s1042 + $0x2c] sm:$0x1] %v1083
      %v1085 = vld [vmem:[%s1042 + $0x30] sm:$0xf]
      %v1086 = vsel %vm1045, %v1022, %v1085
      %1087 = vst [vmem:[%s1042 + $0x30] sm:$0xf] %v1086
      %v1088 = vld [vmem:[%s1042 + $0x34] sm:$0x1]
      %v1089 = vsel %vm1051, %v1023, %v1088
      %1090 = vst [vmem:[%s1042 + $0x34] sm:$0x1] %v1089
      %v1091 = vld [vmem:[%s1042 + $0x38] sm:$0xf]
      %v1092 = vsel %vm1045, %v1024, %v1091
      %1093 = vst [vmem:[%s1042 + $0x38] sm:$0xf] %v1092
      %v1094 = vld [vmem:[%s1042 + $0x3c] sm:$0x1]
      %v1095 = vsel %vm1051, %v1025, %v1094
      %1096 = vst [vmem:[%s1042 + $0x3c] sm:$0x1] %v1095
      %p1097 = scmp.lt.s32.totalorder %s14, 1
      %s1098 = scalar_select %p1097, %s14, 1
      %s1099 = smul.addr %s1098, 20
      %s1100 = smul.addr %s1099, 4
      %s1101 = scalar_lea.vmem %s3, %s1100
      // Predicated region
      $region33: #{last_forward.14} parent=31 // pred_check
        %p1102 = pneg %p100
      $region34: #{last_forward.14} parent=31 // pred_check_branch
        %1104 = sbr.rel (%p1102) target = $region36
      $region35: #{last_forward.14} parent=31 // pred_region
        _
      $region36: #{last_forward.14} parent=31 // pred_fallthru
        _
    $region32: #{last_forward.14} parent=5 // pred_fallthru
      _
    %p1105 = scmp.le.s32.totalorder 2, %s9
    // Predicated region
    $region37: #{last_forward.14} parent=5 // pred_check
      %p1106 = pneg %p1105
    $region38: #{last_forward.14} parent=5 // pred_check_branch
      %1108 = sbr.rel (%p1106) target = $region40
    $region39: #{last_forward.14} parent=5 // pred_region
      %s1109 = ssub.s32 %s9, 2
      // Predicated region
      $region41: #{last_forward.14} parent=39 // pred_check
        %p1110 = pneg %p106
      $region42: #{last_forward.14} parent=39 // pred_check_branch
        %1112 = sbr.rel (%p1110) target = $region44
      $region43: #{last_forward.14} parent=39 // pred_region
        %p1113 = scmp.lt.s32.totalorder %s15, 1
        %s1114 = scalar_select %p1113, %s15, 1
        %s1115 = smul.addr %s1114, 20
        %s1116 = smul.addr %s1115, 4
        %s1117 = scalar_lea.vmem %s3, %s1116
      $region44: #{last_forward.14} parent=39 // pred_fallthru
        _
    $region40: #{last_forward.14} parent=5 // pred_fallthru
      _
  $region6: #{last_forward.14} parent=0 // loop_footer
    %s13 = sadd.s32 1, %s9
  $region7: #{last_forward.14} parent=0 // loop_footer_branch
    %8 = sbr.rel target = $region3
  $region8: #{last_forward.14} parent=0 // loop_exit
    _

// kernel: last_forward.15
$region0: #{last_forward.15}
  #allocation0 [shape = 'u32[]', space=smem, size = 0x4, offset = 0x4, fixed_abs, tag = 'smem constant byte address 0x4 - core index']
  #allocation1 [shape = 'u32[144,128]{1,0:T(1,128)}', space=vmem, size = 0x12000, scoped, tag = 'internal scratch']
  %s0 = inlined_call_operand.vmem [shape: bf16[2,10,10,32], index: 0, kind: input, shape index: {}]
  %s1 = inlined_call_operand.vmem [shape: bf16[288,8], index: 1, kind: input, shape index: {}]
  %s2 = inlined_call_operand.vmem [shape: f32[1,8], index: 2, kind: input, shape index: {}]
  %s3 = inlined_call_operand.vmem [shape: bf16[2,10,10,40], index: 3, kind: output, shape index: {}]
  %s4 = sld [smem:[#allocation0]]
  $region45: #{last_forward.15} parent=0
    _
  %s6 = ssub.s32 1, %s4
  %s7 = scalar_select 0, %s6, %s4
  loop: start=0, step=1, limit=4
  $region2: #{last_forward.15} parent=0 // loop_pre_header
    _
  $region3: #{last_forward.15} parent=0 // loop_header
    %s9 = sphi 0, %s13
    %p10 = scmp.ge.s32.totalorder %s9, 4
    %s19 = sphi 0, %s21
    %s22 = sphi 0, %s19
    %s23 = sphi 0, %s22
    %s39 = sphi 0, %s23
    %s43 = sphi 0, %s43
    %s45 = sphi 0, %s43
    %s46 = sphi 0, %s45
    %s60 = sphi 0, %s46
    %s64 = sphi 0, %s64
    %s66 = sphi 0, %s64
    %s67 = sphi 0, %s66
    %s81 = sphi 0, %s67
    %s87 = sphi 0, %s89
    %s90 = sphi 0, %s87
    %s91 = sphi 0, %s90
    %s107 = sphi 0, %s91
  $region4: #{last_forward.15} parent=0 // loop_header_branch
    %12 = sbr.rel (%p10) target = $region8
  $region5: #{last_forward.15} parent=0 // loop_body
    %s14 = ssub.s32 %s9, 1
    %s15 = ssub.s32 %s9, 2
    %s16 = sadd.s32 %s9, 1
    %s17 = ssub.s32 %s9, %s16
    %p18 = scmp.eq.s32.totalorder %s17, 0
    %s20 = sadd.s32 %s19, 1
    %s21 = scalar_select %p18, %s19, %s20
    %p24 = pneg %p18
    %p25 = scmp.eq.s32.totalorder %s9, 1
    %p26 = por %p24, %p25
    %p27 = scmp.ne.s32.totalorder %s19, %s22
    %p28 = scmp.eq.s32.totalorder %s9, 0
    %p29 = por %p27, %p28
    %p30 = scmp.ne.s32.totalorder %s19, %s22
    %p31 = scmp.eq.s32.totalorder %s14, 1
    %p32 = por %p30, %p31
    %p33 = scmp.ne.s32.totalorder %s22, %s23
    %p34 = scmp.eq.s32.totalorder %s14, 0
    %p35 = por %p33, %p34
    %p36 = scmp.ne.s32.totalorder %s22, %s23
    %p37 = scmp.eq.s32.totalorder %s15, 1
    %p38 = por %p36, %p37
    %p40 = scmp.ne.s32.totalorder %s23, %s39
    %p41 = scmp.eq.s32.totalorder %s15, 0
    %p42 = por %p40, %p41
    %s44 = sadd.s32 %s43, 1
    %p47 = scmp.eq.s32.totalorder %s9, 1
    %p48 = scmp.ne.s32.totalorder %s43, %s45
    %p49 = scmp.eq.s32.totalorder %s9, 0
    %p50 = por %p48, %p49
    %p51 = scmp.ne.s32.totalorder %s43, %s45
    %p52 = scmp.eq.s32.totalorder %s14, 1
    %p53 = por %p51, %p52
    %p54 = scmp.ne.s32.totalorder %s45, %s46
    %p55 = scmp.eq.s32.totalorder %s14, 0
    %p56 = por %p54, %p55
    %p57 = scmp.ne.s32.totalorder %s45, %s46
    %p58 = scmp.eq.s32.totalorder %s15, 1
    %p59 = por %p57, %p58
    %p61 = scmp.ne.s32.totalorder %s46, %s60
    %p62 = scmp.eq.s32.totalorder %s15, 0
    %p63 = por %p61, %p62
    %s65 = sadd.s32 %s64, 1
    %p68 = scmp.eq.s32.totalorder %s9, 1
    %p69 = scmp.ne.s32.totalorder %s64, %s66
    %p70 = scmp.eq.s32.totalorder %s9, 0
    %p71 = por %p69, %p70
    %p72 = scmp.ne.s32.totalorder %s64, %s66
    %p73 = scmp.eq.s32.totalorder %s14, 1
    %p74 = por %p72, %p73
    %p75 = scmp.ne.s32.totalorder %s66, %s67
    %p76 = scmp.eq.s32.totalorder %s14, 0
    %p77 = por %p75, %p76
    %p78 = scmp.ne.s32.totalorder %s66, %s67
    %p79 = scmp.eq.s32.totalorder %s15, 1
    %p80 = por %p78, %p79
    %p82 = scmp.ne.s32.totalorder %s67, %s81
    %p83 = scmp.eq.s32.totalorder %s15, 0
    %p84 = por %p82, %p83
    %s85 = ssub.s32 %s9, %s16
    %p86 = scmp.eq.s32.totalorder %s85, 0
    %s88 = sadd.s32 %s87, 1
    %s89 = scalar_select %p86, %s87, %s88
    %p92 = pneg %p86
    %p93 = scmp.eq.s32.totalorder %s9, 1
    %p94 = por %p92, %p93
    %p95 = scmp.ne.s32.totalorder %s87, %s90
    %p96 = scmp.eq.s32.totalorder %s9, 0
    %p97 = por %p95, %p96
    %p98 = scmp.ne.s32.totalorder %s87, %s90
    %p99 = scmp.eq.s32.totalorder %s14, 1
    %p100 = por %p98, %p99
    %p101 = scmp.ne.s32.totalorder %s90, %s91
    %p102 = scmp.eq.s32.totalorder %s14, 0
    %p103 = por %p101, %p102
    %p104 = scmp.ne.s32.totalorder %s90, %s91
    %p105 = scmp.eq.s32.totalorder %s15, 1
    %p106 = por %p104, %p105
    %p108 = scmp.ne.s32.totalorder %s91, %s107
    %p109 = scmp.eq.s32.totalorder %s15, 0
    %p110 = por %p108, %p109
    %p111 = scmp.le.s32.totalorder 1, %s9
    %p112 = scmp.lt.s32.totalorder %s9, 3
    %p113 = pnand %p111, %p112
    %p114 = pneg %p113
    // Predicated region
    $region9: #{last_forward.15} parent=5 // pred_check
      _
    $region10: #{last_forward.15} parent=5 // pred_check_branch
      %116 = sbr.rel (%p113) target = $region12
    $region11: #{last_forward.15} parent=5 // pred_region
      %s117 = ssub.s32 %s9, 1
      // Predicated region
      $region13: #{last_forward.15} parent=11 // pred_check
        %p118 = pneg %p56
      $region14: #{last_forward.15} parent=11 // pred_check_branch
        %120 = sbr.rel (%p118) target = $region16
      $region15: #{last_forward.15} parent=11 // pred_region
        _
      $region16: #{last_forward.15} parent=11 // pred_fallthru
        _
      // Predicated region
      $region17: #{last_forward.15} parent=11 // pred_check
        %p121 = pneg %p77
      $region18: #{last_forward.15} parent=11 // pred_check_branch
        %123 = sbr.rel (%p121) target = $region20
      $region19: #{last_forward.15} parent=11 // pred_region
        _
      $region20: #{last_forward.15} parent=11 // pred_fallthru
        _
    $region12: #{last_forward.15} parent=5 // pred_fallthru
      _
    %p124 = scmp.lt.s32.totalorder %s9, 2
    // Predicated region
    $region21: #{last_forward.15} parent=5 // pred_check
      %p125 = pneg %p124
    $region22: #{last_forward.15} parent=5 // pred_check_branch
      %127 = sbr.rel (%p125) target = $region24
    $region23: #{last_forward.15} parent=5 // pred_region
      // Predicated region
      $region25: #{last_forward.15} parent=23 // pred_check
        %p128 = pneg %p29
      $region26: #{last_forward.15} parent=23 // pred_check_branch
        %130 = sbr.rel (%p128) target = $region28
      $region27: #{last_forward.15} parent=23 // pred_region
        %p131 = scmp.lt.s32.totalorder %s9, 1
        %s132 = scalar_select %p131, %s9, 1
        %s133 = smul.addr %s132, 20
        %s134 = smul.addr %s133, 4
        %s135 = scalar_lea.vmem %s0, %s134
      $region28: #{last_forward.15} parent=23 // pred_fallthru
        _
    $region24: #{last_forward.15} parent=5 // pred_fallthru
      _
    %p136 = scmp.le.s32.totalorder 1, %s9
    %p137 = scmp.lt.s32.totalorder %s9, 3
    %p138 = pnand %p136, %p137
    %p139 = pneg %p138
    // Predicated region
    $region29: #{last_forward.15} parent=5 // pred_check
      _
    $region30: #{last_forward.15} parent=5 // pred_check_branch
      %141 = sbr.rel (%p138) target = $region32
    $region31: #{last_forward.15} parent=5 // pred_region
      %s142 = ssub.s32 %s9, 1
      %p143 = scmp.lt.s32.totalorder %s14, 1
      %s144 = scalar_select %p143, %s14, 1
      %s145 = smul.addr %s144, 20
      %s146 = smul.addr %s145, 4
      %s147 = scalar_lea.vmem %s0, %s146
      %p148 = pneg %p35
      %p149 = pneg %p32
      %p150 = pneg %p56
      %p151 = pneg %p53
      %p152 = pneg %p77
      %p153 = pneg %p74
      %p154 = pneg %p103
      %p155 = pneg %p100
      %p156 = scmp.lt.s32.totalorder %s14, 1
      %s157 = scalar_select %p156, %s14, 1
      %s158 = smul.addr %s157, 20
      %s159 = smul.addr %s158, 4
      %s160 = scalar_lea.vmem %s3, %s159
      %p161 = scmp.lt.s32.totalorder %s14, 1
      %s162 = scalar_select %p161, %s14, 1
      %s163 = smul.addr %s162, 20
      %s164 = smul.addr %s163, 4
      %s165 = scalar_lea.vmem %s0, %s164
      %p166 = scmp.lt.s32.totalorder %s14, 1
      %s167 = scalar_select %p166, %s14, 1
      %s168 = smul.addr %s167, 20
      %s169 = smul.addr %s168, 4
      %s170 = scalar_lea.vmem %s3, %s169
      %v172 = vld [vmem:[%s165] sm:$0xf]
      %v173 = vld [vmem:[%s165 + $0x4] sm:$0x1]
      %v174 = vld [vmem:[%s165 + $0x8] sm:$0xf]
      %v175 = vld [vmem:[%s165 + $0xc] sm:$0x1]
      %v176 = vld [vmem:[%s165 + $0x10] sm:$0xf]
      %v177 = vld [vmem:[%s165 + $0x14] sm:$0x1]
      %v178 = vld [vmem:[%s165 + $0x18] sm:$0xf]
      %v179 = vld [vmem:[%s165 + $0x1c] sm:$0x1]
      %v180 = vld [vmem:[%s165 + $0x20] sm:$0xf]
      %v181 = vld [vmem:[%s165 + $0x24] sm:$0x1]
      %v182 = vld [vmem:[%s165 + $0x28] sm:$0xf]
      %v183 = vld [vmem:[%s165 + $0x2c] sm:$0x1]
      %v184 = vld [vmem:[%s165 + $0x30] sm:$0xf]
      %v185 = vld [vmem:[%s165 + $0x34] sm:$0x1]
      %v186 = vld [vmem:[%s165 + $0x38] sm:$0xf]
      %v187 = vld [vmem:[%s165 + $0x3c] sm:$0x1]
      %v188 = vld [vmem:[%s165 + $0x40] sm:$0xf]
      %v189 = vld [vmem:[%s165 + $0x44] sm:$0x1]
      %v190 = vld [vmem:[%s165 + $0x48] sm:$0xf]
      %v191 = vld [vmem:[%s165 + $0x4c] sm:$0x1]
      %v208 = vunpack.c.l.b16 %v172
      %v209 = vunpack.c.l.b16 %v173
      %v210 = vunpack.c.l.b16 %v174
      %v211 = vunpack.c.l.b16 %v175
      %v212 = vunpack.c.l.b16 %v176
      %v213 = vunpack.c.l.b16 %v177
      %v214 = vunpack.c.l.b16 %v178
      %v215 = vunpack.c.l.b16 %v179
      %v216 = vunpack.c.l.b16 %v180
      %v217 = vunpack.c.l.b16 %v181
      %v218 = vunpack.c.l.b16 %v182
      %v219 = vunpack.c.l.b16 %v183
      %v220 = vunpack.c.l.b16 %v184
      %v221 = vunpack.c.l.b16 %v185
      %v222 = vunpack.c.l.b16 %v186
      %v223 = vunpack.c.l.b16 %v187
      %v224 = vpack.c.b16 %v209, %v208
      %v225 = vpack.c.b16 %v211, %v210
      %v226 = vpack.c.b16 %v213, %v212
      %v227 = vpack.c.b16 %v215, %v214
      %v228 = vpack.c.b16 %v217, %v216
      %v229 = vpack.c.b16 %v219, %v218
      %v230 = vpack.c.b16 %v221, %v220
      %v231 = vpack.c.b16 %v223, %v222
      %v233 = vshrl.u32 %v224, 16
      %v235 = vshll.u32 %v224, 16
      %v237 = vrot.slane %v235, 1
      %v238 = vor.u32 %v233, %v237
      %v240 = vshrl.u32 %v225, 16
      %v242 = vshll.u32 %v225, 16
      %v244 = vrot.slane %v242, 1
      %v245 = vor.u32 %v240, %v244
      %v247 = vshrl.u32 %v226, 16
      %v249 = vshll.u32 %v226, 16
      %v251 = vrot.slane %v249, 1
      %v252 = vor.u32 %v247, %v251
      %v254 = vshrl.u32 %v227, 16
      %v256 = vshll.u32 %v227, 16
      %v258 = vrot.slane %v256, 1
      %v259 = vor.u32 %v254, %v258
      %v261 = vshrl.u32 %v228, 16
      %v263 = vshll.u32 %v228, 16
      %v265 = vrot.slane %v263, 1
      %v266 = vor.u32 %v261, %v265
      %v268 = vshrl.u32 %v229, 16
      %v270 = vshll.u32 %v229, 16
      %v272 = vrot.slane %v270, 1
      %v273 = vor.u32 %v268, %v272
      %v275 = vshrl.u32 %v230, 16
      %v277 = vshll.u32 %v230, 16
      %v279 = vrot.slane %v277, 1
      %v280 = vor.u32 %v275, %v279
      %v282 = vshrl.u32 %v231, 16
      %v284 = vshll.u32 %v231, 16
      %v286 = vrot.slane %v284, 1
      %v287 = vor.u32 %v282, %v286
      %288 = vrot.lane.b32.xlu0 %v238, 32
      %v289 = vpop.permute.xlu0 %288
      %290 = vrot.lane.b32.xlu0 %v245, 32
      %v291 = vpop.permute.xlu0 %290
      %292 = vrot.lane.b32.xlu0 %v252, 32
      %v293 = vpop.permute.xlu0 %292
      %294 = vrot.lane.b32.xlu0 %v259, 32
      %v295 = vpop.permute.xlu0 %294
      %296 = vrot.lane.b32.xlu0 %v266, 32
      %v297 = vpop.permute.xlu0 %296
      %298 = vrot.lane.b32.xlu0 %v273, 32
      %v299 = vpop.permute.xlu0 %298
      %300 = vrot.lane.b32.xlu0 %v280, 32
      %v301 = vpop.permute.xlu0 %300
      %302 = vrot.lane.b32.xlu0 %v287, 32
      %v303 = vpop.permute.xlu0 %302
      %v304 = vrot.slane %v224, 1
      %v305 = vrot.slane %v225, 1
      %v306 = vrot.slane %v226, 1
      %v307 = vrot.slane %v227, 1
      %v308 = vrot.slane %v228, 1
      %v309 = vrot.slane %v229, 1
      %v310 = vrot.slane %v230, 1
      %v311 = vrot.slane %v231, 1
      %312 = vrot.lane.b32.xlu0 %v304, 64
      %v313 = vpop.permute.xlu0 %312
      %314 = vrot.lane.b32.xlu0 %v305, 64
      %v315 = vpop.permute.xlu0 %314
      %316 = vrot.lane.b32.xlu0 %v306, 64
      %v317 = vpop.permute.xlu0 %316
      %318 = vrot.lane.b32.xlu0 %v307, 64
      %v319 = vpop.permute.xlu0 %318
      %320 = vrot.lane.b32.xlu0 %v308, 64
      %v321 = vpop.permute.xlu0 %320
      %322 = vrot.lane.b32.xlu0 %v309, 64
      %v323 = vpop.permute.xlu0 %322
      %324 = vrot.lane.b32.xlu0 %v310, 64
      %v325 = vpop.permute.xlu0 %324
      %326 = vrot.lane.b32.xlu0 %v311, 64
      %v327 = vpop.permute.xlu0 %326
      %v329 = vunpack.c.l.b16 %v188
      %v330 = vpack.c.b16 %v210, %v210
      %v331 = vpack.c.b16 %v212, %v212
      %v332 = vpack.c.b16 %v214, %v214
      %v333 = vpack.c.b16 %v216, %v216
      %v334 = vpack.c.b16 %v218, %v218
      %v335 = vpack.c.b16 %v220, %v220
      %v336 = vpack.c.b16 %v222, %v222
      %v337 = vpack.c.b16 %v329, %v329
      %338 = vrot.lane.b32.xlu0 %v330, 96
      %v339 = vpop.permute.xlu0 %338
      %340 = vrot.lane.b32.xlu0 %v331, 96
      %v341 = vpop.permute.xlu0 %340
      %342 = vrot.lane.b32.xlu0 %v332, 96
      %v343 = vpop.permute.xlu0 %342
      %344 = vrot.lane.b32.xlu0 %v333, 96
      %v345 = vpop.permute.xlu0 %344
      %346 = vrot.lane.b32.xlu0 %v334, 96
      %v347 = vpop.permute.xlu0 %346
      %348 = vrot.lane.b32.xlu0 %v335, 96
      %v349 = vpop.permute.xlu0 %348
      %350 = vrot.lane.b32.xlu0 %v336, 96
      %v351 = vpop.permute.xlu0 %350
      %352 = vrot.lane.b32.xlu0 %v337, 96
      %v353 = vpop.permute.xlu0 %352
      %v355 = vunpack.c.l.b16 %v189
      %v356 = vpack.c.b16 %v355, %v329
      %v358 = vshrl.u32 %v356, 16
      %v360 = vshll.u32 %v356, 16
      %v362 = vrot.slane %v360, 1
      %v363 = vor.u32 %v358, %v362
      %v364 = vrot.slane %v356, 1
      %365 = vrot.lane.b32.xlu0 %v305, 32
      %v366 = vpop.permute.xlu0 %365
      %367 = vrot.lane.b32.xlu0 %v306, 32
      %v368 = vpop.permute.xlu0 %367
      %369 = vrot.lane.b32.xlu0 %v307, 32
      %v370 = vpop.permute.xlu0 %369
      %371 = vrot.lane.b32.xlu0 %v308, 32
      %v372 = vpop.permute.xlu0 %371
      %373 = vrot.lane.b32.xlu0 %v309, 32
      %v374 = vpop.permute.xlu0 %373
      %375 = vrot.lane.b32.xlu0 %v310, 32
      %v376 = vpop.permute.xlu0 %375
      %377 = vrot.lane.b32.xlu0 %v311, 32
      %v378 = vpop.permute.xlu0 %377
      %379 = vrot.lane.b32.xlu0 %v364, 32
      %v380 = vpop.permute.xlu0 %379
      %v382 = vunpack.c.l.b16 %v190
      %v383 = vpack.c.b16 %v382, %v382
      %384 = vrot.lane.b32.xlu0 %v331, 64
      %v385 = vpop.permute.xlu0 %384
      %386 = vrot.lane.b32.xlu0 %v332, 64
      %v387 = vpop.permute.xlu0 %386
      %388 = vrot.lane.b32.xlu0 %v333, 64
      %v389 = vpop.permute.xlu0 %388
      %390 = vrot.lane.b32.xlu0 %v334, 64
      %v391 = vpop.permute.xlu0 %390
      %392 = vrot.lane.b32.xlu0 %v335, 64
      %v393 = vpop.permute.xlu0 %392
      %394 = vrot.lane.b32.xlu0 %v336, 64
      %v395 = vpop.permute.xlu0 %394
      %396 = vrot.lane.b32.xlu0 %v337, 64
      %v397 = vpop.permute.xlu0 %396
      %398 = vrot.lane.b32.xlu0 %v383, 64
      %v399 = vpop.permute.xlu0 %398
      %v401 = vunpack.c.l.b16 %v191
      %v402 = vpack.c.b16 %v401, %v382
      %v404 = vshrl.u32 %v402, 16
      %v406 = vshll.u32 %v402, 16
      %v408 = vrot.slane %v406, 1
      %v409 = vor.u32 %v404, %v408
      %410 = vrot.lane.b32.xlu0 %v252, 96
      %v411 = vpop.permute.xlu0 %410
      %412 = vrot.lane.b32.xlu0 %v259, 96
      %v413 = vpop.permute.xlu0 %412
      %414 = vrot.lane.b32.xlu0 %v266, 96
      %v415 = vpop.permute.xlu0 %414
      %416 = vrot.lane.b32.xlu0 %v273, 96
      %v417 = vpop.permute.xlu0 %416
      %418 = vrot.lane.b32.xlu0 %v280, 96
      %v419 = vpop.permute.xlu0 %418
      %420 = vrot.lane.b32.xlu0 %v287, 96
      %v421 = vpop.permute.xlu0 %420
      %422 = vrot.lane.b32.xlu0 %v363, 96
      %v423 = vpop.permute.xlu0 %422
      %424 = vrot.lane.b32.xlu0 %v409, 96
      %v425 = vpop.permute.xlu0 %424
      %v426 = vrot.slane %v402, 1
      %vm427 = vcmask 261120
      %v430 = vsel %vm427, %v172, %v289
      %v433 = vsel %vm427, %v174, %v291
      %v436 = vsel %vm427, %v176, %v293
      %v439 = vsel %vm427, %v178, %v295
      %v442 = vsel %vm427, %v180, %v297
      %v445 = vsel %vm427, %v182, %v299
      %v448 = vsel %vm427, %v184, %v301
      %v451 = vsel %vm427, %v186, %v303
      %vm452 = vcmask 523264
      %v454 = vsel %vm452, %v430, %v313
      %v456 = vsel %vm452, %v433, %v315
      %v458 = vsel %vm452, %v436, %v317
      %v460 = vsel %vm452, %v439, %v319
      %v462 = vsel %vm452, %v442, %v321
      %v464 = vsel %vm452, %v445, %v323
      %v466 = vsel %vm452, %v448, %v325
      %v468 = vsel %vm452, %v451, %v327
      %vm469 = vcmask 785408
      %v471 = vsel %vm469, %v454, %v339
      %v473 = vsel %vm469, %v456, %v341
      %v475 = vsel %vm469, %v458, %v343
      %v477 = vsel %vm469, %v460, %v345
      %v479 = vsel %vm469, %v462, %v347
      %v481 = vsel %vm469, %v464, %v349
      %v483 = vsel %vm469, %v466, %v351
      %v485 = vsel %vm469, %v468, %v353
      %v488 = vsel %vm427, %v245, %v366
      %v491 = vsel %vm427, %v252, %v368
      %v494 = vsel %vm427, %v259, %v370
      %v497 = vsel %vm427, %v266, %v372
      %v500 = vsel %vm427, %v273, %v374
      %v503 = vsel %vm427, %v280, %v376
      %v506 = vsel %vm427, %v287, %v378
      %v509 = vsel %vm427, %v363, %v380
      %v511 = vsel %vm452, %v488, %v385
      %v513 = vsel %vm452, %v491, %v387
      %v515 = vsel %vm452, %v494, %v389
      %v517 = vsel %vm452, %v497, %v391
      %v519 = vsel %vm452, %v500, %v393
      %v521 = vsel %vm452, %v503, %v395
      %v523 = vsel %vm452, %v506, %v397
      %v525 = vsel %vm452, %v509, %v399
      %v527 = vsel %vm469, %v511, %v411
      %v529 = vsel %vm469, %v513, %v413
      %v531 = vsel %vm469, %v515, %v415
      %v533 = vsel %vm469, %v517, %v417
      %v535 = vsel %vm469, %v519, %v419
      %v537 = vsel %vm469, %v521, %v421
      %v539 = vsel %vm469, %v523, %v423
      %v541 = vsel %vm469, %v525, %v425
      %v558 = vunpack.c.l.b16 %v471
      %v559 = vunpack.c.l.b16 %v527
      %v560 = vunpack.c.l.b16 %v306
      %v561 = vunpack.c.l.b16 %v473
      %v562 = vunpack.c.l.b16 %v529
      %v563 = vunpack.c.l.b16 %v307
      %v564 = vunpack.c.l.b16 %v475
      %v565 = vunpack.c.l.b16 %v531
      %v566 = vunpack.c.l.b16 %v308
      %v567 = vunpack.c.l.b16 %v477
      %v568 = vunpack.c.l.b16 %v533
      %v569 = vunpack.c.l.b16 %v309
      %v570 = vunpack.c.l.b16 %v479
      %v571 = vunpack.c.l.b16 %v535
      %v572 = vunpack.c.l.b16 %v310
      %v573 = vunpack.c.l.b16 %v481
      %v574 = vunpack.c.l.b16 %v537
      %v575 = vunpack.c.l.b16 %v311
      %v576 = vunpack.c.l.b16 %v483
      %v577 = vunpack.c.l.b16 %v539
      %v578 = vunpack.c.l.b16 %v364
      %v579 = vunpack.c.l.b16 %v485
      %v580 = vunpack.c.l.b16 %v541
      %v581 = vunpack.c.l.b16 %v426
      %v582 = vld [vmem:[%s1] sm:$0xf]
      %v583 = vld [vmem:[%s1 + $0x4] sm:$0xf]
      %v584 = vld [vmem:[%s1 + $0x8] sm:$0xf]
      %v585 = vld [vmem:[%s1 + $0xc] sm:$0xf]
      %v586 = vld [vmem:[%s1 + $0x10] sm:$0xf]
      %v587 = vld [vmem:[%s1 + $0x14] sm:$0xf]
      %v588 = vld [vmem:[%s1 + $0x18] sm:$0xf]
      %v589 = vld [vmem:[%s1 + $0x1c] sm:$0xf]
      %v590 = vld [vmem:[%s1 + $0x20] sm:$0xf]
      %v591 = vld [vmem:[%s1 + $0x24] sm:$0xf]
      %v592 = vld [vmem:[%s1 + $0x28] sm:$0xf]
      %v593 = vld [vmem:[%s1 + $0x2c] sm:$0xf]
      %v594 = vld [vmem:[%s1 + $0x30] sm:$0xf]
      %v595 = vld [vmem:[%s1 + $0x34] sm:$0xf]
      %v596 = vld [vmem:[%s1 + $0x38] sm:$0xf]
      %v597 = vld [vmem:[%s1 + $0x3c] sm:$0xf]
      %v598 = vld [vmem:[%s1 + $0x40] sm:$0xf]
      %v599 = vld [vmem:[%s1 + $0x44] sm:$0xf]
      %v600 = vld [vmem:[%s1 + $0x48] sm:$0xf]
      %v601 = vld [vmem:[%s1 + $0x4c] sm:$0xf]
      %v602 = vld [vmem:[%s1 + $0x50] sm:$0xf]
      %v603 = vld [vmem:[%s1 + $0x54] sm:$0xf]
      %v604 = vld [vmem:[%s1 + $0x58] sm:$0xf]
      %v605 = vld [vmem:[%s1 + $0x5c] sm:$0xf]
      %v606 = vld [vmem:[%s1 + $0x60] sm:$0xf]
      %v607 = vld [vmem:[%s1 + $0x64] sm:$0xf]
      %v608 = vld [vmem:[%s1 + $0x68] sm:$0xf]
      %v609 = vld [vmem:[%s1 + $0x6c] sm:$0xf]
      %v610 = vld [vmem:[%s1 + $0x70] sm:$0xf]
      %v611 = vld [vmem:[%s1 + $0x74] sm:$0xf]
      %v612 = vld [vmem:[%s1 + $0x78] sm:$0xf]
      %v613 = vld [vmem:[%s1 + $0x7c] sm:$0xf]
      %v614 = vld [vmem:[%s1 + $0x80] sm:$0xf]
      %v615 = vld [vmem:[%s1 + $0x84] sm:$0xf]
      %v616 = vld [vmem:[%s1 + $0x88] sm:$0xf]
      %v617 = vld [vmem:[%s1 + $0x8c] sm:$0xf]
      %v618 = vld [vmem:[%s2] sm:$0x1]
      %v620 = vlaneseq
      %v621 = vshrl.u32 %v620, 7
      %v622 = vsub.s32 0, %v621
      %v623 = vrot.slane %v618, %v622
      %v625 = vpack.c.b16 %v561, %v558
      %v626 = vpack.c.b16 %v562, %v559
      %v627 = vpack.c.b16 %v563, %v560
      %v628 = vpack.c.b16 %v567, %v564
      %v629 = vpack.c.b16 %v568, %v565
      %v630 = vpack.c.b16 %v569, %v566
      %v631 = vpack.c.b16 %v573, %v570
      %v632 = vpack.c.b16 %v574, %v571
      %v633 = vpack.c.b16 %v575, %v572
      %v634 = vpack.c.b16 %v579, %v576
      %v635 = vpack.c.b16 %v580, %v577
      %v636 = vpack.c.b16 %v581, %v578
      %v681 = vunpack.c.l.b16 %v582
      %v682 = vunpack.c.l.b16 %v583
      %v683 = vunpack.c.l.b16 %v584
      %v684 = vunpack.c.l.b16 %v585
      %v685 = vunpack.c.l.b16 %v586
      %v686 = vunpack.c.l.b16 %v587
      %v687 = vunpack.c.l.b16 %v588
      %v688 = vunpack.c.l.b16 %v589
      %v689 = vunpack.c.l.b16 %v590
      %v690 = vunpack.c.l.b16 %v591
      %v691 = vunpack.c.l.b16 %v592
      %v692 = vunpack.c.l.b16 %v593
      %v693 = vunpack.c.l.b16 %v594
      %v694 = vunpack.c.l.b16 %v595
      %v695 = vunpack.c.l.b16 %v596
      %v696 = vunpack.c.l.b16 %v597
      %v697 = vunpack.c.l.b16 %v598
      %v698 = vunpack.c.l.b16 %v599
      %v699 = vunpack.c.l.b16 %v600
      %v700 = vunpack.c.l.b16 %v601
      %v701 = vunpack.c.l.b16 %v602
      %v702 = vunpack.c.l.b16 %v603
      %v703 = vunpack.c.l.b16 %v604
      %v704 = vunpack.c.l.b16 %v605
      %v705 = vunpack.c.l.b16 %v606
      %v706 = vunpack.c.l.b16 %v607
      %v707 = vunpack.c.l.b16 %v608
      %v708 = vunpack.c.l.b16 %v609
      %v709 = vunpack.c.l.b16 %v610
      %v710 = vunpack.c.l.b16 %v611
      %v711 = vunpack.c.l.b16 %v612
      %v712 = vunpack.c.l.b16 %v613
      %v713 = vunpack.c.l.b16 %v614
      %v714 = vunpack.c.l.b16 %v615
      %v715 = vunpack.c.l.b16 %v616
      %v716 = vunpack.c.l.b16 %v617
      %v717 = vpack.c.b16 %v682, %v681
      %v718 = vpack.c.b16 %v684, %v683
      %v719 = vpack.c.b16 %v686, %v685
      %v720 = vpack.c.b16 %v688, %v687
      %v721 = vpack.c.b16 %v690, %v689
      %v722 = vpack.c.b16 %v692, %v691
      %v723 = vpack.c.b16 %v694, %v693
      %v724 = vpack.c.b16 %v696, %v695
      %v725 = vpack.c.b16 %v698, %v697
      %v726 = vpack.c.b16 %v700, %v699
      %v727 = vpack.c.b16 %v702, %v701
      %v728 = vpack.c.b16 %v704, %v703
      %v729 = vpack.c.b16 %v706, %v705
      %v730 = vpack.c.b16 %v708, %v707
      %v731 = vpack.c.b16 %v710, %v709
      %v732 = vpack.c.b16 %v712, %v711
      %v733 = vpack.c.b16 %v714, %v713
      %v734 = vpack.c.b16 %v716, %v715
      %v754 = vsel %vm427, %v627, 0
      %v757 = vsel %vm427, %v630, 0
      %v760 = vsel %vm427, %v633, 0
      %v763 = vsel %vm427, %v636, 0
      %765 = vmatprep.subr.bf16.mxu0 0
      %766 = vmatpush1.bf16.msra.mxu0 %v717
      %767 = vmatprep.subr.bf16.mxu0 0
      %768 = vmatpush1.bf16.msra.mxu0 %v718
      %769 = vmatprep.subr.bf16.mxu0 0
      %770 = vmatpush1.bf16.msra.mxu0 %v719
      %771 = vmatprep.subr.bf16.mxu0 0
      %772 = vmatpush1.bf16.msra.mxu0 %v720
      %773 = vmatprep.subr.bf16.mxu0 0
      %774 = vmatpush1.bf16.msra.mxu0 %v721
      %775 = vmatprep.subr.bf16.mxu0 0
      %776 = vmatpush1.bf16.msra.mxu0 %v722
      %777 = vmatprep.subr.bf16.mxu0 0
      %778 = vmatpush1.bf16.msra.mxu0 %v723
      %779 = vmatprep.subr.bf16.mxu0 0
      %780 = vmatpush1.bf16.msra.mxu0 %v724
      %781 = vmatprep.subr.bf16.mxu0 0
      %782 = vmatpush1.bf16.msra.mxu0 %v725
      %783 = vmatprep.subr.bf16.mxu0 0
      %784 = vmatpush1.bf16.msra.mxu0 %v726
      %785 = vmatprep.subr.bf16.mxu0 0
      %786 = vmatpush1.bf16.msra.mxu0 %v727
      %787 = vmatprep.subr.bf16.mxu0 0
      %788 = vmatpush1.bf16.msra.mxu0 %v728
      %789 = vmatprep.subr.bf16.mxu0 0
      %790 = vmatpush1.bf16.msra.mxu0 %v729
      %791 = vmatprep.subr.bf16.mxu0 0
      %792 = vmatpush1.bf16.msra.mxu0 %v730
      %793 = vmatprep.subr.bf16.mxu0 0
      %794 = vmatpush1.bf16.msra.mxu0 %v731
      %795 = vmatprep.subr.bf16.mxu0 0
      %796 = vmatpush1.bf16.msra.mxu0 %v732
      %797 = vmatprep.mubr.bf16.mxu0 %v626
      %798 = vmatmul.mubr.bf16.gmra.mrb[0].mxu0 %v625
      %v799 = vpop.f32.mrb[0].mxu0
      %v800 = vadd.f32 %v623, %v799
      %v801 = vpop.f32.mrb[0].mxu0
      %v802 = vpop.f32.mrb[0].mxu0
      %v803 = vadd.f32 %v623, %v802
      %v804 = vpop.f32.mrb[0].mxu0
      %805 = vmatprep.mubr.bf16.mxu0 %v629
      %806 = vmatmul.mubr.bf16.gmra.mrb[0].mxu0 %v628
      %v807 = vpop.f32.mrb[0].mxu0
      %v808 = vadd.f32 %v623, %v807
      %v809 = vpop.f32.mrb[0].mxu0
      %v810 = vpop.f32.mrb[0].mxu0
      %v811 = vadd.f32 %v623, %v810
      %v812 = vpop.f32.mrb[0].mxu0
      %813 = vmatprep.mubr.bf16.mxu0 %v632
      %814 = vmatmul.mubr.bf16.gmra.mrb[0].mxu0 %v631
      %v815 = vpop.f32.mrb[0].mxu0
      %v816 = vadd.f32 %v623, %v815
      %v817 = vpop.f32.mrb[0].mxu0
      %v818 = vpop.f32.mrb[0].mxu0
      %v819 = vadd.f32 %v623, %v818
      %v820 = vpop.f32.mrb[0].mxu0
      %821 = vmatprep.mubr.bf16.mxu0 %v635
      %822 = vmatmul.mubr.bf16.gmra.mrb[0].mxu0 %v634
      %v823 = vpop.f32.mrb[0].mxu0
      %v824 = vadd.f32 %v623, %v823
      %v825 = vpop.f32.mrb[0].mxu0
      %v826 = vpop.f32.mrb[0].mxu0
      %v827 = vadd.f32 %v623, %v826
      %v828 = vpop.f32.mrb[0].mxu0
      %829 = vdwg.mxu0
      %830 = vmatprep.subr.bf16.mxu0 0
      %831 = vmatpush1.bf16.msra.mxu0 %v733
      %832 = vmatprep.subr.bf16.mxu0 0
      %833 = vmatpush1.bf16.msra.mxu0 %v734
      %834 = vmatprep.subr.bf16.mxu0 0
      %835 = vmatpush1.bf16.msra.mxu0 0
      %836 = vmatprep.subr.bf16.mxu0 0
      %837 = vmatpush1.bf16.msra.mxu0 0
      %838 = vmatprep.subr.bf16.mxu0 0
      %839 = vmatpush1.bf16.msra.mxu0 0
      %840 = vmatprep.subr.bf16.mxu0 0
      %841 = vmatpush1.bf16.msra.mxu0 0
      %842 = vmatprep.subr.bf16.mxu0 0
      %843 = vmatpush1.bf16.msra.mxu0 0
      %844 = vmatprep.subr.bf16.mxu0 0
      %845 = vmatpush1.bf16.msra.mxu0 0
      %846 = vmatprep.subr.bf16.mxu0 0
      %847 = vmatpush1.bf16.msra.mxu0 0
      %848 = vmatprep.subr.bf16.mxu0 0
      %849 = vmatpush1.bf16.msra.mxu0 0
      %850 = vmatprep.subr.bf16.mxu0 0
      %851 = vmatpush1.bf16.msra.mxu0 0
      %852 = vmatprep.subr.bf16.mxu0 0
      %853 = vmatpush1.bf16.msra.mxu0 0
      %854 = vmatprep.subr.bf16.mxu0 0
      %855 = vmatpush1.bf16.msra.mxu0 0
      %856 = vmatprep.subr.bf16.mxu0 0
      %857 = vmatpush1.bf16.msra.mxu0 0
      %858 = vmatprep.subr.bf16.mxu0 0
      %859 = vmatpush1.bf16.msra.mxu0 0
      %860 = vmatprep.subr.bf16.mxu0 0
      %861 = vmatpush1.bf16.msra.mxu0 0
      %862 = vmatprep.mubr.bf16.mxu0 0
      %863 = vmatmul.mubr.bf16.gmra.mrb[0].mxu0 %v754
      %v864 = vpop.f32.mrb[0].mxu0
      %v865 = vadd.f32 %v800, %v864
      %v866 = vpop.f32.mrb[0].mxu0
      %v867 = vpop.f32.mrb[0].mxu0
      %v868 = vadd.f32 %v803, %v867
      %v869 = vpop.f32.mrb[0].mxu0
      %870 = vmatprep.mubr.bf16.mxu0 0
      %871 = vmatmul.mubr.bf16.gmra.mrb[0].mxu0 %v757
      %v872 = vpop.f32.mrb[0].mxu0
      %v873 = vadd.f32 %v808, %v872
      %v874 = vpop.f32.mrb[0].mxu0
      %v875 = vpop.f32.mrb[0].mxu0
      %v876 = vadd.f32 %v811, %v875
      %v877 = vpop.f32.mrb[0].mxu0
      %878 = vmatprep.mubr.bf16.mxu0 0
      %879 = vmatmul.mubr.bf16.gmra.mrb[0].mxu0 %v760
      %v880 = vpop.f32.mrb[0].mxu0
      %v881 = vadd.f32 %v816, %v880
      %v882 = vpop.f32.mrb[0].mxu0
      %v883 = vpop.f32.mrb[0].mxu0
      %v884 = vadd.f32 %v819, %v883
      %v885 = vpop.f32.mrb[0].mxu0
      %886 = vmatprep.mubr.bf16.mxu0 0
      %887 = vmatmul.mubr.bf16.gmra.mrb[0].mxu0 %v763
      %v888 = vpop.f32.mrb[0].mxu0
      %v889 = vadd.f32 %v824, %v888
      %v890 = vpop.f32.mrb[0].mxu0
      %v891 = vpop.f32.mrb[0].mxu0
      %v892 = vadd.f32 %v827, %v891
      %v893 = vpop.f32.mrb[0].mxu0
      %894 = vdwg.mxu0
      %v895 = vmax.f32 %v865, 0.0
      %v896 = vmax.f32 %v868, 0.0
      %v897 = vmax.f32 %v873, 0.0
      %v898 = vmax.f32 %v876, 0.0
      %v899 = vmax.f32 %v881, 0.0
      %v900 = vmax.f32 %v884, 0.0
      %v901 = vmax.f32 %v889, 0.0
      %v902 = vmax.f32 %v892, 0.0
      %v903 = vpack.c.bf16 %v896, %v895
      %v904 = vpack.c.bf16 %v898, %v897
      %v905 = vpack.c.bf16 %v900, %v899
      %v906 = vpack.c.bf16 %v902, %v901
      %v911 = vunpack.c.l.b16 %v903
      %v912 = vunpack.c.h.b16 %v903
      %v913 = vunpack.c.l.b16 %v904
      %v914 = vunpack.c.h.b16 %v904
      %v915 = vunpack.c.l.b16 %v905
      %v916 = vunpack.c.h.b16 %v905
      %v917 = vunpack.c.l.b16 %v906
      %v918 = vunpack.c.h.b16 %v906
      %vm919 = vcmask 322560
      %920 = vst.msk [vmem:[%s170] sm:$0xf] %vm919, 0
      %vm921 = vcmask 319488
      %922 = vst.msk [vmem:[%s170 + $0x4] sm:$0x1] %vm921, 0
      %923 = vst.msk [vmem:[%s170 + $0x8] sm:$0xf] %vm919, 0
      %924 = vst.msk [vmem:[%s170 + $0xc] sm:$0x1] %vm921, 0
      %925 = vst.msk [vmem:[%s170 + $0x10] sm:$0xf] %vm919, 0
      %926 = vst.msk [vmem:[%s170 + $0x14] sm:$0x1] %vm921, 0
      %927 = vst.msk [vmem:[%s170 + $0x18] sm:$0xf] %vm919, 0
      %928 = vst.msk [vmem:[%s170 + $0x1c] sm:$0x1] %vm921, 0
      %929 = vst.msk [vmem:[%s170 + $0x20] sm:$0xf] %vm919, 0
      %930 = vst.msk [vmem:[%s170 + $0x24] sm:$0x1] %vm921, 0
      %931 = vst.msk [vmem:[%s170 + $0x28] sm:$0xf] %vm919, 0
      %932 = vst.msk [vmem:[%s170 + $0x2c] sm:$0x1] %vm921, 0
      %933 = vst.msk [vmem:[%s170 + $0x30] sm:$0xf] %vm919, 0
      %934 = vst.msk [vmem:[%s170 + $0x34] sm:$0x1] %vm921, 0
      %935 = vst.msk [vmem:[%s170 + $0x38] sm:$0xf] %vm919, 0
      %936 = vst.msk [vmem:[%s170 + $0x3c] sm:$0x1] %vm921, 0
      %937 = vst.msk [vmem:[%s170 + $0x40] sm:$0xf] %vm919, 0
      %938 = vst.msk [vmem:[%s170 + $0x44] sm:$0x1] %vm921, 0
      %939 = vst.msk [vmem:[%s170 + $0x48] sm:$0xf] %vm919, 0
      %940 = vst.msk [vmem:[%s170 + $0x4c] sm:$0x1] %vm921, 0
      %v941 = vpack.c.b16 %v911, %v911
      %v942 = vpack.c.b16 %v912, %v912
      %v943 = vpack.c.b16 %v913, %v913
      %v944 = vpack.c.b16 %v914, %v914
      %v945 = vpack.c.b16 %v915, %v915
      %v946 = vpack.c.b16 %v916, %v916
      %v947 = vpack.c.b16 %v917, %v917
      %v948 = vpack.c.b16 %v918, %v918
      %v950 = vshrl.u32 %v941, 16
      %v952 = vrot.slane %v950, 7
      %v953 = vshll.u32 %v941, 16
      %v955 = vor.u32 %v952, %v953
      %v957 = vshrl.u32 %v942, 16
      %v959 = vrot.slane %v957, 7
      %v960 = vshll.u32 %v942, 16
      %v962 = vor.u32 %v959, %v960
      %v964 = vshrl.u32 %v943, 16
      %v966 = vrot.slane %v964, 7
      %v967 = vshll.u32 %v943, 16
      %v969 = vor.u32 %v966, %v967
      %v971 = vshrl.u32 %v944, 16
      %v973 = vrot.slane %v971, 7
      %v974 = vshll.u32 %v944, 16
      %v976 = vor.u32 %v973, %v974
      %v978 = vshrl.u32 %v945, 16
      %v980 = vrot.slane %v978, 7
      %v981 = vshll.u32 %v945, 16
      %v983 = vor.u32 %v980, %v981
      %v985 = vshrl.u32 %v946, 16
      %v987 = vrot.slane %v985, 7
      %v988 = vshll.u32 %v946, 16
      %v990 = vor.u32 %v987, %v988
      %v992 = vshrl.u32 %v947, 16
      %v994 = vrot.slane %v992, 7
      %v995 = vshll.u32 %v947, 16
      %v997 = vor.u32 %v994, %v995
      %v999 = vshrl.u32 %v948, 16
      %v1001 = vrot.slane %v999, 7
      %v1002 = vshll.u32 %v948, 16
      %v1004 = vor.u32 %v1001, %v1002
      %1005 = vrot.lane.b32.xlu0 %v955, 32
      %v1006 = vpop.permute.xlu0 %1005
      %1007 = vrot.lane.b32.xlu0 %v962, 32
      %v1008 = vpop.permute.xlu0 %1007
      %1009 = vrot.lane.b32.xlu0 %v969, 32
      %v1010 = vpop.permute.xlu0 %1009
      %1011 = vrot.lane.b32.xlu0 %v976, 32
      %v1012 = vpop.permute.xlu0 %1011
      %1013 = vrot.lane.b32.xlu0 %v983, 32
      %v1014 = vpop.permute.xlu0 %1013
      %1015 = vrot.lane.b32.xlu0 %v990, 32
      %v1016 = vpop.permute.xlu0 %1015
      %1017 = vrot.lane.b32.xlu0 %v997, 32
      %v1018 = vpop.permute.xlu0 %1017
      %1019 = vrot.lane.b32.xlu0 %v1004, 32
      %v1020 = vpop.permute.xlu0 %1019
      %v1022 = vsel %vm427, %v225, %v1006
      %v1024 = vsel %vm427, %v226, %v1008
      %v1026 = vsel %vm427, %v227, %v1010
      %v1028 = vsel %vm427, %v228, %v1012
      %v1030 = vsel %vm427, %v229, %v1014
      %v1032 = vsel %vm427, %v230, %v1016
      %v1034 = vsel %vm427, %v231, %v1018
      %v1036 = vsel %vm427, %v356, %v1020
      %v1045 = vunpack.c.l.b16 %v1022
      %v1046 = vunpack.c.h.b16 %v1022
      %v1047 = vunpack.c.l.b16 %v1024
      %v1048 = vunpack.c.h.b16 %v1024
      %v1049 = vunpack.c.l.b16 %v1026
      %v1050 = vunpack.c.h.b16 %v1026
      %v1051 = vunpack.c.l.b16 %v1028
      %v1052 = vunpack.c.h.b16 %v1028
      %v1053 = vunpack.c.l.b16 %v1030
      %v1054 = vunpack.c.h.b16 %v1030
      %v1055 = vunpack.c.l.b16 %v1032
      %v1056 = vunpack.c.h.b16 %v1032
      %v1057 = vunpack.c.l.b16 %v1034
      %v1058 = vunpack.c.h.b16 %v1034
      %v1059 = vunpack.c.l.b16 %v1036
      %v1060 = vunpack.c.h.b16 %v1036
      %v1061 = vpack.c.b16 %v1045, %v1045
      %v1062 = vpack.c.b16 %v1046, %v1046
      %v1063 = vpack.c.b16 %v1047, %v1047
      %v1064 = vpack.c.b16 %v1048, %v1048
      %v1065 = vpack.c.b16 %v1049, %v1049
      %v1066 = vpack.c.b16 %v1050, %v1050
      %v1067 = vpack.c.b16 %v1051, %v1051
      %v1068 = vpack.c.b16 %v1052, %v1052
      %v1069 = vpack.c.b16 %v1053, %v1053
      %v1070 = vpack.c.b16 %v1054, %v1054
      %v1071 = vpack.c.b16 %v1055, %v1055
      %v1072 = vpack.c.b16 %v1056, %v1056
      %v1073 = vpack.c.b16 %v1057, %v1057
      %v1074 = vpack.c.b16 %v1058, %v1058
      %v1075 = vpack.c.b16 %v1059, %v1059
      %v1076 = vpack.c.b16 %v1060, %v1060
      %s1093 = scalar_lea.vmem %s170, 8
      %vm1094 = vcmask 322560
      %vm1095 = vsmask.f32 7938
      %vm1096 = vmand %vm1094, %vm1095
      %v1097 = vld [vmem:[%s1093] sm:$0xf]
      %v1098 = vsel %vm1096, %v1061, %v1097
      %1099 = vst [vmem:[%s1093] sm:$0xf] %v1098
      %vm1100 = vcmask 319488
      %vm1101 = vsmask.f32 256
      %vm1102 = vmand %vm1100, %vm1101
      %v1103 = vld [vmem:[%s1093 + $0x4] sm:$0x1]
      %v1104 = vsel %vm1102, %v1062, %v1103
      %1105 = vst [vmem:[%s1093 + $0x4] sm:$0x1] %v1104
      %v1106 = vld [vmem:[%s1093 + $0x8] sm:$0xf]
      %v1107 = vsel %vm1096, %v1063, %v1106
      %1108 = vst [vmem:[%s1093 + $0x8] sm:$0xf] %v1107
      %v1109 = vld [vmem:[%s1093 + $0xc] sm:$0x1]
      %v1110 = vsel %vm1102, %v1064, %v1109
      %1111 = vst [vmem:[%s1093 + $0xc] sm:$0x1] %v1110
      %v1112 = vld [vmem:[%s1093 + $0x10] sm:$0xf]
      %v1113 = vsel %vm1096, %v1065, %v1112
      %1114 = vst [vmem:[%s1093 + $0x10] sm:$0xf] %v1113
      %v1115 = vld [vmem:[%s1093 + $0x14] sm:$0x1]
      %v1116 = vsel %vm1102, %v1066, %v1115
      %1117 = vst [vmem:[%s1093 + $0x14] sm:$0x1] %v1116
      %v1118 = vld [vmem:[%s1093 + $0x18] sm:$0xf]
      %v1119 = vsel %vm1096, %v1067, %v1118
      %1120 = vst [vmem:[%s1093 + $0x18] sm:$0xf] %v1119
      %v1121 = vld [vmem:[%s1093 + $0x1c] sm:$0x1]
      %v1122 = vsel %vm1102, %v1068, %v1121
      %1123 = vst [vmem:[%s1093 + $0x1c] sm:$0x1] %v1122
      %v1124 = vld [vmem:[%s1093 + $0x20] sm:$0xf]
      %v1125 = vsel %vm1096, %v1069, %v1124
      %1126 = vst [vmem:[%s1093 + $0x20] sm:$0xf] %v1125
      %v1127 = vld [vmem:[%s1093 + $0x24] sm:$0x1]
      %v1128 = vsel %vm1102, %v1070, %v1127
      %1129 = vst [vmem:[%s1093 + $0x24] sm:$0x1] %v1128
      %v1130 = vld [vmem:[%s1093 + $0x28] sm:$0xf]
      %v1131 = vsel %vm1096, %v1071, %v1130
      %1132 = vst [vmem:[%s1093 + $0x28] sm:$0xf] %v1131
      %v1133 = vld [vmem:[%s1093 + $0x2c] sm:$0x1]
      %v1134 = vsel %vm1102, %v1072, %v1133
      %1135 = vst [vmem:[%s1093 + $0x2c] sm:$0x1] %v1134
      %v1136 = vld [vmem:[%s1093 + $0x30] sm:$0xf]
      %v1137 = vsel %vm1096, %v1073, %v1136
      %1138 = vst [vmem:[%s1093 + $0x30] sm:$0xf] %v1137
      %v1139 = vld [vmem:[%s1093 + $0x34] sm:$0x1]
      %v1140 = vsel %vm1102, %v1074, %v1139
      %1141 = vst [vmem:[%s1093 + $0x34] sm:$0x1] %v1140
      %v1142 = vld [vmem:[%s1093 + $0x38] sm:$0xf]
      %v1143 = vsel %vm1096, %v1075, %v1142
      %1144 = vst [vmem:[%s1093 + $0x38] sm:$0xf] %v1143
      %v1145 = vld [vmem:[%s1093 + $0x3c] sm:$0x1]
      %v1146 = vsel %vm1102, %v1076, %v1145
      %1147 = vst [vmem:[%s1093 + $0x3c] sm:$0x1] %v1146
      %p1148 = scmp.lt.s32.totalorder %s14, 1
      %s1149 = scalar_select %p1148, %s14, 1
      %s1150 = smul.addr %s1149, 20
      %s1151 = smul.addr %s1150, 4
      %s1152 = scalar_lea.vmem %s3, %s1151
      // Predicated region
      $region33: #{last_forward.15} parent=31 // pred_check
        %p1153 = pneg %p100
      $region34: #{last_forward.15} parent=31 // pred_check_branch
        %1155 = sbr.rel (%p1153) target = $region36
      $region35: #{last_forward.15} parent=31 // pred_region
        _
      $region36: #{last_forward.15} parent=31 // pred_fallthru
        _
    $region32: #{last_forward.15} parent=5 // pred_fallthru
      _
    %p1156 = scmp.le.s32.totalorder 2, %s9
    // Predicated region
    $region37: #{last_forward.15} parent=5 // pred_check
      %p1157 = pneg %p1156
    $region38: #{last_forward.15} parent=5 // pred_check_branch
      %1159 = sbr.rel (%p1157) target = $region40
    $region39: #{last_forward.15} parent=5 // pred_region
      %s1160 = ssub.s32 %s9, 2
      // Predicated region
      $region41: #{last_forward.15} parent=39 // pred_check
        %p1161 = pneg %p106
      $region42: #{last_forward.15} parent=39 // pred_check_branch
        %1163 = sbr.rel (%p1161) target = $region44
      $region43: #{last_forward.15} parent=39 // pred_region
        %p1164 = scmp.lt.s32.totalorder %s15, 1
        %s1165 = scalar_select %p1164, %s15, 1
        %s1166 = smul.addr %s1165, 20
        %s1167 = smul.addr %s1166, 4
        %s1168 = scalar_lea.vmem %s3, %s1167
      $region44: #{last_forward.15} parent=39 // pred_fallthru
        _
    $region40: #{last_forward.15} parent=5 // pred_fallthru
      _
  $region6: #{last_forward.15} parent=0 // loop_footer
    %s13 = sadd.s32 1, %s9
  $region7: #{last_forward.15} parent=0 // loop_footer_branch
    %8 = sbr.rel target = $region3
  $region8: #{last_forward.15} parent=0 // loop_exit
    _

// kernel: last_forward.16
$region0: #{last_forward.16}
  #allocation0 [shape = 'u32[]', space=smem, size = 0x4, offset = 0x4, fixed_abs, tag = 'smem constant byte address 0x4 - core index']
  #allocation1 [shape = 'u32[144,128]{1,0:T(1,128)}', space=vmem, size = 0x12000, scoped, tag = 'internal scratch']
  %s0 = inlined_call_operand.vmem [shape: bf16[128,40], index: 0, kind: input, shape index: {}]
  %s1 = inlined_call_operand.vmem [shape: bf16[40,32], index: 1, kind: input, shape index: {}]
  %s2 = inlined_call_operand.vmem [shape: f32[1,32], index: 2, kind: input, shape index: {}]
  %s3 = inlined_call_operand.vmem [shape: f32[1,32], index: 3, kind: input, shape index: {}]
  %s4 = inlined_call_operand.vmem [shape: f32[1,32], index: 4, kind: input, shape index: {}]
  %s5 = inlined_call_operand.vmem [shape: f32[128,32], index: 5, kind: output, shape index: {}]
  %s6 = sld [smem:[#allocation0]]
  $region30: #{last_forward.16} parent=0
    _
  %s8 = ssub.s32 1, %s6
  %s9 = scalar_select 0, %s8, %s6
  // Predicated region
  $region2: #{last_forward.16} parent=0 // pred_check
    _
  $region3: #{last_forward.16} parent=0 // pred_check_branch
    %11 = sbr.rel (0) target = $region5
  $region4: #{last_forward.16} parent=0 // pred_region
    _
  $region5: #{last_forward.16} parent=0 // pred_fallthru
    _
  // Predicated region
  $region6: #{last_forward.16} parent=0 // pred_check
    _
  $region7: #{last_forward.16} parent=0 // pred_check_branch
    %13 = sbr.rel (0) target = $region9
  $region8: #{last_forward.16} parent=0 // pred_region
    _
  $region9: #{last_forward.16} parent=0 // pred_fallthru
    _
  // Predicated region
  $region10: #{last_forward.16} parent=0 // pred_check
    _
  $region11: #{last_forward.16} parent=0 // pred_check_branch
    %15 = sbr.rel (0) target = $region13
  $region12: #{last_forward.16} parent=0 // pred_region
    _
  $region13: #{last_forward.16} parent=0 // pred_fallthru
    _
  // Predicated region
  $region14: #{last_forward.16} parent=0 // pred_check
    _
  $region15: #{last_forward.16} parent=0 // pred_check_branch
    %17 = sbr.rel (0) target = $region17
  $region16: #{last_forward.16} parent=0 // pred_region
    _
  $region17: #{last_forward.16} parent=0 // pred_fallthru
    _
  // Predicated region
  $region18: #{last_forward.16} parent=0 // pred_check
    _
  $region19: #{last_forward.16} parent=0 // pred_check_branch
    %19 = sbr.rel (0) target = $region21
  $region20: #{last_forward.16} parent=0 // pred_region
    _
  $region21: #{last_forward.16} parent=0 // pred_fallthru
    _
  %v21 = vld [vmem:[%s0] sm:$0xf]
  %v22 = vld [vmem:[%s0 + $0x4] sm:$0xf]
  %v23 = vld [vmem:[%s0 + $0x8] sm:$0xf]
  %v24 = vld [vmem:[%s0 + $0xc] sm:$0xf]
  %v25 = vld [vmem:[%s0 + $0x10] sm:$0xf]
  %v26 = vld [vmem:[%s0 + $0x14] sm:$0xf]
  %v27 = vld [vmem:[%s0 + $0x18] sm:$0xf]
  %v28 = vld [vmem:[%s0 + $0x1c] sm:$0xf]
  %v29 = vld [vmem:[%s0 + $0x20] sm:$0xf]
  %v30 = vld [vmem:[%s0 + $0x24] sm:$0xf]
  %v31 = vld [vmem:[%s0 + $0x28] sm:$0xf]
  %v32 = vld [vmem:[%s0 + $0x2c] sm:$0xf]
  %v33 = vld [vmem:[%s0 + $0x30] sm:$0xf]
  %v34 = vld [vmem:[%s0 + $0x34] sm:$0xf]
  %v35 = vld [vmem:[%s0 + $0x38] sm:$0xf]
  %v36 = vld [vmem:[%s0 + $0x3c] sm:$0xf]
  %v37 = vld [vmem:[%s1] sm:$0xf]
  %v38 = vld [vmem:[%s1 + $0x4] sm:$0xf]
  %v39 = vld [vmem:[%s1 + $0x8] sm:$0xf]
  %v40 = vld [vmem:[%s1 + $0xc] sm:$0xf]
  %v41 = vld [vmem:[%s1 + $0x10] sm:$0xf]
  %v42 = vld [vmem:[%s2] sm:$0x1]
  %v44 = vlaneseq
  %v45 = vshrl.u32 %v44, 7
  %v46 = vsub.s32 0, %v45
  %v47 = vrot.slane %v42, %v46
  %v65 = vunpack.c.l.b16 %v21
  %v66 = vunpack.c.l.b16 %v22
  %v67 = vunpack.c.l.b16 %v23
  %v68 = vunpack.c.l.b16 %v24
  %v69 = vunpack.c.l.b16 %v25
  %v70 = vunpack.c.l.b16 %v26
  %v71 = vunpack.c.l.b16 %v27
  %v72 = vunpack.c.l.b16 %v28
  %v73 = vunpack.c.l.b16 %v29
  %v74 = vunpack.c.l.b16 %v30
  %v75 = vunpack.c.l.b16 %v31
  %v76 = vunpack.c.l.b16 %v32
  %v77 = vunpack.c.l.b16 %v33
  %v78 = vunpack.c.l.b16 %v34
  %v79 = vunpack.c.l.b16 %v35
  %v80 = vunpack.c.l.b16 %v36
  %v81 = vpack.c.b16 %v66, %v65
  %v82 = vpack.c.b16 %v68, %v67
  %v83 = vpack.c.b16 %v70, %v69
  %v84 = vpack.c.b16 %v72, %v71
  %v85 = vpack.c.b16 %v74, %v73
  %v86 = vpack.c.b16 %v76, %v75
  %v87 = vpack.c.b16 %v78, %v77
  %v88 = vpack.c.b16 %v80, %v79
  %v94 = vunpack.c.l.b16 %v37
  %v95 = vunpack.c.l.b16 %v38
  %v96 = vunpack.c.l.b16 %v39
  %v97 = vunpack.c.l.b16 %v40
  %v98 = vunpack.c.l.b16 %v41
  %v99 = vpack.c.b16 %v95, %v94
  %v100 = vpack.c.b16 %v97, %v96
  %v101 = vpack.c.b16 %v98, %v98
  %vm104 = vcmask 326656
  %v106 = vsel %vm104, %v81, 0
  %v109 = vsel %vm104, %v82, 0
  %v112 = vsel %vm104, %v83, 0
  %v115 = vsel %vm104, %v84, 0
  %v118 = vsel %vm104, %v85, 0
  %v121 = vsel %vm104, %v86, 0
  %v124 = vsel %vm104, %v87, 0
  %v127 = vsel %vm104, %v88, 0
  %vm129 = vcmask 1043456
  %v131 = vsel %vm129, %v101, 0
  %133 = vmatprep.subr.bf16.mxu0 0
  %134 = vmatpush1.bf16.msra.mxu0 %v99
  %135 = vmatprep.subr.bf16.mxu0 0
  %136 = vmatpush1.bf16.msra.mxu0 %v100
  %137 = vmatprep.subr.bf16.mxu0 0
  %138 = vmatpush1.bf16.msra.mxu0 %v131
  %139 = vmatprep.subr.bf16.mxu0 0
  %140 = vmatpush1.bf16.msra.mxu0 0
  %141 = vmatprep.subr.bf16.mxu0 0
  %142 = vmatpush1.bf16.msra.mxu0 0
  %143 = vmatprep.subr.bf16.mxu0 0
  %144 = vmatpush1.bf16.msra.mxu0 0
  %145 = vmatprep.subr.bf16.mxu0 0
  %146 = vmatpush1.bf16.msra.mxu0 0
  %147 = vmatprep.subr.bf16.mxu0 0
  %148 = vmatpush1.bf16.msra.mxu0 0
  %149 = vmatprep.subr.bf16.mxu0 0
  %150 = vmatpush1.bf16.msra.mxu0 0
  %151 = vmatprep.subr.bf16.mxu0 0
  %152 = vmatpush1.bf16.msra.mxu0 0
  %153 = vmatprep.subr.bf16.mxu0 0
  %154 = vmatpush1.bf16.msra.mxu0 0
  %155 = vmatprep.subr.bf16.mxu0 0
  %156 = vmatpush1.bf16.msra.mxu0 0
  %157 = vmatprep.subr.bf16.mxu0 0
  %158 = vmatpush1.bf16.msra.mxu0 0
  %159 = vmatprep.subr.bf16.mxu0 0
  %160 = vmatpush1.bf16.msra.mxu0 0
  %161 = vmatprep.subr.bf16.mxu0 0
  %162 = vmatpush1.bf16.msra.mxu0 0
  %163 = vmatprep.subr.bf16.mxu0 0
  %164 = vmatpush1.bf16.msra.mxu0 0
  %165 = vmatprep.mubr.bf16.mxu0 0
  %166 = vmatmul.mubr.bf16.gmra.mrb[0].mxu0 %v106
  %v167 = vpop.f32.mrb[0].mxu0
  %v168 = vadd.f32 %v47, %v167
  %v169 = vpop.f32.mrb[0].mxu0
  %v170 = vpop.f32.mrb[0].mxu0
  %v171 = vadd.f32 %v47, %v170
  %v172 = vpop.f32.mrb[0].mxu0
  %173 = vmatprep.mubr.bf16.mxu0 0
  %174 = vmatmul.mubr.bf16.gmra.mrb[0].mxu0 %v109
  %v175 = vpop.f32.mrb[0].mxu0
  %v176 = vadd.f32 %v47, %v175
  %v177 = vpop.f32.mrb[0].mxu0
  %v178 = vpop.f32.mrb[0].mxu0
  %v179 = vadd.f32 %v47, %v178
  %v180 = vpop.f32.mrb[0].mxu0
  %181 = vmatprep.mubr.bf16.mxu0 0
  %182 = vmatmul.mubr.bf16.gmra.mrb[0].mxu0 %v112
  %v183 = vpop.f32.mrb[0].mxu0
  %v184 = vadd.f32 %v47, %v183
  %v185 = vpop.f32.mrb[0].mxu0
  %v186 = vpop.f32.mrb[0].mxu0
  %v187 = vadd.f32 %v47, %v186
  %v188 = vpop.f32.mrb[0].mxu0
  %189 = vmatprep.mubr.bf16.mxu0 0
  %190 = vmatmul.mubr.bf16.gmra.mrb[0].mxu0 %v115
  %v191 = vpop.f32.mrb[0].mxu0
  %v192 = vadd.f32 %v47, %v191
  %v193 = vpop.f32.mrb[0].mxu0
  %v194 = vpop.f32.mrb[0].mxu0
  %v195 = vadd.f32 %v47, %v194
  %v196 = vpop.f32.mrb[0].mxu0
  %197 = vmatprep.mubr.bf16.mxu0 0
  %198 = vmatmul.mubr.bf16.gmra.mrb[0].mxu0 %v118
  %v199 = vpop.f32.mrb[0].mxu0
  %v200 = vadd.f32 %v47, %v199
  %v201 = vpop.f32.mrb[0].mxu0
  %v202 = vpop.f32.mrb[0].mxu0
  %v203 = vadd.f32 %v47, %v202
  %v204 = vpop.f32.mrb[0].mxu0
  %205 = vmatprep.mubr.bf16.mxu0 0
  %206 = vmatmul.mubr.bf16.gmra.mrb[0].mxu0 %v121
  %v207 = vpop.f32.mrb[0].mxu0
  %v208 = vadd.f32 %v47, %v207
  %v209 = vpop.f32.mrb[0].mxu0
  %v210 = vpop.f32.mrb[0].mxu0
  %v211 = vadd.f32 %v47, %v210
  %v212 = vpop.f32.mrb[0].mxu0
  %213 = vmatprep.mubr.bf16.mxu0 0
  %214 = vmatmul.mubr.bf16.gmra.mrb[0].mxu0 %v124
  %v215 = vpop.f32.mrb[0].mxu0
  %v216 = vadd.f32 %v47, %v215
  %v217 = vpop.f32.mrb[0].mxu0
  %v218 = vpop.f32.mrb[0].mxu0
  %v219 = vadd.f32 %v47, %v218
  %v220 = vpop.f32.mrb[0].mxu0
  %221 = vmatprep.mubr.bf16.mxu0 0
  %222 = vmatmul.mubr.bf16.gmra.mrb[0].mxu0 %v127
  %v223 = vpop.f32.mrb[0].mxu0
  %v224 = vadd.f32 %v47, %v223
  %v225 = vpop.f32.mrb[0].mxu0
  %v226 = vpop.f32.mrb[0].mxu0
  %v227 = vadd.f32 %v47, %v226
  %v228 = vpop.f32.mrb[0].mxu0
  %229 = vdwg.mxu0
  %v230 = vld [vmem:[%s3] sm:$0x1]
  %v231 = vld [vmem:[%s4] sm:$0x1]
  %vm232 = vcmask 261120
  %v233 = vsel %vm232, %v168, 0.0
  %234 = vadd.xlane.f32.xlu0 %v233
  %v235 = vpop.xlane.xlu0 %234
  %v236 = vsel %vm232, %v171, 0.0
  %237 = vadd.xlane.f32.xlu0 %v236
  %v238 = vpop.xlane.xlu0 %237
  %v239 = vsel %vm232, %v176, 0.0
  %240 = vadd.xlane.f32.xlu0 %v239
  %v241 = vpop.xlane.xlu0 %240
  %v242 = vsel %vm232, %v179, 0.0
  %243 = vadd.xlane.f32.xlu0 %v242
  %v244 = vpop.xlane.xlu0 %243
  %v245 = vsel %vm232, %v184, 0.0
  %246 = vadd.xlane.f32.xlu0 %v245
  %v247 = vpop.xlane.xlu0 %246
  %v248 = vsel %vm232, %v187, 0.0
  %249 = vadd.xlane.f32.xlu0 %v248
  %v250 = vpop.xlane.xlu0 %249
  %v251 = vsel %vm232, %v192, 0.0
  %252 = vadd.xlane.f32.xlu0 %v251
  %v253 = vpop.xlane.xlu0 %252
  %v254 = vsel %vm232, %v195, 0.0
  %255 = vadd.xlane.f32.xlu0 %v254
  %v256 = vpop.xlane.xlu0 %255
  %v257 = vsel %vm232, %v200, 0.0
  %258 = vadd.xlane.f32.xlu0 %v257
  %v259 = vpop.xlane.xlu0 %258
  %v260 = vsel %vm232, %v203, 0.0
  %261 = vadd.xlane.f32.xlu0 %v260
  %v262 = vpop.xlane.xlu0 %261
  %v263 = vsel %vm232, %v208, 0.0
  %264 = vadd.xlane.f32.xlu0 %v263
  %v265 = vpop.xlane.xlu0 %264
  %v266 = vsel %vm232, %v211, 0.0
  %267 = vadd.xlane.f32.xlu0 %v266
  %v268 = vpop.xlane.xlu0 %267
  %v269 = vsel %vm232, %v216, 0.0
  %270 = vadd.xlane.f32.xlu0 %v269
  %v271 = vpop.xlane.xlu0 %270
  %v272 = vsel %vm232, %v219, 0.0
  %273 = vadd.xlane.f32.xlu0 %v272
  %v274 = vpop.xlane.xlu0 %273
  %v275 = vsel %vm232, %v224, 0.0
  %276 = vadd.xlane.f32.xlu0 %v275
  %v277 = vpop.xlane.xlu0 %276
  %v278 = vsel %vm232, %v227, 0.0
  %279 = vadd.xlane.f32.xlu0 %v278
  %v280 = vpop.xlane.xlu0 %279
  %v281 = vrcp.pop 32.0
  %v282 = vmul.f32 %v235, %v281
  %v283 = vmul.f32 %v238, %v281
  %v284 = vmul.f32 %v241, %v281
  %v285 = vmul.f32 %v244, %v281
  %v286 = vmul.f32 %v247, %v281
  %v287 = vmul.f32 %v250, %v281
  %v288 = vmul.f32 %v253, %v281
  %v289 = vmul.f32 %v256, %v281
  %v290 = vmul.f32 %v259, %v281
  %v291 = vmul.f32 %v262, %v281
  %v292 = vmul.f32 %v265, %v281
  %v293 = vmul.f32 %v268, %v281
  %v294 = vmul.f32 %v271, %v281
  %v295 = vmul.f32 %v274, %v281
  %v296 = vmul.f32 %v277, %v281
  %v297 = vmul.f32 %v280, %v281
  %v298 = vsub.f32 %v168, %v282
  %v299 = vsub.f32 %v171, %v283
  %v300 = vsub.f32 %v176, %v284
  %v301 = vsub.f32 %v179, %v285
  %v302 = vsub.f32 %v184, %v286
  %v303 = vsub.f32 %v187, %v287
  %v304 = vsub.f32 %v192, %v288
  %v305 = vsub.f32 %v195, %v289
  %v306 = vsub.f32 %v200, %v290
  %v307 = vsub.f32 %v203, %v291
  %v308 = vsub.f32 %v208, %v292
  %v309 = vsub.f32 %v211, %v293
  %v310 = vsub.f32 %v216, %v294
  %v311 = vsub.f32 %v219, %v295
  %v312 = vsub.f32 %v224, %v296
  %v313 = vsub.f32 %v227, %v297
  %v314 = vmul.f32 %v298, %v298
  %v315 = vmul.f32 %v299, %v299
  %v316 = vmul.f32 %v300, %v300
  %v317 = vmul.f32 %v301, %v301
  %v318 = vmul.f32 %v302, %v302
  %v319 = vmul.f32 %v303, %v303
  %v320 = vmul.f32 %v304, %v304
  %v321 = vmul.f32 %v305, %v305
  %v322 = vmul.f32 %v306, %v306
  %v323 = vmul.f32 %v307, %v307
  %v324 = vmul.f32 %v308, %v308
  %v325 = vmul.f32 %v309, %v309
  %v326 = vmul.f32 %v310, %v310
  %v327 = vmul.f32 %v311, %v311
  %v328 = vmul.f32 %v312, %v312
  %v329 = vmul.f32 %v313, %v313
  %v330 = vsel %vm232, %v314, 0.0
  %331 = vadd.xlane.f32.xlu0 %v330
  %v332 = vpop.xlane.xlu0 %331
  %v333 = vsel %vm232, %v315, 0.0
  %334 = vadd.xlane.f32.xlu0 %v333
  %v335 = vpop.xlane.xlu0 %334
  %v336 = vsel %vm232, %v316, 0.0
  %337 = vadd.xlane.f32.xlu0 %v336
  %v338 = vpop.xlane.xlu0 %337
  %v339 = vsel %vm232, %v317, 0.0
  %340 = vadd.xlane.f32.xlu0 %v339
  %v341 = vpop.xlane.xlu0 %340
  %v342 = vsel %vm232, %v318, 0.0
  %343 = vadd.xlane.f32.xlu0 %v342
  %v344 = vpop.xlane.xlu0 %343
  %v345 = vsel %vm232, %v319, 0.0
  %346 = vadd.xlane.f32.xlu0 %v345
  %v347 = vpop.xlane.xlu0 %346
  %v348 = vsel %vm232, %v320, 0.0
  %349 = vadd.xlane.f32.xlu0 %v348
  %v350 = vpop.xlane.xlu0 %349
  %v351 = vsel %vm232, %v321, 0.0
  %352 = vadd.xlane.f32.xlu0 %v351
  %v353 = vpop.xlane.xlu0 %352
  %v354 = vsel %vm232, %v322, 0.0
  %355 = vadd.xlane.f32.xlu0 %v354
  %v356 = vpop.xlane.xlu0 %355
  %v357 = vsel %vm232, %v323, 0.0
  %358 = vadd.xlane.f32.xlu0 %v357
  %v359 = vpop.xlane.xlu0 %358
  %v360 = vsel %vm232, %v324, 0.0
  %361 = vadd.xlane.f32.xlu0 %v360
  %v362 = vpop.xlane.xlu0 %361
  %v363 = vsel %vm232, %v325, 0.0
  %364 = vadd.xlane.f32.xlu0 %v363
  %v365 = vpop.xlane.xlu0 %364
  %v366 = vsel %vm232, %v326, 0.0
  %367 = vadd.xlane.f32.xlu0 %v366
  %v368 = vpop.xlane.xlu0 %367
  %v369 = vsel %vm232, %v327, 0.0
  %370 = vadd.xlane.f32.xlu0 %v369
  %v371 = vpop.xlane.xlu0 %370
  %v372 = vsel %vm232, %v328, 0.0
  %373 = vadd.xlane.f32.xlu0 %v372
  %v374 = vpop.xlane.xlu0 %373
  %v375 = vsel %vm232, %v329, 0.0
  %376 = vadd.xlane.f32.xlu0 %v375
  %v377 = vpop.xlane.xlu0 %376
  %v378 = vmul.f32 %v332, %v281
  %v379 = vmul.f32 %v335, %v281
  %v380 = vmul.f32 %v338, %v281
  %v381 = vmul.f32 %v341, %v281
  %v382 = vmul.f32 %v344, %v281
  %v383 = vmul.f32 %v347, %v281
  %v384 = vmul.f32 %v350, %v281
  %v385 = vmul.f32 %v353, %v281
  %v386 = vmul.f32 %v356, %v281
  %v387 = vmul.f32 %v359, %v281
  %v388 = vmul.f32 %v362, %v281
  %v389 = vmul.f32 %v365, %v281
  %v390 = vmul.f32 %v368, %v281
  %v391 = vmul.f32 %v371, %v281
  %v392 = vmul.f32 %v374, %v281
  %v393 = vmul.f32 %v377, %v281
  %v394 = vadd.f32 %v378, 1e-05
  %v395 = vadd.f32 %v379, 1e-05
  %v396 = vadd.f32 %v380, 1e-05
  %v397 = vadd.f32 %v381, 1e-05
  %v398 = vadd.f32 %v382, 1e-05
  %v399 = vadd.f32 %v383, 1e-05
  %v400 = vadd.f32 %v384, 1e-05
  %v401 = vadd.f32 %v385, 1e-05
  %v402 = vadd.f32 %v386, 1e-05
  %v403 = vadd.f32 %v387, 1e-05
  %v404 = vadd.f32 %v388, 1e-05
  %v405 = vadd.f32 %v389, 1e-05
  %v406 = vadd.f32 %v390, 1e-05
  %v407 = vadd.f32 %v391, 1e-05
  %v408 = vadd.f32 %v392, 1e-05
  %v409 = vadd.f32 %v393, 1e-05
  %v410 = vrsqrt.pop %v394
  %v411 = vrsqrt.pop %v395
  %v412 = vrsqrt.pop %v396
  %v413 = vrsqrt.pop %v397
  %v414 = vrsqrt.pop %v398
  %v415 = vrsqrt.pop %v399
  %v416 = vrsqrt.pop %v400
  %v417 = vrsqrt.pop %v401
  %v418 = vrsqrt.pop %v402
  %v419 = vrsqrt.pop %v403
  %v420 = vrsqrt.pop %v404
  %v421 = vrsqrt.pop %v405
  %v422 = vrsqrt.pop %v406
  %v423 = vrsqrt.pop %v407
  %v424 = vrsqrt.pop %v408
  %v425 = vrsqrt.pop %v409
  %v426 = vmul.f32 %v298, %v410
  %v427 = vmul.f32 %v299, %v411
  %v428 = vmul.f32 %v300, %v412
  %v429 = vmul.f32 %v301, %v413
  %v430 = vmul.f32 %v302, %v414
  %v431 = vmul.f32 %v303, %v415
  %v432 = vmul.f32 %v304, %v416
  %v433 = vmul.f32 %v305, %v417
  %v434 = vmul.f32 %v306, %v418
  %v435 = vmul.f32 %v307, %v419
  %v436 = vmul.f32 %v308, %v420
  %v437 = vmul.f32 %v309, %v421
  %v438 = vmul.f32 %v310, %v422
  %v439 = vmul.f32 %v311, %v423
  %v440 = vmul.f32 %v312, %v424
  %v441 = vmul.f32 %v313, %v425
  %v443 = vlaneseq
  %v444 = vshrl.u32 %v443, 7
  %v445 = vsub.s32 0, %v444
  %v446 = vrot.slane %v230, %v445
  %v448 = vmul.f32 %v426, %v446
  %v449 = vmul.f32 %v427, %v446
  %v450 = vmul.f32 %v428, %v446
  %v451 = vmul.f32 %v429, %v446
  %v452 = vmul.f32 %v430, %v446
  %v453 = vmul.f32 %v431, %v446
  %v454 = vmul.f32 %v432, %v446
  %v455 = vmul.f32 %v433, %v446
  %v456 = vmul.f32 %v434, %v446
  %v457 = vmul.f32 %v435, %v446
  %v458 = vmul.f32 %v436, %v446
  %v459 = vmul.f32 %v437, %v446
  %v460 = vmul.f32 %v438, %v446
  %v461 = vmul.f32 %v439, %v446
  %v462 = vmul.f32 %v440, %v446
  %v463 = vmul.f32 %v441, %v446
  %v465 = vlaneseq
  %v466 = vshrl.u32 %v465, 7
  %v467 = vsub.s32 0, %v466
  %v468 = vrot.slane %v231, %v467
  %v470 = vadd.f32 %v448, %v468
  %v471 = vadd.f32 %v449, %v468
  %v472 = vadd.f32 %v450, %v468
  %v473 = vadd.f32 %v451, %v468
  %v474 = vadd.f32 %v452, %v468
  %v475 = vadd.f32 %v453, %v468
  %v476 = vadd.f32 %v454, %v468
  %v477 = vadd.f32 %v455, %v468
  %v478 = vadd.f32 %v456, %v468
  %v479 = vadd.f32 %v457, %v468
  %v480 = vadd.f32 %v458, %v468
  %v481 = vadd.f32 %v459, %v468
  %v482 = vadd.f32 %v460, %v468
  %v483 = vadd.f32 %v461, %v468
  %v484 = vadd.f32 %v462, %v468
  %v485 = vadd.f32 %v463, %v468
  %486 = vst.msk [vmem:[%s5] sm:$0xff] %vm232, %v470
  %487 = vst.msk [vmem:[%s5 + $0x8] sm:$0xff] %vm232, %v471
  %488 = vst.msk [vmem:[%s5 + $0x10] sm:$0xff] %vm232, %v472
  %489 = vst.msk [vmem:[%s5 + $0x18] sm:$0xff] %vm232, %v473
  %490 = vst.msk [vmem:[%s5 + $0x20] sm:$0xff] %vm232, %v474
  %491 = vst.msk [vmem:[%s5 + $0x28] sm:$0xff] %vm232, %v475
  %492 = vst.msk [vmem:[%s5 + $0x30] sm:$0xff] %vm232, %v476
  %493 = vst.msk [vmem:[%s5 + $0x38] sm:$0xff] %vm232, %v477
  %494 = vst.msk [vmem:[%s5 + $0x40] sm:$0xff] %vm232, %v478
  %495 = vst.msk [vmem:[%s5 + $0x48] sm:$0xff] %vm232, %v479
  %496 = vst.msk [vmem:[%s5 + $0x50] sm:$0xff] %vm232, %v480
  %497 = vst.msk [vmem:[%s5 + $0x58] sm:$0xff] %vm232, %v481
  %498 = vst.msk [vmem:[%s5 + $0x60] sm:$0xff] %vm232, %v482
  %499 = vst.msk [vmem:[%s5 + $0x68] sm:$0xff] %vm232, %v483
  %500 = vst.msk [vmem:[%s5 + $0x70] sm:$0xff] %vm232, %v484
  %501 = vst.msk [vmem:[%s5 + $0x78] sm:$0xff] %vm232, %v485
  // Predicated region
  $region22: #{last_forward.16} parent=0 // pred_check
    _
  $region23: #{last_forward.16} parent=0 // pred_check_branch
    %503 = sbr.rel (0) target = $region25
  $region24: #{last_forward.16} parent=0 // pred_region
    _
  $region25: #{last_forward.16} parent=0 // pred_fallthru
    _
  // Predicated region
  $region26: #{last_forward.16} parent=0 // pred_check
    _
  $region27: #{last_forward.16} parent=0 // pred_check_branch
    %505 = sbr.rel (0) target = $region29
  $region28: #{last_forward.16} parent=0 // pred_region
    _
  $region29: #{last_forward.16} parent=0 // pred_fallthru
    _

// kernel: last_forward.23
$region0: #{last_forward.23}
  #allocation0 [shape = 'u32[]', space=smem, size = 0x4, offset = 0x4, fixed_abs, tag = 'smem constant byte address 0x4 - core index']
  #allocation1 [shape = 'u32[144,128]{1,0:T(1,128)}', space=vmem, size = 0x12000, scoped, tag = 'internal scratch']
  %s0 = inlined_call_operand.vmem [shape: f32[16,32], index: 0, kind: input, shape index: {}]
  %s1 = inlined_call_operand.vmem [shape: bf16[32,128], index: 1, kind: input, shape index: {}]
  %s2 = inlined_call_operand.vmem [shape: f32[1,128], index: 2, kind: input, shape index: {}]
  %s3 = inlined_call_operand.vmem [shape: f32[16,128], index: 3, kind: output, shape index: {}]
  %s4 = sld [smem:[#allocation0]]
  $region22: #{last_forward.23} parent=0
    _
  %s6 = ssub.s32 1, %s4
  %s7 = scalar_select 0, %s6, %s4
  // Predicated region
  $region2: #{last_forward.23} parent=0 // pred_check
    _
  $region3: #{last_forward.23} parent=0 // pred_check_branch
    %9 = sbr.rel (0) target = $region5
  $region4: #{last_forward.23} parent=0 // pred_region
    _
  $region5: #{last_forward.23} parent=0 // pred_fallthru
    _
  // Predicated region
  $region6: #{last_forward.23} parent=0 // pred_check
    _
  $region7: #{last_forward.23} parent=0 // pred_check_branch
    %11 = sbr.rel (0) target = $region9
  $region8: #{last_forward.23} parent=0 // pred_region
    _
  $region9: #{last_forward.23} parent=0 // pred_fallthru
    _
  // Predicated region
  $region10: #{last_forward.23} parent=0 // pred_check
    _
  $region11: #{last_forward.23} parent=0 // pred_check_branch
    %13 = sbr.rel (0) target = $region13
  $region12: #{last_forward.23} parent=0 // pred_region
    _
  $region13: #{last_forward.23} parent=0 // pred_fallthru
    _
  %v15 = vld [vmem:[%s0] sm:$0xff]
  %v16 = vld [vmem:[%s0 + $0x8] sm:$0xff]
  %v17 = vpack.c.bf16 %v16, %v15
  %v18 = vld [vmem:[%s1] sm:$0xf]
  %v19 = vld [vmem:[%s1 + $0x4] sm:$0xf]
  %v20 = vld [vmem:[%s1 + $0x8] sm:$0xf]
  %v21 = vld [vmem:[%s1 + $0xc] sm:$0xf]
  %v22 = vld [vmem:[%s2] sm:$0x1]
  %v24 = vlaneseq
  %v25 = vshrl.u32 %v24, 7
  %v26 = vsub.s32 0, %v25
  %v27 = vrot.slane %v22, %v26
  %v33 = vunpack.c.l.b16 %v18
  %v34 = vunpack.c.l.b16 %v19
  %v35 = vunpack.c.l.b16 %v20
  %v36 = vunpack.c.l.b16 %v21
  %v37 = vpack.c.b16 %v34, %v33
  %v38 = vpack.c.b16 %v36, %v35
  %vm41 = vcmask 261120
  %v43 = vsel %vm41, %v17, 0
  %45 = vmatprep.subr.bf16.mxu0 0
  %46 = vmatpush1.bf16.msra.mxu0 %v37
  %47 = vmatprep.subr.bf16.mxu0 0
  %48 = vmatpush1.bf16.msra.mxu0 %v38
  %49 = vmatprep.subr.bf16.mxu0 0
  %50 = vmatpush1.bf16.msra.mxu0 0
  %51 = vmatprep.subr.bf16.mxu0 0
  %52 = vmatpush1.bf16.msra.mxu0 0
  %53 = vmatprep.subr.bf16.mxu0 0
  %54 = vmatpush1.bf16.msra.mxu0 0
  %55 = vmatprep.subr.bf16.mxu0 0
  %56 = vmatpush1.bf16.msra.mxu0 0
  %57 = vmatprep.subr.bf16.mxu0 0
  %58 = vmatpush1.bf16.msra.mxu0 0
  %59 = vmatprep.subr.bf16.mxu0 0
  %60 = vmatpush1.bf16.msra.mxu0 0
  %61 = vmatprep.subr.bf16.mxu0 0
  %62 = vmatpush1.bf16.msra.mxu0 0
  %63 = vmatprep.subr.bf16.mxu0 0
  %64 = vmatpush1.bf16.msra.mxu0 0
  %65 = vmatprep.subr.bf16.mxu0 0
  %66 = vmatpush1.bf16.msra.mxu0 0
  %67 = vmatprep.subr.bf16.mxu0 0
  %68 = vmatpush1.bf16.msra.mxu0 0
  %69 = vmatprep.subr.bf16.mxu0 0
  %70 = vmatpush1.bf16.msra.mxu0 0
  %71 = vmatprep.subr.bf16.mxu0 0
  %72 = vmatpush1.bf16.msra.mxu0 0
  %73 = vmatprep.subr.bf16.mxu0 0
  %74 = vmatpush1.bf16.msra.mxu0 0
  %75 = vmatprep.subr.bf16.mxu0 0
  %76 = vmatpush1.bf16.msra.mxu0 0
  %77 = vmatprep.mubr.bf16.mxu0 0
  %78 = vmatmul.mubr.bf16.gmra.mrb[0].mxu0 %v43
  %v79 = vpop.f32.mrb[0].mxu0
  %v80 = vadd.f32 %v27, %v79
  %v81 = vpop.f32.mrb[0].mxu0
  %v82 = vpop.f32.mrb[0].mxu0
  %v83 = vadd.f32 %v27, %v82
  %v84 = vpop.f32.mrb[0].mxu0
  %85 = vdwg.mxu0
  %86 = vst [vmem:[%s3] sm:$0xff] %v80
  %87 = vst [vmem:[%s3 + $0x8] sm:$0xff] %v83
  // Predicated region
  $region14: #{last_forward.23} parent=0 // pred_check
    _
  $region15: #{last_forward.23} parent=0 // pred_check_branch
    %89 = sbr.rel (0) target = $region17
  $region16: #{last_forward.23} parent=0 // pred_region
    _
  $region17: #{last_forward.23} parent=0 // pred_fallthru
    _
  // Predicated region
  $region18: #{last_forward.23} parent=0 // pred_check
    _
  $region19: #{last_forward.23} parent=0 // pred_check_branch
    %91 = sbr.rel (0) target = $region21
  $region20: #{last_forward.23} parent=0 // pred_region
    _
  $region21: #{last_forward.23} parent=0 // pred_fallthru
    _

// kernel: last_forward.19
$region0: #{last_forward.19}
  #allocation0 [shape = 'u32[]', space=smem, size = 0x4, offset = 0x4, fixed_abs, tag = 'smem constant byte address 0x4 - core index']
  #allocation1 [shape = 'u32[144,128]{1,0:T(1,128)}', space=vmem, size = 0x12000, scoped, tag = 'internal scratch']
  %s0 = inlined_call_operand.vmem [shape: f32[16,32], index: 0, kind: input, shape index: {}]
  %s1 = inlined_call_operand.vmem [shape: bf16[32,64], index: 1, kind: input, shape index: {}]
  %s2 = inlined_call_operand.vmem [shape: f32[1,64], index: 2, kind: input, shape index: {}]
  %s3 = inlined_call_operand.vmem [shape: bf16[64,32], index: 3, kind: input, shape index: {}]
  %s4 = inlined_call_operand.vmem [shape: f32[1,32], index: 4, kind: input, shape index: {}]
  %s5 = inlined_call_operand.vmem [shape: f32[1,32], index: 5, kind: input, shape index: {}]
  %s6 = inlined_call_operand.vmem [shape: f32[1,32], index: 6, kind: input, shape index: {}]
  %s7 = inlined_call_operand.vmem [shape: f32[16,32], index: 7, kind: output, shape index: {}]
  %s8 = sld [smem:[#allocation0]]
  $region38: #{last_forward.19} parent=0
    _
  %s10 = ssub.s32 1, %s8
  %s11 = scalar_select 0, %s10, %s8
  // Predicated region
  $region2: #{last_forward.19} parent=0 // pred_check
    _
  $region3: #{last_forward.19} parent=0 // pred_check_branch
    %13 = sbr.rel (0) target = $region5
  $region4: #{last_forward.19} parent=0 // pred_region
    _
  $region5: #{last_forward.19} parent=0 // pred_fallthru
    _
  // Predicated region
  $region6: #{last_forward.19} parent=0 // pred_check
    _
  $region7: #{last_forward.19} parent=0 // pred_check_branch
    %15 = sbr.rel (0) target = $region9
  $region8: #{last_forward.19} parent=0 // pred_region
    _
  $region9: #{last_forward.19} parent=0 // pred_fallthru
    _
  // Predicated region
  $region10: #{last_forward.19} parent=0 // pred_check
    _
  $region11: #{last_forward.19} parent=0 // pred_check_branch
    %17 = sbr.rel (0) target = $region13
  $region12: #{last_forward.19} parent=0 // pred_region
    _
  $region13: #{last_forward.19} parent=0 // pred_fallthru
    _
  // Predicated region
  $region14: #{last_forward.19} parent=0 // pred_check
    _
  $region15: #{last_forward.19} parent=0 // pred_check_branch
    %19 = sbr.rel (0) target = $region17
  $region16: #{last_forward.19} parent=0 // pred_region
    _
  $region17: #{last_forward.19} parent=0 // pred_fallthru
    _
  // Predicated region
  $region18: #{last_forward.19} parent=0 // pred_check
    _
  $region19: #{last_forward.19} parent=0 // pred_check_branch
    %21 = sbr.rel (0) target = $region21
  $region20: #{last_forward.19} parent=0 // pred_region
    _
  $region21: #{last_forward.19} parent=0 // pred_fallthru
    _
  // Predicated region
  $region22: #{last_forward.19} parent=0 // pred_check
    _
  $region23: #{last_forward.19} parent=0 // pred_check_branch
    %23 = sbr.rel (0) target = $region25
  $region24: #{last_forward.19} parent=0 // pred_region
    _
  $region25: #{last_forward.19} parent=0 // pred_fallthru
    _
  // Predicated region
  $region26: #{last_forward.19} parent=0 // pred_check
    _
  $region27: #{last_forward.19} parent=0 // pred_check_branch
    %25 = sbr.rel (0) target = $region29
  $region28: #{last_forward.19} parent=0 // pred_region
    _
  $region29: #{last_forward.19} parent=0 // pred_fallthru
    _
  %v27 = vld [vmem:[%s0] sm:$0xff]
  %v28 = vld [vmem:[%s0 + $0x8] sm:$0xff]
  %v29 = vpack.c.bf16 %v28, %v27
  %v30 = vld [vmem:[%s1] sm:$0xf]
  %v31 = vld [vmem:[%s1 + $0x4] sm:$0xf]
  %v32 = vld [vmem:[%s1 + $0x8] sm:$0xf]
  %v33 = vld [vmem:[%s1 + $0xc] sm:$0xf]
  %v34 = vld [vmem:[%s2] sm:$0x1]
  %v36 = vlaneseq
  %v37 = vshrl.u32 %v36, 7
  %v38 = vsub.s32 0, %v37
  %v39 = vrot.slane %v34, %v38
  %v45 = vunpack.c.l.b16 %v30
  %v46 = vunpack.c.l.b16 %v31
  %v47 = vunpack.c.l.b16 %v32
  %v48 = vunpack.c.l.b16 %v33
  %v49 = vpack.c.b16 %v46, %v45
  %v50 = vpack.c.b16 %v48, %v47
  %vm53 = vcmask 261120
  %v55 = vsel %vm53, %v29, 0
  %57 = vmatprep.subr.bf16.mxu0 0
  %58 = vmatpush1.bf16.msra.mxu0 %v49
  %59 = vmatprep.subr.bf16.mxu0 0
  %60 = vmatpush1.bf16.msra.mxu0 %v50
  %61 = vmatprep.subr.bf16.mxu0 0
  %62 = vmatpush1.bf16.msra.mxu0 0
  %63 = vmatprep.subr.bf16.mxu0 0
  %64 = vmatpush1.bf16.msra.mxu0 0
  %65 = vmatprep.subr.bf16.mxu0 0
  %66 = vmatpush1.bf16.msra.mxu0 0
  %67 = vmatprep.subr.bf16.mxu0 0
  %68 = vmatpush1.bf16.msra.mxu0 0
  %69 = vmatprep.subr.bf16.mxu0 0
  %70 = vmatpush1.bf16.msra.mxu0 0
  %71 = vmatprep.subr.bf16.mxu0 0
  %72 = vmatpush1.bf16.msra.mxu0 0
  %73 = vmatprep.subr.bf16.mxu0 0
  %74 = vmatpush1.bf16.msra.mxu0 0
  %75 = vmatprep.subr.bf16.mxu0 0
  %76 = vmatpush1.bf16.msra.mxu0 0
  %77 = vmatprep.subr.bf16.mxu0 0
  %78 = vmatpush1.bf16.msra.mxu0 0
  %79 = vmatprep.subr.bf16.mxu0 0
  %80 = vmatpush1.bf16.msra.mxu0 0
  %81 = vmatprep.subr.bf16.mxu0 0
  %82 = vmatpush1.bf16.msra.mxu0 0
  %83 = vmatprep.subr.bf16.mxu0 0
  %84 = vmatpush1.bf16.msra.mxu0 0
  %85 = vmatprep.subr.bf16.mxu0 0
  %86 = vmatpush1.bf16.msra.mxu0 0
  %87 = vmatprep.subr.bf16.mxu0 0
  %88 = vmatpush1.bf16.msra.mxu0 0
  %89 = vmatprep.mubr.bf16.mxu0 0
  %90 = vmatmul.mubr.bf16.gmra.mrb[0].mxu0 %v55
  %v91 = vpop.f32.mrb[0].mxu0
  %v92 = vadd.f32 %v39, %v91
  %v93 = vpop.f32.mrb[0].mxu0
  %v94 = vpop.f32.mrb[0].mxu0
  %v95 = vadd.f32 %v39, %v94
  %v96 = vpop.f32.mrb[0].mxu0
  %97 = vdwg.mxu0
  %v98 = vmax.f32 %v92, 0.0
  %v99 = vmax.f32 %v95, 0.0
  %v100 = vpack.c.bf16 %v99, %v98
  %v101 = vld [vmem:[%s3] sm:$0xf]
  %v102 = vld [vmem:[%s3 + $0x4] sm:$0xf]
  %v103 = vld [vmem:[%s3 + $0x8] sm:$0xf]
  %v104 = vld [vmem:[%s3 + $0xc] sm:$0xf]
  %v105 = vld [vmem:[%s3 + $0x10] sm:$0xf]
  %v106 = vld [vmem:[%s3 + $0x14] sm:$0xf]
  %v107 = vld [vmem:[%s3 + $0x18] sm:$0xf]
  %v108 = vld [vmem:[%s3 + $0x1c] sm:$0xf]
  %v109 = vld [vmem:[%s4] sm:$0x1]
  %v111 = vlaneseq
  %v112 = vshrl.u32 %v111, 7
  %v113 = vsub.s32 0, %v112
  %v114 = vrot.slane %v109, %v113
  %v124 = vunpack.c.l.b16 %v101
  %v125 = vunpack.c.l.b16 %v102
  %v126 = vunpack.c.l.b16 %v103
  %v127 = vunpack.c.l.b16 %v104
  %v128 = vunpack.c.l.b16 %v105
  %v129 = vunpack.c.l.b16 %v106
  %v130 = vunpack.c.l.b16 %v107
  %v131 = vunpack.c.l.b16 %v108
  %v132 = vpack.c.b16 %v125, %v124
  %v133 = vpack.c.b16 %v127, %v126
  %v134 = vpack.c.b16 %v129, %v128
  %v135 = vpack.c.b16 %v131, %v130
  %vm140 = vcmask 523264
  %v142 = vsel %vm140, %v100, 0
  %144 = vmatprep.subr.bf16.mxu0 0
  %145 = vmatpush1.bf16.msra.mxu0 %v132
  %146 = vmatprep.subr.bf16.mxu0 0
  %147 = vmatpush1.bf16.msra.mxu0 %v133
  %148 = vmatprep.subr.bf16.mxu0 0
  %149 = vmatpush1.bf16.msra.mxu0 %v134
  %150 = vmatprep.subr.bf16.mxu0 0
  %151 = vmatpush1.bf16.msra.mxu0 %v135
  %152 = vmatprep.subr.bf16.mxu0 0
  %153 = vmatpush1.bf16.msra.mxu0 0
  %154 = vmatprep.subr.bf16.mxu0 0
  %155 = vmatpush1.bf16.msra.mxu0 0
  %156 = vmatprep.subr.bf16.mxu0 0
  %157 = vmatpush1.bf16.msra.mxu0 0
  %158 = vmatprep.subr.bf16.mxu0 0
  %159 = vmatpush1.bf16.msra.mxu0 0
  %160 = vmatprep.subr.bf16.mxu0 0
  %161 = vmatpush1.bf16.msra.mxu0 0
  %162 = vmatprep.subr.bf16.mxu0 0
  %163 = vmatpush1.bf16.msra.mxu0 0
  %164 = vmatprep.subr.bf16.mxu0 0
  %165 = vmatpush1.bf16.msra.mxu0 0
  %166 = vmatprep.subr.bf16.mxu0 0
  %167 = vmatpush1.bf16.msra.mxu0 0
  %168 = vmatprep.subr.bf16.mxu0 0
  %169 = vmatpush1.bf16.msra.mxu0 0
  %170 = vmatprep.subr.bf16.mxu0 0
  %171 = vmatpush1.bf16.msra.mxu0 0
  %172 = vmatprep.subr.bf16.mxu0 0
  %173 = vmatpush1.bf16.msra.mxu0 0
  %174 = vmatprep.subr.bf16.mxu0 0
  %175 = vmatpush1.bf16.msra.mxu0 0
  %176 = vmatprep.mubr.bf16.mxu0 0
  %177 = vmatmul.mubr.bf16.gmra.mrb[0].mxu0 %v142
  %v178 = vpop.f32.mrb[0].mxu0
  %v179 = vadd.f32 %v114, %v178
  %v180 = vpop.f32.mrb[0].mxu0
  %v181 = vpop.f32.mrb[0].mxu0
  %v182 = vadd.f32 %v114, %v181
  %v183 = vpop.f32.mrb[0].mxu0
  %184 = vdwg.mxu0
  %v185 = vadd.f32 %v179, %v27
  %v186 = vadd.f32 %v182, %v28
  %v187 = vld [vmem:[%s5] sm:$0x1]
  %v188 = vld [vmem:[%s6] sm:$0x1]
  %v189 = vsel %vm53, %v185, 0.0
  %190 = vadd.xlane.f32.xlu0 %v189
  %v191 = vpop.xlane.xlu0 %190
  %v192 = vsel %vm53, %v186, 0.0
  %193 = vadd.xlane.f32.xlu0 %v192
  %v194 = vpop.xlane.xlu0 %193
  %v195 = vrcp.pop 32.0
  %v196 = vmul.f32 %v191, %v195
  %v197 = vmul.f32 %v194, %v195
  %v198 = vsub.f32 %v185, %v196
  %v199 = vsub.f32 %v186, %v197
  %v200 = vmul.f32 %v198, %v198
  %v201 = vmul.f32 %v199, %v199
  %v202 = vsel %vm53, %v200, 0.0
  %203 = vadd.xlane.f32.xlu0 %v202
  %v204 = vpop.xlane.xlu0 %203
  %v205 = vsel %vm53, %v201, 0.0
  %206 = vadd.xlane.f32.xlu0 %v205
  %v207 = vpop.xlane.xlu0 %206
  %v208 = vmul.f32 %v204, %v195
  %v209 = vmul.f32 %v207, %v195
  %v210 = vadd.f32 %v208, 1e-05
  %v211 = vadd.f32 %v209, 1e-05
  %v212 = vrsqrt.pop %v210
  %v213 = vrsqrt.pop %v211
  %v214 = vmul.f32 %v198, %v212
  %v215 = vmul.f32 %v199, %v213
  %v217 = vlaneseq
  %v218 = vshrl.u32 %v217, 7
  %v219 = vsub.s32 0, %v218
  %v220 = vrot.slane %v187, %v219
  %v222 = vmul.f32 %v214, %v220
  %v223 = vmul.f32 %v215, %v220
  %v225 = vlaneseq
  %v226 = vshrl.u32 %v225, 7
  %v227 = vsub.s32 0, %v226
  %v228 = vrot.slane %v188, %v227
  %v230 = vadd.f32 %v222, %v228
  %v231 = vadd.f32 %v223, %v228
  %232 = vst.msk [vmem:[%s7] sm:$0xff] %vm53, %v230
  %233 = vst.msk [vmem:[%s7 + $0x8] sm:$0xff] %vm53, %v231
  // Predicated region
  $region30: #{last_forward.19} parent=0 // pred_check
    _
  $region31: #{last_forward.19} parent=0 // pred_check_branch
    %235 = sbr.rel (0) target = $region33
  $region32: #{last_forward.19} parent=0 // pred_region
    _
  $region33: #{last_forward.19} parent=0 // pred_fallthru
    _
  // Predicated region
  $region34: #{last_forward.19} parent=0 // pred_check
    _
  $region35: #{last_forward.19} parent=0 // pred_check_branch
    %237 = sbr.rel (0) target = $region37
  $region36: #{last_forward.19} parent=0 // pred_region
    _
  $region37: #{last_forward.19} parent=0 // pred_fallthru
    _

// kernel: last_forward.18
$region0: #{last_forward.18}
  #allocation0 [shape = 'u32[]', space=smem, size = 0x4, offset = 0x4, fixed_abs, tag = 'smem constant byte address 0x4 - core index']
  #allocation1 [shape = 'u32[144,128]{1,0:T(1,128)}', space=vmem, size = 0x12000, scoped, tag = 'internal scratch']
  %s0 = inlined_call_operand.vmem [shape: f32[2,8,32], index: 0, kind: input, shape index: {}]
  %s1 = inlined_call_operand.vmem [shape: bf16[2,64,32], index: 1, kind: input, shape index: {}]
  %s2 = inlined_call_operand.vmem [shape: f32[2,1,64], index: 2, kind: input, shape index: {}]
  %s3 = inlined_call_operand.vmem [shape: bf16[4,32,8], index: 3, kind: input, shape index: {}]
  %s4 = inlined_call_operand.vmem [shape: f32[4,1,8], index: 4, kind: input, shape index: {}]
  %s5 = inlined_call_operand.vmem [shape: bf16[4,32,8], index: 5, kind: input, shape index: {}]
  %s6 = inlined_call_operand.vmem [shape: f32[4,1,8], index: 6, kind: input, shape index: {}]
  %s7 = inlined_call_operand.vmem [shape: bf16[4,32,8], index: 7, kind: input, shape index: {}]
  %s8 = inlined_call_operand.vmem [shape: f32[4,1,8], index: 8, kind: input, shape index: {}]
  %s9 = inlined_call_operand.vmem [shape: bf16[4,8,32], index: 9, kind: input, shape index: {}]
  %s10 = inlined_call_operand.vmem [shape: f32[1,32], index: 10, kind: input, shape index: {}]
  %s11 = inlined_call_operand.vmem [shape: f32[1,32], index: 11, kind: input, shape index: {}]
  %s12 = inlined_call_operand.vmem [shape: f32[1,32], index: 12, kind: input, shape index: {}]
  %s13 = inlined_call_operand.vmem [shape: f32[2,8,32], index: 13, kind: output, shape index: {}]
  %s14 = sld [smem:[#allocation0]]
  $region85: #{last_forward.18} parent=0
    _
  %s16 = ssub.s32 1, %s14
  %s17 = scalar_select 0, %s16, %s14
  loop: start=0, step=1, limit=4
  $region2: #{last_forward.18} parent=0 // loop_pre_header
    _
  $region3: #{last_forward.18} parent=0 // loop_header
    %s19 = sphi 0, %s23
    %p20 = scmp.ge.s32.totalorder %s19, 4
    %s29 = sphi 0, %s31
    %s32 = sphi 0, %s29
    %s33 = sphi 0, %s32
    %s49 = sphi 0, %s33
    %s55 = sphi 0, %s57
    %s58 = sphi 0, %s55
    %s59 = sphi 0, %s58
    %s75 = sphi 0, %s59
    %s81 = sphi 0, %s83
    %s84 = sphi 0, %s81
    %s85 = sphi 0, %s84
    %s101 = sphi 0, %s85
    %s105 = sphi 0, %s105
    %s107 = sphi 0, %s105
    %s108 = sphi 0, %s107
    %s122 = sphi 0, %s108
    %s126 = sphi 0, %s126
    %s128 = sphi 0, %s126
    %s129 = sphi 0, %s128
    %s143 = sphi 0, %s129
    %s147 = sphi 0, %s147
    %s149 = sphi 0, %s147
    %s150 = sphi 0, %s149
    %s164 = sphi 0, %s150
    %s168 = sphi 0, %s168
    %s170 = sphi 0, %s168
    %s171 = sphi 0, %s170
    %s185 = sphi 0, %s171
    %s189 = sphi 0, %s189
    %s191 = sphi 0, %s189
    %s192 = sphi 0, %s191
    %s206 = sphi 0, %s192
    %s210 = sphi 0, %s210
    %s212 = sphi 0, %s210
    %s213 = sphi 0, %s212
    %s227 = sphi 0, %s213
    %s231 = sphi 0, %s231
    %s233 = sphi 0, %s231
    %s234 = sphi 0, %s233
    %s248 = sphi 0, %s234
    %s252 = sphi 0, %s252
    %s254 = sphi 0, %s252
    %s255 = sphi 0, %s254
    %s269 = sphi 0, %s255
    %s273 = sphi 0, %s273
    %s275 = sphi 0, %s273
    %s276 = sphi 0, %s275
    %s290 = sphi 0, %s276
    %s294 = sphi 0, %s294
    %s296 = sphi 0, %s294
    %s297 = sphi 0, %s296
    %s311 = sphi 0, %s297
    %s317 = sphi 0, %s319
    %s320 = sphi 0, %s317
    %s321 = sphi 0, %s320
    %s337 = sphi 0, %s321
  $region4: #{last_forward.18} parent=0 // loop_header_branch
    %22 = sbr.rel (%p20) target = $region8
  $region5: #{last_forward.18} parent=0 // loop_body
    %s24 = ssub.s32 %s19, 1
    %s25 = ssub.s32 %s19, 2
    %s26 = sadd.s32 %s19, 1
    %s27 = ssub.s32 %s19, %s26
    %p28 = scmp.eq.s32.totalorder %s27, 0
    %s30 = sadd.s32 %s29, 1
    %s31 = scalar_select %p28, %s29, %s30
    %p34 = pneg %p28
    %p35 = scmp.eq.s32.totalorder %s19, 1
    %p36 = por %p34, %p35
    %p37 = scmp.ne.s32.totalorder %s29, %s32
    %p38 = scmp.eq.s32.totalorder %s19, 0
    %p39 = por %p37, %p38
    %p40 = scmp.ne.s32.totalorder %s29, %s32
    %p41 = scmp.eq.s32.totalorder %s24, 1
    %p42 = por %p40, %p41
    %p43 = scmp.ne.s32.totalorder %s32, %s33
    %p44 = scmp.eq.s32.totalorder %s24, 0
    %p45 = por %p43, %p44
    %p46 = scmp.ne.s32.totalorder %s32, %s33
    %p47 = scmp.eq.s32.totalorder %s25, 1
    %p48 = por %p46, %p47
    %p50 = scmp.ne.s32.totalorder %s33, %s49
    %p51 = scmp.eq.s32.totalorder %s25, 0
    %p52 = por %p50, %p51
    %s53 = ssub.s32 %s19, %s26
    %p54 = scmp.eq.s32.totalorder %s53, 0
    %s56 = sadd.s32 %s55, 1
    %s57 = scalar_select %p54, %s55, %s56
    %p60 = pneg %p54
    %p61 = scmp.eq.s32.totalorder %s19, 1
    %p62 = por %p60, %p61
    %p63 = scmp.ne.s32.totalorder %s55, %s58
    %p64 = scmp.eq.s32.totalorder %s19, 0
    %p65 = por %p63, %p64
    %p66 = scmp.ne.s32.totalorder %s55, %s58
    %p67 = scmp.eq.s32.totalorder %s24, 1
    %p68 = por %p66, %p67
    %p69 = scmp.ne.s32.totalorder %s58, %s59
    %p70 = scmp.eq.s32.totalorder %s24, 0
    %p71 = por %p69, %p70
    %p72 = scmp.ne.s32.totalorder %s58, %s59
    %p73 = scmp.eq.s32.totalorder %s25, 1
    %p74 = por %p72, %p73
    %p76 = scmp.ne.s32.totalorder %s59, %s75
    %p77 = scmp.eq.s32.totalorder %s25, 0
    %p78 = por %p76, %p77
    %s79 = ssub.s32 %s19, %s26
    %p80 = scmp.eq.s32.totalorder %s79, 0
    %s82 = sadd.s32 %s81, 1
    %s83 = scalar_select %p80, %s81, %s82
    %p86 = pneg %p80
    %p87 = scmp.eq.s32.totalorder %s19, 1
    %p88 = por %p86, %p87
    %p89 = scmp.ne.s32.totalorder %s81, %s84
    %p90 = scmp.eq.s32.totalorder %s19, 0
    %p91 = por %p89, %p90
    %p92 = scmp.ne.s32.totalorder %s81, %s84
    %p93 = scmp.eq.s32.totalorder %s24, 1
    %p94 = por %p92, %p93
    %p95 = scmp.ne.s32.totalorder %s84, %s85
    %p96 = scmp.eq.s32.totalorder %s24, 0
    %p97 = por %p95, %p96
    %p98 = scmp.ne.s32.totalorder %s84, %s85
    %p99 = scmp.eq.s32.totalorder %s25, 1
    %p100 = por %p98, %p99
    %p102 = scmp.ne.s32.totalorder %s85, %s101
    %p103 = scmp.eq.s32.totalorder %s25, 0
    %p104 = por %p102, %p103
    %s106 = sadd.s32 %s105, 1
    %p109 = scmp.eq.s32.totalorder %s19, 1
    %p110 = scmp.ne.s32.totalorder %s105, %s107
    %p111 = scmp.eq.s32.totalorder %s19, 0
    %p112 = por %p110, %p111
    %p113 = scmp.ne.s32.totalorder %s105, %s107
    %p114 = scmp.eq.s32.totalorder %s24, 1
    %p115 = por %p113, %p114
    %p116 = scmp.ne.s32.totalorder %s107, %s108
    %p117 = scmp.eq.s32.totalorder %s24, 0
    %p118 = por %p116, %p117
    %p119 = scmp.ne.s32.totalorder %s107, %s108
    %p120 = scmp.eq.s32.totalorder %s25, 1
    %p121 = por %p119, %p120
    %p123 = scmp.ne.s32.totalorder %s108, %s122
    %p124 = scmp.eq.s32.totalorder %s25, 0
    %p125 = por %p123, %p124
    %s127 = sadd.s32 %s126, 1
    %p130 = scmp.eq.s32.totalorder %s19, 1
    %p131 = scmp.ne.s32.totalorder %s126, %s128
    %p132 = scmp.eq.s32.totalorder %s19, 0
    %p133 = por %p131, %p132
    %p134 = scmp.ne.s32.totalorder %s126, %s128
    %p135 = scmp.eq.s32.totalorder %s24, 1
    %p136 = por %p134, %p135
    %p137 = scmp.ne.s32.totalorder %s128, %s129
    %p138 = scmp.eq.s32.totalorder %s24, 0
    %p139 = por %p137, %p138
    %p140 = scmp.ne.s32.totalorder %s128, %s129
    %p141 = scmp.eq.s32.totalorder %s25, 1
    %p142 = por %p140, %p141
    %p144 = scmp.ne.s32.totalorder %s129, %s143
    %p145 = scmp.eq.s32.totalorder %s25, 0
    %p146 = por %p144, %p145
    %s148 = sadd.s32 %s147, 1
    %p151 = scmp.eq.s32.totalorder %s19, 1
    %p152 = scmp.ne.s32.totalorder %s147, %s149
    %p153 = scmp.eq.s32.totalorder %s19, 0
    %p154 = por %p152, %p153
    %p155 = scmp.ne.s32.totalorder %s147, %s149
    %p156 = scmp.eq.s32.totalorder %s24, 1
    %p157 = por %p155, %p156
    %p158 = scmp.ne.s32.totalorder %s149, %s150
    %p159 = scmp.eq.s32.totalorder %s24, 0
    %p160 = por %p158, %p159
    %p161 = scmp.ne.s32.totalorder %s149, %s150
    %p162 = scmp.eq.s32.totalorder %s25, 1
    %p163 = por %p161, %p162
    %p165 = scmp.ne.s32.totalorder %s150, %s164
    %p166 = scmp.eq.s32.totalorder %s25, 0
    %p167 = por %p165, %p166
    %s169 = sadd.s32 %s168, 1
    %p172 = scmp.eq.s32.totalorder %s19, 1
    %p173 = scmp.ne.s32.totalorder %s168, %s170
    %p174 = scmp.eq.s32.totalorder %s19, 0
    %p175 = por %p173, %p174
    %p176 = scmp.ne.s32.totalorder %s168, %s170
    %p177 = scmp.eq.s32.totalorder %s24, 1
    %p178 = por %p176, %p177
    %p179 = scmp.ne.s32.totalorder %s170, %s171
    %p180 = scmp.eq.s32.totalorder %s24, 0
    %p181 = por %p179, %p180
    %p182 = scmp.ne.s32.totalorder %s170, %s171
    %p183 = scmp.eq.s32.totalorder %s25, 1
    %p184 = por %p182, %p183
    %p186 = scmp.ne.s32.totalorder %s171, %s185
    %p187 = scmp.eq.s32.totalorder %s25, 0
    %p188 = por %p186, %p187
    %s190 = sadd.s32 %s189, 1
    %p193 = scmp.eq.s32.totalorder %s19, 1
    %p194 = scmp.ne.s32.totalorder %s189, %s191
    %p195 = scmp.eq.s32.totalorder %s19, 0
    %p196 = por %p194, %p195
    %p197 = scmp.ne.s32.totalorder %s189, %s191
    %p198 = scmp.eq.s32.totalorder %s24, 1
    %p199 = por %p197, %p198
    %p200 = scmp.ne.s32.totalorder %s191, %s192
    %p201 = scmp.eq.s32.totalorder %s24, 0
    %p202 = por %p200, %p201
    %p203 = scmp.ne.s32.totalorder %s191, %s192
    %p204 = scmp.eq.s32.totalorder %s25, 1
    %p205 = por %p203, %p204
    %p207 = scmp.ne.s32.totalorder %s192, %s206
    %p208 = scmp.eq.s32.totalorder %s25, 0
    %p209 = por %p207, %p208
    %s211 = sadd.s32 %s210, 1
    %p214 = scmp.eq.s32.totalorder %s19, 1
    %p215 = scmp.ne.s32.totalorder %s210, %s212
    %p216 = scmp.eq.s32.totalorder %s19, 0
    %p217 = por %p215, %p216
    %p218 = scmp.ne.s32.totalorder %s210, %s212
    %p219 = scmp.eq.s32.totalorder %s24, 1
    %p220 = por %p218, %p219
    %p221 = scmp.ne.s32.totalorder %s212, %s213
    %p222 = scmp.eq.s32.totalorder %s24, 0
    %p223 = por %p221, %p222
    %p224 = scmp.ne.s32.totalorder %s212, %s213
    %p225 = scmp.eq.s32.totalorder %s25, 1
    %p226 = por %p224, %p225
    %p228 = scmp.ne.s32.totalorder %s213, %s227
    %p229 = scmp.eq.s32.totalorder %s25, 0
    %p230 = por %p228, %p229
    %s232 = sadd.s32 %s231, 1
    %p235 = scmp.eq.s32.totalorder %s19, 1
    %p236 = scmp.ne.s32.totalorder %s231, %s233
    %p237 = scmp.eq.s32.totalorder %s19, 0
    %p238 = por %p236, %p237
    %p239 = scmp.ne.s32.totalorder %s231, %s233
    %p240 = scmp.eq.s32.totalorder %s24, 1
    %p241 = por %p239, %p240
    %p242 = scmp.ne.s32.totalorder %s233, %s234
    %p243 = scmp.eq.s32.totalorder %s24, 0
    %p244 = por %p242, %p243
    %p245 = scmp.ne.s32.totalorder %s233, %s234
    %p246 = scmp.eq.s32.totalorder %s25, 1
    %p247 = por %p245, %p246
    %p249 = scmp.ne.s32.totalorder %s234, %s248
    %p250 = scmp.eq.s32.totalorder %s25, 0
    %p251 = por %p249, %p250
    %s253 = sadd.s32 %s252, 1
    %p256 = scmp.eq.s32.totalorder %s19, 1
    %p257 = scmp.ne.s32.totalorder %s252, %s254
    %p258 = scmp.eq.s32.totalorder %s19, 0
    %p259 = por %p257, %p258
    %p260 = scmp.ne.s32.totalorder %s252, %s254
    %p261 = scmp.eq.s32.totalorder %s24, 1
    %p262 = por %p260, %p261
    %p263 = scmp.ne.s32.totalorder %s254, %s255
    %p264 = scmp.eq.s32.totalorder %s24, 0
    %p265 = por %p263, %p264
    %p266 = scmp.ne.s32.totalorder %s254, %s255
    %p267 = scmp.eq.s32.totalorder %s25, 1
    %p268 = por %p266, %p267
    %p270 = scmp.ne.s32.totalorder %s255, %s269
    %p271 = scmp.eq.s32.totalorder %s25, 0
    %p272 = por %p270, %p271
    %s274 = sadd.s32 %s273, 1
    %p277 = scmp.eq.s32.totalorder %s19, 1
    %p278 = scmp.ne.s32.totalorder %s273, %s275
    %p279 = scmp.eq.s32.totalorder %s19, 0
    %p280 = por %p278, %p279
    %p281 = scmp.ne.s32.totalorder %s273, %s275
    %p282 = scmp.eq.s32.totalorder %s24, 1
    %p283 = por %p281, %p282
    %p284 = scmp.ne.s32.totalorder %s275, %s276
    %p285 = scmp.eq.s32.totalorder %s24, 0
    %p286 = por %p284, %p285
    %p287 = scmp.ne.s32.totalorder %s275, %s276
    %p288 = scmp.eq.s32.totalorder %s25, 1
    %p289 = por %p287, %p288
    %p291 = scmp.ne.s32.totalorder %s276, %s290
    %p292 = scmp.eq.s32.totalorder %s25, 0
    %p293 = por %p291, %p292
    %s295 = sadd.s32 %s294, 1
    %p298 = scmp.eq.s32.totalorder %s19, 1
    %p299 = scmp.ne.s32.totalorder %s294, %s296
    %p300 = scmp.eq.s32.totalorder %s19, 0
    %p301 = por %p299, %p300
    %p302 = scmp.ne.s32.totalorder %s294, %s296
    %p303 = scmp.eq.s32.totalorder %s24, 1
    %p304 = por %p302, %p303
    %p305 = scmp.ne.s32.totalorder %s296, %s297
    %p306 = scmp.eq.s32.totalorder %s24, 0
    %p307 = por %p305, %p306
    %p308 = scmp.ne.s32.totalorder %s296, %s297
    %p309 = scmp.eq.s32.totalorder %s25, 1
    %p310 = por %p308, %p309
    %p312 = scmp.ne.s32.totalorder %s297, %s311
    %p313 = scmp.eq.s32.totalorder %s25, 0
    %p314 = por %p312, %p313
    %s315 = ssub.s32 %s19, %s26
    %p316 = scmp.eq.s32.totalorder %s315, 0
    %s318 = sadd.s32 %s317, 1
    %s319 = scalar_select %p316, %s317, %s318
    %p322 = pneg %p316
    %p323 = scmp.eq.s32.totalorder %s19, 1
    %p324 = por %p322, %p323
    %p325 = scmp.ne.s32.totalorder %s317, %s320
    %p326 = scmp.eq.s32.totalorder %s19, 0
    %p327 = por %p325, %p326
    %p328 = scmp.ne.s32.totalorder %s317, %s320
    %p329 = scmp.eq.s32.totalorder %s24, 1
    %p330 = por %p328, %p329
    %p331 = scmp.ne.s32.totalorder %s320, %s321
    %p332 = scmp.eq.s32.totalorder %s24, 0
    %p333 = por %p331, %p332
    %p334 = scmp.ne.s32.totalorder %s320, %s321
    %p335 = scmp.eq.s32.totalorder %s25, 1
    %p336 = por %p334, %p335
    %p338 = scmp.ne.s32.totalorder %s321, %s337
    %p339 = scmp.eq.s32.totalorder %s25, 0
    %p340 = por %p338, %p339
    %p341 = scmp.le.s32.totalorder 1, %s19
    %p342 = scmp.lt.s32.totalorder %s19, 3
    %p343 = pnand %p341, %p342
    %p344 = pneg %p343
    // Predicated region
    $region9: #{last_forward.18} parent=5 // pred_check
      _
    $region10: #{last_forward.18} parent=5 // pred_check_branch
      %346 = sbr.rel (%p343) target = $region12
    $region11: #{last_forward.18} parent=5 // pred_region
      %s347 = ssub.s32 %s19, 1
      // Predicated region
      $region13: #{last_forward.18} parent=11 // pred_check
        %p348 = pneg %p118
      $region14: #{last_forward.18} parent=11 // pred_check_branch
        %350 = sbr.rel (%p348) target = $region16
      $region15: #{last_forward.18} parent=11 // pred_region
        _
      $region16: #{last_forward.18} parent=11 // pred_fallthru
        _
      // Predicated region
      $region17: #{last_forward.18} parent=11 // pred_check
        %p351 = pneg %p139
      $region18: #{last_forward.18} parent=11 // pred_check_branch
        %353 = sbr.rel (%p351) target = $region20
      $region19: #{last_forward.18} parent=11 // pred_region
        _
      $region20: #{last_forward.18} parent=11 // pred_fallthru
        _
      // Predicated region
      $region21: #{last_forward.18} parent=11 // pred_check
        %p354 = pneg %p160
      $region22: #{last_forward.18} parent=11 // pred_check_branch
        %356 = sbr.rel (%p354) target = $region24
      $region23: #{last_forward.18} parent=11 // pred_region
        _
      $region24: #{last_forward.18} parent=11 // pred_fallthru
        _
      // Predicated region
      $region25: #{last_forward.18} parent=11 // pred_check
        %p357 = pneg %p181
      $region26: #{last_forward.18} parent=11 // pred_check_branch
        %359 = sbr.rel (%p357) target = $region28
      $region27: #{last_forward.18} parent=11 // pred_region
        _
      $region28: #{last_forward.18} parent=11 // pred_fallthru
        _
      // Predicated region
      $region29: #{last_forward.18} parent=11 // pred_check
        %p360 = pneg %p202
      $region30: #{last_forward.18} parent=11 // pred_check_branch
        %362 = sbr.rel (%p360) target = $region32
      $region31: #{last_forward.18} parent=11 // pred_region
        _
      $region32: #{last_forward.18} parent=11 // pred_fallthru
        _
      // Predicated region
      $region33: #{last_forward.18} parent=11 // pred_check
        %p363 = pneg %p223
      $region34: #{last_forward.18} parent=11 // pred_check_branch
        %365 = sbr.rel (%p363) target = $region36
      $region35: #{last_forward.18} parent=11 // pred_region
        _
      $region36: #{last_forward.18} parent=11 // pred_fallthru
        _
      // Predicated region
      $region37: #{last_forward.18} parent=11 // pred_check
        %p366 = pneg %p244
      $region38: #{last_forward.18} parent=11 // pred_check_branch
        %368 = sbr.rel (%p366) target = $region40
      $region39: #{last_forward.18} parent=11 // pred_region
        _
      $region40: #{last_forward.18} parent=11 // pred_fallthru
        _
      // Predicated region
      $region41: #{last_forward.18} parent=11 // pred_check
        %p369 = pneg %p265
      $region42: #{last_forward.18} parent=11 // pred_check_branch
        %371 = sbr.rel (%p369) target = $region44
      $region43: #{last_forward.18} parent=11 // pred_region
        _
      $region44: #{last_forward.18} parent=11 // pred_fallthru
        _
      // Predicated region
      $region45: #{last_forward.18} parent=11 // pred_check
        %p372 = pneg %p286
      $region46: #{last_forward.18} parent=11 // pred_check_branch
        %374 = sbr.rel (%p372) target = $region48
      $region47: #{last_forward.18} parent=11 // pred_region
        _
      $region48: #{last_forward.18} parent=11 // pred_fallthru
        _
      // Predicated region
      $region49: #{last_forward.18} parent=11 // pred_check
        %p375 = pneg %p307
      $region50: #{last_forward.18} parent=11 // pred_check_branch
        %377 = sbr.rel (%p375) target = $region52
      $region51: #{last_forward.18} parent=11 // pred_region
        _
      $region52: #{last_forward.18} parent=11 // pred_fallthru
        _
    $region12: #{last_forward.18} parent=5 // pred_fallthru
      _
    %p378 = scmp.lt.s32.totalorder %s19, 2
    // Predicated region
    $region53: #{last_forward.18} parent=5 // pred_check
      %p379 = pneg %p378
    $region54: #{last_forward.18} parent=5 // pred_check_branch
      %381 = sbr.rel (%p379) target = $region56
    $region55: #{last_forward.18} parent=5 // pred_region
      // Predicated region
      $region57: #{last_forward.18} parent=55 // pred_check
        %p382 = pneg %p39
      $region58: #{last_forward.18} parent=55 // pred_check_branch
        %384 = sbr.rel (%p382) target = $region60
      $region59: #{last_forward.18} parent=55 // pred_region
        %p385 = scmp.lt.s32.totalorder %s19, 1
        %s386 = scalar_select %p385, %s19, 1
        %s387 = smul.addr %s386, 8
        %s388 = scalar_lea.vmem %s0, %s387
      $region60: #{last_forward.18} parent=55 // pred_fallthru
        _
      // Predicated region
      $region61: #{last_forward.18} parent=55 // pred_check
        %p389 = pneg %p65
      $region62: #{last_forward.18} parent=55 // pred_check_branch
        %391 = sbr.rel (%p389) target = $region64
      $region63: #{last_forward.18} parent=55 // pred_region
        %p392 = scmp.lt.s32.totalorder %s19, 1
        %s393 = scalar_select %p392, %s19, 1
        %s394 = smul.addr %s393, 8
        %s395 = smul.addr %s394, 4
        %s396 = scalar_lea.vmem %s1, %s395
      $region64: #{last_forward.18} parent=55 // pred_fallthru
        _
      // Predicated region
      $region65: #{last_forward.18} parent=55 // pred_check
        %p397 = pneg %p91
      $region66: #{last_forward.18} parent=55 // pred_check_branch
        %399 = sbr.rel (%p397) target = $region68
      $region67: #{last_forward.18} parent=55 // pred_region
        %p400 = scmp.lt.s32.totalorder %s19, 1
        %s401 = scalar_select %p400, %s19, 1
        %s402 = scalar_lea.vmem %s2, %s401
      $region68: #{last_forward.18} parent=55 // pred_fallthru
        _
    $region56: #{last_forward.18} parent=5 // pred_fallthru
      _
    %p403 = scmp.le.s32.totalorder 1, %s19
    %p404 = scmp.lt.s32.totalorder %s19, 3
    %p405 = pnand %p403, %p404
    %p406 = pneg %p405
    // Predicated region
    $region69: #{last_forward.18} parent=5 // pred_check
      _
    $region70: #{last_forward.18} parent=5 // pred_check_branch
      %408 = sbr.rel (%p405) target = $region72
    $region71: #{last_forward.18} parent=5 // pred_region
      %s409 = ssub.s32 %s19, 1
      %p410 = scmp.lt.s32.totalorder %s24, 1
      %s411 = scalar_select %p410, %s24, 1
      %s412 = smul.addr %s411, 8
      %s413 = scalar_lea.vmem %s0, %s412
      %p414 = pneg %p45
      %p415 = pneg %p42
      %p416 = scmp.lt.s32.totalorder %s24, 1
      %s417 = scalar_select %p416, %s24, 1
      %s418 = smul.addr %s417, 8
      %s419 = smul.addr %s418, 4
      %s420 = scalar_lea.vmem %s1, %s419
      %p421 = pneg %p71
      %p422 = pneg %p68
      %p423 = scmp.lt.s32.totalorder %s24, 1
      %s424 = scalar_select %p423, %s24, 1
      %s425 = scalar_lea.vmem %s2, %s424
      %p426 = pneg %p97
      %p427 = pneg %p94
      %p428 = pneg %p118
      %p429 = pneg %p115
      %p430 = pneg %p139
      %p431 = pneg %p136
      %p432 = pneg %p160
      %p433 = pneg %p157
      %p434 = pneg %p181
      %p435 = pneg %p178
      %p436 = pneg %p202
      %p437 = pneg %p199
      %p438 = pneg %p223
      %p439 = pneg %p220
      %p440 = pneg %p244
      %p441 = pneg %p241
      %p442 = pneg %p265
      %p443 = pneg %p262
      %p444 = pneg %p286
      %p445 = pneg %p283
      %p446 = pneg %p307
      %p447 = pneg %p304
      %p448 = pneg %p333
      %p449 = pneg %p330
      %p450 = scmp.lt.s32.totalorder %s24, 1
      %s451 = scalar_select %p450, %s24, 1
      %s452 = smul.addr %s451, 8
      %s453 = scalar_lea.vmem %s13, %s452
      %p454 = scmp.lt.s32.totalorder %s24, 1
      %s455 = scalar_select %p454, %s24, 1
      %s456 = smul.addr %s455, 8
      %s457 = scalar_lea.vmem %s0, %s456
      %p458 = scmp.lt.s32.totalorder %s24, 1
      %s459 = scalar_select %p458, %s24, 1
      %s460 = smul.addr %s459, 8
      %s461 = smul.addr %s460, 4
      %s462 = scalar_lea.vmem %s1, %s461
      %p463 = scmp.lt.s32.totalorder %s24, 1
      %s464 = scalar_select %p463, %s24, 1
      %s465 = scalar_lea.vmem %s2, %s464
      %p466 = scmp.lt.s32.totalorder %s24, 1
      %s467 = scalar_select %p466, %s24, 1
      %s468 = smul.addr %s467, 8
      %s469 = scalar_lea.vmem %s13, %s468
      %v471 = vld [vmem:[%s457] sm:$0xff]
      %v472 = vpack.c.bf16 %v471, %v471
      %v473 = vld [vmem:[%s462] sm:$0xf]
      %v474 = vld [vmem:[%s462 + $0x4] sm:$0xf]
      %v475 = vld [vmem:[%s462 + $0x8] sm:$0xf]
      %v476 = vld [vmem:[%s462 + $0xc] sm:$0xf]
      %v477 = vld [vmem:[%s462 + $0x10] sm:$0xf]
      %v478 = vld [vmem:[%s462 + $0x14] sm:$0xf]
      %v479 = vld [vmem:[%s462 + $0x18] sm:$0xf]
      %v480 = vld [vmem:[%s462 + $0x1c] sm:$0xf]
      %v481 = vld [vmem:[%s465] sm:$0x1]
      %v482 = vld [vmem:[%s3] sm:$0xf]
      %v483 = vld [vmem:[%s3 + $0x4] sm:$0xf]
      %v484 = vld [vmem:[%s3 + $0x8] sm:$0xf]
      %v485 = vld [vmem:[%s3 + $0xc] sm:$0xf]
      %v486 = vld [vmem:[%s4] sm:$0x1]
      %v488 = vlaneseq
      %v489 = vshrl.u32 %v488, 7
      %v490 = vsub.s32 0, %v489
      %v491 = vrot.slane %v486, %v490
      %v497 = vunpack.c.l.b16 %v482
      %v498 = vunpack.c.l.b16 %v483
      %v499 = vunpack.c.l.b16 %v484
      %v500 = vunpack.c.l.b16 %v485
      %v501 = vpack.c.b16 %v498, %v497
      %v502 = vpack.c.b16 %v500, %v499
      %vm505 = vcmask 261120
      %v507 = vsel %vm505, %v472, 0
      %509 = vmatprep.subr.bf16.mxu0 0
      %510 = vmatpush1.bf16.msra.mxu0 %v501
      %511 = vmatprep.subr.bf16.mxu0 0
      %512 = vmatpush1.bf16.msra.mxu0 %v502
      %513 = vmatprep.subr.bf16.mxu0 0
      %514 = vmatpush1.bf16.msra.mxu0 0
      %515 = vmatprep.subr.bf16.mxu0 0
      %516 = vmatpush1.bf16.msra.mxu0 0
      %517 = vmatprep.subr.bf16.mxu0 0
      %518 = vmatpush1.bf16.msra.mxu0 0
      %519 = vmatprep.subr.bf16.mxu0 0
      %520 = vmatpush1.bf16.msra.mxu0 0
      %521 = vmatprep.subr.bf16.mxu0 0
      %522 = vmatpush1.bf16.msra.mxu0 0
      %523 = vmatprep.subr.bf16.mxu0 0
      %524 = vmatpush1.bf16.msra.mxu0 0
      %525 = vmatprep.subr.bf16.mxu0 0
      %526 = vmatpush1.bf16.msra.mxu0 0
      %527 = vmatprep.subr.bf16.mxu0 0
      %528 = vmatpush1.bf16.msra.mxu0 0
      %529 = vmatprep.subr.bf16.mxu0 0
      %530 = vmatpush1.bf16.msra.mxu0 0
      %531 = vmatprep.subr.bf16.mxu0 0
      %532 = vmatpush1.bf16.msra.mxu0 0
      %533 = vmatprep.subr.bf16.mxu0 0
      %534 = vmatpush1.bf16.msra.mxu0 0
      %535 = vmatprep.subr.bf16.mxu0 0
      %536 = vmatpush1.bf16.msra.mxu0 0
      %537 = vmatprep.subr.bf16.mxu0 0
      %538 = vmatpush1.bf16.msra.mxu0 0
      %539 = vmatprep.subr.bf16.mxu0 0
      %540 = vmatpush1.bf16.msra.mxu0 0
      %541 = vmatprep.mubr.bf16.mxu0 0
      %542 = vmatmul.mubr.bf16.gmra.mrb[0].mxu0 %v507
      %v543 = vpop.f32.mrb[0].mxu0
      %v544 = vadd.f32 %v491, %v543
      %v545 = vpop.f32.mrb[0].mxu0
      %v546 = vpop.f32.mrb[0].mxu0
      %v547 = vpop.f32.mrb[0].mxu0
      %548 = vdwg.mxu0
      %v549 = vld [vmem:[%s5] sm:$0xf]
      %v550 = vld [vmem:[%s5 + $0x4] sm:$0xf]
      %v551 = vld [vmem:[%s5 + $0x8] sm:$0xf]
      %v552 = vld [vmem:[%s5 + $0xc] sm:$0xf]
      %v553 = vld [vmem:[%s6] sm:$0x1]
      %v555 = vlaneseq
      %v556 = vshrl.u32 %v555, 7
      %v557 = vsub.s32 0, %v556
      %v558 = vrot.slane %v553, %v557
      %v568 = vunpack.c.l.b16 %v473
      %v569 = vunpack.c.l.b16 %v474
      %v570 = vunpack.c.l.b16 %v475
      %v571 = vunpack.c.l.b16 %v476
      %v572 = vunpack.c.l.b16 %v477
      %v573 = vunpack.c.l.b16 %v478
      %v574 = vunpack.c.l.b16 %v479
      %v575 = vunpack.c.l.b16 %v480
      %v576 = vpack.c.b16 %v569, %v568
      %v577 = vpack.c.b16 %v571, %v570
      %v578 = vpack.c.b16 %v573, %v572
      %v579 = vpack.c.b16 %v575, %v574
      %v584 = vunpack.c.l.b16 %v549
      %v585 = vunpack.c.l.b16 %v550
      %v586 = vunpack.c.l.b16 %v551
      %v587 = vunpack.c.l.b16 %v552
      %v588 = vpack.c.b16 %v585, %v584
      %v589 = vpack.c.b16 %v587, %v586
      %v593 = vsel %vm505, %v576, 0
      %v596 = vsel %vm505, %v577, 0
      %v599 = vsel %vm505, %v578, 0
      %v602 = vsel %vm505, %v579, 0
      %604 = vmatprep.subr.bf16.mxu0 0
      %605 = vmatpush1.bf16.msra.mxu0 %v588
      %606 = vmatprep.subr.bf16.mxu0 0
      %607 = vmatpush1.bf16.msra.mxu0 %v589
      %608 = vmatprep.subr.bf16.mxu0 0
      %609 = vmatpush1.bf16.msra.mxu0 0
      %610 = vmatprep.subr.bf16.mxu0 0
      %611 = vmatpush1.bf16.msra.mxu0 0
      %612 = vmatprep.subr.bf16.mxu0 0
      %613 = vmatpush1.bf16.msra.mxu0 0
      %614 = vmatprep.subr.bf16.mxu0 0
      %615 = vmatpush1.bf16.msra.mxu0 0
      %616 = vmatprep.subr.bf16.mxu0 0
      %617 = vmatpush1.bf16.msra.mxu0 0
      %618 = vmatprep.subr.bf16.mxu0 0
      %619 = vmatpush1.bf16.msra.mxu0 0
      %620 = vmatprep.subr.bf16.mxu0 0
      %621 = vmatpush1.bf16.msra.mxu0 0
      %622 = vmatprep.subr.bf16.mxu0 0
      %623 = vmatpush1.bf16.msra.mxu0 0
      %624 = vmatprep.subr.bf16.mxu0 0
      %625 = vmatpush1.bf16.msra.mxu0 0
      %626 = vmatprep.subr.bf16.mxu0 0
      %627 = vmatpush1.bf16.msra.mxu0 0
      %628 = vmatprep.subr.bf16.mxu0 0
      %629 = vmatpush1.bf16.msra.mxu0 0
      %630 = vmatprep.subr.bf16.mxu0 0
      %631 = vmatpush1.bf16.msra.mxu0 0
      %632 = vmatprep.subr.bf16.mxu0 0
      %633 = vmatpush1.bf16.msra.mxu0 0
      %634 = vmatprep.subr.bf16.mxu0 0
      %635 = vmatpush1.bf16.msra.mxu0 0
      %636 = vmatprep.mubr.bf16.mxu0 0
      %637 = vmatmul.mubr.bf16.gmra.mrb[0].mxu0 %v593
      %v638 = vpop.f32.mrb[0].mxu0
      %v639 = vadd.f32 %v558, %v638
      %v640 = vpop.f32.mrb[0].mxu0
      %v641 = vpop.f32.mrb[0].mxu0
      %v642 = vadd.f32 %v558, %v641
      %v643 = vpop.f32.mrb[0].mxu0
      %644 = vmatprep.mubr.bf16.mxu0 0
      %645 = vmatmul.mubr.bf16.gmra.mrb[0].mxu0 %v596
      %v646 = vpop.f32.mrb[0].mxu0
      %v647 = vadd.f32 %v558, %v646
      %v648 = vpop.f32.mrb[0].mxu0
      %v649 = vpop.f32.mrb[0].mxu0
      %v650 = vadd.f32 %v558, %v649
      %v651 = vpop.f32.mrb[0].mxu0
      %652 = vmatprep.mubr.bf16.mxu0 0
      %653 = vmatmul.mubr.bf16.gmra.mrb[0].mxu0 %v599
      %v654 = vpop.f32.mrb[0].mxu0
      %v655 = vadd.f32 %v558, %v654
      %v656 = vpop.f32.mrb[0].mxu0
      %v657 = vpop.f32.mrb[0].mxu0
      %v658 = vadd.f32 %v558, %v657
      %v659 = vpop.f32.mrb[0].mxu0
      %660 = vmatprep.mubr.bf16.mxu0 0
      %661 = vmatmul.mubr.bf16.gmra.mrb[0].mxu0 %v602
      %v662 = vpop.f32.mrb[0].mxu0
      %v663 = vadd.f32 %v558, %v662
      %v664 = vpop.f32.mrb[0].mxu0
      %v665 = vpop.f32.mrb[0].mxu0
      %v666 = vadd.f32 %v558, %v665
      %v667 = vpop.f32.mrb[0].mxu0
      %668 = vdwg.mxu0
      %v669 = vld [vmem:[%s7] sm:$0xf]
      %v670 = vld [vmem:[%s7 + $0x4] sm:$0xf]
      %v671 = vld [vmem:[%s7 + $0x8] sm:$0xf]
      %v672 = vld [vmem:[%s7 + $0xc] sm:$0xf]
      %v673 = vld [vmem:[%s8] sm:$0x1]
      %v675 = vlaneseq
      %v676 = vshrl.u32 %v675, 7
      %v677 = vsub.s32 0, %v676
      %v678 = vrot.slane %v673, %v677
      %v684 = vunpack.c.l.b16 %v669
      %v685 = vunpack.c.l.b16 %v670
      %v686 = vunpack.c.l.b16 %v671
      %v687 = vunpack.c.l.b16 %v672
      %v688 = vpack.c.b16 %v685, %v684
      %v689 = vpack.c.b16 %v687, %v686
      %692 = vmatprep.subr.bf16.mxu0 0
      %693 = vmatpush1.bf16.msra.mxu0 %v688
      %694 = vmatprep.subr.bf16.mxu0 0
      %695 = vmatpush1.bf16.msra.mxu0 %v689
      %696 = vmatprep.subr.bf16.mxu0 0
      %697 = vmatpush1.bf16.msra.mxu0 0
      %698 = vmatprep.subr.bf16.mxu0 0
      %699 = vmatpush1.bf16.msra.mxu0 0
      %700 = vmatprep.subr.bf16.mxu0 0
      %701 = vmatpush1.bf16.msra.mxu0 0
      %702 = vmatprep.subr.bf16.mxu0 0
      %703 = vmatpush1.bf16.msra.mxu0 0
      %704 = vmatprep.subr.bf16.mxu0 0
      %705 = vmatpush1.bf16.msra.mxu0 0
      %706 = vmatprep.subr.bf16.mxu0 0
      %707 = vmatpush1.bf16.msra.mxu0 0
      %708 = vmatprep.subr.bf16.mxu0 0
      %709 = vmatpush1.bf16.msra.mxu0 0
      %710 = vmatprep.subr.bf16.mxu0 0
      %711 = vmatpush1.bf16.msra.mxu0 0
      %712 = vmatprep.subr.bf16.mxu0 0
      %713 = vmatpush1.bf16.msra.mxu0 0
      %714 = vmatprep.subr.bf16.mxu0 0
      %715 = vmatpush1.bf16.msra.mxu0 0
      %716 = vmatprep.subr.bf16.mxu0 0
      %717 = vmatpush1.bf16.msra.mxu0 0
      %718 = vmatprep.subr.bf16.mxu0 0
      %719 = vmatpush1.bf16.msra.mxu0 0
      %720 = vmatprep.subr.bf16.mxu0 0
      %721 = vmatpush1.bf16.msra.mxu0 0
      %722 = vmatprep.subr.bf16.mxu0 0
      %723 = vmatpush1.bf16.msra.mxu0 0
      %724 = vmatprep.mubr.bf16.mxu0 0
      %725 = vmatmul.mubr.bf16.gmra.mrb[0].mxu0 %v593
      %v726 = vpop.f32.mrb[0].mxu0
      %v727 = vadd.f32 %v678, %v726
      %v728 = vpop.f32.mrb[0].mxu0
      %v729 = vpop.f32.mrb[0].mxu0
      %v730 = vadd.f32 %v678, %v729
      %v731 = vpop.f32.mrb[0].mxu0
      %732 = vmatprep.mubr.bf16.mxu0 0
      %733 = vmatmul.mubr.bf16.gmra.mrb[0].mxu0 %v596
      %v734 = vpop.f32.mrb[0].mxu0
      %v735 = vadd.f32 %v678, %v734
      %v736 = vpop.f32.mrb[0].mxu0
      %v737 = vpop.f32.mrb[0].mxu0
      %v738 = vadd.f32 %v678, %v737
      %v739 = vpop.f32.mrb[0].mxu0
      %740 = vmatprep.mubr.bf16.mxu0 0
      %741 = vmatmul.mubr.bf16.gmra.mrb[0].mxu0 %v599
      %v742 = vpop.f32.mrb[0].mxu0
      %v743 = vadd.f32 %v678, %v742
      %v744 = vpop.f32.mrb[0].mxu0
      %v745 = vpop.f32.mrb[0].mxu0
      %v746 = vadd.f32 %v678, %v745
      %v747 = vpop.f32.mrb[0].mxu0
      %748 = vmatprep.mubr.bf16.mxu0 0
      %749 = vmatmul.mubr.bf16.gmra.mrb[0].mxu0 %v602
      %v750 = vpop.f32.mrb[0].mxu0
      %v751 = vadd.f32 %v678, %v750
      %v752 = vpop.f32.mrb[0].mxu0
      %v753 = vpop.f32.mrb[0].mxu0
      %v754 = vadd.f32 %v678, %v753
      %v755 = vpop.f32.mrb[0].mxu0
      %756 = vdwg.mxu0
      %v757 = vpack.c.bf16 %v544, %v544
      %v758 = vpack.c.bf16 %v642, %v639
      %v759 = vpack.c.bf16 %v650, %v647
      %v760 = vpack.c.bf16 %v658, %v655
      %v761 = vpack.c.bf16 %v666, %v663
      %vm762 = vcmask 64512
      %v764 = vsel %vm762, %v757, 0
      %v767 = vsel %vm762, %v758, 0
      %v770 = vsel %vm762, %v759, 0
      %v773 = vsel %vm762, %v760, 0
      %v776 = vsel %vm762, %v761, 0
      %778 = vmatprep.subr.bf16.mxu0 0
      %779 = vmatpush1.bf16.xpose.msra.mxu0 %v767
      %780 = vmatprep.subr.bf16.mxu0 0
      %781 = vmatpush1.bf16.xpose.msra.mxu0 %v770
      %782 = vmatprep.subr.bf16.mxu0 0
      %783 = vmatpush1.bf16.xpose.msra.mxu0 %v773
      %784 = vmatprep.subr.bf16.mxu0 0
      %785 = vmatpush1.bf16.xpose.msra.mxu0 %v776
      %786 = vmatprep.subr.bf16.mxu0 0
      %787 = vmatpush1.bf16.xpose.msra.mxu0 0
      %788 = vmatprep.subr.bf16.mxu0 0
      %789 = vmatpush1.bf16.xpose.msra.mxu0 0
      %790 = vmatprep.subr.bf16.mxu0 0
      %791 = vmatpush1.bf16.xpose.msra.mxu0 0
      %792 = vmatprep.subr.bf16.mxu0 0
      %793 = vmatpush1.bf16.xpose.msra.mxu0 0
      %794 = vmatprep.subr.bf16.mxu0 0
      %795 = vmatpush1.bf16.xpose.msra.mxu0 0
      %796 = vmatprep.subr.bf16.mxu0 0
      %797 = vmatpush1.bf16.xpose.msra.mxu0 0
      %798 = vmatprep.subr.bf16.mxu0 0
      %799 = vmatpush1.bf16.xpose.msra.mxu0 0
      %800 = vmatprep.subr.bf16.mxu0 0
      %801 = vmatpush1.bf16.xpose.msra.mxu0 0
      %802 = vmatprep.subr.bf16.mxu0 0
      %803 = vmatpush1.bf16.xpose.msra.mxu0 0
      %804 = vmatprep.subr.bf16.mxu0 0
      %805 = vmatpush1.bf16.xpose.msra.mxu0 0
      %806 = vmatprep.subr.bf16.mxu0 0
      %807 = vmatpush1.bf16.xpose.msra.mxu0 0
      %808 = vmatprep.subr.bf16.mxu0 0
      %809 = vmatpush1.bf16.xpose.msra.mxu0 0
      %810 = vmatprep.mubr.bf16.mxu0 0
      %811 = vmatmul.mubr.bf16.gmra.mrb[0].mxu0 %v764
      %v812 = vpop.f32.mrb[0].mxu0
      %v813 = vadd.f32 0.0, %v812
      %v814 = vpop.f32.mrb[0].mxu0
      %v815 = vpop.f32.mrb[0].mxu0
      %v816 = vpop.f32.mrb[0].mxu0
      %817 = vdwg.mxu0
      %v818 = vmul.f32 %v813, 0.35355338
      %v820 = vlaneseq
      %v821 = vshrl.u32 %v820, 7
      %v822 = vsub.s32 0, %v821
      %v823 = vrot.slane %v481, %v822
      %v825 = vadd.f32 %v818, %v823
      %vm826 = vcmask 523264
      %v827 = vsel %vm826, %v825, -inf
      %828 = vmax.xlane.f32.xlu0 %v827
      %v829 = vpop.xlane.xlu0 %828
      %v830 = vsub.f32 %v825, %v829
      %v831 = vmul.f32 %v830, 1.442695
      %v832 = vpow.pop %v831
      %v833 = vsel %vm826, %v832, 0.0
      %834 = vadd.xlane.f32.xlu0 %v833
      %v835 = vpop.xlane.xlu0 %834
      %v836 = vrcp.pop %v835
      %v837 = vmul.f32 %v832, %v836
      %v838 = vpack.c.bf16 %v837, %v837
      %v839 = vpack.c.bf16 %v730, %v727
      %v840 = vpack.c.bf16 %v738, %v735
      %v841 = vpack.c.bf16 %v746, %v743
      %v842 = vpack.c.bf16 %v754, %v751
      %v844 = vsel %vm826, %v838, 0
      %846 = vmatprep.subr.bf16.mxu0 0
      %847 = vmatpush1.bf16.msra.mxu0 %v839
      %848 = vmatprep.subr.bf16.mxu0 0
      %849 = vmatpush1.bf16.msra.mxu0 %v840
      %850 = vmatprep.subr.bf16.mxu0 0
      %851 = vmatpush1.bf16.msra.mxu0 %v841
      %852 = vmatprep.subr.bf16.mxu0 0
      %853 = vmatpush1.bf16.msra.mxu0 %v842
      %854 = vmatprep.subr.bf16.mxu0 0
      %855 = vmatpush1.bf16.msra.mxu0 0
      %856 = vmatprep.subr.bf16.mxu0 0
      %857 = vmatpush1.bf16.msra.mxu0 0
      %858 = vmatprep.subr.bf16.mxu0 0
      %859 = vmatpush1.bf16.msra.mxu0 0
      %860 = vmatprep.subr.bf16.mxu0 0
      %861 = vmatpush1.bf16.msra.mxu0 0
      %862 = vmatprep.subr.bf16.mxu0 0
      %863 = vmatpush1.bf16.msra.mxu0 0
      %864 = vmatprep.subr.bf16.mxu0 0
      %865 = vmatpush1.bf16.msra.mxu0 0
      %866 = vmatprep.subr.bf16.mxu0 0
      %867 = vmatpush1.bf16.msra.mxu0 0
      %868 = vmatprep.subr.bf16.mxu0 0
      %869 = vmatpush1.bf16.msra.mxu0 0
      %870 = vmatprep.subr.bf16.mxu0 0
      %871 = vmatpush1.bf16.msra.mxu0 0
      %872 = vmatprep.subr.bf16.mxu0 0
      %873 = vmatpush1.bf16.msra.mxu0 0
      %874 = vmatprep.subr.bf16.mxu0 0
      %875 = vmatpush1.bf16.msra.mxu0 0
      %876 = vmatprep.subr.bf16.mxu0 0
      %877 = vmatpush1.bf16.msra.mxu0 0
      %878 = vmatprep.mubr.bf16.mxu0 0
      %879 = vmatmul.mubr.bf16.gmra.mrb[0].mxu0 %v844
      %v880 = vpop.f32.mrb[0].mxu0
      %v881 = vadd.f32 0.0, %v880
      %v882 = vpop.f32.mrb[0].mxu0
      %v883 = vpop.f32.mrb[0].mxu0
      %v884 = vpop.f32.mrb[0].mxu0
      %885 = vdwg.mxu0
      %v886 = vpack.c.bf16 %v881, %v881
      %v887 = vld [vmem:[%s9] sm:$0xf]
      %s888 = scalar_lea.vmem %s3, 16
      %v889 = vld [vmem:[%s888] sm:$0xf]
      %v890 = vld [vmem:[%s888 + $0x4] sm:$0xf]
      %v891 = vld [vmem:[%s888 + $0x8] sm:$0xf]
      %v892 = vld [vmem:[%s888 + $0xc] sm:$0xf]
      %s893 = scalar_lea.vmem %s4, 1
      %v894 = vld [vmem:[%s893] sm:$0x1]
      %v896 = vlaneseq
      %v897 = vshrl.u32 %v896, 7
      %v898 = vsub.s32 0, %v897
      %v899 = vrot.slane %v894, %v898
      %v905 = vunpack.c.l.b16 %v889
      %v906 = vunpack.c.l.b16 %v890
      %v907 = vunpack.c.l.b16 %v891
      %v908 = vunpack.c.l.b16 %v892
      %v909 = vpack.c.b16 %v906, %v905
      %v910 = vpack.c.b16 %v908, %v907
      %913 = vmatprep.subr.bf16.mxu0 0
      %914 = vmatpush1.bf16.msra.mxu0 %v909
      %915 = vmatprep.subr.bf16.mxu0 0
      %916 = vmatpush1.bf16.msra.mxu0 %v910
      %917 = vmatprep.subr.bf16.mxu0 0
      %918 = vmatpush1.bf16.msra.mxu0 0
      %919 = vmatprep.subr.bf16.mxu0 0
      %920 = vmatpush1.bf16.msra.mxu0 0
      %921 = vmatprep.subr.bf16.mxu0 0
      %922 = vmatpush1.bf16.msra.mxu0 0
      %923 = vmatprep.subr.bf16.mxu0 0
      %924 = vmatpush1.bf16.msra.mxu0 0
      %925 = vmatprep.subr.bf16.mxu0 0
      %926 = vmatpush1.bf16.msra.mxu0 0
      %927 = vmatprep.subr.bf16.mxu0 0
      %928 = vmatpush1.bf16.msra.mxu0 0
      %929 = vmatprep.subr.bf16.mxu0 0
      %930 = vmatpush1.bf16.msra.mxu0 0
      %931 = vmatprep.subr.bf16.mxu0 0
      %932 = vmatpush1.bf16.msra.mxu0 0
      %933 = vmatprep.subr.bf16.mxu0 0
      %934 = vmatpush1.bf16.msra.mxu0 0
      %935 = vmatprep.subr.bf16.mxu0 0
      %936 = vmatpush1.bf16.msra.mxu0 0
      %937 = vmatprep.subr.bf16.mxu0 0
      %938 = vmatpush1.bf16.msra.mxu0 0
      %939 = vmatprep.subr.bf16.mxu0 0
      %940 = vmatpush1.bf16.msra.mxu0 0
      %941 = vmatprep.subr.bf16.mxu0 0
      %942 = vmatpush1.bf16.msra.mxu0 0
      %943 = vmatprep.subr.bf16.mxu0 0
      %944 = vmatpush1.bf16.msra.mxu0 0
      %945 = vmatprep.mubr.bf16.mxu0 0
      %946 = vmatmul.mubr.bf16.gmra.mrb[0].mxu0 %v507
      %v947 = vpop.f32.mrb[0].mxu0
      %v948 = vadd.f32 %v899, %v947
      %v949 = vpop.f32.mrb[0].mxu0
      %v950 = vpop.f32.mrb[0].mxu0
      %v951 = vpop.f32.mrb[0].mxu0
      %952 = vdwg.mxu0
      %s953 = scalar_lea.vmem %s5, 16
      %v954 = vld [vmem:[%s953] sm:$0xf]
      %v955 = vld [vmem:[%s953 + $0x4] sm:$0xf]
      %v956 = vld [vmem:[%s953 + $0x8] sm:$0xf]
      %v957 = vld [vmem:[%s953 + $0xc] sm:$0xf]
      %s958 = scalar_lea.vmem %s6, 1
      %v959 = vld [vmem:[%s958] sm:$0x1]
      %v961 = vlaneseq
      %v962 = vshrl.u32 %v961, 7
      %v963 = vsub.s32 0, %v962
      %v964 = vrot.slane %v959, %v963
      %v970 = vunpack.c.l.b16 %v954
      %v971 = vunpack.c.l.b16 %v955
      %v972 = vunpack.c.l.b16 %v956
      %v973 = vunpack.c.l.b16 %v957
      %v974 = vpack.c.b16 %v971, %v970
      %v975 = vpack.c.b16 %v973, %v972
      %978 = vmatprep.subr.bf16.mxu0 0
      %979 = vmatpush1.bf16.msra.mxu0 %v974
      %980 = vmatprep.subr.bf16.mxu0 0
      %981 = vmatpush1.bf16.msra.mxu0 %v975
      %982 = vmatprep.subr.bf16.mxu0 0
      %983 = vmatpush1.bf16.msra.mxu0 0
      %984 = vmatprep.subr.bf16.mxu0 0
      %985 = vmatpush1.bf16.msra.mxu0 0
      %986 = vmatprep.subr.bf16.mxu0 0
      %987 = vmatpush1.bf16.msra.mxu0 0
      %988 = vmatprep.subr.bf16.mxu0 0
      %989 = vmatpush1.bf16.msra.mxu0 0
      %990 = vmatprep.subr.bf16.mxu0 0
      %991 = vmatpush1.bf16.msra.mxu0 0
      %992 = vmatprep.subr.bf16.mxu0 0
      %993 = vmatpush1.bf16.msra.mxu0 0
      %994 = vmatprep.subr.bf16.mxu0 0
      %995 = vmatpush1.bf16.msra.mxu0 0
      %996 = vmatprep.subr.bf16.mxu0 0
      %997 = vmatpush1.bf16.msra.mxu0 0
      %998 = vmatprep.subr.bf16.mxu0 0
      %999 = vmatpush1.bf16.msra.mxu0 0
      %1000 = vmatprep.subr.bf16.mxu0 0
      %1001 = vmatpush1.bf16.msra.mxu0 0
      %1002 = vmatprep.subr.bf16.mxu0 0
      %1003 = vmatpush1.bf16.msra.mxu0 0
      %1004 = vmatprep.subr.bf16.mxu0 0
      %1005 = vmatpush1.bf16.msra.mxu0 0
      %1006 = vmatprep.subr.bf16.mxu0 0
      %1007 = vmatpush1.bf16.msra.mxu0 0
      %1008 = vmatprep.subr.bf16.mxu0 0
      %1009 = vmatpush1.bf16.msra.mxu0 0
      %1010 = vmatprep.mubr.bf16.mxu0 0
      %1011 = vmatmul.mubr.bf16.gmra.mrb[0].mxu0 %v593
      %v1012 = vpop.f32.mrb[0].mxu0
      %v1013 = vadd.f32 %v964, %v1012
      %v1014 = vpop.f32.mrb[0].mxu0
      %v1015 = vpop.f32.mrb[0].mxu0
      %v1016 = vadd.f32 %v964, %v1015
      %v1017 = vpop.f32.mrb[0].mxu0
      %1018 = vmatprep.mubr.bf16.mxu0 0
      %1019 = vmatmul.mubr.bf16.gmra.mrb[0].mxu0 %v596
      %v1020 = vpop.f32.mrb[0].mxu0
      %v1021 = vadd.f32 %v964, %v1020
      %v1022 = vpop.f32.mrb[0].mxu0
      %v1023 = vpop.f32.mrb[0].mxu0
      %v1024 = vadd.f32 %v964, %v1023
      %v1025 = vpop.f32.mrb[0].mxu0
      %1026 = vmatprep.mubr.bf16.mxu0 0
      %1027 = vmatmul.mubr.bf16.gmra.mrb[0].mxu0 %v599
      %v1028 = vpop.f32.mrb[0].mxu0
      %v1029 = vadd.f32 %v964, %v1028
      %v1030 = vpop.f32.mrb[0].mxu0
      %v1031 = vpop.f32.mrb[0].mxu0
      %v1032 = vadd.f32 %v964, %v1031
      %v1033 = vpop.f32.mrb[0].mxu0
      %1034 = vmatprep.mubr.bf16.mxu0 0
      %1035 = vmatmul.mubr.bf16.gmra.mrb[0].mxu0 %v602
      %v1036 = vpop.f32.mrb[0].mxu0
      %v1037 = vadd.f32 %v964, %v1036
      %v1038 = vpop.f32.mrb[0].mxu0
      %v1039 = vpop.f32.mrb[0].mxu0
      %v1040 = vadd.f32 %v964, %v1039
      %v1041 = vpop.f32.mrb[0].mxu0
      %1042 = vdwg.mxu0
      %s1043 = scalar_lea.vmem %s7, 16
      %v1044 = vld [vmem:[%s1043] sm:$0xf]
      %v1045 = vld [vmem:[%s1043 + $0x4] sm:$0xf]
      %v1046 = vld [vmem:[%s1043 + $0x8] sm:$0xf]
      %v1047 = vld [vmem:[%s1043 + $0xc] sm:$0xf]
      %s1048 = scalar_lea.vmem %s8, 1
      %v1049 = vld [vmem:[%s1048] sm:$0x1]
      %v1051 = vlaneseq
      %v1052 = vshrl.u32 %v1051, 7
      %v1053 = vsub.s32 0, %v1052
      %v1054 = vrot.slane %v1049, %v1053
      %v1060 = vunpack.c.l.b16 %v1044
      %v1061 = vunpack.c.l.b16 %v1045
      %v1062 = vunpack.c.l.b16 %v1046
      %v1063 = vunpack.c.l.b16 %v1047
      %v1064 = vpack.c.b16 %v1061, %v1060
      %v1065 = vpack.c.b16 %v1063, %v1062
      %1068 = vmatprep.subr.bf16.mxu0 0
      %1069 = vmatpush1.bf16.msra.mxu0 %v1064
      %1070 = vmatprep.subr.bf16.mxu0 0
      %1071 = vmatpush1.bf16.msra.mxu0 %v1065
      %1072 = vmatprep.subr.bf16.mxu0 0
      %1073 = vmatpush1.bf16.msra.mxu0 0
      %1074 = vmatprep.subr.bf16.mxu0 0
      %1075 = vmatpush1.bf16.msra.mxu0 0
      %1076 = vmatprep.subr.bf16.mxu0 0
      %1077 = vmatpush1.bf16.msra.mxu0 0
      %1078 = vmatprep.subr.bf16.mxu0 0
      %1079 = vmatpush1.bf16.msra.mxu0 0
      %1080 = vmatprep.subr.bf16.mxu0 0
      %1081 = vmatpush1.bf16.msra.mxu0 0
      %1082 = vmatprep.subr.bf16.mxu0 0
      %1083 = vmatpush1.bf16.msra.mxu0 0
      %1084 = vmatprep.subr.bf16.mxu0 0
      %1085 = vmatpush1.bf16.msra.mxu0 0
      %1086 = vmatprep.subr.bf16.mxu0 0
      %1087 = vmatpush1.bf16.msra.mxu0 0
      %1088 = vmatprep.subr.bf16.mxu0 0
      %1089 = vmatpush1.bf16.msra.mxu0 0
      %1090 = vmatprep.subr.bf16.mxu0 0
      %1091 = vmatpush1.bf16.msra.mxu0 0
      %1092 = vmatprep.subr.bf16.mxu0 0
      %1093 = vmatpush1.bf16.msra.mxu0 0
      %1094 = vmatprep.subr.bf16.mxu0 0
      %1095 = vmatpush1.bf16.msra.mxu0 0
      %1096 = vmatprep.subr.bf16.mxu0 0
      %1097 = vmatpush1.bf16.msra.mxu0 0
      %1098 = vmatprep.subr.bf16.mxu0 0
      %1099 = vmatpush1.bf16.msra.mxu0 0
      %1100 = vmatprep.mubr.bf16.mxu0 0
      %1101 = vmatmul.mubr.bf16.gmra.mrb[0].mxu0 %v593
      %v1102 = vpop.f32.mrb[0].mxu0
      %v1103 = vadd.f32 %v1054, %v1102
      %v1104 = vpop.f32.mrb[0].mxu0
      %v1105 = vpop.f32.mrb[0].mxu0
      %v1106 = vadd.f32 %v1054, %v1105
      %v1107 = vpop.f32.mrb[0].mxu0
      %1108 = vmatprep.mubr.bf16.mxu0 0
      %1109 = vmatmul.mubr.bf16.gmra.mrb[0].mxu0 %v596
      %v1110 = vpop.f32.mrb[0].mxu0
      %v1111 = vadd.f32 %v1054, %v1110
      %v1112 = vpop.f32.mrb[0].mxu0
      %v1113 = vpop.f32.mrb[0].mxu0
      %v1114 = vadd.f32 %v1054, %v1113
      %v1115 = vpop.f32.mrb[0].mxu0
      %1116 = vmatprep.mubr.bf16.mxu0 0
      %1117 = vmatmul.mubr.bf16.gmra.mrb[0].mxu0 %v599
      %v1118 = vpop.f32.mrb[0].mxu0
      %v1119 = vadd.f32 %v1054, %v1118
      %v1120 = vpop.f32.mrb[0].mxu0
      %v1121 = vpop.f32.mrb[0].mxu0
      %v1122 = vadd.f32 %v1054, %v1121
      %v1123 = vpop.f32.mrb[0].mxu0
      %1124 = vmatprep.mubr.bf16.mxu0 0
      %1125 = vmatmul.mubr.bf16.gmra.mrb[0].mxu0 %v602
      %v1126 = vpop.f32.mrb[0].mxu0
      %v1127 = vadd.f32 %v1054, %v1126
      %v1128 = vpop.f32.mrb[0].mxu0
      %v1129 = vpop.f32.mrb[0].mxu0
      %v1130 = vadd.f32 %v1054, %v1129
      %v1131 = vpop.f32.mrb[0].mxu0
      %1132 = vdwg.mxu0
      %v1133 = vpack.c.bf16 %v948, %v948
      %v1134 = vpack.c.bf16 %v1016, %v1013
      %v1135 = vpack.c.bf16 %v1024, %v1021
      %v1136 = vpack.c.bf16 %v1032, %v1029
      %v1137 = vpack.c.bf16 %v1040, %v1037
      %v1139 = vsel %vm762, %v1133, 0
      %v1142 = vsel %vm762, %v1134, 0
      %v1145 = vsel %vm762, %v1135, 0
      %v1148 = vsel %vm762, %v1136, 0
      %v1151 = vsel %vm762, %v1137, 0
      %1153 = vmatprep.subr.bf16.mxu0 0
      %1154 = vmatpush1.bf16.xpose.msra.mxu0 %v1142
      %1155 = vmatprep.subr.bf16.mxu0 0
      %1156 = vmatpush1.bf16.xpose.msra.mxu0 %v1145
      %1157 = vmatprep.subr.bf16.mxu0 0
      %1158 = vmatpush1.bf16.xpose.msra.mxu0 %v1148
      %1159 = vmatprep.subr.bf16.mxu0 0
      %1160 = vmatpush1.bf16.xpose.msra.mxu0 %v1151
      %1161 = vmatprep.subr.bf16.mxu0 0
      %1162 = vmatpush1.bf16.xpose.msra.mxu0 0
      %1163 = vmatprep.subr.bf16.mxu0 0
      %1164 = vmatpush1.bf16.xpose.msra.mxu0 0
      %1165 = vmatprep.subr.bf16.mxu0 0
      %1166 = vmatpush1.bf16.xpose.msra.mxu0 0
      %1167 = vmatprep.subr.bf16.mxu0 0
      %1168 = vmatpush1.bf16.xpose.msra.mxu0 0
      %1169 = vmatprep.subr.bf16.mxu0 0
      %1170 = vmatpush1.bf16.xpose.msra.mxu0 0
      %1171 = vmatprep.subr.bf16.mxu0 0
      %1172 = vmatpush1.bf16.xpose.msra.mxu0 0
      %1173 = vmatprep.subr.bf16.mxu0 0
      %1174 = vmatpush1.bf16.xpose.msra.mxu0 0
      %1175 = vmatprep.subr.bf16.mxu0 0
      %1176 = vmatpush1.bf16.xpose.msra.mxu0 0
      %1177 = vmatprep.subr.bf16.mxu0 0
      %1178 = vmatpush1.bf16.xpose.msra.mxu0 0
      %1179 = vmatprep.subr.bf16.mxu0 0
      %1180 = vmatpush1.bf16.xpose.msra.mxu0 0
      %1181 = vmatprep.subr.bf16.mxu0 0
      %1182 = vmatpush1.bf16.xpose.msra.mxu0 0
      %1183 = vmatprep.subr.bf16.mxu0 0
      %1184 = vmatpush1.bf16.xpose.msra.mxu0 0
      %1185 = vmatprep.mubr.bf16.mxu0 0
      %1186 = vmatmul.mubr.bf16.gmra.mrb[0].mxu0 %v1139
      %v1187 = vpop.f32.mrb[0].mxu0
      %v1188 = vadd.f32 0.0, %v1187
      %v1189 = vpop.f32.mrb[0].mxu0
      %v1190 = vpop.f32.mrb[0].mxu0
      %v1191 = vpop.f32.mrb[0].mxu0
      %1192 = vdwg.mxu0
      %v1193 = vmul.f32 %v1188, 0.35355338
      %v1194 = vadd.f32 %v1193, %v823
      %v1195 = vsel %vm826, %v1194, -inf
      %1196 = vmax.xlane.f32.xlu0 %v1195
      %v1197 = vpop.xlane.xlu0 %1196
      %v1198 = vsub.f32 %v1194, %v1197
      %v1199 = vmul.f32 %v1198, 1.442695
      %v1200 = vpow.pop %v1199
      %v1201 = vsel %vm826, %v1200, 0.0
      %1202 = vadd.xlane.f32.xlu0 %v1201
      %v1203 = vpop.xlane.xlu0 %1202
      %v1204 = vrcp.pop %v1203
      %v1205 = vmul.f32 %v1200, %v1204
      %v1206 = vpack.c.bf16 %v1205, %v1205
      %v1207 = vpack.c.bf16 %v1106, %v1103
      %v1208 = vpack.c.bf16 %v1114, %v1111
      %v1209 = vpack.c.bf16 %v1122, %v1119
      %v1210 = vpack.c.bf16 %v1130, %v1127
      %v1212 = vsel %vm826, %v1206, 0
      %1214 = vmatprep.subr.bf16.mxu0 0
      %1215 = vmatpush1.bf16.msra.mxu0 %v1207
      %1216 = vmatprep.subr.bf16.mxu0 0
      %1217 = vmatpush1.bf16.msra.mxu0 %v1208
      %1218 = vmatprep.subr.bf16.mxu0 0
      %1219 = vmatpush1.bf16.msra.mxu0 %v1209
      %1220 = vmatprep.subr.bf16.mxu0 0
      %1221 = vmatpush1.bf16.msra.mxu0 %v1210
      %1222 = vmatprep.subr.bf16.mxu0 0
      %1223 = vmatpush1.bf16.msra.mxu0 0
      %1224 = vmatprep.subr.bf16.mxu0 0
      %1225 = vmatpush1.bf16.msra.mxu0 0
      %1226 = vmatprep.subr.bf16.mxu0 0
      %1227 = vmatpush1.bf16.msra.mxu0 0
      %1228 = vmatprep.subr.bf16.mxu0 0
      %1229 = vmatpush1.bf16.msra.mxu0 0
      %1230 = vmatprep.subr.bf16.mxu0 0
      %1231 = vmatpush1.bf16.msra.mxu0 0
      %1232 = vmatprep.subr.bf16.mxu0 0
      %1233 = vmatpush1.bf16.msra.mxu0 0
      %1234 = vmatprep.subr.bf16.mxu0 0
      %1235 = vmatpush1.bf16.msra.mxu0 0
      %1236 = vmatprep.subr.bf16.mxu0 0
      %1237 = vmatpush1.bf16.msra.mxu0 0
      %1238 = vmatprep.subr.bf16.mxu0 0
      %1239 = vmatpush1.bf16.msra.mxu0 0
      %1240 = vmatprep.subr.bf16.mxu0 0
      %1241 = vmatpush1.bf16.msra.mxu0 0
      %1242 = vmatprep.subr.bf16.mxu0 0
      %1243 = vmatpush1.bf16.msra.mxu0 0
      %1244 = vmatprep.subr.bf16.mxu0 0
      %1245 = vmatpush1.bf16.msra.mxu0 0
      %1246 = vmatprep.mubr.bf16.mxu0 0
      %1247 = vmatmul.mubr.bf16.gmra.mrb[0].mxu0 %v1212
      %v1248 = vpop.f32.mrb[0].mxu0
      %v1249 = vadd.f32 0.0, %v1248
      %v1250 = vpop.f32.mrb[0].mxu0
      %v1251 = vpop.f32.mrb[0].mxu0
      %v1252 = vpop.f32.mrb[0].mxu0
      %1253 = vdwg.mxu0
      %v1254 = vpack.c.bf16 %v1249, %v1249
      %s1255 = scalar_lea.vmem %s9, 4
      %v1256 = vld [vmem:[%s1255] sm:$0xf]
      %v1258 = vsel %vm762, %v1254, 0
      %vm1260 = vcmask 1043456
      %v1262 = vsel %vm1260, %v1256, 0
      %1264 = vmatprep.subr.bf16.mxu0 0
      %1265 = vmatpush1.bf16.msra.mxu0 %v1262
      %1266 = vmatprep.subr.bf16.mxu0 0
      %1267 = vmatpush1.bf16.msra.mxu0 0
      %1268 = vmatprep.subr.bf16.mxu0 0
      %1269 = vmatpush1.bf16.msra.mxu0 0
      %1270 = vmatprep.subr.bf16.mxu0 0
      %1271 = vmatpush1.bf16.msra.mxu0 0
      %1272 = vmatprep.subr.bf16.mxu0 0
      %1273 = vmatpush1.bf16.msra.mxu0 0
      %1274 = vmatprep.subr.bf16.mxu0 0
      %1275 = vmatpush1.bf16.msra.mxu0 0
      %1276 = vmatprep.subr.bf16.mxu0 0
      %1277 = vmatpush1.bf16.msra.mxu0 0
      %1278 = vmatprep.subr.bf16.mxu0 0
      %1279 = vmatpush1.bf16.msra.mxu0 0
      %1280 = vmatprep.subr.bf16.mxu0 0
      %1281 = vmatpush1.bf16.msra.mxu0 0
      %1282 = vmatprep.subr.bf16.mxu0 0
      %1283 = vmatpush1.bf16.msra.mxu0 0
      %1284 = vmatprep.subr.bf16.mxu0 0
      %1285 = vmatpush1.bf16.msra.mxu0 0
      %1286 = vmatprep.subr.bf16.mxu0 0
      %1287 = vmatpush1.bf16.msra.mxu0 0
      %1288 = vmatprep.subr.bf16.mxu0 0
      %1289 = vmatpush1.bf16.msra.mxu0 0
      %1290 = vmatprep.subr.bf16.mxu0 0
      %1291 = vmatpush1.bf16.msra.mxu0 0
      %1292 = vmatprep.subr.bf16.mxu0 0
      %1293 = vmatpush1.bf16.msra.mxu0 0
      %1294 = vmatprep.subr.bf16.mxu0 0
      %1295 = vmatpush1.bf16.msra.mxu0 0
      %1296 = vmatprep.mubr.bf16.mxu0 0
      %1297 = vmatmul.mubr.bf16.gmra.mrb[0].mxu0 %v1258
      %v1298 = vpop.f32.mrb[0].mxu0
      %v1299 = vadd.f32 0.0, %v1298
      %v1300 = vpop.f32.mrb[0].mxu0
      %v1301 = vpop.f32.mrb[0].mxu0
      %v1302 = vpop.f32.mrb[0].mxu0
      %1303 = vdwg.mxu0
      %v1305 = vsel %vm762, %v886, 0
      %v1308 = vsel %vm1260, %v887, 0
      %1310 = vmatprep.subr.bf16.mxu0 0
      %1311 = vmatpush1.bf16.msra.mxu0 %v1308
      %1312 = vmatprep.subr.bf16.mxu0 0
      %1313 = vmatpush1.bf16.msra.mxu0 0
      %1314 = vmatprep.subr.bf16.mxu0 0
      %1315 = vmatpush1.bf16.msra.mxu0 0
      %1316 = vmatprep.subr.bf16.mxu0 0
      %1317 = vmatpush1.bf16.msra.mxu0 0
      %1318 = vmatprep.subr.bf16.mxu0 0
      %1319 = vmatpush1.bf16.msra.mxu0 0
      %1320 = vmatprep.subr.bf16.mxu0 0
      %1321 = vmatpush1.bf16.msra.mxu0 0
      %1322 = vmatprep.subr.bf16.mxu0 0
      %1323 = vmatpush1.bf16.msra.mxu0 0
      %1324 = vmatprep.subr.bf16.mxu0 0
      %1325 = vmatpush1.bf16.msra.mxu0 0
      %1326 = vmatprep.subr.bf16.mxu0 0
      %1327 = vmatpush1.bf16.msra.mxu0 0
      %1328 = vmatprep.subr.bf16.mxu0 0
      %1329 = vmatpush1.bf16.msra.mxu0 0
      %1330 = vmatprep.subr.bf16.mxu0 0
      %1331 = vmatpush1.bf16.msra.mxu0 0
      %1332 = vmatprep.subr.bf16.mxu0 0
      %1333 = vmatpush1.bf16.msra.mxu0 0
      %1334 = vmatprep.subr.bf16.mxu0 0
      %1335 = vmatpush1.bf16.msra.mxu0 0
      %1336 = vmatprep.subr.bf16.mxu0 0
      %1337 = vmatpush1.bf16.msra.mxu0 0
      %1338 = vmatprep.subr.bf16.mxu0 0
      %1339 = vmatpush1.bf16.msra.mxu0 0
      %1340 = vmatprep.subr.bf16.mxu0 0
      %1341 = vmatpush1.bf16.msra.mxu0 0
      %1342 = vmatprep.mubr.bf16.mxu0 0
      %1343 = vmatmul.mubr.bf16.gmra.mrb[0].mxu0 %v1305
      %v1344 = vpop.f32.mrb[0].mxu0
      %v1345 = vadd.f32 %v1299, %v1344
      %v1346 = vpop.f32.mrb[0].mxu0
      %v1347 = vpop.f32.mrb[0].mxu0
      %v1348 = vpop.f32.mrb[0].mxu0
      %1349 = vdwg.mxu0
      %s1350 = scalar_lea.vmem %s3, 32
      %v1351 = vld [vmem:[%s1350] sm:$0xf]
      %v1352 = vld [vmem:[%s1350 + $0x4] sm:$0xf]
      %v1353 = vld [vmem:[%s1350 + $0x8] sm:$0xf]
      %v1354 = vld [vmem:[%s1350 + $0xc] sm:$0xf]
      %s1355 = scalar_lea.vmem %s4, 2
      %v1356 = vld [vmem:[%s1355] sm:$0x1]
      %v1358 = vlaneseq
      %v1359 = vshrl.u32 %v1358, 7
      %v1360 = vsub.s32 0, %v1359
      %v1361 = vrot.slane %v1356, %v1360
      %v1367 = vunpack.c.l.b16 %v1351
      %v1368 = vunpack.c.l.b16 %v1352
      %v1369 = vunpack.c.l.b16 %v1353
      %v1370 = vunpack.c.l.b16 %v1354
      %v1371 = vpack.c.b16 %v1368, %v1367
      %v1372 = vpack.c.b16 %v1370, %v1369
      %1375 = vmatprep.subr.bf16.mxu0 0
      %1376 = vmatpush1.bf16.msra.mxu0 %v1371
      %1377 = vmatprep.subr.bf16.mxu0 0
      %1378 = vmatpush1.bf16.msra.mxu0 %v1372
      %1379 = vmatprep.subr.bf16.mxu0 0
      %1380 = vmatpush1.bf16.msra.mxu0 0
      %1381 = vmatprep.subr.bf16.mxu0 0
      %1382 = vmatpush1.bf16.msra.mxu0 0
      %1383 = vmatprep.subr.bf16.mxu0 0
      %1384 = vmatpush1.bf16.msra.mxu0 0
      %1385 = vmatprep.subr.bf16.mxu0 0
      %1386 = vmatpush1.bf16.msra.mxu0 0
      %1387 = vmatprep.subr.bf16.mxu0 0
      %1388 = vmatpush1.bf16.msra.mxu0 0
      %1389 = vmatprep.subr.bf16.mxu0 0
      %1390 = vmatpush1.bf16.msra.mxu0 0
      %1391 = vmatprep.subr.bf16.mxu0 0
      %1392 = vmatpush1.bf16.msra.mxu0 0
      %1393 = vmatprep.subr.bf16.mxu0 0
      %1394 = vmatpush1.bf16.msra.mxu0 0
      %1395 = vmatprep.subr.bf16.mxu0 0
      %1396 = vmatpush1.bf16.msra.mxu0 0
      %1397 = vmatprep.subr.bf16.mxu0 0
      %1398 = vmatpush1.bf16.msra.mxu0 0
      %1399 = vmatprep.subr.bf16.mxu0 0
      %1400 = vmatpush1.bf16.msra.mxu0 0
      %1401 = vmatprep.subr.bf16.mxu0 0
      %1402 = vmatpush1.bf16.msra.mxu0 0
      %1403 = vmatprep.subr.bf16.mxu0 0
      %1404 = vmatpush1.bf16.msra.mxu0 0
      %1405 = vmatprep.subr.bf16.mxu0 0
      %1406 = vmatpush1.bf16.msra.mxu0 0
      %1407 = vmatprep.mubr.bf16.mxu0 0
      %1408 = vmatmul.mubr.bf16.gmra.mrb[0].mxu0 %v507
      %v1409 = vpop.f32.mrb[0].mxu0
      %v1410 = vadd.f32 %v1361, %v1409
      %v1411 = vpop.f32.mrb[0].mxu0
      %v1412 = vpop.f32.mrb[0].mxu0
      %v1413 = vpop.f32.mrb[0].mxu0
      %1414 = vdwg.mxu0
      %s1415 = scalar_lea.vmem %s5, 32
      %v1416 = vld [vmem:[%s1415] sm:$0xf]
      %v1417 = vld [vmem:[%s1415 + $0x4] sm:$0xf]
      %v1418 = vld [vmem:[%s1415 + $0x8] sm:$0xf]
      %v1419 = vld [vmem:[%s1415 + $0xc] sm:$0xf]
      %s1420 = scalar_lea.vmem %s6, 2
      %v1421 = vld [vmem:[%s1420] sm:$0x1]
      %v1423 = vlaneseq
      %v1424 = vshrl.u32 %v1423, 7
      %v1425 = vsub.s32 0, %v1424
      %v1426 = vrot.slane %v1421, %v1425
      %v1432 = vunpack.c.l.b16 %v1416
      %v1433 = vunpack.c.l.b16 %v1417
      %v1434 = vunpack.c.l.b16 %v1418
      %v1435 = vunpack.c.l.b16 %v1419
      %v1436 = vpack.c.b16 %v1433, %v1432
      %v1437 = vpack.c.b16 %v1435, %v1434
      %1440 = vmatprep.subr.bf16.mxu0 0
      %1441 = vmatpush1.bf16.msra.mxu0 %v1436
      %1442 = vmatprep.subr.bf16.mxu0 0
      %1443 = vmatpush1.bf16.msra.mxu0 %v1437
      %1444 = vmatprep.subr.bf16.mxu0 0
      %1445 = vmatpush1.bf16.msra.mxu0 0
      %1446 = vmatprep.subr.bf16.mxu0 0
      %1447 = vmatpush1.bf16.msra.mxu0 0
      %1448 = vmatprep.subr.bf16.mxu0 0
      %1449 = vmatpush1.bf16.msra.mxu0 0
      %1450 = vmatprep.subr.bf16.mxu0 0
      %1451 = vmatpush1.bf16.msra.mxu0 0
      %1452 = vmatprep.subr.bf16.mxu0 0
      %1453 = vmatpush1.bf16.msra.mxu0 0
      %1454 = vmatprep.subr.bf16.mxu0 0
      %1455 = vmatpush1.bf16.msra.mxu0 0
      %1456 = vmatprep.subr.bf16.mxu0 0
      %1457 = vmatpush1.bf16.msra.mxu0 0
      %1458 = vmatprep.subr.bf16.mxu0 0
      %1459 = vmatpush1.bf16.msra.mxu0 0
      %1460 = vmatprep.subr.bf16.mxu0 0
      %1461 = vmatpush1.bf16.msra.mxu0 0
      %1462 = vmatprep.subr.bf16.mxu0 0
      %1463 = vmatpush1.bf16.msra.mxu0 0
      %1464 = vmatprep.subr.bf16.mxu0 0
      %1465 = vmatpush1.bf16.msra.mxu0 0
      %1466 = vmatprep.subr.bf16.mxu0 0
      %1467 = vmatpush1.bf16.msra.mxu0 0
      %1468 = vmatprep.subr.bf16.mxu0 0
      %1469 = vmatpush1.bf16.msra.mxu0 0
      %1470 = vmatprep.subr.bf16.mxu0 0
      %1471 = vmatpush1.bf16.msra.mxu0 0
      %1472 = vmatprep.mubr.bf16.mxu0 0
      %1473 = vmatmul.mubr.bf16.gmra.mrb[0].mxu0 %v593
      %v1474 = vpop.f32.mrb[0].mxu0
      %v1475 = vadd.f32 %v1426, %v1474
      %v1476 = vpop.f32.mrb[0].mxu0
      %v1477 = vpop.f32.mrb[0].mxu0
      %v1478 = vadd.f32 %v1426, %v1477
      %v1479 = vpop.f32.mrb[0].mxu0
      %1480 = vmatprep.mubr.bf16.mxu0 0
      %1481 = vmatmul.mubr.bf16.gmra.mrb[0].mxu0 %v596
      %v1482 = vpop.f32.mrb[0].mxu0
      %v1483 = vadd.f32 %v1426, %v1482
      %v1484 = vpop.f32.mrb[0].mxu0
      %v1485 = vpop.f32.mrb[0].mxu0
      %v1486 = vadd.f32 %v1426, %v1485
      %v1487 = vpop.f32.mrb[0].mxu0
      %1488 = vmatprep.mubr.bf16.mxu0 0
      %1489 = vmatmul.mubr.bf16.gmra.mrb[0].mxu0 %v599
      %v1490 = vpop.f32.mrb[0].mxu0
      %v1491 = vadd.f32 %v1426, %v1490
      %v1492 = vpop.f32.mrb[0].mxu0
      %v1493 = vpop.f32.mrb[0].mxu0
      %v1494 = vadd.f32 %v1426, %v1493
      %v1495 = vpop.f32.mrb[0].mxu0
      %1496 = vmatprep.mubr.bf16.mxu0 0
      %1497 = vmatmul.mubr.bf16.gmra.mrb[0].mxu0 %v602
      %v1498 = vpop.f32.mrb[0].mxu0
      %v1499 = vadd.f32 %v1426, %v1498
      %v1500 = vpop.f32.mrb[0].mxu0
      %v1501 = vpop.f32.mrb[0].mxu0
      %v1502 = vadd.f32 %v1426, %v1501
      %v1503 = vpop.f32.mrb[0].mxu0
      %1504 = vdwg.mxu0
      %s1505 = scalar_lea.vmem %s7, 32
      %v1506 = vld [vmem:[%s1505] sm:$0xf]
      %v1507 = vld [vmem:[%s1505 + $0x4] sm:$0xf]
      %v1508 = vld [vmem:[%s1505 + $0x8] sm:$0xf]
      %v1509 = vld [vmem:[%s1505 + $0xc] sm:$0xf]
      %s1510 = scalar_lea.vmem %s8, 2
      %v1511 = vld [vmem:[%s1510] sm:$0x1]
      %v1513 = vlaneseq
      %v1514 = vshrl.u32 %v1513, 7
      %v1515 = vsub.s32 0, %v1514
      %v1516 = vrot.slane %v1511, %v1515
      %v1522 = vunpack.c.l.b16 %v1506
      %v1523 = vunpack.c.l.b16 %v1507
      %v1524 = vunpack.c.l.b16 %v1508
      %v1525 = vunpack.c.l.b16 %v1509
      %v1526 = vpack.c.b16 %v1523, %v1522
      %v1527 = vpack.c.b16 %v1525, %v1524
      %1530 = vmatprep.subr.bf16.mxu0 0
      %1531 = vmatpush1.bf16.msra.mxu0 %v1526
      %1532 = vmatprep.subr.bf16.mxu0 0
      %1533 = vmatpush1.bf16.msra.mxu0 %v1527
      %1534 = vmatprep.subr.bf16.mxu0 0
      %1535 = vmatpush1.bf16.msra.mxu0 0
      %1536 = vmatprep.subr.bf16.mxu0 0
      %1537 = vmatpush1.bf16.msra.mxu0 0
      %1538 = vmatprep.subr.bf16.mxu0 0
      %1539 = vmatpush1.bf16.msra.mxu0 0
      %1540 = vmatprep.subr.bf16.mxu0 0
      %1541 = vmatpush1.bf16.msra.mxu0 0
      %1542 = vmatprep.subr.bf16.mxu0 0
      %1543 = vmatpush1.bf16.msra.mxu0 0
      %1544 = vmatprep.subr.bf16.mxu0 0
      %1545 = vmatpush1.bf16.msra.mxu0 0
      %1546 = vmatprep.subr.bf16.mxu0 0
      %1547 = vmatpush1.bf16.msra.mxu0 0
      %1548 = vmatprep.subr.bf16.mxu0 0
      %1549 = vmatpush1.bf16.msra.mxu0 0
      %1550 = vmatprep.subr.bf16.mxu0 0
      %1551 = vmatpush1.bf16.msra.mxu0 0
      %1552 = vmatprep.subr.bf16.mxu0 0
      %1553 = vmatpush1.bf16.msra.mxu0 0
      %1554 = vmatprep.subr.bf16.mxu0 0
      %1555 = vmatpush1.bf16.msra.mxu0 0
      %1556 = vmatprep.subr.bf16.mxu0 0
      %1557 = vmatpush1.bf16.msra.mxu0 0
      %1558 = vmatprep.subr.bf16.mxu0 0
      %1559 = vmatpush1.bf16.msra.mxu0 0
      %1560 = vmatprep.subr.bf16.mxu0 0
      %1561 = vmatpush1.bf16.msra.mxu0 0
      %1562 = vmatprep.mubr.bf16.mxu0 0
      %1563 = vmatmul.mubr.bf16.gmra.mrb[0].mxu0 %v593
      %v1564 = vpop.f32.mrb[0].mxu0
      %v1565 = vadd.f32 %v1516, %v1564
      %v1566 = vpop.f32.mrb[0].mxu0
      %v1567 = vpop.f32.mrb[0].mxu0
      %v1568 = vadd.f32 %v1516, %v1567
      %v1569 = vpop.f32.mrb[0].mxu0
      %1570 = vmatprep.mubr.bf16.mxu0 0
      %1571 = vmatmul.mubr.bf16.gmra.mrb[0].mxu0 %v596
      %v1572 = vpop.f32.mrb[0].mxu0
      %v1573 = vadd.f32 %v1516, %v1572
      %v1574 = vpop.f32.mrb[0].mxu0
      %v1575 = vpop.f32.mrb[0].mxu0
      %v1576 = vadd.f32 %v1516, %v1575
      %v1577 = vpop.f32.mrb[0].mxu0
      %1578 = vmatprep.mubr.bf16.mxu0 0
      %1579 = vmatmul.mubr.bf16.gmra.mrb[0].mxu0 %v599
      %v1580 = vpop.f32.mrb[0].mxu0
      %v1581 = vadd.f32 %v1516, %v1580
      %v1582 = vpop.f32.mrb[0].mxu0
      %v1583 = vpop.f32.mrb[0].mxu0
      %v1584 = vadd.f32 %v1516, %v1583
      %v1585 = vpop.f32.mrb[0].mxu0
      %1586 = vmatprep.mubr.bf16.mxu0 0
      %1587 = vmatmul.mubr.bf16.gmra.mrb[0].mxu0 %v602
      %v1588 = vpop.f32.mrb[0].mxu0
      %v1589 = vadd.f32 %v1516, %v1588
      %v1590 = vpop.f32.mrb[0].mxu0
      %v1591 = vpop.f32.mrb[0].mxu0
      %v1592 = vadd.f32 %v1516, %v1591
      %v1593 = vpop.f32.mrb[0].mxu0
      %1594 = vdwg.mxu0
      %v1595 = vpack.c.bf16 %v1410, %v1410
      %v1596 = vpack.c.bf16 %v1478, %v1475
      %v1597 = vpack.c.bf16 %v1486, %v1483
      %v1598 = vpack.c.bf16 %v1494, %v1491
      %v1599 = vpack.c.bf16 %v1502, %v1499
      %v1601 = vsel %vm762, %v1595, 0
      %v1604 = vsel %vm762, %v1596, 0
      %v1607 = vsel %vm762, %v1597, 0
      %v1610 = vsel %vm762, %v1598, 0
      %v1613 = vsel %vm762, %v1599, 0
      %1615 = vmatprep.subr.bf16.mxu0 0
      %1616 = vmatpush1.bf16.xpose.msra.mxu0 %v1604
      %1617 = vmatprep.subr.bf16.mxu0 0
      %1618 = vmatpush1.bf16.xpose.msra.mxu0 %v1607
      %1619 = vmatprep.subr.bf16.mxu0 0
      %1620 = vmatpush1.bf16.xpose.msra.mxu0 %v1610
      %1621 = vmatprep.subr.bf16.mxu0 0
      %1622 = vmatpush1.bf16.xpose.msra.mxu0 %v1613
      %1623 = vmatprep.subr.bf16.mxu0 0
      %1624 = vmatpush1.bf16.xpose.msra.mxu0 0
      %1625 = vmatprep.subr.bf16.mxu0 0
      %1626 = vmatpush1.bf16.xpose.msra.mxu0 0
      %1627 = vmatprep.subr.bf16.mxu0 0
      %1628 = vmatpush1.bf16.xpose.msra.mxu0 0
      %1629 = vmatprep.subr.bf16.mxu0 0
      %1630 = vmatpush1.bf16.xpose.msra.mxu0 0
      %1631 = vmatprep.subr.bf16.mxu0 0
      %1632 = vmatpush1.bf16.xpose.msra.mxu0 0
      %1633 = vmatprep.subr.bf16.mxu0 0
      %1634 = vmatpush1.bf16.xpose.msra.mxu0 0
      %1635 = vmatprep.subr.bf16.mxu0 0
      %1636 = vmatpush1.bf16.xpose.msra.mxu0 0
      %1637 = vmatprep.subr.bf16.mxu0 0
      %1638 = vmatpush1.bf16.xpose.msra.mxu0 0
      %1639 = vmatprep.subr.bf16.mxu0 0
      %1640 = vmatpush1.bf16.xpose.msra.mxu0 0
      %1641 = vmatprep.subr.bf16.mxu0 0
      %1642 = vmatpush1.bf16.xpose.msra.mxu0 0
      %1643 = vmatprep.subr.bf16.mxu0 0
      %1644 = vmatpush1.bf16.xpose.msra.mxu0 0
      %1645 = vmatprep.subr.bf16.mxu0 0
      %1646 = vmatpush1.bf16.xpose.msra.mxu0 0
      %1647 = vmatprep.mubr.bf16.mxu0 0
      %1648 = vmatmul.mubr.bf16.gmra.mrb[0].mxu0 %v1601
      %v1649 = vpop.f32.mrb[0].mxu0
      %v1650 = vadd.f32 0.0, %v1649
      %v1651 = vpop.f32.mrb[0].mxu0
      %v1652 = vpop.f32.mrb[0].mxu0
      %v1653 = vpop.f32.mrb[0].mxu0
      %1654 = vdwg.mxu0
      %v1655 = vmul.f32 %v1650, 0.35355338
      %v1656 = vadd.f32 %v1655, %v823
      %v1657 = vsel %vm826, %v1656, -inf
      %1658 = vmax.xlane.f32.xlu0 %v1657
      %v1659 = vpop.xlane.xlu0 %1658
      %v1660 = vsub.f32 %v1656, %v1659
      %v1661 = vmul.f32 %v1660, 1.442695
      %v1662 = vpow.pop %v1661
      %v1663 = vsel %vm826, %v1662, 0.0
      %1664 = vadd.xlane.f32.xlu0 %v1663
      %v1665 = vpop.xlane.xlu0 %1664
      %v1666 = vrcp.pop %v1665
      %v1667 = vmul.f32 %v1662, %v1666
      %v1668 = vpack.c.bf16 %v1667, %v1667
      %v1669 = vpack.c.bf16 %v1568, %v1565
      %v1670 = vpack.c.bf16 %v1576, %v1573
      %v1671 = vpack.c.bf16 %v1584, %v1581
      %v1672 = vpack.c.bf16 %v1592, %v1589
      %v1674 = vsel %vm826, %v1668, 0
      %1676 = vmatprep.subr.bf16.mxu0 0
      %1677 = vmatpush1.bf16.msra.mxu0 %v1669
      %1678 = vmatprep.subr.bf16.mxu0 0
      %1679 = vmatpush1.bf16.msra.mxu0 %v1670
      %1680 = vmatprep.subr.bf16.mxu0 0
      %1681 = vmatpush1.bf16.msra.mxu0 %v1671
      %1682 = vmatprep.subr.bf16.mxu0 0
      %1683 = vmatpush1.bf16.msra.mxu0 %v1672
      %1684 = vmatprep.subr.bf16.mxu0 0
      %1685 = vmatpush1.bf16.msra.mxu0 0
      %1686 = vmatprep.subr.bf16.mxu0 0
      %1687 = vmatpush1.bf16.msra.mxu0 0
      %1688 = vmatprep.subr.bf16.mxu0 0
      %1689 = vmatpush1.bf16.msra.mxu0 0
      %1690 = vmatprep.subr.bf16.mxu0 0
      %1691 = vmatpush1.bf16.msra.mxu0 0
      %1692 = vmatprep.subr.bf16.mxu0 0
      %1693 = vmatpush1.bf16.msra.mxu0 0
      %1694 = vmatprep.subr.bf16.mxu0 0
      %1695 = vmatpush1.bf16.msra.mxu0 0
      %1696 = vmatprep.subr.bf16.mxu0 0
      %1697 = vmatpush1.bf16.msra.mxu0 0
      %1698 = vmatprep.subr.bf16.mxu0 0
      %1699 = vmatpush1.bf16.msra.mxu0 0
      %1700 = vmatprep.subr.bf16.mxu0 0
      %1701 = vmatpush1.bf16.msra.mxu0 0
      %1702 = vmatprep.subr.bf16.mxu0 0
      %1703 = vmatpush1.bf16.msra.mxu0 0
      %1704 = vmatprep.subr.bf16.mxu0 0
      %1705 = vmatpush1.bf16.msra.mxu0 0
      %1706 = vmatprep.subr.bf16.mxu0 0
      %1707 = vmatpush1.bf16.msra.mxu0 0
      %1708 = vmatprep.mubr.bf16.mxu0 0
      %1709 = vmatmul.mubr.bf16.gmra.mrb[0].mxu0 %v1674
      %v1710 = vpop.f32.mrb[0].mxu0
      %v1711 = vadd.f32 0.0, %v1710
      %v1712 = vpop.f32.mrb[0].mxu0
      %v1713 = vpop.f32.mrb[0].mxu0
      %v1714 = vpop.f32.mrb[0].mxu0
      %1715 = vdwg.mxu0
      %v1716 = vpack.c.bf16 %v1711, %v1711
      %s1717 = scalar_lea.vmem %s9, 8
      %v1718 = vld [vmem:[%s1717] sm:$0xf]
      %v1720 = vsel %vm762, %v1716, 0
      %v1723 = vsel %vm1260, %v1718, 0
      %1725 = vmatprep.subr.bf16.mxu0 0
      %1726 = vmatpush1.bf16.msra.mxu0 %v1723
      %1727 = vmatprep.subr.bf16.mxu0 0
      %1728 = vmatpush1.bf16.msra.mxu0 0
      %1729 = vmatprep.subr.bf16.mxu0 0
      %1730 = vmatpush1.bf16.msra.mxu0 0
      %1731 = vmatprep.subr.bf16.mxu0 0
      %1732 = vmatpush1.bf16.msra.mxu0 0
      %1733 = vmatprep.subr.bf16.mxu0 0
      %1734 = vmatpush1.bf16.msra.mxu0 0
      %1735 = vmatprep.subr.bf16.mxu0 0
      %1736 = vmatpush1.bf16.msra.mxu0 0
      %1737 = vmatprep.subr.bf16.mxu0 0
      %1738 = vmatpush1.bf16.msra.mxu0 0
      %1739 = vmatprep.subr.bf16.mxu0 0
      %1740 = vmatpush1.bf16.msra.mxu0 0
      %1741 = vmatprep.subr.bf16.mxu0 0
      %1742 = vmatpush1.bf16.msra.mxu0 0
      %1743 = vmatprep.subr.bf16.mxu0 0
      %1744 = vmatpush1.bf16.msra.mxu0 0
      %1745 = vmatprep.subr.bf16.mxu0 0
      %1746 = vmatpush1.bf16.msra.mxu0 0
      %1747 = vmatprep.subr.bf16.mxu0 0
      %1748 = vmatpush1.bf16.msra.mxu0 0
      %1749 = vmatprep.subr.bf16.mxu0 0
      %1750 = vmatpush1.bf16.msra.mxu0 0
      %1751 = vmatprep.subr.bf16.mxu0 0
      %1752 = vmatpush1.bf16.msra.mxu0 0
      %1753 = vmatprep.subr.bf16.mxu0 0
      %1754 = vmatpush1.bf16.msra.mxu0 0
      %1755 = vmatprep.subr.bf16.mxu0 0
      %1756 = vmatpush1.bf16.msra.mxu0 0
      %1757 = vmatprep.mubr.bf16.mxu0 0
      %1758 = vmatmul.mubr.bf16.gmra.mrb[0].mxu0 %v1720
      %v1759 = vpop.f32.mrb[0].mxu0
      %v1760 = vadd.f32 0.0, %v1759
      %v1761 = vpop.f32.mrb[0].mxu0
      %v1762 = vpop.f32.mrb[0].mxu0
      %v1763 = vpop.f32.mrb[0].mxu0
      %1764 = vdwg.mxu0
      %v1765 = vadd.f32 %v1345, %v1760
      %s1766 = scalar_lea.vmem %s3, 48
      %v1767 = vld [vmem:[%s1766] sm:$0xf]
      %v1768 = vld [vmem:[%s1766 + $0x4] sm:$0xf]
      %v1769 = vld [vmem:[%s1766 + $0x8] sm:$0xf]
      %v1770 = vld [vmem:[%s1766 + $0xc] sm:$0xf]
      %s1771 = scalar_lea.vmem %s4, 3
      %v1772 = vld [vmem:[%s1771] sm:$0x1]
      %v1774 = vlaneseq
      %v1775 = vshrl.u32 %v1774, 7
      %v1776 = vsub.s32 0, %v1775
      %v1777 = vrot.slane %v1772, %v1776
      %v1783 = vunpack.c.l.b16 %v1767
      %v1784 = vunpack.c.l.b16 %v1768
      %v1785 = vunpack.c.l.b16 %v1769
      %v1786 = vunpack.c.l.b16 %v1770
      %v1787 = vpack.c.b16 %v1784, %v1783
      %v1788 = vpack.c.b16 %v1786, %v1785
      %1791 = vmatprep.subr.bf16.mxu0 0
      %1792 = vmatpush1.bf16.msra.mxu0 %v1787
      %1793 = vmatprep.subr.bf16.mxu0 0
      %1794 = vmatpush1.bf16.msra.mxu0 %v1788
      %1795 = vmatprep.subr.bf16.mxu0 0
      %1796 = vmatpush1.bf16.msra.mxu0 0
      %1797 = vmatprep.subr.bf16.mxu0 0
      %1798 = vmatpush1.bf16.msra.mxu0 0
      %1799 = vmatprep.subr.bf16.mxu0 0
      %1800 = vmatpush1.bf16.msra.mxu0 0
      %1801 = vmatprep.subr.bf16.mxu0 0
      %1802 = vmatpush1.bf16.msra.mxu0 0
      %1803 = vmatprep.subr.bf16.mxu0 0
      %1804 = vmatpush1.bf16.msra.mxu0 0
      %1805 = vmatprep.subr.bf16.mxu0 0
      %1806 = vmatpush1.bf16.msra.mxu0 0
      %1807 = vmatprep.subr.bf16.mxu0 0
      %1808 = vmatpush1.bf16.msra.mxu0 0
      %1809 = vmatprep.subr.bf16.mxu0 0
      %1810 = vmatpush1.bf16.msra.mxu0 0
      %1811 = vmatprep.subr.bf16.mxu0 0
      %1812 = vmatpush1.bf16.msra.mxu0 0
      %1813 = vmatprep.subr.bf16.mxu0 0
      %1814 = vmatpush1.bf16.msra.mxu0 0
      %1815 = vmatprep.subr.bf16.mxu0 0
      %1816 = vmatpush1.bf16.msra.mxu0 0
      %1817 = vmatprep.subr.bf16.mxu0 0
      %1818 = vmatpush1.bf16.msra.mxu0 0
      %1819 = vmatprep.subr.bf16.mxu0 0
      %1820 = vmatpush1.bf16.msra.mxu0 0
      %1821 = vmatprep.subr.bf16.mxu0 0
      %1822 = vmatpush1.bf16.msra.mxu0 0
      %1823 = vmatprep.mubr.bf16.mxu0 0
      %1824 = vmatmul.mubr.bf16.gmra.mrb[0].mxu0 %v507
      %v1825 = vpop.f32.mrb[0].mxu0
      %v1826 = vadd.f32 %v1777, %v1825
      %v1827 = vpop.f32.mrb[0].mxu0
      %v1828 = vpop.f32.mrb[0].mxu0
      %v1829 = vpop.f32.mrb[0].mxu0
      %1830 = vdwg.mxu0
      %s1831 = scalar_lea.vmem %s5, 48
      %v1832 = vld [vmem:[%s1831] sm:$0xf]
      %v1833 = vld [vmem:[%s1831 + $0x4] sm:$0xf]
      %v1834 = vld [vmem:[%s1831 + $0x8] sm:$0xf]
      %v1835 = vld [vmem:[%s1831 + $0xc] sm:$0xf]
      %s1836 = scalar_lea.vmem %s6, 3
      %v1837 = vld [vmem:[%s1836] sm:$0x1]
      %v1839 = vlaneseq
      %v1840 = vshrl.u32 %v1839, 7
      %v1841 = vsub.s32 0, %v1840
      %v1842 = vrot.slane %v1837, %v1841
      %v1848 = vunpack.c.l.b16 %v1832
      %v1849 = vunpack.c.l.b16 %v1833
      %v1850 = vunpack.c.l.b16 %v1834
      %v1851 = vunpack.c.l.b16 %v1835
      %v1852 = vpack.c.b16 %v1849, %v1848
      %v1853 = vpack.c.b16 %v1851, %v1850
      %1856 = vmatprep.subr.bf16.mxu0 0
      %1857 = vmatpush1.bf16.msra.mxu0 %v1852
      %1858 = vmatprep.subr.bf16.mxu0 0
      %1859 = vmatpush1.bf16.msra.mxu0 %v1853
      %1860 = vmatprep.subr.bf16.mxu0 0
      %1861 = vmatpush1.bf16.msra.mxu0 0
      %1862 = vmatprep.subr.bf16.mxu0 0
      %1863 = vmatpush1.bf16.msra.mxu0 0
      %1864 = vmatprep.subr.bf16.mxu0 0
      %1865 = vmatpush1.bf16.msra.mxu0 0
      %1866 = vmatprep.subr.bf16.mxu0 0
      %1867 = vmatpush1.bf16.msra.mxu0 0
      %1868 = vmatprep.subr.bf16.mxu0 0
      %1869 = vmatpush1.bf16.msra.mxu0 0
      %1870 = vmatprep.subr.bf16.mxu0 0
      %1871 = vmatpush1.bf16.msra.mxu0 0
      %1872 = vmatprep.subr.bf16.mxu0 0
      %1873 = vmatpush1.bf16.msra.mxu0 0
      %1874 = vmatprep.subr.bf16.mxu0 0
      %1875 = vmatpush1.bf16.msra.mxu0 0
      %1876 = vmatprep.subr.bf16.mxu0 0
      %1877 = vmatpush1.bf16.msra.mxu0 0
      %1878 = vmatprep.subr.bf16.mxu0 0
      %1879 = vmatpush1.bf16.msra.mxu0 0
      %1880 = vmatprep.subr.bf16.mxu0 0
      %1881 = vmatpush1.bf16.msra.mxu0 0
      %1882 = vmatprep.subr.bf16.mxu0 0
      %1883 = vmatpush1.bf16.msra.mxu0 0
      %1884 = vmatprep.subr.bf16.mxu0 0
      %1885 = vmatpush1.bf16.msra.mxu0 0
      %1886 = vmatprep.subr.bf16.mxu0 0
      %1887 = vmatpush1.bf16.msra.mxu0 0
      %1888 = vmatprep.mubr.bf16.mxu0 0
      %1889 = vmatmul.mubr.bf16.gmra.mrb[0].mxu0 %v593
      %v1890 = vpop.f32.mrb[0].mxu0
      %v1891 = vadd.f32 %v1842, %v1890
      %v1892 = vpop.f32.mrb[0].mxu0
      %v1893 = vpop.f32.mrb[0].mxu0
      %v1894 = vadd.f32 %v1842, %v1893
      %v1895 = vpop.f32.mrb[0].mxu0
      %1896 = vmatprep.mubr.bf16.mxu0 0
      %1897 = vmatmul.mubr.bf16.gmra.mrb[0].mxu0 %v596
      %v1898 = vpop.f32.mrb[0].mxu0
      %v1899 = vadd.f32 %v1842, %v1898
      %v1900 = vpop.f32.mrb[0].mxu0
      %v1901 = vpop.f32.mrb[0].mxu0
      %v1902 = vadd.f32 %v1842, %v1901
      %v1903 = vpop.f32.mrb[0].mxu0
      %1904 = vmatprep.mubr.bf16.mxu0 0
      %1905 = vmatmul.mubr.bf16.gmra.mrb[0].mxu0 %v599
      %v1906 = vpop.f32.mrb[0].mxu0
      %v1907 = vadd.f32 %v1842, %v1906
      %v1908 = vpop.f32.mrb[0].mxu0
      %v1909 = vpop.f32.mrb[0].mxu0
      %v1910 = vadd.f32 %v1842, %v1909
      %v1911 = vpop.f32.mrb[0].mxu0
      %1912 = vmatprep.mubr.bf16.mxu0 0
      %1913 = vmatmul.mubr.bf16.gmra.mrb[0].mxu0 %v602
      %v1914 = vpop.f32.mrb[0].mxu0
      %v1915 = vadd.f32 %v1842, %v1914
      %v1916 = vpop.f32.mrb[0].mxu0
      %v1917 = vpop.f32.mrb[0].mxu0
      %v1918 = vadd.f32 %v1842, %v1917
      %v1919 = vpop.f32.mrb[0].mxu0
      %1920 = vdwg.mxu0
      %s1921 = scalar_lea.vmem %s7, 48
      %v1922 = vld [vmem:[%s1921] sm:$0xf]
      %v1923 = vld [vmem:[%s1921 + $0x4] sm:$0xf]
      %v1924 = vld [vmem:[%s1921 + $0x8] sm:$0xf]
      %v1925 = vld [vmem:[%s1921 + $0xc] sm:$0xf]
      %s1926 = scalar_lea.vmem %s8, 3
      %v1927 = vld [vmem:[%s1926] sm:$0x1]
      %v1929 = vlaneseq
      %v1930 = vshrl.u32 %v1929, 7
      %v1931 = vsub.s32 0, %v1930
      %v1932 = vrot.slane %v1927, %v1931
      %v1938 = vunpack.c.l.b16 %v1922
      %v1939 = vunpack.c.l.b16 %v1923
      %v1940 = vunpack.c.l.b16 %v1924
      %v1941 = vunpack.c.l.b16 %v1925
      %v1942 = vpack.c.b16 %v1939, %v1938
      %v1943 = vpack.c.b16 %v1941, %v1940
      %1946 = vmatprep.subr.bf16.mxu0 0
      %1947 = vmatpush1.bf16.msra.mxu0 %v1942
      %1948 = vmatprep.subr.bf16.mxu0 0
      %1949 = vmatpush1.bf16.msra.mxu0 %v1943
      %1950 = vmatprep.subr.bf16.mxu0 0
      %1951 = vmatpush1.bf16.msra.mxu0 0
      %1952 = vmatprep.subr.bf16.mxu0 0
      %1953 = vmatpush1.bf16.msra.mxu0 0
      %1954 = vmatprep.subr.bf16.mxu0 0
      %1955 = vmatpush1.bf16.msra.mxu0 0
      %1956 = vmatprep.subr.bf16.mxu0 0
      %1957 = vmatpush1.bf16.msra.mxu0 0
      %1958 = vmatprep.subr.bf16.mxu0 0
      %1959 = vmatpush1.bf16.msra.mxu0 0
      %1960 = vmatprep.subr.bf16.mxu0 0
      %1961 = vmatpush1.bf16.msra.mxu0 0
      %1962 = vmatprep.subr.bf16.mxu0 0
      %1963 = vmatpush1.bf16.msra.mxu0 0
      %1964 = vmatprep.subr.bf16.mxu0 0
      %1965 = vmatpush1.bf16.msra.mxu0 0
      %1966 = vmatprep.subr.bf16.mxu0 0
      %1967 = vmatpush1.bf16.msra.mxu0 0
      %1968 = vmatprep.subr.bf16.mxu0 0
      %1969 = vmatpush1.bf16.msra.mxu0 0
      %1970 = vmatprep.subr.bf16.mxu0 0
      %1971 = vmatpush1.bf16.msra.mxu0 0
      %1972 = vmatprep.subr.bf16.mxu0 0
      %1973 = vmatpush1.bf16.msra.mxu0 0
      %1974 = vmatprep.subr.bf16.mxu0 0
      %1975 = vmatpush1.bf16.msra.mxu0 0
      %1976 = vmatprep.subr.bf16.mxu0 0
      %1977 = vmatpush1.bf16.msra.mxu0 0
      %1978 = vmatprep.mubr.bf16.mxu0 0
      %1979 = vmatmul.mubr.bf16.gmra.mrb[0].mxu0 %v593
      %v1980 = vpop.f32.mrb[0].mxu0
      %v1981 = vadd.f32 %v1932, %v1980
      %v1982 = vpop.f32.mrb[0].mxu0
      %v1983 = vpop.f32.mrb[0].mxu0
      %v1984 = vadd.f32 %v1932, %v1983
      %v1985 = vpop.f32.mrb[0].mxu0
      %1986 = vmatprep.mubr.bf16.mxu0 0
      %1987 = vmatmul.mubr.bf16.gmra.mrb[0].mxu0 %v596
      %v1988 = vpop.f32.mrb[0].mxu0
      %v1989 = vadd.f32 %v1932, %v1988
      %v1990 = vpop.f32.mrb[0].mxu0
      %v1991 = vpop.f32.mrb[0].mxu0
      %v1992 = vadd.f32 %v1932, %v1991
      %v1993 = vpop.f32.mrb[0].mxu0
      %1994 = vmatprep.mubr.bf16.mxu0 0
      %1995 = vmatmul.mubr.bf16.gmra.mrb[0].mxu0 %v599
      %v1996 = vpop.f32.mrb[0].mxu0
      %v1997 = vadd.f32 %v1932, %v1996
      %v1998 = vpop.f32.mrb[0].mxu0
      %v1999 = vpop.f32.mrb[0].mxu0
      %v2000 = vadd.f32 %v1932, %v1999
      %v2001 = vpop.f32.mrb[0].mxu0
      %2002 = vmatprep.mubr.bf16.mxu0 0
      %2003 = vmatmul.mubr.bf16.gmra.mrb[0].mxu0 %v602
      %v2004 = vpop.f32.mrb[0].mxu0
      %v2005 = vadd.f32 %v1932, %v2004
      %v2006 = vpop.f32.mrb[0].mxu0
      %v2007 = vpop.f32.mrb[0].mxu0
      %v2008 = vadd.f32 %v1932, %v2007
      %v2009 = vpop.f32.mrb[0].mxu0
      %2010 = vdwg.mxu0
      %v2011 = vpack.c.bf16 %v1826, %v1826
      %v2012 = vpack.c.bf16 %v1894, %v1891
      %v2013 = vpack.c.bf16 %v1902, %v1899
      %v2014 = vpack.c.bf16 %v1910, %v1907
      %v2015 = vpack.c.bf16 %v1918, %v1915
      %v2017 = vsel %vm762, %v2011, 0
      %v2020 = vsel %vm762, %v2012, 0
      %v2023 = vsel %vm762, %v2013, 0
      %v2026 = vsel %vm762, %v2014, 0
      %v2029 = vsel %vm762, %v2015, 0
      %2031 = vmatprep.subr.bf16.mxu0 0
      %2032 = vmatpush1.bf16.xpose.msra.mxu0 %v2020
      %2033 = vmatprep.subr.bf16.mxu0 0
      %2034 = vmatpush1.bf16.xpose.msra.mxu0 %v2023
      %2035 = vmatprep.subr.bf16.mxu0 0
      %2036 = vmatpush1.bf16.xpose.msra.mxu0 %v2026
      %2037 = vmatprep.subr.bf16.mxu0 0
      %2038 = vmatpush1.bf16.xpose.msra.mxu0 %v2029
      %2039 = vmatprep.subr.bf16.mxu0 0
      %2040 = vmatpush1.bf16.xpose.msra.mxu0 0
      %2041 = vmatprep.subr.bf16.mxu0 0
      %2042 = vmatpush1.bf16.xpose.msra.mxu0 0
      %2043 = vmatprep.subr.bf16.mxu0 0
      %2044 = vmatpush1.bf16.xpose.msra.mxu0 0
      %2045 = vmatprep.subr.bf16.mxu0 0
      %2046 = vmatpush1.bf16.xpose.msra.mxu0 0
      %2047 = vmatprep.subr.bf16.mxu0 0
      %2048 = vmatpush1.bf16.xpose.msra.mxu0 0
      %2049 = vmatprep.subr.bf16.mxu0 0
      %2050 = vmatpush1.bf16.xpose.msra.mxu0 0
      %2051 = vmatprep.subr.bf16.mxu0 0
      %2052 = vmatpush1.bf16.xpose.msra.mxu0 0
      %2053 = vmatprep.subr.bf16.mxu0 0
      %2054 = vmatpush1.bf16.xpose.msra.mxu0 0
      %2055 = vmatprep.subr.bf16.mxu0 0
      %2056 = vmatpush1.bf16.xpose.msra.mxu0 0
      %2057 = vmatprep.subr.bf16.mxu0 0
      %2058 = vmatpush1.bf16.xpose.msra.mxu0 0
      %2059 = vmatprep.subr.bf16.mxu0 0
      %2060 = vmatpush1.bf16.xpose.msra.mxu0 0
      %2061 = vmatprep.subr.bf16.mxu0 0
      %2062 = vmatpush1.bf16.xpose.msra.mxu0 0
      %2063 = vmatprep.mubr.bf16.mxu0 0
      %2064 = vmatmul.mubr.bf16.gmra.mrb[0].mxu0 %v2017
      %v2065 = vpop.f32.mrb[0].mxu0
      %v2066 = vadd.f32 0.0, %v2065
      %v2067 = vpop.f32.mrb[0].mxu0
      %v2068 = vpop.f32.mrb[0].mxu0
      %v2069 = vpop.f32.mrb[0].mxu0
      %2070 = vdwg.mxu0
      %v2071 = vmul.f32 %v2066, 0.35355338
      %v2072 = vadd.f32 %v2071, %v823
      %v2073 = vsel %vm826, %v2072, -inf
      %2074 = vmax.xlane.f32.xlu0 %v2073
      %v2075 = vpop.xlane.xlu0 %2074
      %v2076 = vsub.f32 %v2072, %v2075
      %v2077 = vmul.f32 %v2076, 1.442695
      %v2078 = vpow.pop %v2077
      %v2079 = vsel %vm826, %v2078, 0.0
      %2080 = vadd.xlane.f32.xlu0 %v2079
      %v2081 = vpop.xlane.xlu0 %2080
      %v2082 = vrcp.pop %v2081
      %v2083 = vmul.f32 %v2078, %v2082
      %v2084 = vpack.c.bf16 %v2083, %v2083
      %v2085 = vpack.c.bf16 %v1984, %v1981
      %v2086 = vpack.c.bf16 %v1992, %v1989
      %v2087 = vpack.c.bf16 %v2000, %v1997
      %v2088 = vpack.c.bf16 %v2008, %v2005
      %v2090 = vsel %vm826, %v2084, 0
      %2092 = vmatprep.subr.bf16.mxu0 0
      %2093 = vmatpush1.bf16.msra.mxu0 %v2085
      %2094 = vmatprep.subr.bf16.mxu0 0
      %2095 = vmatpush1.bf16.msra.mxu0 %v2086
      %2096 = vmatprep.subr.bf16.mxu0 0
      %2097 = vmatpush1.bf16.msra.mxu0 %v2087
      %2098 = vmatprep.subr.bf16.mxu0 0
      %2099 = vmatpush1.bf16.msra.mxu0 %v2088
      %2100 = vmatprep.subr.bf16.mxu0 0
      %2101 = vmatpush1.bf16.msra.mxu0 0
      %2102 = vmatprep.subr.bf16.mxu0 0
      %2103 = vmatpush1.bf16.msra.mxu0 0
      %2104 = vmatprep.subr.bf16.mxu0 0
      %2105 = vmatpush1.bf16.msra.mxu0 0
      %2106 = vmatprep.subr.bf16.mxu0 0
      %2107 = vmatpush1.bf16.msra.mxu0 0
      %2108 = vmatprep.subr.bf16.mxu0 0
      %2109 = vmatpush1.bf16.msra.mxu0 0
      %2110 = vmatprep.subr.bf16.mxu0 0
      %2111 = vmatpush1.bf16.msra.mxu0 0
      %2112 = vmatprep.subr.bf16.mxu0 0
      %2113 = vmatpush1.bf16.msra.mxu0 0
      %2114 = vmatprep.subr.bf16.mxu0 0
      %2115 = vmatpush1.bf16.msra.mxu0 0
      %2116 = vmatprep.subr.bf16.mxu0 0
      %2117 = vmatpush1.bf16.msra.mxu0 0
      %2118 = vmatprep.subr.bf16.mxu0 0
      %2119 = vmatpush1.bf16.msra.mxu0 0
      %2120 = vmatprep.subr.bf16.mxu0 0
      %2121 = vmatpush1.bf16.msra.mxu0 0
      %2122 = vmatprep.subr.bf16.mxu0 0
      %2123 = vmatpush1.bf16.msra.mxu0 0
      %2124 = vmatprep.mubr.bf16.mxu0 0
      %2125 = vmatmul.mubr.bf16.gmra.mrb[0].mxu0 %v2090
      %v2126 = vpop.f32.mrb[0].mxu0
      %v2127 = vadd.f32 0.0, %v2126
      %v2128 = vpop.f32.mrb[0].mxu0
      %v2129 = vpop.f32.mrb[0].mxu0
      %v2130 = vpop.f32.mrb[0].mxu0
      %2131 = vdwg.mxu0
      %v2132 = vpack.c.bf16 %v2127, %v2127
      %s2133 = scalar_lea.vmem %s9, 12
      %v2134 = vld [vmem:[%s2133] sm:$0xf]
      %v2136 = vsel %vm762, %v2132, 0
      %v2139 = vsel %vm1260, %v2134, 0
      %2141 = vmatprep.subr.bf16.mxu0 0
      %2142 = vmatpush1.bf16.msra.mxu0 %v2139
      %2143 = vmatprep.subr.bf16.mxu0 0
      %2144 = vmatpush1.bf16.msra.mxu0 0
      %2145 = vmatprep.subr.bf16.mxu0 0
      %2146 = vmatpush1.bf16.msra.mxu0 0
      %2147 = vmatprep.subr.bf16.mxu0 0
      %2148 = vmatpush1.bf16.msra.mxu0 0
      %2149 = vmatprep.subr.bf16.mxu0 0
      %2150 = vmatpush1.bf16.msra.mxu0 0
      %2151 = vmatprep.subr.bf16.mxu0 0
      %2152 = vmatpush1.bf16.msra.mxu0 0
      %2153 = vmatprep.subr.bf16.mxu0 0
      %2154 = vmatpush1.bf16.msra.mxu0 0
      %2155 = vmatprep.subr.bf16.mxu0 0
      %2156 = vmatpush1.bf16.msra.mxu0 0
      %2157 = vmatprep.subr.bf16.mxu0 0
      %2158 = vmatpush1.bf16.msra.mxu0 0
      %2159 = vmatprep.subr.bf16.mxu0 0
      %2160 = vmatpush1.bf16.msra.mxu0 0
      %2161 = vmatprep.subr.bf16.mxu0 0
      %2162 = vmatpush1.bf16.msra.mxu0 0
      %2163 = vmatprep.subr.bf16.mxu0 0
      %2164 = vmatpush1.bf16.msra.mxu0 0
      %2165 = vmatprep.subr.bf16.mxu0 0
      %2166 = vmatpush1.bf16.msra.mxu0 0
      %2167 = vmatprep.subr.bf16.mxu0 0
      %2168 = vmatpush1.bf16.msra.mxu0 0
      %2169 = vmatprep.subr.bf16.mxu0 0
      %2170 = vmatpush1.bf16.msra.mxu0 0
      %2171 = vmatprep.subr.bf16.mxu0 0
      %2172 = vmatpush1.bf16.msra.mxu0 0
      %2173 = vmatprep.mubr.bf16.mxu0 0
      %2174 = vmatmul.mubr.bf16.gmra.mrb[0].mxu0 %v2136
      %v2175 = vpop.f32.mrb[0].mxu0
      %v2176 = vadd.f32 0.0, %v2175
      %v2177 = vpop.f32.mrb[0].mxu0
      %v2178 = vpop.f32.mrb[0].mxu0
      %v2179 = vpop.f32.mrb[0].mxu0
      %2180 = vdwg.mxu0
      %v2181 = vadd.f32 %v1765, %v2176
      %v2182 = vld [vmem:[%s10] sm:$0x1]
      %v2184 = vlaneseq
      %v2185 = vshrl.u32 %v2184, 7
      %v2186 = vsub.s32 0, %v2185
      %v2187 = vrot.slane %v2182, %v2186
      %v2189 = vadd.f32 %v2181, %v2187
      %v2190 = vadd.f32 %v2189, %v471
      %v2191 = vld [vmem:[%s11] sm:$0x1]
      %v2192 = vld [vmem:[%s12] sm:$0x1]
      %v2193 = vsel %vm505, %v2190, 0.0
      %2194 = vadd.xlane.f32.xlu0 %v2193
      %v2195 = vpop.xlane.xlu0 %2194
      %v2196 = vrcp.pop 32.0
      %v2197 = vmul.f32 %v2195, %v2196
      %v2198 = vsub.f32 %v2190, %v2197
      %v2199 = vmul.f32 %v2198, %v2198
      %v2200 = vsel %vm505, %v2199, 0.0
      %2201 = vadd.xlane.f32.xlu0 %v2200
      %v2202 = vpop.xlane.xlu0 %2201
      %v2203 = vmul.f32 %v2202, %v2196
      %v2204 = vadd.f32 %v2203, 1e-05
      %v2205 = vrsqrt.pop %v2204
      %v2206 = vmul.f32 %v2198, %v2205
      %v2208 = vlaneseq
      %v2209 = vshrl.u32 %v2208, 7
      %v2210 = vsub.s32 0, %v2209
      %v2211 = vrot.slane %v2191, %v2210
      %v2213 = vmul.f32 %v2206, %v2211
      %v2215 = vlaneseq
      %v2216 = vshrl.u32 %v2215, 7
      %v2217 = vsub.s32 0, %v2216
      %v2218 = vrot.slane %v2192, %v2217
      %v2220 = vadd.f32 %v2213, %v2218
      %2221 = vst.msk [vmem:[%s469] sm:$0xff] %vm505, %v2220
      %p2222 = scmp.lt.s32.totalorder %s24, 1
      %s2223 = scalar_select %p2222, %s24, 1
      %s2224 = smul.addr %s2223, 8
      %s2225 = scalar_lea.vmem %s13, %s2224
      // Predicated region
      $region73: #{last_forward.18} parent=71 // pred_check
        %p2226 = pneg %p330
      $region74: #{last_forward.18} parent=71 // pred_check_branch
        %2228 = sbr.rel (%p2226) target = $region76
      $region75: #{last_forward.18} parent=71 // pred_region
        _
      $region76: #{last_forward.18} parent=71 // pred_fallthru
        _
    $region72: #{last_forward.18} parent=5 // pred_fallthru
      _
    %p2229 = scmp.le.s32.totalorder 2, %s19
    // Predicated region
    $region77: #{last_forward.18} parent=5 // pred_check
      %p2230 = pneg %p2229
    $region78: #{last_forward.18} parent=5 // pred_check_branch
      %2232 = sbr.rel (%p2230) target = $region80
    $region79: #{last_forward.18} parent=5 // pred_region
      %s2233 = ssub.s32 %s19, 2
      // Predicated region
      $region81: #{last_forward.18} parent=79 // pred_check
        %p2234 = pneg %p336
      $region82: #{last_forward.18} parent=79 // pred_check_branch
        %2236 = sbr.rel (%p2234) target = $region84
      $region83: #{last_forward.18} parent=79 // pred_region
        %p2237 = scmp.lt.s32.totalorder %s25, 1
        %s2238 = scalar_select %p2237, %s25, 1
        %s2239 = smul.addr %s2238, 8
        %s2240 = scalar_lea.vmem %s13, %s2239
      $region84: #{last_forward.18} parent=79 // pred_fallthru
        _
    $region80: #{last_forward.18} parent=5 // pred_fallthru
      _
  $region6: #{last_forward.18} parent=0 // loop_footer
    %s23 = sadd.s32 1, %s19
  $region7: #{last_forward.18} parent=0 // loop_footer_branch
    %18 = sbr.rel target = $region3
  $region8: #{last_forward.18} parent=0 // loop_exit
    _

// kernel: last_forward.17
$region0: #{last_forward.17}
  #allocation0 [shape = 'u32[]', space=smem, size = 0x4, offset = 0x4, fixed_abs, tag = 'smem constant byte address 0x4 - core index']
  #allocation1 [shape = 'u32[144,128]{1,0:T(1,128)}', space=vmem, size = 0x12000, scoped, tag = 'internal scratch']
  %s0 = inlined_call_operand.vmem [shape: f32[2,8,32], index: 0, kind: input, shape index: {}]
  %s1 = inlined_call_operand.vmem [shape: bf16[4,32,8], index: 1, kind: input, shape index: {}]
  %s2 = inlined_call_operand.vmem [shape: f32[4,1,8], index: 2, kind: input, shape index: {}]
  %s3 = inlined_call_operand.vmem [shape: bf16[4,32,8], index: 3, kind: input, shape index: {}]
  %s4 = inlined_call_operand.vmem [shape: f32[4,1,8], index: 4, kind: input, shape index: {}]
  %s5 = inlined_call_operand.vmem [shape: bf16[4,32,8], index: 5, kind: input, shape index: {}]
  %s6 = inlined_call_operand.vmem [shape: f32[4,1,8], index: 6, kind: input, shape index: {}]
  %s7 = inlined_call_operand.vmem [shape: bf16[4,8,32], index: 7, kind: input, shape index: {}]
  %s8 = inlined_call_operand.vmem [shape: f32[1,32], index: 8, kind: input, shape index: {}]
  %s9 = inlined_call_operand.vmem [shape: f32[1,32], index: 9, kind: input, shape index: {}]
  %s10 = inlined_call_operand.vmem [shape: f32[1,32], index: 10, kind: input, shape index: {}]
  %s11 = inlined_call_operand.vmem [shape: f32[2,8,32], index: 11, kind: output, shape index: {}]
  %s12 = sld [smem:[#allocation0]]
  $region77: #{last_forward.17} parent=0
    _
  %s14 = ssub.s32 1, %s12
  %s15 = scalar_select 0, %s14, %s12
  loop: start=0, step=1, limit=4
  $region2: #{last_forward.17} parent=0 // loop_pre_header
    _
  $region3: #{last_forward.17} parent=0 // loop_header
    %s17 = sphi 0, %s21
    %p18 = scmp.ge.s32.totalorder %s17, 4
    %s27 = sphi 0, %s29
    %s30 = sphi 0, %s27
    %s31 = sphi 0, %s30
    %s47 = sphi 0, %s31
    %s51 = sphi 0, %s51
    %s53 = sphi 0, %s51
    %s54 = sphi 0, %s53
    %s68 = sphi 0, %s54
    %s72 = sphi 0, %s72
    %s74 = sphi 0, %s72
    %s75 = sphi 0, %s74
    %s89 = sphi 0, %s75
    %s93 = sphi 0, %s93
    %s95 = sphi 0, %s93
    %s96 = sphi 0, %s95
    %s110 = sphi 0, %s96
    %s114 = sphi 0, %s114
    %s116 = sphi 0, %s114
    %s117 = sphi 0, %s116
    %s131 = sphi 0, %s117
    %s135 = sphi 0, %s135
    %s137 = sphi 0, %s135
    %s138 = sphi 0, %s137
    %s152 = sphi 0, %s138
    %s156 = sphi 0, %s156
    %s158 = sphi 0, %s156
    %s159 = sphi 0, %s158
    %s173 = sphi 0, %s159
    %s177 = sphi 0, %s177
    %s179 = sphi 0, %s177
    %s180 = sphi 0, %s179
    %s194 = sphi 0, %s180
    %s198 = sphi 0, %s198
    %s200 = sphi 0, %s198
    %s201 = sphi 0, %s200
    %s215 = sphi 0, %s201
    %s219 = sphi 0, %s219
    %s221 = sphi 0, %s219
    %s222 = sphi 0, %s221
    %s236 = sphi 0, %s222
    %s240 = sphi 0, %s240
    %s242 = sphi 0, %s240
    %s243 = sphi 0, %s242
    %s257 = sphi 0, %s243
    %s263 = sphi 0, %s265
    %s266 = sphi 0, %s263
    %s267 = sphi 0, %s266
    %s283 = sphi 0, %s267
  $region4: #{last_forward.17} parent=0 // loop_header_branch
    %20 = sbr.rel (%p18) target = $region8
  $region5: #{last_forward.17} parent=0 // loop_body
    %s22 = ssub.s32 %s17, 1
    %s23 = ssub.s32 %s17, 2
    %s24 = sadd.s32 %s17, 1
    %s25 = ssub.s32 %s17, %s24
    %p26 = scmp.eq.s32.totalorder %s25, 0
    %s28 = sadd.s32 %s27, 1
    %s29 = scalar_select %p26, %s27, %s28
    %p32 = pneg %p26
    %p33 = scmp.eq.s32.totalorder %s17, 1
    %p34 = por %p32, %p33
    %p35 = scmp.ne.s32.totalorder %s27, %s30
    %p36 = scmp.eq.s32.totalorder %s17, 0
    %p37 = por %p35, %p36
    %p38 = scmp.ne.s32.totalorder %s27, %s30
    %p39 = scmp.eq.s32.totalorder %s22, 1
    %p40 = por %p38, %p39
    %p41 = scmp.ne.s32.totalorder %s30, %s31
    %p42 = scmp.eq.s32.totalorder %s22, 0
    %p43 = por %p41, %p42
    %p44 = scmp.ne.s32.totalorder %s30, %s31
    %p45 = scmp.eq.s32.totalorder %s23, 1
    %p46 = por %p44, %p45
    %p48 = scmp.ne.s32.totalorder %s31, %s47
    %p49 = scmp.eq.s32.totalorder %s23, 0
    %p50 = por %p48, %p49
    %s52 = sadd.s32 %s51, 1
    %p55 = scmp.eq.s32.totalorder %s17, 1
    %p56 = scmp.ne.s32.totalorder %s51, %s53
    %p57 = scmp.eq.s32.totalorder %s17, 0
    %p58 = por %p56, %p57
    %p59 = scmp.ne.s32.totalorder %s51, %s53
    %p60 = scmp.eq.s32.totalorder %s22, 1
    %p61 = por %p59, %p60
    %p62 = scmp.ne.s32.totalorder %s53, %s54
    %p63 = scmp.eq.s32.totalorder %s22, 0
    %p64 = por %p62, %p63
    %p65 = scmp.ne.s32.totalorder %s53, %s54
    %p66 = scmp.eq.s32.totalorder %s23, 1
    %p67 = por %p65, %p66
    %p69 = scmp.ne.s32.totalorder %s54, %s68
    %p70 = scmp.eq.s32.totalorder %s23, 0
    %p71 = por %p69, %p70
    %s73 = sadd.s32 %s72, 1
    %p76 = scmp.eq.s32.totalorder %s17, 1
    %p77 = scmp.ne.s32.totalorder %s72, %s74
    %p78 = scmp.eq.s32.totalorder %s17, 0
    %p79 = por %p77, %p78
    %p80 = scmp.ne.s32.totalorder %s72, %s74
    %p81 = scmp.eq.s32.totalorder %s22, 1
    %p82 = por %p80, %p81
    %p83 = scmp.ne.s32.totalorder %s74, %s75
    %p84 = scmp.eq.s32.totalorder %s22, 0
    %p85 = por %p83, %p84
    %p86 = scmp.ne.s32.totalorder %s74, %s75
    %p87 = scmp.eq.s32.totalorder %s23, 1
    %p88 = por %p86, %p87
    %p90 = scmp.ne.s32.totalorder %s75, %s89
    %p91 = scmp.eq.s32.totalorder %s23, 0
    %p92 = por %p90, %p91
    %s94 = sadd.s32 %s93, 1
    %p97 = scmp.eq.s32.totalorder %s17, 1
    %p98 = scmp.ne.s32.totalorder %s93, %s95
    %p99 = scmp.eq.s32.totalorder %s17, 0
    %p100 = por %p98, %p99
    %p101 = scmp.ne.s32.totalorder %s93, %s95
    %p102 = scmp.eq.s32.totalorder %s22, 1
    %p103 = por %p101, %p102
    %p104 = scmp.ne.s32.totalorder %s95, %s96
    %p105 = scmp.eq.s32.totalorder %s22, 0
    %p106 = por %p104, %p105
    %p107 = scmp.ne.s32.totalorder %s95, %s96
    %p108 = scmp.eq.s32.totalorder %s23, 1
    %p109 = por %p107, %p108
    %p111 = scmp.ne.s32.totalorder %s96, %s110
    %p112 = scmp.eq.s32.totalorder %s23, 0
    %p113 = por %p111, %p112
    %s115 = sadd.s32 %s114, 1
    %p118 = scmp.eq.s32.totalorder %s17, 1
    %p119 = scmp.ne.s32.totalorder %s114, %s116
    %p120 = scmp.eq.s32.totalorder %s17, 0
    %p121 = por %p119, %p120
    %p122 = scmp.ne.s32.totalorder %s114, %s116
    %p123 = scmp.eq.s32.totalorder %s22, 1
    %p124 = por %p122, %p123
    %p125 = scmp.ne.s32.totalorder %s116, %s117
    %p126 = scmp.eq.s32.totalorder %s22, 0
    %p127 = por %p125, %p126
    %p128 = scmp.ne.s32.totalorder %s116, %s117
    %p129 = scmp.eq.s32.totalorder %s23, 1
    %p130 = por %p128, %p129
    %p132 = scmp.ne.s32.totalorder %s117, %s131
    %p133 = scmp.eq.s32.totalorder %s23, 0
    %p134 = por %p132, %p133
    %s136 = sadd.s32 %s135, 1
    %p139 = scmp.eq.s32.totalorder %s17, 1
    %p140 = scmp.ne.s32.totalorder %s135, %s137
    %p141 = scmp.eq.s32.totalorder %s17, 0
    %p142 = por %p140, %p141
    %p143 = scmp.ne.s32.totalorder %s135, %s137
    %p144 = scmp.eq.s32.totalorder %s22, 1
    %p145 = por %p143, %p144
    %p146 = scmp.ne.s32.totalorder %s137, %s138
    %p147 = scmp.eq.s32.totalorder %s22, 0
    %p148 = por %p146, %p147
    %p149 = scmp.ne.s32.totalorder %s137, %s138
    %p150 = scmp.eq.s32.totalorder %s23, 1
    %p151 = por %p149, %p150
    %p153 = scmp.ne.s32.totalorder %s138, %s152
    %p154 = scmp.eq.s32.totalorder %s23, 0
    %p155 = por %p153, %p154
    %s157 = sadd.s32 %s156, 1
    %p160 = scmp.eq.s32.totalorder %s17, 1
    %p161 = scmp.ne.s32.totalorder %s156, %s158
    %p162 = scmp.eq.s32.totalorder %s17, 0
    %p163 = por %p161, %p162
    %p164 = scmp.ne.s32.totalorder %s156, %s158
    %p165 = scmp.eq.s32.totalorder %s22, 1
    %p166 = por %p164, %p165
    %p167 = scmp.ne.s32.totalorder %s158, %s159
    %p168 = scmp.eq.s32.totalorder %s22, 0
    %p169 = por %p167, %p168
    %p170 = scmp.ne.s32.totalorder %s158, %s159
    %p171 = scmp.eq.s32.totalorder %s23, 1
    %p172 = por %p170, %p171
    %p174 = scmp.ne.s32.totalorder %s159, %s173
    %p175 = scmp.eq.s32.totalorder %s23, 0
    %p176 = por %p174, %p175
    %s178 = sadd.s32 %s177, 1
    %p181 = scmp.eq.s32.totalorder %s17, 1
    %p182 = scmp.ne.s32.totalorder %s177, %s179
    %p183 = scmp.eq.s32.totalorder %s17, 0
    %p184 = por %p182, %p183
    %p185 = scmp.ne.s32.totalorder %s177, %s179
    %p186 = scmp.eq.s32.totalorder %s22, 1
    %p187 = por %p185, %p186
    %p188 = scmp.ne.s32.totalorder %s179, %s180
    %p189 = scmp.eq.s32.totalorder %s22, 0
    %p190 = por %p188, %p189
    %p191 = scmp.ne.s32.totalorder %s179, %s180
    %p192 = scmp.eq.s32.totalorder %s23, 1
    %p193 = por %p191, %p192
    %p195 = scmp.ne.s32.totalorder %s180, %s194
    %p196 = scmp.eq.s32.totalorder %s23, 0
    %p197 = por %p195, %p196
    %s199 = sadd.s32 %s198, 1
    %p202 = scmp.eq.s32.totalorder %s17, 1
    %p203 = scmp.ne.s32.totalorder %s198, %s200
    %p204 = scmp.eq.s32.totalorder %s17, 0
    %p205 = por %p203, %p204
    %p206 = scmp.ne.s32.totalorder %s198, %s200
    %p207 = scmp.eq.s32.totalorder %s22, 1
    %p208 = por %p206, %p207
    %p209 = scmp.ne.s32.totalorder %s200, %s201
    %p210 = scmp.eq.s32.totalorder %s22, 0
    %p211 = por %p209, %p210
    %p212 = scmp.ne.s32.totalorder %s200, %s201
    %p213 = scmp.eq.s32.totalorder %s23, 1
    %p214 = por %p212, %p213
    %p216 = scmp.ne.s32.totalorder %s201, %s215
    %p217 = scmp.eq.s32.totalorder %s23, 0
    %p218 = por %p216, %p217
    %s220 = sadd.s32 %s219, 1
    %p223 = scmp.eq.s32.totalorder %s17, 1
    %p224 = scmp.ne.s32.totalorder %s219, %s221
    %p225 = scmp.eq.s32.totalorder %s17, 0
    %p226 = por %p224, %p225
    %p227 = scmp.ne.s32.totalorder %s219, %s221
    %p228 = scmp.eq.s32.totalorder %s22, 1
    %p229 = por %p227, %p228
    %p230 = scmp.ne.s32.totalorder %s221, %s222
    %p231 = scmp.eq.s32.totalorder %s22, 0
    %p232 = por %p230, %p231
    %p233 = scmp.ne.s32.totalorder %s221, %s222
    %p234 = scmp.eq.s32.totalorder %s23, 1
    %p235 = por %p233, %p234
    %p237 = scmp.ne.s32.totalorder %s222, %s236
    %p238 = scmp.eq.s32.totalorder %s23, 0
    %p239 = por %p237, %p238
    %s241 = sadd.s32 %s240, 1
    %p244 = scmp.eq.s32.totalorder %s17, 1
    %p245 = scmp.ne.s32.totalorder %s240, %s242
    %p246 = scmp.eq.s32.totalorder %s17, 0
    %p247 = por %p245, %p246
    %p248 = scmp.ne.s32.totalorder %s240, %s242
    %p249 = scmp.eq.s32.totalorder %s22, 1
    %p250 = por %p248, %p249
    %p251 = scmp.ne.s32.totalorder %s242, %s243
    %p252 = scmp.eq.s32.totalorder %s22, 0
    %p253 = por %p251, %p252
    %p254 = scmp.ne.s32.totalorder %s242, %s243
    %p255 = scmp.eq.s32.totalorder %s23, 1
    %p256 = por %p254, %p255
    %p258 = scmp.ne.s32.totalorder %s243, %s257
    %p259 = scmp.eq.s32.totalorder %s23, 0
    %p260 = por %p258, %p259
    %s261 = ssub.s32 %s17, %s24
    %p262 = scmp.eq.s32.totalorder %s261, 0
    %s264 = sadd.s32 %s263, 1
    %s265 = scalar_select %p262, %s263, %s264
    %p268 = pneg %p262
    %p269 = scmp.eq.s32.totalorder %s17, 1
    %p270 = por %p268, %p269
    %p271 = scmp.ne.s32.totalorder %s263, %s266
    %p272 = scmp.eq.s32.totalorder %s17, 0
    %p273 = por %p271, %p272
    %p274 = scmp.ne.s32.totalorder %s263, %s266
    %p275 = scmp.eq.s32.totalorder %s22, 1
    %p276 = por %p274, %p275
    %p277 = scmp.ne.s32.totalorder %s266, %s267
    %p278 = scmp.eq.s32.totalorder %s22, 0
    %p279 = por %p277, %p278
    %p280 = scmp.ne.s32.totalorder %s266, %s267
    %p281 = scmp.eq.s32.totalorder %s23, 1
    %p282 = por %p280, %p281
    %p284 = scmp.ne.s32.totalorder %s267, %s283
    %p285 = scmp.eq.s32.totalorder %s23, 0
    %p286 = por %p284, %p285
    %p287 = scmp.le.s32.totalorder 1, %s17
    %p288 = scmp.lt.s32.totalorder %s17, 3
    %p289 = pnand %p287, %p288
    %p290 = pneg %p289
    // Predicated region
    $region9: #{last_forward.17} parent=5 // pred_check
      _
    $region10: #{last_forward.17} parent=5 // pred_check_branch
      %292 = sbr.rel (%p289) target = $region12
    $region11: #{last_forward.17} parent=5 // pred_region
      %s293 = ssub.s32 %s17, 1
      // Predicated region
      $region13: #{last_forward.17} parent=11 // pred_check
        %p294 = pneg %p64
      $region14: #{last_forward.17} parent=11 // pred_check_branch
        %296 = sbr.rel (%p294) target = $region16
      $region15: #{last_forward.17} parent=11 // pred_region
        _
      $region16: #{last_forward.17} parent=11 // pred_fallthru
        _
      // Predicated region
      $region17: #{last_forward.17} parent=11 // pred_check
        %p297 = pneg %p85
      $region18: #{last_forward.17} parent=11 // pred_check_branch
        %299 = sbr.rel (%p297) target = $region20
      $region19: #{last_forward.17} parent=11 // pred_region
        _
      $region20: #{last_forward.17} parent=11 // pred_fallthru
        _
      // Predicated region
      $region21: #{last_forward.17} parent=11 // pred_check
        %p300 = pneg %p106
      $region22: #{last_forward.17} parent=11 // pred_check_branch
        %302 = sbr.rel (%p300) target = $region24
      $region23: #{last_forward.17} parent=11 // pred_region
        _
      $region24: #{last_forward.17} parent=11 // pred_fallthru
        _
      // Predicated region
      $region25: #{last_forward.17} parent=11 // pred_check
        %p303 = pneg %p127
      $region26: #{last_forward.17} parent=11 // pred_check_branch
        %305 = sbr.rel (%p303) target = $region28
      $region27: #{last_forward.17} parent=11 // pred_region
        _
      $region28: #{last_forward.17} parent=11 // pred_fallthru
        _
      // Predicated region
      $region29: #{last_forward.17} parent=11 // pred_check
        %p306 = pneg %p148
      $region30: #{last_forward.17} parent=11 // pred_check_branch
        %308 = sbr.rel (%p306) target = $region32
      $region31: #{last_forward.17} parent=11 // pred_region
        _
      $region32: #{last_forward.17} parent=11 // pred_fallthru
        _
      // Predicated region
      $region33: #{last_forward.17} parent=11 // pred_check
        %p309 = pneg %p169
      $region34: #{last_forward.17} parent=11 // pred_check_branch
        %311 = sbr.rel (%p309) target = $region36
      $region35: #{last_forward.17} parent=11 // pred_region
        _
      $region36: #{last_forward.17} parent=11 // pred_fallthru
        _
      // Predicated region
      $region37: #{last_forward.17} parent=11 // pred_check
        %p312 = pneg %p190
      $region38: #{last_forward.17} parent=11 // pred_check_branch
        %314 = sbr.rel (%p312) target = $region40
      $region39: #{last_forward.17} parent=11 // pred_region
        _
      $region40: #{last_forward.17} parent=11 // pred_fallthru
        _
      // Predicated region
      $region41: #{last_forward.17} parent=11 // pred_check
        %p315 = pneg %p211
      $region42: #{last_forward.17} parent=11 // pred_check_branch
        %317 = sbr.rel (%p315) target = $region44
      $region43: #{last_forward.17} parent=11 // pred_region
        _
      $region44: #{last_forward.17} parent=11 // pred_fallthru
        _
      // Predicated region
      $region45: #{last_forward.17} parent=11 // pred_check
        %p318 = pneg %p232
      $region46: #{last_forward.17} parent=11 // pred_check_branch
        %320 = sbr.rel (%p318) target = $region48
      $region47: #{last_forward.17} parent=11 // pred_region
        _
      $region48: #{last_forward.17} parent=11 // pred_fallthru
        _
      // Predicated region
      $region49: #{last_forward.17} parent=11 // pred_check
        %p321 = pneg %p253
      $region50: #{last_forward.17} parent=11 // pred_check_branch
        %323 = sbr.rel (%p321) target = $region52
      $region51: #{last_forward.17} parent=11 // pred_region
        _
      $region52: #{last_forward.17} parent=11 // pred_fallthru
        _
    $region12: #{last_forward.17} parent=5 // pred_fallthru
      _
    %p324 = scmp.lt.s32.totalorder %s17, 2
    // Predicated region
    $region53: #{last_forward.17} parent=5 // pred_check
      %p325 = pneg %p324
    $region54: #{last_forward.17} parent=5 // pred_check_branch
      %327 = sbr.rel (%p325) target = $region56
    $region55: #{last_forward.17} parent=5 // pred_region
      // Predicated region
      $region57: #{last_forward.17} parent=55 // pred_check
        %p328 = pneg %p37
      $region58: #{last_forward.17} parent=55 // pred_check_branch
        %330 = sbr.rel (%p328) target = $region60
      $region59: #{last_forward.17} parent=55 // pred_region
        %p331 = scmp.lt.s32.totalorder %s17, 1
        %s332 = scalar_select %p331, %s17, 1
        %s333 = smul.addr %s332, 8
        %s334 = scalar_lea.vmem %s0, %s333
      $region60: #{last_forward.17} parent=55 // pred_fallthru
        _
    $region56: #{last_forward.17} parent=5 // pred_fallthru
      _
    %p335 = scmp.le.s32.totalorder 1, %s17
    %p336 = scmp.lt.s32.totalorder %s17, 3
    %p337 = pnand %p335, %p336
    %p338 = pneg %p337
    // Predicated region
    $region61: #{last_forward.17} parent=5 // pred_check
      _
    $region62: #{last_forward.17} parent=5 // pred_check_branch
      %340 = sbr.rel (%p337) target = $region64
    $region63: #{last_forward.17} parent=5 // pred_region
      %s341 = ssub.s32 %s17, 1
      %p342 = scmp.lt.s32.totalorder %s22, 1
      %s343 = scalar_select %p342, %s22, 1
      %s344 = smul.addr %s343, 8
      %s345 = scalar_lea.vmem %s0, %s344
      %p346 = pneg %p43
      %p347 = pneg %p40
      %p348 = pneg %p64
      %p349 = pneg %p61
      %p350 = pneg %p85
      %p351 = pneg %p82
      %p352 = pneg %p106
      %p353 = pneg %p103
      %p354 = pneg %p127
      %p355 = pneg %p124
      %p356 = pneg %p148
      %p357 = pneg %p145
      %p358 = pneg %p169
      %p359 = pneg %p166
      %p360 = pneg %p190
      %p361 = pneg %p187
      %p362 = pneg %p211
      %p363 = pneg %p208
      %p364 = pneg %p232
      %p365 = pneg %p229
      %p366 = pneg %p253
      %p367 = pneg %p250
      %p368 = pneg %p279
      %p369 = pneg %p276
      %p370 = scmp.lt.s32.totalorder %s22, 1
      %s371 = scalar_select %p370, %s22, 1
      %s372 = smul.addr %s371, 8
      %s373 = scalar_lea.vmem %s11, %s372
      %p374 = scmp.lt.s32.totalorder %s22, 1
      %s375 = scalar_select %p374, %s22, 1
      %s376 = smul.addr %s375, 8
      %s377 = scalar_lea.vmem %s0, %s376
      %p378 = scmp.lt.s32.totalorder %s22, 1
      %s379 = scalar_select %p378, %s22, 1
      %s380 = smul.addr %s379, 8
      %s381 = scalar_lea.vmem %s11, %s380
      %v383 = vld [vmem:[%s377] sm:$0xff]
      %v384 = vpack.c.bf16 %v383, %v383
      %v385 = vlaneseq
      %v386 = vshrl.u32 %v385, 7
      %v387 = vlaneseq
      %v388 = vand.u32 %v387, 127
      %vm389 = vcmp.gt.s32.totalorder %v388, %v386
      %v390 = vsel %vm389, -1e+09, 0.0
      %v391 = vld [vmem:[%s1] sm:$0xf]
      %v392 = vld [vmem:[%s1 + $0x4] sm:$0xf]
      %v393 = vld [vmem:[%s1 + $0x8] sm:$0xf]
      %v394 = vld [vmem:[%s1 + $0xc] sm:$0xf]
      %v395 = vld [vmem:[%s2] sm:$0x1]
      %v397 = vlaneseq
      %v398 = vshrl.u32 %v397, 7
      %v399 = vsub.s32 0, %v398
      %v400 = vrot.slane %v395, %v399
      %v406 = vunpack.c.l.b16 %v391
      %v407 = vunpack.c.l.b16 %v392
      %v408 = vunpack.c.l.b16 %v393
      %v409 = vunpack.c.l.b16 %v394
      %v410 = vpack.c.b16 %v407, %v406
      %v411 = vpack.c.b16 %v409, %v408
      %vm414 = vcmask 261120
      %v416 = vsel %vm414, %v384, 0
      %418 = vmatprep.subr.bf16.mxu0 0
      %419 = vmatpush1.bf16.msra.mxu0 %v410
      %420 = vmatprep.subr.bf16.mxu0 0
      %421 = vmatpush1.bf16.msra.mxu0 %v411
      %422 = vmatprep.subr.bf16.mxu0 0
      %423 = vmatpush1.bf16.msra.mxu0 0
      %424 = vmatprep.subr.bf16.mxu0 0
      %425 = vmatpush1.bf16.msra.mxu0 0
      %426 = vmatprep.subr.bf16.mxu0 0
      %427 = vmatpush1.bf16.msra.mxu0 0
      %428 = vmatprep.subr.bf16.mxu0 0
      %429 = vmatpush1.bf16.msra.mxu0 0
      %430 = vmatprep.subr.bf16.mxu0 0
      %431 = vmatpush1.bf16.msra.mxu0 0
      %432 = vmatprep.subr.bf16.mxu0 0
      %433 = vmatpush1.bf16.msra.mxu0 0
      %434 = vmatprep.subr.bf16.mxu0 0
      %435 = vmatpush1.bf16.msra.mxu0 0
      %436 = vmatprep.subr.bf16.mxu0 0
      %437 = vmatpush1.bf16.msra.mxu0 0
      %438 = vmatprep.subr.bf16.mxu0 0
      %439 = vmatpush1.bf16.msra.mxu0 0
      %440 = vmatprep.subr.bf16.mxu0 0
      %441 = vmatpush1.bf16.msra.mxu0 0
      %442 = vmatprep.subr.bf16.mxu0 0
      %443 = vmatpush1.bf16.msra.mxu0 0
      %444 = vmatprep.subr.bf16.mxu0 0
      %445 = vmatpush1.bf16.msra.mxu0 0
      %446 = vmatprep.subr.bf16.mxu0 0
      %447 = vmatpush1.bf16.msra.mxu0 0
      %448 = vmatprep.subr.bf16.mxu0 0
      %449 = vmatpush1.bf16.msra.mxu0 0
      %450 = vmatprep.mubr.bf16.mxu0 0
      %451 = vmatmul.mubr.bf16.gmra.mrb[0].mxu0 %v416
      %v452 = vpop.f32.mrb[0].mxu0
      %v453 = vadd.f32 %v400, %v452
      %v454 = vpop.f32.mrb[0].mxu0
      %v455 = vpop.f32.mrb[0].mxu0
      %v456 = vpop.f32.mrb[0].mxu0
      %457 = vdwg.mxu0
      %v458 = vld [vmem:[%s3] sm:$0xf]
      %v459 = vld [vmem:[%s3 + $0x4] sm:$0xf]
      %v460 = vld [vmem:[%s3 + $0x8] sm:$0xf]
      %v461 = vld [vmem:[%s3 + $0xc] sm:$0xf]
      %v462 = vld [vmem:[%s4] sm:$0x1]
      %v464 = vlaneseq
      %v465 = vshrl.u32 %v464, 7
      %v466 = vsub.s32 0, %v465
      %v467 = vrot.slane %v462, %v466
      %v473 = vunpack.c.l.b16 %v458
      %v474 = vunpack.c.l.b16 %v459
      %v475 = vunpack.c.l.b16 %v460
      %v476 = vunpack.c.l.b16 %v461
      %v477 = vpack.c.b16 %v474, %v473
      %v478 = vpack.c.b16 %v476, %v475
      %481 = vmatprep.subr.bf16.mxu0 0
      %482 = vmatpush1.bf16.msra.mxu0 %v477
      %483 = vmatprep.subr.bf16.mxu0 0
      %484 = vmatpush1.bf16.msra.mxu0 %v478
      %485 = vmatprep.subr.bf16.mxu0 0
      %486 = vmatpush1.bf16.msra.mxu0 0
      %487 = vmatprep.subr.bf16.mxu0 0
      %488 = vmatpush1.bf16.msra.mxu0 0
      %489 = vmatprep.subr.bf16.mxu0 0
      %490 = vmatpush1.bf16.msra.mxu0 0
      %491 = vmatprep.subr.bf16.mxu0 0
      %492 = vmatpush1.bf16.msra.mxu0 0
      %493 = vmatprep.subr.bf16.mxu0 0
      %494 = vmatpush1.bf16.msra.mxu0 0
      %495 = vmatprep.subr.bf16.mxu0 0
      %496 = vmatpush1.bf16.msra.mxu0 0
      %497 = vmatprep.subr.bf16.mxu0 0
      %498 = vmatpush1.bf16.msra.mxu0 0
      %499 = vmatprep.subr.bf16.mxu0 0
      %500 = vmatpush1.bf16.msra.mxu0 0
      %501 = vmatprep.subr.bf16.mxu0 0
      %502 = vmatpush1.bf16.msra.mxu0 0
      %503 = vmatprep.subr.bf16.mxu0 0
      %504 = vmatpush1.bf16.msra.mxu0 0
      %505 = vmatprep.subr.bf16.mxu0 0
      %506 = vmatpush1.bf16.msra.mxu0 0
      %507 = vmatprep.subr.bf16.mxu0 0
      %508 = vmatpush1.bf16.msra.mxu0 0
      %509 = vmatprep.subr.bf16.mxu0 0
      %510 = vmatpush1.bf16.msra.mxu0 0
      %511 = vmatprep.subr.bf16.mxu0 0
      %512 = vmatpush1.bf16.msra.mxu0 0
      %513 = vmatprep.mubr.bf16.mxu0 0
      %514 = vmatmul.mubr.bf16.gmra.mrb[0].mxu0 %v416
      %v515 = vpop.f32.mrb[0].mxu0
      %v516 = vadd.f32 %v467, %v515
      %v517 = vpop.f32.mrb[0].mxu0
      %v518 = vpop.f32.mrb[0].mxu0
      %v519 = vpop.f32.mrb[0].mxu0
      %520 = vdwg.mxu0
      %v521 = vld [vmem:[%s5] sm:$0xf]
      %v522 = vld [vmem:[%s5 + $0x4] sm:$0xf]
      %v523 = vld [vmem:[%s5 + $0x8] sm:$0xf]
      %v524 = vld [vmem:[%s5 + $0xc] sm:$0xf]
      %v525 = vld [vmem:[%s6] sm:$0x1]
      %v527 = vlaneseq
      %v528 = vshrl.u32 %v527, 7
      %v529 = vsub.s32 0, %v528
      %v530 = vrot.slane %v525, %v529
      %v536 = vunpack.c.l.b16 %v521
      %v537 = vunpack.c.l.b16 %v522
      %v538 = vunpack.c.l.b16 %v523
      %v539 = vunpack.c.l.b16 %v524
      %v540 = vpack.c.b16 %v537, %v536
      %v541 = vpack.c.b16 %v539, %v538
      %544 = vmatprep.subr.bf16.mxu0 0
      %545 = vmatpush1.bf16.msra.mxu0 %v540
      %546 = vmatprep.subr.bf16.mxu0 0
      %547 = vmatpush1.bf16.msra.mxu0 %v541
      %548 = vmatprep.subr.bf16.mxu0 0
      %549 = vmatpush1.bf16.msra.mxu0 0
      %550 = vmatprep.subr.bf16.mxu0 0
      %551 = vmatpush1.bf16.msra.mxu0 0
      %552 = vmatprep.subr.bf16.mxu0 0
      %553 = vmatpush1.bf16.msra.mxu0 0
      %554 = vmatprep.subr.bf16.mxu0 0
      %555 = vmatpush1.bf16.msra.mxu0 0
      %556 = vmatprep.subr.bf16.mxu0 0
      %557 = vmatpush1.bf16.msra.mxu0 0
      %558 = vmatprep.subr.bf16.mxu0 0
      %559 = vmatpush1.bf16.msra.mxu0 0
      %560 = vmatprep.subr.bf16.mxu0 0
      %561 = vmatpush1.bf16.msra.mxu0 0
      %562 = vmatprep.subr.bf16.mxu0 0
      %563 = vmatpush1.bf16.msra.mxu0 0
      %564 = vmatprep.subr.bf16.mxu0 0
      %565 = vmatpush1.bf16.msra.mxu0 0
      %566 = vmatprep.subr.bf16.mxu0 0
      %567 = vmatpush1.bf16.msra.mxu0 0
      %568 = vmatprep.subr.bf16.mxu0 0
      %569 = vmatpush1.bf16.msra.mxu0 0
      %570 = vmatprep.subr.bf16.mxu0 0
      %571 = vmatpush1.bf16.msra.mxu0 0
      %572 = vmatprep.subr.bf16.mxu0 0
      %573 = vmatpush1.bf16.msra.mxu0 0
      %574 = vmatprep.subr.bf16.mxu0 0
      %575 = vmatpush1.bf16.msra.mxu0 0
      %576 = vmatprep.mubr.bf16.mxu0 0
      %577 = vmatmul.mubr.bf16.gmra.mrb[0].mxu0 %v416
      %v578 = vpop.f32.mrb[0].mxu0
      %v579 = vadd.f32 %v530, %v578
      %v580 = vpop.f32.mrb[0].mxu0
      %v581 = vpop.f32.mrb[0].mxu0
      %v582 = vpop.f32.mrb[0].mxu0
      %583 = vdwg.mxu0
      %v584 = vpack.c.bf16 %v453, %v453
      %v585 = vpack.c.bf16 %v516, %v516
      %vm586 = vcmask 64512
      %v588 = vsel %vm586, %v584, 0
      %v591 = vsel %vm586, %v585, 0
      %593 = vmatprep.subr.bf16.mxu0 0
      %594 = vmatpush1.bf16.xpose.msra.mxu0 %v591
      %595 = vmatprep.subr.bf16.mxu0 0
      %596 = vmatpush1.bf16.xpose.msra.mxu0 0
      %597 = vmatprep.subr.bf16.mxu0 0
      %598 = vmatpush1.bf16.xpose.msra.mxu0 0
      %599 = vmatprep.subr.bf16.mxu0 0
      %600 = vmatpush1.bf16.xpose.msra.mxu0 0
      %601 = vmatprep.subr.bf16.mxu0 0
      %602 = vmatpush1.bf16.xpose.msra.mxu0 0
      %603 = vmatprep.subr.bf16.mxu0 0
      %604 = vmatpush1.bf16.xpose.msra.mxu0 0
      %605 = vmatprep.subr.bf16.mxu0 0
      %606 = vmatpush1.bf16.xpose.msra.mxu0 0
      %607 = vmatprep.subr.bf16.mxu0 0
      %608 = vmatpush1.bf16.xpose.msra.mxu0 0
      %609 = vmatprep.subr.bf16.mxu0 0
      %610 = vmatpush1.bf16.xpose.msra.mxu0 0
      %611 = vmatprep.subr.bf16.mxu0 0
      %612 = vmatpush1.bf16.xpose.msra.mxu0 0
      %613 = vmatprep.subr.bf16.mxu0 0
      %614 = vmatpush1.bf16.xpose.msra.mxu0 0
      %615 = vmatprep.subr.bf16.mxu0 0
      %616 = vmatpush1.bf16.xpose.msra.mxu0 0
      %617 = vmatprep.subr.bf16.mxu0 0
      %618 = vmatpush1.bf16.xpose.msra.mxu0 0
      %619 = vmatprep.subr.bf16.mxu0 0
      %620 = vmatpush1.bf16.xpose.msra.mxu0 0
      %621 = vmatprep.subr.bf16.mxu0 0
      %622 = vmatpush1.bf16.xpose.msra.mxu0 0
      %623 = vmatprep.subr.bf16.mxu0 0
      %624 = vmatpush1.bf16.xpose.msra.mxu0 0
      %625 = vmatprep.mubr.bf16.mxu0 0
      %626 = vmatmul.mubr.bf16.gmra.mrb[0].mxu0 %v588
      %v627 = vpop.f32.mrb[0].mxu0
      %v628 = vadd.f32 0.0, %v627
      %v629 = vpop.f32.mrb[0].mxu0
      %v630 = vpop.f32.mrb[0].mxu0
      %v631 = vpop.f32.mrb[0].mxu0
      %632 = vdwg.mxu0
      %v633 = vmul.f32 %v628, 0.35355338
      %v634 = vadd.f32 %v633, %v390
      %v635 = vsel %vm586, %v634, -inf
      %636 = vmax.xlane.f32.xlu0 %v635
      %v637 = vpop.xlane.xlu0 %636
      %v638 = vsub.f32 %v634, %v637
      %v639 = vmul.f32 %v638, 1.442695
      %v640 = vpow.pop %v639
      %v641 = vsel %vm586, %v640, 0.0
      %642 = vadd.xlane.f32.xlu0 %v641
      %v643 = vpop.xlane.xlu0 %642
      %v644 = vrcp.pop %v643
      %v645 = vmul.f32 %v640, %v644
      %v646 = vpack.c.bf16 %v645, %v645
      %v647 = vpack.c.bf16 %v579, %v579
      %v649 = vsel %vm586, %v646, 0
      %vm651 = vcmask 1043456
      %v653 = vsel %vm651, %v647, 0
      %655 = vmatprep.subr.bf16.mxu0 0
      %656 = vmatpush1.bf16.msra.mxu0 %v653
      %657 = vmatprep.subr.bf16.mxu0 0
      %658 = vmatpush1.bf16.msra.mxu0 0
      %659 = vmatprep.subr.bf16.mxu0 0
      %660 = vmatpush1.bf16.msra.mxu0 0
      %661 = vmatprep.subr.bf16.mxu0 0
      %662 = vmatpush1.bf16.msra.mxu0 0
      %663 = vmatprep.subr.bf16.mxu0 0
      %664 = vmatpush1.bf16.msra.mxu0 0
      %665 = vmatprep.subr.bf16.mxu0 0
      %666 = vmatpush1.bf16.msra.mxu0 0
      %667 = vmatprep.subr.bf16.mxu0 0
      %668 = vmatpush1.bf16.msra.mxu0 0
      %669 = vmatprep.subr.bf16.mxu0 0
      %670 = vmatpush1.bf16.msra.mxu0 0
      %671 = vmatprep.subr.bf16.mxu0 0
      %672 = vmatpush1.bf16.msra.mxu0 0
      %673 = vmatprep.subr.bf16.mxu0 0
      %674 = vmatpush1.bf16.msra.mxu0 0
      %675 = vmatprep.subr.bf16.mxu0 0
      %676 = vmatpush1.bf16.msra.mxu0 0
      %677 = vmatprep.subr.bf16.mxu0 0
      %678 = vmatpush1.bf16.msra.mxu0 0
      %679 = vmatprep.subr.bf16.mxu0 0
      %680 = vmatpush1.bf16.msra.mxu0 0
      %681 = vmatprep.subr.bf16.mxu0 0
      %682 = vmatpush1.bf16.msra.mxu0 0
      %683 = vmatprep.subr.bf16.mxu0 0
      %684 = vmatpush1.bf16.msra.mxu0 0
      %685 = vmatprep.subr.bf16.mxu0 0
      %686 = vmatpush1.bf16.msra.mxu0 0
      %687 = vmatprep.mubr.bf16.mxu0 0
      %688 = vmatmul.mubr.bf16.gmra.mrb[0].mxu0 %v649
      %v689 = vpop.f32.mrb[0].mxu0
      %v690 = vadd.f32 0.0, %v689
      %v691 = vpop.f32.mrb[0].mxu0
      %v692 = vpop.f32.mrb[0].mxu0
      %v693 = vpop.f32.mrb[0].mxu0
      %694 = vdwg.mxu0
      %v695 = vpack.c.bf16 %v690, %v690
      %v696 = vld [vmem:[%s7] sm:$0xf]
      %s697 = scalar_lea.vmem %s1, 16
      %v698 = vld [vmem:[%s697] sm:$0xf]
      %v699 = vld [vmem:[%s697 + $0x4] sm:$0xf]
      %v700 = vld [vmem:[%s697 + $0x8] sm:$0xf]
      %v701 = vld [vmem:[%s697 + $0xc] sm:$0xf]
      %s702 = scalar_lea.vmem %s2, 1
      %v703 = vld [vmem:[%s702] sm:$0x1]
      %v705 = vlaneseq
      %v706 = vshrl.u32 %v705, 7
      %v707 = vsub.s32 0, %v706
      %v708 = vrot.slane %v703, %v707
      %v714 = vunpack.c.l.b16 %v698
      %v715 = vunpack.c.l.b16 %v699
      %v716 = vunpack.c.l.b16 %v700
      %v717 = vunpack.c.l.b16 %v701
      %v718 = vpack.c.b16 %v715, %v714
      %v719 = vpack.c.b16 %v717, %v716
      %722 = vmatprep.subr.bf16.mxu0 0
      %723 = vmatpush1.bf16.msra.mxu0 %v718
      %724 = vmatprep.subr.bf16.mxu0 0
      %725 = vmatpush1.bf16.msra.mxu0 %v719
      %726 = vmatprep.subr.bf16.mxu0 0
      %727 = vmatpush1.bf16.msra.mxu0 0
      %728 = vmatprep.subr.bf16.mxu0 0
      %729 = vmatpush1.bf16.msra.mxu0 0
      %730 = vmatprep.subr.bf16.mxu0 0
      %731 = vmatpush1.bf16.msra.mxu0 0
      %732 = vmatprep.subr.bf16.mxu0 0
      %733 = vmatpush1.bf16.msra.mxu0 0
      %734 = vmatprep.subr.bf16.mxu0 0
      %735 = vmatpush1.bf16.msra.mxu0 0
      %736 = vmatprep.subr.bf16.mxu0 0
      %737 = vmatpush1.bf16.msra.mxu0 0
      %738 = vmatprep.subr.bf16.mxu0 0
      %739 = vmatpush1.bf16.msra.mxu0 0
      %740 = vmatprep.subr.bf16.mxu0 0
      %741 = vmatpush1.bf16.msra.mxu0 0
      %742 = vmatprep.subr.bf16.mxu0 0
      %743 = vmatpush1.bf16.msra.mxu0 0
      %744 = vmatprep.subr.bf16.mxu0 0
      %745 = vmatpush1.bf16.msra.mxu0 0
      %746 = vmatprep.subr.bf16.mxu0 0
      %747 = vmatpush1.bf16.msra.mxu0 0
      %748 = vmatprep.subr.bf16.mxu0 0
      %749 = vmatpush1.bf16.msra.mxu0 0
      %750 = vmatprep.subr.bf16.mxu0 0
      %751 = vmatpush1.bf16.msra.mxu0 0
      %752 = vmatprep.subr.bf16.mxu0 0
      %753 = vmatpush1.bf16.msra.mxu0 0
      %754 = vmatprep.mubr.bf16.mxu0 0
      %755 = vmatmul.mubr.bf16.gmra.mrb[0].mxu0 %v416
      %v756 = vpop.f32.mrb[0].mxu0
      %v757 = vadd.f32 %v708, %v756
      %v758 = vpop.f32.mrb[0].mxu0
      %v759 = vpop.f32.mrb[0].mxu0
      %v760 = vpop.f32.mrb[0].mxu0
      %761 = vdwg.mxu0
      %s762 = scalar_lea.vmem %s3, 16
      %v763 = vld [vmem:[%s762] sm:$0xf]
      %v764 = vld [vmem:[%s762 + $0x4] sm:$0xf]
      %v765 = vld [vmem:[%s762 + $0x8] sm:$0xf]
      %v766 = vld [vmem:[%s762 + $0xc] sm:$0xf]
      %s767 = scalar_lea.vmem %s4, 1
      %v768 = vld [vmem:[%s767] sm:$0x1]
      %v770 = vlaneseq
      %v771 = vshrl.u32 %v770, 7
      %v772 = vsub.s32 0, %v771
      %v773 = vrot.slane %v768, %v772
      %v779 = vunpack.c.l.b16 %v763
      %v780 = vunpack.c.l.b16 %v764
      %v781 = vunpack.c.l.b16 %v765
      %v782 = vunpack.c.l.b16 %v766
      %v783 = vpack.c.b16 %v780, %v779
      %v784 = vpack.c.b16 %v782, %v781
      %787 = vmatprep.subr.bf16.mxu0 0
      %788 = vmatpush1.bf16.msra.mxu0 %v783
      %789 = vmatprep.subr.bf16.mxu0 0
      %790 = vmatpush1.bf16.msra.mxu0 %v784
      %791 = vmatprep.subr.bf16.mxu0 0
      %792 = vmatpush1.bf16.msra.mxu0 0
      %793 = vmatprep.subr.bf16.mxu0 0
      %794 = vmatpush1.bf16.msra.mxu0 0
      %795 = vmatprep.subr.bf16.mxu0 0
      %796 = vmatpush1.bf16.msra.mxu0 0
      %797 = vmatprep.subr.bf16.mxu0 0
      %798 = vmatpush1.bf16.msra.mxu0 0
      %799 = vmatprep.subr.bf16.mxu0 0
      %800 = vmatpush1.bf16.msra.mxu0 0
      %801 = vmatprep.subr.bf16.mxu0 0
      %802 = vmatpush1.bf16.msra.mxu0 0
      %803 = vmatprep.subr.bf16.mxu0 0
      %804 = vmatpush1.bf16.msra.mxu0 0
      %805 = vmatprep.subr.bf16.mxu0 0
      %806 = vmatpush1.bf16.msra.mxu0 0
      %807 = vmatprep.subr.bf16.mxu0 0
      %808 = vmatpush1.bf16.msra.mxu0 0
      %809 = vmatprep.subr.bf16.mxu0 0
      %810 = vmatpush1.bf16.msra.mxu0 0
      %811 = vmatprep.subr.bf16.mxu0 0
      %812 = vmatpush1.bf16.msra.mxu0 0
      %813 = vmatprep.subr.bf16.mxu0 0
      %814 = vmatpush1.bf16.msra.mxu0 0
      %815 = vmatprep.subr.bf16.mxu0 0
      %816 = vmatpush1.bf16.msra.mxu0 0
      %817 = vmatprep.subr.bf16.mxu0 0
      %818 = vmatpush1.bf16.msra.mxu0 0
      %819 = vmatprep.mubr.bf16.mxu0 0
      %820 = vmatmul.mubr.bf16.gmra.mrb[0].mxu0 %v416
      %v821 = vpop.f32.mrb[0].mxu0
      %v822 = vadd.f32 %v773, %v821
      %v823 = vpop.f32.mrb[0].mxu0
      %v824 = vpop.f32.mrb[0].mxu0
      %v825 = vpop.f32.mrb[0].mxu0
      %826 = vdwg.mxu0
      %s827 = scalar_lea.vmem %s5, 16
      %v828 = vld [vmem:[%s827] sm:$0xf]
      %v829 = vld [vmem:[%s827 + $0x4] sm:$0xf]
      %v830 = vld [vmem:[%s827 + $0x8] sm:$0xf]
      %v831 = vld [vmem:[%s827 + $0xc] sm:$0xf]
      %s832 = scalar_lea.vmem %s6, 1
      %v833 = vld [vmem:[%s832] sm:$0x1]
      %v835 = vlaneseq
      %v836 = vshrl.u32 %v835, 7
      %v837 = vsub.s32 0, %v836
      %v838 = vrot.slane %v833, %v837
      %v844 = vunpack.c.l.b16 %v828
      %v845 = vunpack.c.l.b16 %v829
      %v846 = vunpack.c.l.b16 %v830
      %v847 = vunpack.c.l.b16 %v831
      %v848 = vpack.c.b16 %v845, %v844
      %v849 = vpack.c.b16 %v847, %v846
      %852 = vmatprep.subr.bf16.mxu0 0
      %853 = vmatpush1.bf16.msra.mxu0 %v848
      %854 = vmatprep.subr.bf16.mxu0 0
      %855 = vmatpush1.bf16.msra.mxu0 %v849
      %856 = vmatprep.subr.bf16.mxu0 0
      %857 = vmatpush1.bf16.msra.mxu0 0
      %858 = vmatprep.subr.bf16.mxu0 0
      %859 = vmatpush1.bf16.msra.mxu0 0
      %860 = vmatprep.subr.bf16.mxu0 0
      %861 = vmatpush1.bf16.msra.mxu0 0
      %862 = vmatprep.subr.bf16.mxu0 0
      %863 = vmatpush1.bf16.msra.mxu0 0
      %864 = vmatprep.subr.bf16.mxu0 0
      %865 = vmatpush1.bf16.msra.mxu0 0
      %866 = vmatprep.subr.bf16.mxu0 0
      %867 = vmatpush1.bf16.msra.mxu0 0
      %868 = vmatprep.subr.bf16.mxu0 0
      %869 = vmatpush1.bf16.msra.mxu0 0
      %870 = vmatprep.subr.bf16.mxu0 0
      %871 = vmatpush1.bf16.msra.mxu0 0
      %872 = vmatprep.subr.bf16.mxu0 0
      %873 = vmatpush1.bf16.msra.mxu0 0
      %874 = vmatprep.subr.bf16.mxu0 0
      %875 = vmatpush1.bf16.msra.mxu0 0
      %876 = vmatprep.subr.bf16.mxu0 0
      %877 = vmatpush1.bf16.msra.mxu0 0
      %878 = vmatprep.subr.bf16.mxu0 0
      %879 = vmatpush1.bf16.msra.mxu0 0
      %880 = vmatprep.subr.bf16.mxu0 0
      %881 = vmatpush1.bf16.msra.mxu0 0
      %882 = vmatprep.subr.bf16.mxu0 0
      %883 = vmatpush1.bf16.msra.mxu0 0
      %884 = vmatprep.mubr.bf16.mxu0 0
      %885 = vmatmul.mubr.bf16.gmra.mrb[0].mxu0 %v416
      %v886 = vpop.f32.mrb[0].mxu0
      %v887 = vadd.f32 %v838, %v886
      %v888 = vpop.f32.mrb[0].mxu0
      %v889 = vpop.f32.mrb[0].mxu0
      %v890 = vpop.f32.mrb[0].mxu0
      %891 = vdwg.mxu0
      %v892 = vpack.c.bf16 %v757, %v757
      %v893 = vpack.c.bf16 %v822, %v822
      %v895 = vsel %vm586, %v892, 0
      %v898 = vsel %vm586, %v893, 0
      %900 = vmatprep.subr.bf16.mxu0 0
      %901 = vmatpush1.bf16.xpose.msra.mxu0 %v898
      %902 = vmatprep.subr.bf16.mxu0 0
      %903 = vmatpush1.bf16.xpose.msra.mxu0 0
      %904 = vmatprep.subr.bf16.mxu0 0
      %905 = vmatpush1.bf16.xpose.msra.mxu0 0
      %906 = vmatprep.subr.bf16.mxu0 0
      %907 = vmatpush1.bf16.xpose.msra.mxu0 0
      %908 = vmatprep.subr.bf16.mxu0 0
      %909 = vmatpush1.bf16.xpose.msra.mxu0 0
      %910 = vmatprep.subr.bf16.mxu0 0
      %911 = vmatpush1.bf16.xpose.msra.mxu0 0
      %912 = vmatprep.subr.bf16.mxu0 0
      %913 = vmatpush1.bf16.xpose.msra.mxu0 0
      %914 = vmatprep.subr.bf16.mxu0 0
      %915 = vmatpush1.bf16.xpose.msra.mxu0 0
      %916 = vmatprep.subr.bf16.mxu0 0
      %917 = vmatpush1.bf16.xpose.msra.mxu0 0
      %918 = vmatprep.subr.bf16.mxu0 0
      %919 = vmatpush1.bf16.xpose.msra.mxu0 0
      %920 = vmatprep.subr.bf16.mxu0 0
      %921 = vmatpush1.bf16.xpose.msra.mxu0 0
      %922 = vmatprep.subr.bf16.mxu0 0
      %923 = vmatpush1.bf16.xpose.msra.mxu0 0
      %924 = vmatprep.subr.bf16.mxu0 0
      %925 = vmatpush1.bf16.xpose.msra.mxu0 0
      %926 = vmatprep.subr.bf16.mxu0 0
      %927 = vmatpush1.bf16.xpose.msra.mxu0 0
      %928 = vmatprep.subr.bf16.mxu0 0
      %929 = vmatpush1.bf16.xpose.msra.mxu0 0
      %930 = vmatprep.subr.bf16.mxu0 0
      %931 = vmatpush1.bf16.xpose.msra.mxu0 0
      %932 = vmatprep.mubr.bf16.mxu0 0
      %933 = vmatmul.mubr.bf16.gmra.mrb[0].mxu0 %v895
      %v934 = vpop.f32.mrb[0].mxu0
      %v935 = vadd.f32 0.0, %v934
      %v936 = vpop.f32.mrb[0].mxu0
      %v937 = vpop.f32.mrb[0].mxu0
      %v938 = vpop.f32.mrb[0].mxu0
      %939 = vdwg.mxu0
      %v940 = vmul.f32 %v935, 0.35355338
      %v941 = vadd.f32 %v940, %v390
      %v942 = vsel %vm586, %v941, -inf
      %943 = vmax.xlane.f32.xlu0 %v942
      %v944 = vpop.xlane.xlu0 %943
      %v945 = vsub.f32 %v941, %v944
      %v946 = vmul.f32 %v945, 1.442695
      %v947 = vpow.pop %v946
      %v948 = vsel %vm586, %v947, 0.0
      %949 = vadd.xlane.f32.xlu0 %v948
      %v950 = vpop.xlane.xlu0 %949
      %v951 = vrcp.pop %v950
      %v952 = vmul.f32 %v947, %v951
      %v953 = vpack.c.bf16 %v952, %v952
      %v954 = vpack.c.bf16 %v887, %v887
      %v956 = vsel %vm586, %v953, 0
      %v959 = vsel %vm651, %v954, 0
      %961 = vmatprep.subr.bf16.mxu0 0
      %962 = vmatpush1.bf16.msra.mxu0 %v959
      %963 = vmatprep.subr.bf16.mxu0 0
      %964 = vmatpush1.bf16.msra.mxu0 0
      %965 = vmatprep.subr.bf16.mxu0 0
      %966 = vmatpush1.bf16.msra.mxu0 0
      %967 = vmatprep.subr.bf16.mxu0 0
      %968 = vmatpush1.bf16.msra.mxu0 0
      %969 = vmatprep.subr.bf16.mxu0 0
      %970 = vmatpush1.bf16.msra.mxu0 0
      %971 = vmatprep.subr.bf16.mxu0 0
      %972 = vmatpush1.bf16.msra.mxu0 0
      %973 = vmatprep.subr.bf16.mxu0 0
      %974 = vmatpush1.bf16.msra.mxu0 0
      %975 = vmatprep.subr.bf16.mxu0 0
      %976 = vmatpush1.bf16.msra.mxu0 0
      %977 = vmatprep.subr.bf16.mxu0 0
      %978 = vmatpush1.bf16.msra.mxu0 0
      %979 = vmatprep.subr.bf16.mxu0 0
      %980 = vmatpush1.bf16.msra.mxu0 0
      %981 = vmatprep.subr.bf16.mxu0 0
      %982 = vmatpush1.bf16.msra.mxu0 0
      %983 = vmatprep.subr.bf16.mxu0 0
      %984 = vmatpush1.bf16.msra.mxu0 0
      %985 = vmatprep.subr.bf16.mxu0 0
      %986 = vmatpush1.bf16.msra.mxu0 0
      %987 = vmatprep.subr.bf16.mxu0 0
      %988 = vmatpush1.bf16.msra.mxu0 0
      %989 = vmatprep.subr.bf16.mxu0 0
      %990 = vmatpush1.bf16.msra.mxu0 0
      %991 = vmatprep.subr.bf16.mxu0 0
      %992 = vmatpush1.bf16.msra.mxu0 0
      %993 = vmatprep.mubr.bf16.mxu0 0
      %994 = vmatmul.mubr.bf16.gmra.mrb[0].mxu0 %v956
      %v995 = vpop.f32.mrb[0].mxu0
      %v996 = vadd.f32 0.0, %v995
      %v997 = vpop.f32.mrb[0].mxu0
      %v998 = vpop.f32.mrb[0].mxu0
      %v999 = vpop.f32.mrb[0].mxu0
      %1000 = vdwg.mxu0
      %v1001 = vpack.c.bf16 %v996, %v996
      %s1002 = scalar_lea.vmem %s7, 4
      %v1003 = vld [vmem:[%s1002] sm:$0xf]
      %v1005 = vsel %vm586, %v1001, 0
      %v1008 = vsel %vm651, %v1003, 0
      %1010 = vmatprep.subr.bf16.mxu0 0
      %1011 = vmatpush1.bf16.msra.mxu0 %v1008
      %1012 = vmatprep.subr.bf16.mxu0 0
      %1013 = vmatpush1.bf16.msra.mxu0 0
      %1014 = vmatprep.subr.bf16.mxu0 0
      %1015 = vmatpush1.bf16.msra.mxu0 0
      %1016 = vmatprep.subr.bf16.mxu0 0
      %1017 = vmatpush1.bf16.msra.mxu0 0
      %1018 = vmatprep.subr.bf16.mxu0 0
      %1019 = vmatpush1.bf16.msra.mxu0 0
      %1020 = vmatprep.subr.bf16.mxu0 0
      %1021 = vmatpush1.bf16.msra.mxu0 0
      %1022 = vmatprep.subr.bf16.mxu0 0
      %1023 = vmatpush1.bf16.msra.mxu0 0
      %1024 = vmatprep.subr.bf16.mxu0 0
      %1025 = vmatpush1.bf16.msra.mxu0 0
      %1026 = vmatprep.subr.bf16.mxu0 0
      %1027 = vmatpush1.bf16.msra.mxu0 0
      %1028 = vmatprep.subr.bf16.mxu0 0
      %1029 = vmatpush1.bf16.msra.mxu0 0
      %1030 = vmatprep.subr.bf16.mxu0 0
      %1031 = vmatpush1.bf16.msra.mxu0 0
      %1032 = vmatprep.subr.bf16.mxu0 0
      %1033 = vmatpush1.bf16.msra.mxu0 0
      %1034 = vmatprep.subr.bf16.mxu0 0
      %1035 = vmatpush1.bf16.msra.mxu0 0
      %1036 = vmatprep.subr.bf16.mxu0 0
      %1037 = vmatpush1.bf16.msra.mxu0 0
      %1038 = vmatprep.subr.bf16.mxu0 0
      %1039 = vmatpush1.bf16.msra.mxu0 0
      %1040 = vmatprep.subr.bf16.mxu0 0
      %1041 = vmatpush1.bf16.msra.mxu0 0
      %1042 = vmatprep.mubr.bf16.mxu0 0
      %1043 = vmatmul.mubr.bf16.gmra.mrb[0].mxu0 %v1005
      %v1044 = vpop.f32.mrb[0].mxu0
      %v1045 = vadd.f32 0.0, %v1044
      %v1046 = vpop.f32.mrb[0].mxu0
      %v1047 = vpop.f32.mrb[0].mxu0
      %v1048 = vpop.f32.mrb[0].mxu0
      %1049 = vdwg.mxu0
      %v1051 = vsel %vm586, %v695, 0
      %v1054 = vsel %vm651, %v696, 0
      %1056 = vmatprep.subr.bf16.mxu0 0
      %1057 = vmatpush1.bf16.msra.mxu0 %v1054
      %1058 = vmatprep.subr.bf16.mxu0 0
      %1059 = vmatpush1.bf16.msra.mxu0 0
      %1060 = vmatprep.subr.bf16.mxu0 0
      %1061 = vmatpush1.bf16.msra.mxu0 0
      %1062 = vmatprep.subr.bf16.mxu0 0
      %1063 = vmatpush1.bf16.msra.mxu0 0
      %1064 = vmatprep.subr.bf16.mxu0 0
      %1065 = vmatpush1.bf16.msra.mxu0 0
      %1066 = vmatprep.subr.bf16.mxu0 0
      %1067 = vmatpush1.bf16.msra.mxu0 0
      %1068 = vmatprep.subr.bf16.mxu0 0
      %1069 = vmatpush1.bf16.msra.mxu0 0
      %1070 = vmatprep.subr.bf16.mxu0 0
      %1071 = vmatpush1.bf16.msra.mxu0 0
      %1072 = vmatprep.subr.bf16.mxu0 0
      %1073 = vmatpush1.bf16.msra.mxu0 0
      %1074 = vmatprep.subr.bf16.mxu0 0
      %1075 = vmatpush1.bf16.msra.mxu0 0
      %1076 = vmatprep.subr.bf16.mxu0 0
      %1077 = vmatpush1.bf16.msra.mxu0 0
      %1078 = vmatprep.subr.bf16.mxu0 0
      %1079 = vmatpush1.bf16.msra.mxu0 0
      %1080 = vmatprep.subr.bf16.mxu0 0
      %1081 = vmatpush1.bf16.msra.mxu0 0
      %1082 = vmatprep.subr.bf16.mxu0 0
      %1083 = vmatpush1.bf16.msra.mxu0 0
      %1084 = vmatprep.subr.bf16.mxu0 0
      %1085 = vmatpush1.bf16.msra.mxu0 0
      %1086 = vmatprep.subr.bf16.mxu0 0
      %1087 = vmatpush1.bf16.msra.mxu0 0
      %1088 = vmatprep.mubr.bf16.mxu0 0
      %1089 = vmatmul.mubr.bf16.gmra.mrb[0].mxu0 %v1051
      %v1090 = vpop.f32.mrb[0].mxu0
      %v1091 = vadd.f32 %v1045, %v1090
      %v1092 = vpop.f32.mrb[0].mxu0
      %v1093 = vpop.f32.mrb[0].mxu0
      %v1094 = vpop.f32.mrb[0].mxu0
      %1095 = vdwg.mxu0
      %s1096 = scalar_lea.vmem %s1, 32
      %v1097 = vld [vmem:[%s1096] sm:$0xf]
      %v1098 = vld [vmem:[%s1096 + $0x4] sm:$0xf]
      %v1099 = vld [vmem:[%s1096 + $0x8] sm:$0xf]
      %v1100 = vld [vmem:[%s1096 + $0xc] sm:$0xf]
      %s1101 = scalar_lea.vmem %s2, 2
      %v1102 = vld [vmem:[%s1101] sm:$0x1]
      %v1104 = vlaneseq
      %v1105 = vshrl.u32 %v1104, 7
      %v1106 = vsub.s32 0, %v1105
      %v1107 = vrot.slane %v1102, %v1106
      %v1113 = vunpack.c.l.b16 %v1097
      %v1114 = vunpack.c.l.b16 %v1098
      %v1115 = vunpack.c.l.b16 %v1099
      %v1116 = vunpack.c.l.b16 %v1100
      %v1117 = vpack.c.b16 %v1114, %v1113
      %v1118 = vpack.c.b16 %v1116, %v1115
      %1121 = vmatprep.subr.bf16.mxu0 0
      %1122 = vmatpush1.bf16.msra.mxu0 %v1117
      %1123 = vmatprep.subr.bf16.mxu0 0
      %1124 = vmatpush1.bf16.msra.mxu0 %v1118
      %1125 = vmatprep.subr.bf16.mxu0 0
      %1126 = vmatpush1.bf16.msra.mxu0 0
      %1127 = vmatprep.subr.bf16.mxu0 0
      %1128 = vmatpush1.bf16.msra.mxu0 0
      %1129 = vmatprep.subr.bf16.mxu0 0
      %1130 = vmatpush1.bf16.msra.mxu0 0
      %1131 = vmatprep.subr.bf16.mxu0 0
      %1132 = vmatpush1.bf16.msra.mxu0 0
      %1133 = vmatprep.subr.bf16.mxu0 0
      %1134 = vmatpush1.bf16.msra.mxu0 0
      %1135 = vmatprep.subr.bf16.mxu0 0
      %1136 = vmatpush1.bf16.msra.mxu0 0
      %1137 = vmatprep.subr.bf16.mxu0 0
      %1138 = vmatpush1.bf16.msra.mxu0 0
      %1139 = vmatprep.subr.bf16.mxu0 0
      %1140 = vmatpush1.bf16.msra.mxu0 0
      %1141 = vmatprep.subr.bf16.mxu0 0
      %1142 = vmatpush1.bf16.msra.mxu0 0
      %1143 = vmatprep.subr.bf16.mxu0 0
      %1144 = vmatpush1.bf16.msra.mxu0 0
      %1145 = vmatprep.subr.bf16.mxu0 0
      %1146 = vmatpush1.bf16.msra.mxu0 0
      %1147 = vmatprep.subr.bf16.mxu0 0
      %1148 = vmatpush1.bf16.msra.mxu0 0
      %1149 = vmatprep.subr.bf16.mxu0 0
      %1150 = vmatpush1.bf16.msra.mxu0 0
      %1151 = vmatprep.subr.bf16.mxu0 0
      %1152 = vmatpush1.bf16.msra.mxu0 0
      %1153 = vmatprep.mubr.bf16.mxu0 0
      %1154 = vmatmul.mubr.bf16.gmra.mrb[0].mxu0 %v416
      %v1155 = vpop.f32.mrb[0].mxu0
      %v1156 = vadd.f32 %v1107, %v1155
      %v1157 = vpop.f32.mrb[0].mxu0
      %v1158 = vpop.f32.mrb[0].mxu0
      %v1159 = vpop.f32.mrb[0].mxu0
      %1160 = vdwg.mxu0
      %s1161 = scalar_lea.vmem %s3, 32
      %v1162 = vld [vmem:[%s1161] sm:$0xf]
      %v1163 = vld [vmem:[%s1161 + $0x4] sm:$0xf]
      %v1164 = vld [vmem:[%s1161 + $0x8] sm:$0xf]
      %v1165 = vld [vmem:[%s1161 + $0xc] sm:$0xf]
      %s1166 = scalar_lea.vmem %s4, 2
      %v1167 = vld [vmem:[%s1166] sm:$0x1]
      %v1169 = vlaneseq
      %v1170 = vshrl.u32 %v1169, 7
      %v1171 = vsub.s32 0, %v1170
      %v1172 = vrot.slane %v1167, %v1171
      %v1178 = vunpack.c.l.b16 %v1162
      %v1179 = vunpack.c.l.b16 %v1163
      %v1180 = vunpack.c.l.b16 %v1164
      %v1181 = vunpack.c.l.b16 %v1165
      %v1182 = vpack.c.b16 %v1179, %v1178
      %v1183 = vpack.c.b16 %v1181, %v1180
      %1186 = vmatprep.subr.bf16.mxu0 0
      %1187 = vmatpush1.bf16.msra.mxu0 %v1182
      %1188 = vmatprep.subr.bf16.mxu0 0
      %1189 = vmatpush1.bf16.msra.mxu0 %v1183
      %1190 = vmatprep.subr.bf16.mxu0 0
      %1191 = vmatpush1.bf16.msra.mxu0 0
      %1192 = vmatprep.subr.bf16.mxu0 0
      %1193 = vmatpush1.bf16.msra.mxu0 0
      %1194 = vmatprep.subr.bf16.mxu0 0
      %1195 = vmatpush1.bf16.msra.mxu0 0
      %1196 = vmatprep.subr.bf16.mxu0 0
      %1197 = vmatpush1.bf16.msra.mxu0 0
      %1198 = vmatprep.subr.bf16.mxu0 0
      %1199 = vmatpush1.bf16.msra.mxu0 0
      %1200 = vmatprep.subr.bf16.mxu0 0
      %1201 = vmatpush1.bf16.msra.mxu0 0
      %1202 = vmatprep.subr.bf16.mxu0 0
      %1203 = vmatpush1.bf16.msra.mxu0 0
      %1204 = vmatprep.subr.bf16.mxu0 0
      %1205 = vmatpush1.bf16.msra.mxu0 0
      %1206 = vmatprep.subr.bf16.mxu0 0
      %1207 = vmatpush1.bf16.msra.mxu0 0
      %1208 = vmatprep.subr.bf16.mxu0 0
      %1209 = vmatpush1.bf16.msra.mxu0 0
      %1210 = vmatprep.subr.bf16.mxu0 0
      %1211 = vmatpush1.bf16.msra.mxu0 0
      %1212 = vmatprep.subr.bf16.mxu0 0
      %1213 = vmatpush1.bf16.msra.mxu0 0
      %1214 = vmatprep.subr.bf16.mxu0 0
      %1215 = vmatpush1.bf16.msra.mxu0 0
      %1216 = vmatprep.subr.bf16.mxu0 0
      %1217 = vmatpush1.bf16.msra.mxu0 0
      %1218 = vmatprep.mubr.bf16.mxu0 0
      %1219 = vmatmul.mubr.bf16.gmra.mrb[0].mxu0 %v416
      %v1220 = vpop.f32.mrb[0].mxu0
      %v1221 = vadd.f32 %v1172, %v1220
      %v1222 = vpop.f32.mrb[0].mxu0
      %v1223 = vpop.f32.mrb[0].mxu0
      %v1224 = vpop.f32.mrb[0].mxu0
      %1225 = vdwg.mxu0
      %s1226 = scalar_lea.vmem %s5, 32
      %v1227 = vld [vmem:[%s1226] sm:$0xf]
      %v1228 = vld [vmem:[%s1226 + $0x4] sm:$0xf]
      %v1229 = vld [vmem:[%s1226 + $0x8] sm:$0xf]
      %v1230 = vld [vmem:[%s1226 + $0xc] sm:$0xf]
      %s1231 = scalar_lea.vmem %s6, 2
      %v1232 = vld [vmem:[%s1231] sm:$0x1]
      %v1234 = vlaneseq
      %v1235 = vshrl.u32 %v1234, 7
      %v1236 = vsub.s32 0, %v1235
      %v1237 = vrot.slane %v1232, %v1236
      %v1243 = vunpack.c.l.b16 %v1227
      %v1244 = vunpack.c.l.b16 %v1228
      %v1245 = vunpack.c.l.b16 %v1229
      %v1246 = vunpack.c.l.b16 %v1230
      %v1247 = vpack.c.b16 %v1244, %v1243
      %v1248 = vpack.c.b16 %v1246, %v1245
      %1251 = vmatprep.subr.bf16.mxu0 0
      %1252 = vmatpush1.bf16.msra.mxu0 %v1247
      %1253 = vmatprep.subr.bf16.mxu0 0
      %1254 = vmatpush1.bf16.msra.mxu0 %v1248
      %1255 = vmatprep.subr.bf16.mxu0 0
      %1256 = vmatpush1.bf16.msra.mxu0 0
      %1257 = vmatprep.subr.bf16.mxu0 0
      %1258 = vmatpush1.bf16.msra.mxu0 0
      %1259 = vmatprep.subr.bf16.mxu0 0
      %1260 = vmatpush1.bf16.msra.mxu0 0
      %1261 = vmatprep.subr.bf16.mxu0 0
      %1262 = vmatpush1.bf16.msra.mxu0 0
      %1263 = vmatprep.subr.bf16.mxu0 0
      %1264 = vmatpush1.bf16.msra.mxu0 0
      %1265 = vmatprep.subr.bf16.mxu0 0
      %1266 = vmatpush1.bf16.msra.mxu0 0
      %1267 = vmatprep.subr.bf16.mxu0 0
      %1268 = vmatpush1.bf16.msra.mxu0 0
      %1269 = vmatprep.subr.bf16.mxu0 0
      %1270 = vmatpush1.bf16.msra.mxu0 0
      %1271 = vmatprep.subr.bf16.mxu0 0
      %1272 = vmatpush1.bf16.msra.mxu0 0
      %1273 = vmatprep.subr.bf16.mxu0 0
      %1274 = vmatpush1.bf16.msra.mxu0 0
      %1275 = vmatprep.subr.bf16.mxu0 0
      %1276 = vmatpush1.bf16.msra.mxu0 0
      %1277 = vmatprep.subr.bf16.mxu0 0
      %1278 = vmatpush1.bf16.msra.mxu0 0
      %1279 = vmatprep.subr.bf16.mxu0 0
      %1280 = vmatpush1.bf16.msra.mxu0 0
      %1281 = vmatprep.subr.bf16.mxu0 0
      %1282 = vmatpush1.bf16.msra.mxu0 0
      %1283 = vmatprep.mubr.bf16.mxu0 0
      %1284 = vmatmul.mubr.bf16.gmra.mrb[0].mxu0 %v416
      %v1285 = vpop.f32.mrb[0].mxu0
      %v1286 = vadd.f32 %v1237, %v1285
      %v1287 = vpop.f32.mrb[0].mxu0
      %v1288 = vpop.f32.mrb[0].mxu0
      %v1289 = vpop.f32.mrb[0].mxu0
      %1290 = vdwg.mxu0
      %v1291 = vpack.c.bf16 %v1156, %v1156
      %v1292 = vpack.c.bf16 %v1221, %v1221
      %v1294 = vsel %vm586, %v1291, 0
      %v1297 = vsel %vm586, %v1292, 0
      %1299 = vmatprep.subr.bf16.mxu0 0
      %1300 = vmatpush1.bf16.xpose.msra.mxu0 %v1297
      %1301 = vmatprep.subr.bf16.mxu0 0
      %1302 = vmatpush1.bf16.xpose.msra.mxu0 0
      %1303 = vmatprep.subr.bf16.mxu0 0
      %1304 = vmatpush1.bf16.xpose.msra.mxu0 0
      %1305 = vmatprep.subr.bf16.mxu0 0
      %1306 = vmatpush1.bf16.xpose.msra.mxu0 0
      %1307 = vmatprep.subr.bf16.mxu0 0
      %1308 = vmatpush1.bf16.xpose.msra.mxu0 0
      %1309 = vmatprep.subr.bf16.mxu0 0
      %1310 = vmatpush1.bf16.xpose.msra.mxu0 0
      %1311 = vmatprep.subr.bf16.mxu0 0
      %1312 = vmatpush1.bf16.xpose.msra.mxu0 0
      %1313 = vmatprep.subr.bf16.mxu0 0
      %1314 = vmatpush1.bf16.xpose.msra.mxu0 0
      %1315 = vmatprep.subr.bf16.mxu0 0
      %1316 = vmatpush1.bf16.xpose.msra.mxu0 0
      %1317 = vmatprep.subr.bf16.mxu0 0
      %1318 = vmatpush1.bf16.xpose.msra.mxu0 0
      %1319 = vmatprep.subr.bf16.mxu0 0
      %1320 = vmatpush1.bf16.xpose.msra.mxu0 0
      %1321 = vmatprep.subr.bf16.mxu0 0
      %1322 = vmatpush1.bf16.xpose.msra.mxu0 0
      %1323 = vmatprep.subr.bf16.mxu0 0
      %1324 = vmatpush1.bf16.xpose.msra.mxu0 0
      %1325 = vmatprep.subr.bf16.mxu0 0
      %1326 = vmatpush1.bf16.xpose.msra.mxu0 0
      %1327 = vmatprep.subr.bf16.mxu0 0
      %1328 = vmatpush1.bf16.xpose.msra.mxu0 0
      %1329 = vmatprep.subr.bf16.mxu0 0
      %1330 = vmatpush1.bf16.xpose.msra.mxu0 0
      %1331 = vmatprep.mubr.bf16.mxu0 0
      %1332 = vmatmul.mubr.bf16.gmra.mrb[0].mxu0 %v1294
      %v1333 = vpop.f32.mrb[0].mxu0
      %v1334 = vadd.f32 0.0, %v1333
      %v1335 = vpop.f32.mrb[0].mxu0
      %v1336 = vpop.f32.mrb[0].mxu0
      %v1337 = vpop.f32.mrb[0].mxu0
      %1338 = vdwg.mxu0
      %v1339 = vmul.f32 %v1334, 0.35355338
      %v1340 = vadd.f32 %v1339, %v390
      %v1341 = vsel %vm586, %v1340, -inf
      %1342 = vmax.xlane.f32.xlu0 %v1341
      %v1343 = vpop.xlane.xlu0 %1342
      %v1344 = vsub.f32 %v1340, %v1343
      %v1345 = vmul.f32 %v1344, 1.442695
      %v1346 = vpow.pop %v1345
      %v1347 = vsel %vm586, %v1346, 0.0
      %1348 = vadd.xlane.f32.xlu0 %v1347
      %v1349 = vpop.xlane.xlu0 %1348
      %v1350 = vrcp.pop %v1349
      %v1351 = vmul.f32 %v1346, %v1350
      %v1352 = vpack.c.bf16 %v1351, %v1351
      %v1353 = vpack.c.bf16 %v1286, %v1286
      %v1355 = vsel %vm586, %v1352, 0
      %v1358 = vsel %vm651, %v1353, 0
      %1360 = vmatprep.subr.bf16.mxu0 0
      %1361 = vmatpush1.bf16.msra.mxu0 %v1358
      %1362 = vmatprep.subr.bf16.mxu0 0
      %1363 = vmatpush1.bf16.msra.mxu0 0
      %1364 = vmatprep.subr.bf16.mxu0 0
      %1365 = vmatpush1.bf16.msra.mxu0 0
      %1366 = vmatprep.subr.bf16.mxu0 0
      %1367 = vmatpush1.bf16.msra.mxu0 0
      %1368 = vmatprep.subr.bf16.mxu0 0
      %1369 = vmatpush1.bf16.msra.mxu0 0
      %1370 = vmatprep.subr.bf16.mxu0 0
      %1371 = vmatpush1.bf16.msra.mxu0 0
      %1372 = vmatprep.subr.bf16.mxu0 0
      %1373 = vmatpush1.bf16.msra.mxu0 0
      %1374 = vmatprep.subr.bf16.mxu0 0
      %1375 = vmatpush1.bf16.msra.mxu0 0
      %1376 = vmatprep.subr.bf16.mxu0 0
      %1377 = vmatpush1.bf16.msra.mxu0 0
      %1378 = vmatprep.subr.bf16.mxu0 0
      %1379 = vmatpush1.bf16.msra.mxu0 0
      %1380 = vmatprep.subr.bf16.mxu0 0
      %1381 = vmatpush1.bf16.msra.mxu0 0
      %1382 = vmatprep.subr.bf16.mxu0 0
      %1383 = vmatpush1.bf16.msra.mxu0 0
      %1384 = vmatprep.subr.bf16.mxu0 0
      %1385 = vmatpush1.bf16.msra.mxu0 0
      %1386 = vmatprep.subr.bf16.mxu0 0
      %1387 = vmatpush1.bf16.msra.mxu0 0
      %1388 = vmatprep.subr.bf16.mxu0 0
      %1389 = vmatpush1.bf16.msra.mxu0 0
      %1390 = vmatprep.subr.bf16.mxu0 0
      %1391 = vmatpush1.bf16.msra.mxu0 0
      %1392 = vmatprep.mubr.bf16.mxu0 0
      %1393 = vmatmul.mubr.bf16.gmra.mrb[0].mxu0 %v1355
      %v1394 = vpop.f32.mrb[0].mxu0
      %v1395 = vadd.f32 0.0, %v1394
      %v1396 = vpop.f32.mrb[0].mxu0
      %v1397 = vpop.f32.mrb[0].mxu0
      %v1398 = vpop.f32.mrb[0].mxu0
      %1399 = vdwg.mxu0
      %v1400 = vpack.c.bf16 %v1395, %v1395
      %s1401 = scalar_lea.vmem %s7, 8
      %v1402 = vld [vmem:[%s1401] sm:$0xf]
      %v1404 = vsel %vm586, %v1400, 0
      %v1407 = vsel %vm651, %v1402, 0
      %1409 = vmatprep.subr.bf16.mxu0 0
      %1410 = vmatpush1.bf16.msra.mxu0 %v1407
      %1411 = vmatprep.subr.bf16.mxu0 0
      %1412 = vmatpush1.bf16.msra.mxu0 0
      %1413 = vmatprep.subr.bf16.mxu0 0
      %1414 = vmatpush1.bf16.msra.mxu0 0
      %1415 = vmatprep.subr.bf16.mxu0 0
      %1416 = vmatpush1.bf16.msra.mxu0 0
      %1417 = vmatprep.subr.bf16.mxu0 0
      %1418 = vmatpush1.bf16.msra.mxu0 0
      %1419 = vmatprep.subr.bf16.mxu0 0
      %1420 = vmatpush1.bf16.msra.mxu0 0
      %1421 = vmatprep.subr.bf16.mxu0 0
      %1422 = vmatpush1.bf16.msra.mxu0 0
      %1423 = vmatprep.subr.bf16.mxu0 0
      %1424 = vmatpush1.bf16.msra.mxu0 0
      %1425 = vmatprep.subr.bf16.mxu0 0
      %1426 = vmatpush1.bf16.msra.mxu0 0
      %1427 = vmatprep.subr.bf16.mxu0 0
      %1428 = vmatpush1.bf16.msra.mxu0 0
      %1429 = vmatprep.subr.bf16.mxu0 0
      %1430 = vmatpush1.bf16.msra.mxu0 0
      %1431 = vmatprep.subr.bf16.mxu0 0
      %1432 = vmatpush1.bf16.msra.mxu0 0
      %1433 = vmatprep.subr.bf16.mxu0 0
      %1434 = vmatpush1.bf16.msra.mxu0 0
      %1435 = vmatprep.subr.bf16.mxu0 0
      %1436 = vmatpush1.bf16.msra.mxu0 0
      %1437 = vmatprep.subr.bf16.mxu0 0
      %1438 = vmatpush1.bf16.msra.mxu0 0
      %1439 = vmatprep.subr.bf16.mxu0 0
      %1440 = vmatpush1.bf16.msra.mxu0 0
      %1441 = vmatprep.mubr.bf16.mxu0 0
      %1442 = vmatmul.mubr.bf16.gmra.mrb[0].mxu0 %v1404
      %v1443 = vpop.f32.mrb[0].mxu0
      %v1444 = vadd.f32 0.0, %v1443
      %v1445 = vpop.f32.mrb[0].mxu0
      %v1446 = vpop.f32.mrb[0].mxu0
      %v1447 = vpop.f32.mrb[0].mxu0
      %1448 = vdwg.mxu0
      %v1449 = vadd.f32 %v1091, %v1444
      %s1450 = scalar_lea.vmem %s1, 48
      %v1451 = vld [vmem:[%s1450] sm:$0xf]
      %v1452 = vld [vmem:[%s1450 + $0x4] sm:$0xf]
      %v1453 = vld [vmem:[%s1450 + $0x8] sm:$0xf]
      %v1454 = vld [vmem:[%s1450 + $0xc] sm:$0xf]
      %s1455 = scalar_lea.vmem %s2, 3
      %v1456 = vld [vmem:[%s1455] sm:$0x1]
      %v1458 = vlaneseq
      %v1459 = vshrl.u32 %v1458, 7
      %v1460 = vsub.s32 0, %v1459
      %v1461 = vrot.slane %v1456, %v1460
      %v1467 = vunpack.c.l.b16 %v1451
      %v1468 = vunpack.c.l.b16 %v1452
      %v1469 = vunpack.c.l.b16 %v1453
      %v1470 = vunpack.c.l.b16 %v1454
      %v1471 = vpack.c.b16 %v1468, %v1467
      %v1472 = vpack.c.b16 %v1470, %v1469
      %1475 = vmatprep.subr.bf16.mxu0 0
      %1476 = vmatpush1.bf16.msra.mxu0 %v1471
      %1477 = vmatprep.subr.bf16.mxu0 0
      %1478 = vmatpush1.bf16.msra.mxu0 %v1472
      %1479 = vmatprep.subr.bf16.mxu0 0
      %1480 = vmatpush1.bf16.msra.mxu0 0
      %1481 = vmatprep.subr.bf16.mxu0 0
      %1482 = vmatpush1.bf16.msra.mxu0 0
      %1483 = vmatprep.subr.bf16.mxu0 0
      %1484 = vmatpush1.bf16.msra.mxu0 0
      %1485 = vmatprep.subr.bf16.mxu0 0
      %1486 = vmatpush1.bf16.msra.mxu0 0
      %1487 = vmatprep.subr.bf16.mxu0 0
      %1488 = vmatpush1.bf16.msra.mxu0 0
      %1489 = vmatprep.subr.bf16.mxu0 0
      %1490 = vmatpush1.bf16.msra.mxu0 0
      %1491 = vmatprep.subr.bf16.mxu0 0
      %1492 = vmatpush1.bf16.msra.mxu0 0
      %1493 = vmatprep.subr.bf16.mxu0 0
      %1494 = vmatpush1.bf16.msra.mxu0 0
      %1495 = vmatprep.subr.bf16.mxu0 0
      %1496 = vmatpush1.bf16.msra.mxu0 0
      %1497 = vmatprep.subr.bf16.mxu0 0
      %1498 = vmatpush1.bf16.msra.mxu0 0
      %1499 = vmatprep.subr.bf16.mxu0 0
      %1500 = vmatpush1.bf16.msra.mxu0 0
      %1501 = vmatprep.subr.bf16.mxu0 0
      %1502 = vmatpush1.bf16.msra.mxu0 0
      %1503 = vmatprep.subr.bf16.mxu0 0
      %1504 = vmatpush1.bf16.msra.mxu0 0
      %1505 = vmatprep.subr.bf16.mxu0 0
      %1506 = vmatpush1.bf16.msra.mxu0 0
      %1507 = vmatprep.mubr.bf16.mxu0 0
      %1508 = vmatmul.mubr.bf16.gmra.mrb[0].mxu0 %v416
      %v1509 = vpop.f32.mrb[0].mxu0
      %v1510 = vadd.f32 %v1461, %v1509
      %v1511 = vpop.f32.mrb[0].mxu0
      %v1512 = vpop.f32.mrb[0].mxu0
      %v1513 = vpop.f32.mrb[0].mxu0
      %1514 = vdwg.mxu0
      %s1515 = scalar_lea.vmem %s3, 48
      %v1516 = vld [vmem:[%s1515] sm:$0xf]
      %v1517 = vld [vmem:[%s1515 + $0x4] sm:$0xf]
      %v1518 = vld [vmem:[%s1515 + $0x8] sm:$0xf]
      %v1519 = vld [vmem:[%s1515 + $0xc] sm:$0xf]
      %s1520 = scalar_lea.vmem %s4, 3
      %v1521 = vld [vmem:[%s1520] sm:$0x1]
      %v1523 = vlaneseq
      %v1524 = vshrl.u32 %v1523, 7
      %v1525 = vsub.s32 0, %v1524
      %v1526 = vrot.slane %v1521, %v1525
      %v1532 = vunpack.c.l.b16 %v1516
      %v1533 = vunpack.c.l.b16 %v1517
      %v1534 = vunpack.c.l.b16 %v1518
      %v1535 = vunpack.c.l.b16 %v1519
      %v1536 = vpack.c.b16 %v1533, %v1532
      %v1537 = vpack.c.b16 %v1535, %v1534
      %1540 = vmatprep.subr.bf16.mxu0 0
      %1541 = vmatpush1.bf16.msra.mxu0 %v1536
      %1542 = vmatprep.subr.bf16.mxu0 0
      %1543 = vmatpush1.bf16.msra.mxu0 %v1537
      %1544 = vmatprep.subr.bf16.mxu0 0
      %1545 = vmatpush1.bf16.msra.mxu0 0
      %1546 = vmatprep.subr.bf16.mxu0 0
      %1547 = vmatpush1.bf16.msra.mxu0 0
      %1548 = vmatprep.subr.bf16.mxu0 0
      %1549 = vmatpush1.bf16.msra.mxu0 0
      %1550 = vmatprep.subr.bf16.mxu0 0
      %1551 = vmatpush1.bf16.msra.mxu0 0
      %1552 = vmatprep.subr.bf16.mxu0 0
      %1553 = vmatpush1.bf16.msra.mxu0 0
      %1554 = vmatprep.subr.bf16.mxu0 0
      %1555 = vmatpush1.bf16.msra.mxu0 0
      %1556 = vmatprep.subr.bf16.mxu0 0
      %1557 = vmatpush1.bf16.msra.mxu0 0
      %1558 = vmatprep.subr.bf16.mxu0 0
      %1559 = vmatpush1.bf16.msra.mxu0 0
      %1560 = vmatprep.subr.bf16.mxu0 0
      %1561 = vmatpush1.bf16.msra.mxu0 0
      %1562 = vmatprep.subr.bf16.mxu0 0
      %1563 = vmatpush1.bf16.msra.mxu0 0
      %1564 = vmatprep.subr.bf16.mxu0 0
      %1565 = vmatpush1.bf16.msra.mxu0 0
      %1566 = vmatprep.subr.bf16.mxu0 0
      %1567 = vmatpush1.bf16.msra.mxu0 0
      %1568 = vmatprep.subr.bf16.mxu0 0
      %1569 = vmatpush1.bf16.msra.mxu0 0
      %1570 = vmatprep.subr.bf16.mxu0 0
      %1571 = vmatpush1.bf16.msra.mxu0 0
      %1572 = vmatprep.mubr.bf16.mxu0 0
      %1573 = vmatmul.mubr.bf16.gmra.mrb[0].mxu0 %v416
      %v1574 = vpop.f32.mrb[0].mxu0
      %v1575 = vadd.f32 %v1526, %v1574
      %v1576 = vpop.f32.mrb[0].mxu0
      %v1577 = vpop.f32.mrb[0].mxu0
      %v1578 = vpop.f32.mrb[0].mxu0
      %1579 = vdwg.mxu0
      %s1580 = scalar_lea.vmem %s5, 48
      %v1581 = vld [vmem:[%s1580] sm:$0xf]
      %v1582 = vld [vmem:[%s1580 + $0x4] sm:$0xf]
      %v1583 = vld [vmem:[%s1580 + $0x8] sm:$0xf]
      %v1584 = vld [vmem:[%s1580 + $0xc] sm:$0xf]
      %s1585 = scalar_lea.vmem %s6, 3
      %v1586 = vld [vmem:[%s1585] sm:$0x1]
      %v1588 = vlaneseq
      %v1589 = vshrl.u32 %v1588, 7
      %v1590 = vsub.s32 0, %v1589
      %v1591 = vrot.slane %v1586, %v1590
      %v1597 = vunpack.c.l.b16 %v1581
      %v1598 = vunpack.c.l.b16 %v1582
      %v1599 = vunpack.c.l.b16 %v1583
      %v1600 = vunpack.c.l.b16 %v1584
      %v1601 = vpack.c.b16 %v1598, %v1597
      %v1602 = vpack.c.b16 %v1600, %v1599
      %1605 = vmatprep.subr.bf16.mxu0 0
      %1606 = vmatpush1.bf16.msra.mxu0 %v1601
      %1607 = vmatprep.subr.bf16.mxu0 0
      %1608 = vmatpush1.bf16.msra.mxu0 %v1602
      %1609 = vmatprep.subr.bf16.mxu0 0
      %1610 = vmatpush1.bf16.msra.mxu0 0
      %1611 = vmatprep.subr.bf16.mxu0 0
      %1612 = vmatpush1.bf16.msra.mxu0 0
      %1613 = vmatprep.subr.bf16.mxu0 0
      %1614 = vmatpush1.bf16.msra.mxu0 0
      %1615 = vmatprep.subr.bf16.mxu0 0
      %1616 = vmatpush1.bf16.msra.mxu0 0
      %1617 = vmatprep.subr.bf16.mxu0 0
      %1618 = vmatpush1.bf16.msra.mxu0 0
      %1619 = vmatprep.subr.bf16.mxu0 0
      %1620 = vmatpush1.bf16.msra.mxu0 0
      %1621 = vmatprep.subr.bf16.mxu0 0
      %1622 = vmatpush1.bf16.msra.mxu0 0
      %1623 = vmatprep.subr.bf16.mxu0 0
      %1624 = vmatpush1.bf16.msra.mxu0 0
      %1625 = vmatprep.subr.bf16.mxu0 0
      %1626 = vmatpush1.bf16.msra.mxu0 0
      %1627 = vmatprep.subr.bf16.mxu0 0
      %1628 = vmatpush1.bf16.msra.mxu0 0
      %1629 = vmatprep.subr.bf16.mxu0 0
      %1630 = vmatpush1.bf16.msra.mxu0 0
      %1631 = vmatprep.subr.bf16.mxu0 0
      %1632 = vmatpush1.bf16.msra.mxu0 0
      %1633 = vmatprep.subr.bf16.mxu0 0
      %1634 = vmatpush1.bf16.msra.mxu0 0
      %1635 = vmatprep.subr.bf16.mxu0 0
      %1636 = vmatpush1.bf16.msra.mxu0 0
      %1637 = vmatprep.mubr.bf16.mxu0 0
      %1638 = vmatmul.mubr.bf16.gmra.mrb[0].mxu0 %v416
      %v1639 = vpop.f32.mrb[0].mxu0
      %v1640 = vadd.f32 %v1591, %v1639
      %v1641 = vpop.f32.mrb[0].mxu0
      %v1642 = vpop.f32.mrb[0].mxu0
      %v1643 = vpop.f32.mrb[0].mxu0
      %1644 = vdwg.mxu0
      %v1645 = vpack.c.bf16 %v1510, %v1510
      %v1646 = vpack.c.bf16 %v1575, %v1575
      %v1648 = vsel %vm586, %v1645, 0
      %v1651 = vsel %vm586, %v1646, 0
      %1653 = vmatprep.subr.bf16.mxu0 0
      %1654 = vmatpush1.bf16.xpose.msra.mxu0 %v1651
      %1655 = vmatprep.subr.bf16.mxu0 0
      %1656 = vmatpush1.bf16.xpose.msra.mxu0 0
      %1657 = vmatprep.subr.bf16.mxu0 0
      %1658 = vmatpush1.bf16.xpose.msra.mxu0 0
      %1659 = vmatprep.subr.bf16.mxu0 0
      %1660 = vmatpush1.bf16.xpose.msra.mxu0 0
      %1661 = vmatprep.subr.bf16.mxu0 0
      %1662 = vmatpush1.bf16.xpose.msra.mxu0 0
      %1663 = vmatprep.subr.bf16.mxu0 0
      %1664 = vmatpush1.bf16.xpose.msra.mxu0 0
      %1665 = vmatprep.subr.bf16.mxu0 0
      %1666 = vmatpush1.bf16.xpose.msra.mxu0 0
      %1667 = vmatprep.subr.bf16.mxu0 0
      %1668 = vmatpush1.bf16.xpose.msra.mxu0 0
      %1669 = vmatprep.subr.bf16.mxu0 0
      %1670 = vmatpush1.bf16.xpose.msra.mxu0 0
      %1671 = vmatprep.subr.bf16.mxu0 0
      %1672 = vmatpush1.bf16.xpose.msra.mxu0 0
      %1673 = vmatprep.subr.bf16.mxu0 0
      %1674 = vmatpush1.bf16.xpose.msra.mxu0 0
      %1675 = vmatprep.subr.bf16.mxu0 0
      %1676 = vmatpush1.bf16.xpose.msra.mxu0 0
      %1677 = vmatprep.subr.bf16.mxu0 0
      %1678 = vmatpush1.bf16.xpose.msra.mxu0 0
      %1679 = vmatprep.subr.bf16.mxu0 0
      %1680 = vmatpush1.bf16.xpose.msra.mxu0 0
      %1681 = vmatprep.subr.bf16.mxu0 0
      %1682 = vmatpush1.bf16.xpose.msra.mxu0 0
      %1683 = vmatprep.subr.bf16.mxu0 0
      %1684 = vmatpush1.bf16.xpose.msra.mxu0 0
      %1685 = vmatprep.mubr.bf16.mxu0 0
      %1686 = vmatmul.mubr.bf16.gmra.mrb[0].mxu0 %v1648
      %v1687 = vpop.f32.mrb[0].mxu0
      %v1688 = vadd.f32 0.0, %v1687
      %v1689 = vpop.f32.mrb[0].mxu0
      %v1690 = vpop.f32.mrb[0].mxu0
      %v1691 = vpop.f32.mrb[0].mxu0
      %1692 = vdwg.mxu0
      %v1693 = vmul.f32 %v1688, 0.35355338
      %v1694 = vadd.f32 %v1693, %v390
      %v1695 = vsel %vm586, %v1694, -inf
      %1696 = vmax.xlane.f32.xlu0 %v1695
      %v1697 = vpop.xlane.xlu0 %1696
      %v1698 = vsub.f32 %v1694, %v1697
      %v1699 = vmul.f32 %v1698, 1.442695
      %v1700 = vpow.pop %v1699
      %v1701 = vsel %vm586, %v1700, 0.0
      %1702 = vadd.xlane.f32.xlu0 %v1701
      %v1703 = vpop.xlane.xlu0 %1702
      %v1704 = vrcp.pop %v1703
      %v1705 = vmul.f32 %v1700, %v1704
      %v1706 = vpack.c.bf16 %v1705, %v1705
      %v1707 = vpack.c.bf16 %v1640, %v1640
      %v1709 = vsel %vm586, %v1706, 0
      %v1712 = vsel %vm651, %v1707, 0
      %1714 = vmatprep.subr.bf16.mxu0 0
      %1715 = vmatpush1.bf16.msra.mxu0 %v1712
      %1716 = vmatprep.subr.bf16.mxu0 0
      %1717 = vmatpush1.bf16.msra.mxu0 0
      %1718 = vmatprep.subr.bf16.mxu0 0
      %1719 = vmatpush1.bf16.msra.mxu0 0
      %1720 = vmatprep.subr.bf16.mxu0 0
      %1721 = vmatpush1.bf16.msra.mxu0 0
      %1722 = vmatprep.subr.bf16.mxu0 0
      %1723 = vmatpush1.bf16.msra.mxu0 0
      %1724 = vmatprep.subr.bf16.mxu0 0
      %1725 = vmatpush1.bf16.msra.mxu0 0
      %1726 = vmatprep.subr.bf16.mxu0 0
      %1727 = vmatpush1.bf16.msra.mxu0 0
      %1728 = vmatprep.subr.bf16.mxu0 0
      %1729 = vmatpush1.bf16.msra.mxu0 0
      %1730 = vmatprep.subr.bf16.mxu0 0
      %1731 = vmatpush1.bf16.msra.mxu0 0
      %1732 = vmatprep.subr.bf16.mxu0 0
      %1733 = vmatpush1.bf16.msra.mxu0 0
      %1734 = vmatprep.subr.bf16.mxu0 0
      %1735 = vmatpush1.bf16.msra.mxu0 0
      %1736 = vmatprep.subr.bf16.mxu0 0
      %1737 = vmatpush1.bf16.msra.mxu0 0
      %1738 = vmatprep.subr.bf16.mxu0 0
      %1739 = vmatpush1.bf16.msra.mxu0 0
      %1740 = vmatprep.subr.bf16.mxu0 0
      %1741 = vmatpush1.bf16.msra.mxu0 0
      %1742 = vmatprep.subr.bf16.mxu0 0
      %1743 = vmatpush1.bf16.msra.mxu0 0
      %1744 = vmatprep.subr.bf16.mxu0 0
      %1745 = vmatpush1.bf16.msra.mxu0 0
      %1746 = vmatprep.mubr.bf16.mxu0 0
      %1747 = vmatmul.mubr.bf16.gmra.mrb[0].mxu0 %v1709
      %v1748 = vpop.f32.mrb[0].mxu0
      %v1749 = vadd.f32 0.0, %v1748
      %v1750 = vpop.f32.mrb[0].mxu0
      %v1751 = vpop.f32.mrb[0].mxu0
      %v1752 = vpop.f32.mrb[0].mxu0
      %1753 = vdwg.mxu0
      %v1754 = vpack.c.bf16 %v1749, %v1749
      %s1755 = scalar_lea.vmem %s7, 12
      %v1756 = vld [vmem:[%s1755] sm:$0xf]
      %v1758 = vsel %vm586, %v1754, 0
      %v1761 = vsel %vm651, %v1756, 0
      %1763 = vmatprep.subr.bf16.mxu0 0
      %1764 = vmatpush1.bf16.msra.mxu0 %v1761
      %1765 = vmatprep.subr.bf16.mxu0 0
      %1766 = vmatpush1.bf16.msra.mxu0 0
      %1767 = vmatprep.subr.bf16.mxu0 0
      %1768 = vmatpush1.bf16.msra.mxu0 0
      %1769 = vmatprep.subr.bf16.mxu0 0
      %1770 = vmatpush1.bf16.msra.mxu0 0
      %1771 = vmatprep.subr.bf16.mxu0 0
      %1772 = vmatpush1.bf16.msra.mxu0 0
      %1773 = vmatprep.subr.bf16.mxu0 0
      %1774 = vmatpush1.bf16.msra.mxu0 0
      %1775 = vmatprep.subr.bf16.mxu0 0
      %1776 = vmatpush1.bf16.msra.mxu0 0
      %1777 = vmatprep.subr.bf16.mxu0 0
      %1778 = vmatpush1.bf16.msra.mxu0 0
      %1779 = vmatprep.subr.bf16.mxu0 0
      %1780 = vmatpush1.bf16.msra.mxu0 0
      %1781 = vmatprep.subr.bf16.mxu0 0
      %1782 = vmatpush1.bf16.msra.mxu0 0
      %1783 = vmatprep.subr.bf16.mxu0 0
      %1784 = vmatpush1.bf16.msra.mxu0 0
      %1785 = vmatprep.subr.bf16.mxu0 0
      %1786 = vmatpush1.bf16.msra.mxu0 0
      %1787 = vmatprep.subr.bf16.mxu0 0
      %1788 = vmatpush1.bf16.msra.mxu0 0
      %1789 = vmatprep.subr.bf16.mxu0 0
      %1790 = vmatpush1.bf16.msra.mxu0 0
      %1791 = vmatprep.subr.bf16.mxu0 0
      %1792 = vmatpush1.bf16.msra.mxu0 0
      %1793 = vmatprep.subr.bf16.mxu0 0
      %1794 = vmatpush1.bf16.msra.mxu0 0
      %1795 = vmatprep.mubr.bf16.mxu0 0
      %1796 = vmatmul.mubr.bf16.gmra.mrb[0].mxu0 %v1758
      %v1797 = vpop.f32.mrb[0].mxu0
      %v1798 = vadd.f32 0.0, %v1797
      %v1799 = vpop.f32.mrb[0].mxu0
      %v1800 = vpop.f32.mrb[0].mxu0
      %v1801 = vpop.f32.mrb[0].mxu0
      %1802 = vdwg.mxu0
      %v1803 = vadd.f32 %v1449, %v1798
      %v1804 = vld [vmem:[%s8] sm:$0x1]
      %v1806 = vlaneseq
      %v1807 = vshrl.u32 %v1806, 7
      %v1808 = vsub.s32 0, %v1807
      %v1809 = vrot.slane %v1804, %v1808
      %v1811 = vadd.f32 %v1803, %v1809
      %v1812 = vadd.f32 %v1811, %v383
      %v1813 = vld [vmem:[%s9] sm:$0x1]
      %v1814 = vld [vmem:[%s10] sm:$0x1]
      %v1815 = vsel %vm414, %v1812, 0.0
      %1816 = vadd.xlane.f32.xlu0 %v1815
      %v1817 = vpop.xlane.xlu0 %1816
      %v1818 = vrcp.pop 32.0
      %v1819 = vmul.f32 %v1817, %v1818
      %v1820 = vsub.f32 %v1812, %v1819
      %v1821 = vmul.f32 %v1820, %v1820
      %v1822 = vsel %vm414, %v1821, 0.0
      %1823 = vadd.xlane.f32.xlu0 %v1822
      %v1824 = vpop.xlane.xlu0 %1823
      %v1825 = vmul.f32 %v1824, %v1818
      %v1826 = vadd.f32 %v1825, 1e-05
      %v1827 = vrsqrt.pop %v1826
      %v1828 = vmul.f32 %v1820, %v1827
      %v1830 = vlaneseq
      %v1831 = vshrl.u32 %v1830, 7
      %v1832 = vsub.s32 0, %v1831
      %v1833 = vrot.slane %v1813, %v1832
      %v1835 = vmul.f32 %v1828, %v1833
      %v1837 = vlaneseq
      %v1838 = vshrl.u32 %v1837, 7
      %v1839 = vsub.s32 0, %v1838
      %v1840 = vrot.slane %v1814, %v1839
      %v1842 = vadd.f32 %v1835, %v1840
      %1843 = vst.msk [vmem:[%s381] sm:$0xff] %vm414, %v1842
      %p1844 = scmp.lt.s32.totalorder %s22, 1
      %s1845 = scalar_select %p1844, %s22, 1
      %s1846 = smul.addr %s1845, 8
      %s1847 = scalar_lea.vmem %s11, %s1846
      // Predicated region
      $region65: #{last_forward.17} parent=63 // pred_check
        %p1848 = pneg %p276
      $region66: #{last_forward.17} parent=63 // pred_check_branch
        %1850 = sbr.rel (%p1848) target = $region68
      $region67: #{last_forward.17} parent=63 // pred_region
        _
      $region68: #{last_forward.17} parent=63 // pred_fallthru
        _
    $region64: #{last_forward.17} parent=5 // pred_fallthru
      _
    %p1851 = scmp.le.s32.totalorder 2, %s17
    // Predicated region
    $region69: #{last_forward.17} parent=5 // pred_check
      %p1852 = pneg %p1851
    $region70: #{last_forward.17} parent=5 // pred_check_branch
      %1854 = sbr.rel (%p1852) target = $region72
    $region71: #{last_forward.17} parent=5 // pred_region
      %s1855 = ssub.s32 %s17, 2
      // Predicated region
      $region73: #{last_forward.17} parent=71 // pred_check
        %p1856 = pneg %p282
      $region74: #{last_forward.17} parent=71 // pred_check_branch
        %1858 = sbr.rel (%p1856) target = $region76
      $region75: #{last_forward.17} parent=71 // pred_region
        %p1859 = scmp.lt.s32.totalorder %s23, 1
        %s1860 = scalar_select %p1859, %s23, 1
        %s1861 = smul.addr %s1860, 8
        %s1862 = scalar_lea.vmem %s11, %s1861
      $region76: #{last_forward.17} parent=71 // pred_fallthru
        _
    $region72: #{last_forward.17} parent=5 // pred_fallthru
      _
  $region6: #{last_forward.17} parent=0 // loop_footer
    %s21 = sadd.s32 1, %s17
  $region7: #{last_forward.17} parent=0 // loop_footer_branch
    %16 = sbr.rel target = $region3
  $region8: #{last_forward.17} parent=0 // loop_exit
    _

</llo_original>
